<compile_context>
chip_gen: v7x
topology: tpu7x:2x2x1
jax: 0.10.0
libtpu: 0.0.40
codegen_flags: <defaults>
</compile_context>

<pallas_src>
import math

import numpy as np
import jax
import jax.numpy as jnp
from jax.experimental import pallas as pl
from jax.experimental.pallas import tpu as pltpu


def _harmonic_kernel(x_ref, s_ref, b_ref, o_ref):
    # x_ref: (G, R*D)        row-grouped input points
    # s_ref: (R*D, R*out)    block-diagonal scatter/scale matrix (constant)
    # b_ref: (1, R*out)      0 on sin lanes, pi/2 on cos lanes (constant)
    # o_ref: (G, R*out)      lane-dense output block (R*out % 128 == 0)
    phase = jnp.dot(x_ref[...], s_ref[...], preferred_element_type=jnp.float32)
    phase = phase + b_ref[...]                        # broadcast over sublanes
    o_ref[...] = jnp.sin(phase).astype(o_ref.dtype)   # cos(t) == sin(t + pi/2)


def harmonic_embedding(x, harmonic_dim=10, omega=0.1, *, tm=4096, out_dtype=None):
    """x: (..., D) -> (..., 2 * D * harmonic_dim), matching the torch module."""
    H = int(harmonic_dim)
    *lead, D = x.shape
    M = int(np.prod(lead)) if lead else 1
    DH = D * H
    out_dim = 2 * DH
    out_dtype = x.dtype if out_dtype is None else out_dtype

    # ---- row grouping so the output block's lane dim is a multiple of 128 ---
    R = 128 // math.gcd(out_dim, 128)          # points per grouped row
    W_in, W_out = R * D, R * out_dim           # grouped row widths

    n_groups = pl.cdiv(M, R)
    G_blk = min(max(tm // R, 1), n_groups)     # row groups per grid step
    G_blk = pl.cdiv(G_blk, 8) * 8              # keep sublane dim 8-aligned
    grid = pl.cdiv(n_groups, G_blk)
    n_groups_pad = grid * G_blk
    M_pad = n_groups_pad * R

    # ---- constants built with numpy (compile-time, no extra XLA ops) --------
    freq = (omega * (2.0 ** np.arange(H))).astype(np.float32)            # (H,)
    S_small = np.zeros((D, out_dim), np.float32)
    for d in range(D):
        S_small[d, d * H:(d + 1) * H] = freq               # sin half
        S_small[d, DH + d * H:DH + (d + 1) * H] = freq     # cos half
    S = np.kron(np.eye(R, dtype=np.float32), S_small)      # (W_in, W_out)
    bias = np.tile(
        np.concatenate([np.zeros(DH, np.float32),
                        np.full(DH, np.pi / 2, np.float32)]), R)[None, :]  # (1, W_out)

    # ---- flatten, pad to whole blocks, group rows (free row-major reshapes) -
    x2 = x.reshape(M, D).astype(jnp.float32)   # keep the phase math in f32
    if M_pad != M:
        x2 = jnp.pad(x2, ((0, M_pad - M), (0, 0)))
    xg = x2.reshape(n_groups_pad, W_in)

    cost = pl.CostEstimate(
        flops=2 * n_groups_pad * W_in * W_out,
        transcendentals=n_groups_pad * W_out,
        bytes_accessed=4 * (n_groups_pad * (W_in + W_out) + W_in * W_out + W_out),
    )

    out = pl.pallas_call(
        _harmonic_kernel,
        out_shape=jax.ShapeDtypeStruct((n_groups_pad, W_out), out_dtype),
        grid_spec=pltpu.PrefetchScalarGridSpec(
            num_scalar_prefetch=0,
            grid=(grid,),
            in_specs=[
                pl.BlockSpec((G_blk, W_in), lambda i: (i, 0)),
                pl.BlockSpec((W_in, W_out), lambda i: (0, 0)),   # VMEM-resident
                pl.BlockSpec((1, W_out), lambda i: (0, 0)),      # VMEM-resident
            ],
            out_specs=pl.BlockSpec((G_blk, W_out), lambda i: (i, 0)),
        ),
        compiler_params=pltpu.CompilerParams(
            dimension_semantics=("parallel",)),   # shards grid over v7x's 2 TCs
        cost_estimate=cost,
    )(xg, jnp.asarray(S), jnp.asarray(bias))

    out = out.reshape(M_pad, out_dim)             # free row-major reshape
    if M_pad != M:
        out = out[:M]
    return out.reshape(*lead, out_dim)


def harmonic_embedding_ref(x, harmonic_dim=10, omega=0.1):
    freq = omega * (2.0 ** jnp.arange(harmonic_dim, dtype=x.dtype))
    embed = (x[..., None] * freq).reshape(*x.shape[:-1], -1)
    return jnp.concatenate([jnp.sin(embed), jnp.cos(embed)], axis=-1)


if __name__ == "__main__":
    key = jax.random.PRNGKey(0)
    k1, k2 = jax.random.split(key)
    harmonic_dim, omega = 10, 0.1

    # Case 1: multi-step grid (grid = 4) — exercises the pipelined path.
    B, N, D = 2, 2048, 3
    x = jax.random.uniform(k1, (B, N, D), dtype=jnp.float32, minval=-1.0, maxval=1.0)
    out = jax.block_until_ready(harmonic_embedding(x, harmonic_dim, omega, tm=1024))
    ref = harmonic_embedding_ref(x, harmonic_dim, omega)
    assert out.shape == (B, N, 2 * D * harmonic_dim), out.shape
    np.testing.assert_allclose(np.asarray(out), np.asarray(ref), rtol=5e-5, atol=5e-5)

    # Case 2: point count not a multiple of the row group — exercises padding.
    x_odd = jax.random.uniform(k2, (2, 100, D), dtype=jnp.float32, minval=-1.0, maxval=1.0)
    out_odd = jax.block_until_ready(harmonic_embedding(x_odd, harmonic_dim, omega))
    ref_odd = harmonic_embedding_ref(x_odd, harmonic_dim, omega)
    assert out_odd.shape == (2, 100, 2 * D * harmonic_dim), out_odd.shape
    np.testing.assert_allclose(np.asarray(out_odd), np.asarray(ref_odd), rtol=5e-5, atol=5e-5)

    print("KERNEL_OK")
</pallas_src>

<mosaic_0001>
module attributes {stable_mosaic.version = 11 : i64} {
  func.func @_harmonic_kernel(%arg0: i32, %arg1: memref<32x96xf32, #tpu.memory_space<vmem>>, %arg2: memref<96x1920xf32, #tpu.memory_space<vmem>>, %arg3: memref<1x1920xf32, #tpu.memory_space<vmem>>, %arg4: memref<32x1920xf32, #tpu.memory_space<vmem>>) attributes {dimension_semantics = [#tpu.dimension_semantics<parallel>], iteration_bounds = array<i64: 4>, scalar_prefetch = 0 : i64, scratch_operands = 0 : i64, tpu.core_type = #tpu.core_type<tc>, window_params = [{transform_indices = @transform_0, window_bounds = array<i64: 32, 96>}, {pipeline_mode = #tpu.pipeline_mode<synchronous>, transform_indices = @transform_1, window_bounds = array<i64: 96, 1920>}, {pipeline_mode = #tpu.pipeline_mode<synchronous>, transform_indices = @transform_2, window_bounds = array<i64: 1, 1920>}, {transform_indices = @transform_3, window_bounds = array<i64: 32, 1920>}]} {
    %c0 = arith.constant 0 : index
    %c0_0 = arith.constant 0 : index
    %0 = vector.load %arg1[%c0, %c0_0] : memref<32x96xf32, #tpu.memory_space<vmem>>, vector<32x96xf32>
    %c0_1 = arith.constant 0 : index
    %c0_2 = arith.constant 0 : index
    %1 = vector.load %arg2[%c0_1, %c0_2] : memref<96x1920xf32, #tpu.memory_space<vmem>>, vector<96x1920xf32>
    %cst = arith.constant dense<0.000000e+00> : vector<32x1920xf32>
    %2 = tpu.matmul %0, %1, %cst {dimension_numbers = #tpu.dot_dimension_numbers<[1], [0], [0], [1], [0, 0, 1, 1], [], []>} : vector<32x96xf32>, vector<96x1920xf32>, vector<32x1920xf32> -> vector<32x1920xf32>
    %c0_3 = arith.constant 0 : index
    %c0_4 = arith.constant 0 : index
    %3 = vector.load %arg3[%c0_3, %c0_4] : memref<1x1920xf32, #tpu.memory_space<vmem>>, vector<1x1920xf32>
    %4 = vector.broadcast %3 : vector<1x1920xf32> to vector<32x1920xf32>
    %5 = arith.addf %2, %4 : vector<32x1920xf32>
    %6 = math.sin %5 : vector<32x1920xf32>
    %c0_5 = arith.constant 0 : index
    %c0_6 = arith.constant 0 : index
    %7 = vector.load %arg4[%c0_5, %c0_6] : memref<32x1920xf32, #tpu.memory_space<vmem>>, vector<32x1920xf32>
    tpu.vector_store %arg4[%c0_5, %c0_6], %6 {strides = array<i32>} : memref<32x1920xf32, #tpu.memory_space<vmem>>, vector<32x1920xf32>,
    return
  }
  func.func @transform_0(%arg0: i32) -> (i32, i32) {
    %c0_i32 = arith.constant 0 : i32
    %c0_i32_0 = arith.constant 0 : i32
    return %arg0, %c0_i32 : i32, i32
  }
  func.func @transform_1(%arg0: i32) -> (i32, i32) {
    %c0_i32 = arith.constant 0 : i32
    %c0_i32_0 = arith.constant 0 : i32
    %c0_i32_1 = arith.constant 0 : i32
    return %c0_i32, %c0_i32_0 : i32, i32
  }
  func.func @transform_2(%arg0: i32) -> (i32, i32) {
    %c0_i32 = arith.constant 0 : i32
    %c0_i32_0 = arith.constant 0 : i32
    %c0_i32_1 = arith.constant 0 : i32
    return %c0_i32, %c0_i32_0 : i32, i32
  }
  func.func @transform_3(%arg0: i32) -> (i32, i32) {
    %c0_i32 = arith.constant 0 : i32
    %c0_i32_0 = arith.constant 0 : i32
    return %arg0, %c0_i32 : i32, i32
  }
}

</mosaic_0001>

<llo_original>
// kernel: tpu_custom_call.1
$region0: #{tpu_custom_call.1}
  #allocation0 [shape = 'u32[]', space=smem, size = 0x4, offset = 0x4, fixed_abs, tag = 'smem constant byte address 0x4 - core index']
  #allocation1 [shape = 'u32[144,128]{1,0:T(1,128)}', space=vmem, size = 0x12000, scoped, tag = 'internal scratch']
  %s0 = inlined_call_operand.vmem [shape: f32[128,96], index: 0, kind: input, shape index: {}]
  %s1 = inlined_call_operand.hbm [shape: f32[96,1920], index: 1, kind: input, shape index: {}]
  %s2 = inlined_call_operand.vmem [shape: f32[1,1920], index: 2, kind: input, shape index: {}]
  %s3 = inlined_call_operand.hbm [shape: f32[128,1920], index: 3, kind: output, shape index: {}]
  %s4 = sld [smem:[#allocation0]]
  $region49: #{tpu_custom_call.1} parent=0
    _
  %s6 = ssub.s32 1, %s4
  %s7 = scalar_select 0, %s6, %s4
  $region1: #{tpu_custom_call.1} parent=0
    #allocation2 [shape = 'u8[737280]{0}', space=vmem, size = 0xb4000, scoped, tag = 'input window, operand 1, single buffered']
    #allocation3 [shape = 's32[2]{0}', space=sflag, size = 0x8, scoped, tag = 'scoped memory for tpu_custom_call.1']
    #allocation4 [shape = 's32[2]{0}', space=sflag, size = 0x8, scoped, tag = 'scoped memory for tpu_custom_call.1']
    #allocation5 [shape = 'u8[491520]{0}', space=vmem, size = 0x78000, scoped, tag = 'output window, operand 0']
    %8 = vsyncpa [#allocation3], 0
    %9 = vsyncpa [#allocation4], 0
    %s10 = scalar_lea.sflag [#allocation4], 1
    %11 = vsyncpa %s10, 0
    loop: start=0, step=1, limit=6
    $region2: #{tpu_custom_call.1} parent=1 // loop_pre_header
      _
    $region3: #{tpu_custom_call.1} parent=1 // loop_header
      %s13 = sphi 0, %s17
      %p14 = scmp.ge.s32.totalorder %s13, 6
      %s23 = sphi 0, %s25
      %s26 = sphi 0, %s23
      %s27 = sphi 0, %s26
      %s43 = sphi 0, %s27
      %s47 = sphi 0, %s47
      %s49 = sphi 0, %s47
      %s50 = sphi 0, %s49
      %s64 = sphi 0, %s50
      %s68 = sphi 0, %s68
      %s70 = sphi 0, %s68
      %s71 = sphi 0, %s70
      %s85 = sphi 0, %s71
      %s91 = sphi 0, %s93
      %s94 = sphi 0, %s91
      %s95 = sphi 0, %s94
      %s111 = sphi 0, %s95
    $region4: #{tpu_custom_call.1} parent=1 // loop_header_branch
      %16 = sbr.rel (%p14) target = $region8
    $region5: #{tpu_custom_call.1} parent=1 // loop_body
      %s18 = ssub.s32 %s13, 1
      %s19 = ssub.s32 %s13, 2
      %s20 = sadd.s32 %s13, 1
      %s21 = ssub.s32 %s13, %s20
      %p22 = scmp.eq.s32.totalorder %s21, 0
      %s24 = sadd.s32 %s23, 1
      %s25 = scalar_select %p22, %s23, %s24
      %p28 = pneg %p22
      %p29 = scmp.eq.s32.totalorder %s13, 3
      %p30 = por %p28, %p29
      %p31 = scmp.ne.s32.totalorder %s23, %s26
      %p32 = scmp.eq.s32.totalorder %s13, 0
      %p33 = por %p31, %p32
      %p34 = scmp.ne.s32.totalorder %s23, %s26
      %p35 = scmp.eq.s32.totalorder %s18, 3
      %p36 = por %p34, %p35
      %p37 = scmp.ne.s32.totalorder %s26, %s27
      %p38 = scmp.eq.s32.totalorder %s18, 0
      %p39 = por %p37, %p38
      %p40 = scmp.ne.s32.totalorder %s26, %s27
      %p41 = scmp.eq.s32.totalorder %s19, 3
      %p42 = por %p40, %p41
      %p44 = scmp.ne.s32.totalorder %s27, %s43
      %p45 = scmp.eq.s32.totalorder %s19, 0
      %p46 = por %p44, %p45
      %s48 = sadd.s32 %s47, 1
      %p51 = scmp.eq.s32.totalorder %s13, 3
      %p52 = scmp.ne.s32.totalorder %s47, %s49
      %p53 = scmp.eq.s32.totalorder %s13, 0
      %p54 = por %p52, %p53
      %p55 = scmp.ne.s32.totalorder %s47, %s49
      %p56 = scmp.eq.s32.totalorder %s18, 3
      %p57 = por %p55, %p56
      %p58 = scmp.ne.s32.totalorder %s49, %s50
      %p59 = scmp.eq.s32.totalorder %s18, 0
      %p60 = por %p58, %p59
      %p61 = scmp.ne.s32.totalorder %s49, %s50
      %p62 = scmp.eq.s32.totalorder %s19, 3
      %p63 = por %p61, %p62
      %p65 = scmp.ne.s32.totalorder %s50, %s64
      %p66 = scmp.eq.s32.totalorder %s19, 0
      %p67 = por %p65, %p66
      %s69 = sadd.s32 %s68, 1
      %p72 = scmp.eq.s32.totalorder %s13, 3
      %p73 = scmp.ne.s32.totalorder %s68, %s70
      %p74 = scmp.eq.s32.totalorder %s13, 0
      %p75 = por %p73, %p74
      %p76 = scmp.ne.s32.totalorder %s68, %s70
      %p77 = scmp.eq.s32.totalorder %s18, 3
      %p78 = por %p76, %p77
      %p79 = scmp.ne.s32.totalorder %s70, %s71
      %p80 = scmp.eq.s32.totalorder %s18, 0
      %p81 = por %p79, %p80
      %p82 = scmp.ne.s32.totalorder %s70, %s71
      %p83 = scmp.eq.s32.totalorder %s19, 3
      %p84 = por %p82, %p83
      %p86 = scmp.ne.s32.totalorder %s71, %s85
      %p87 = scmp.eq.s32.totalorder %s19, 0
      %p88 = por %p86, %p87
      %s89 = ssub.s32 %s13, %s20
      %p90 = scmp.eq.s32.totalorder %s89, 0
      %s92 = sadd.s32 %s91, 1
      %s93 = scalar_select %p90, %s91, %s92
      %p96 = pneg %p90
      %p97 = scmp.eq.s32.totalorder %s13, 3
      %p98 = por %p96, %p97
      %p99 = scmp.ne.s32.totalorder %s91, %s94
      %p100 = scmp.eq.s32.totalorder %s13, 0
      %p101 = por %p99, %p100
      %p102 = scmp.ne.s32.totalorder %s91, %s94
      %p103 = scmp.eq.s32.totalorder %s18, 3
      %p104 = por %p102, %p103
      %p105 = scmp.ne.s32.totalorder %s94, %s95
      %p106 = scmp.eq.s32.totalorder %s18, 0
      %p107 = por %p105, %p106
      %p108 = scmp.ne.s32.totalorder %s94, %s95
      %p109 = scmp.eq.s32.totalorder %s19, 3
      %p110 = por %p108, %p109
      %p112 = scmp.ne.s32.totalorder %s95, %s111
      %p113 = scmp.eq.s32.totalorder %s19, 0
      %p114 = por %p112, %p113
      %p115 = scmp.le.s32.totalorder 1, %s13
      %p116 = scmp.lt.s32.totalorder %s13, 5
      %p117 = pnand %p115, %p116
      %p118 = pneg %p117
      // Predicated region
      $region9: #{tpu_custom_call.1} parent=5 // pred_check
        _
      $region10: #{tpu_custom_call.1} parent=5 // pred_check_branch
        %120 = sbr.rel (%p117) target = $region12
      $region11: #{tpu_custom_call.1} parent=5 // pred_region
        %s121 = ssub.s32 %s13, 1
        // Predicated region
        $region13: #{tpu_custom_call.1} parent=11 // pred_check
          %p122 = pneg %p60
        $region14: #{tpu_custom_call.1} parent=11 // pred_check_branch
          %124 = sbr.rel (%p122) target = $region16
        $region15: #{tpu_custom_call.1} parent=11 // pred_region
          %s126 = ssub.s32 23040, 23040
          %127 = vsyncadd [#allocation3], %s126
          %s128 = sshll.u32 [#allocation2], 4
          %s129 = int_to_ptr.vmem [resolvable:$true] %s128
          %134 = dma.hbm_to_vmem [thread:$0]  %s1, 23040, %s129, [#allocation3], 1920, 1920, 120
        $region16: #{tpu_custom_call.1} parent=11 // pred_fallthru
          _
        // Predicated region
        $region17: #{tpu_custom_call.1} parent=11 // pred_check
          %p135 = pneg %p81
        $region18: #{tpu_custom_call.1} parent=11 // pred_check_branch
          %137 = sbr.rel (%p135) target = $region20
        $region19: #{tpu_custom_call.1} parent=11 // pred_region
          _
        $region20: #{tpu_custom_call.1} parent=11 // pred_fallthru
          _
      $region12: #{tpu_custom_call.1} parent=5 // pred_fallthru
        _
      %p138 = scmp.lt.s32.totalorder %s13, 4
      // Predicated region
      $region21: #{tpu_custom_call.1} parent=5 // pred_check
        %p139 = pneg %p138
      $region22: #{tpu_custom_call.1} parent=5 // pred_check_branch
        %141 = sbr.rel (%p139) target = $region24
      $region23: #{tpu_custom_call.1} parent=5 // pred_region
        // Predicated region
        $region25: #{tpu_custom_call.1} parent=23 // pred_check
          %p142 = pneg %p33
        $region26: #{tpu_custom_call.1} parent=23 // pred_check_branch
          %144 = sbr.rel (%p142) target = $region28
        $region27: #{tpu_custom_call.1} parent=23 // pred_region
          %s145 = smul.u32 4, %s13
          %p146 = scmp.lt.s32.totalorder %s145, 15
          %s147 = scalar_select %p146, %s145, 15
          %s148 = smul.addr %s147, 8
          %s149 = scalar_lea.vmem %s0, %s148
          %s150 = smul.u32 4, %s13
        $region28: #{tpu_custom_call.1} parent=23 // pred_fallthru
          _
      $region24: #{tpu_custom_call.1} parent=5 // pred_fallthru
        _
      %p151 = scmp.le.s32.totalorder 1, %s13
      %p152 = scmp.lt.s32.totalorder %s13, 5
      %p153 = pnand %p151, %p152
      %p154 = pneg %p153
      // Predicated region
      $region29: #{tpu_custom_call.1} parent=5 // pred_check
        _
      $region30: #{tpu_custom_call.1} parent=5 // pred_check_branch
        %156 = sbr.rel (%p153) target = $region32
      $region31: #{tpu_custom_call.1} parent=5 // pred_region
        %s157 = ssub.s32 %s13, 1
        // Predicated region
        $region33: #{tpu_custom_call.1} parent=31 // pred_check
          %p158 = pneg %p60
        $region34: #{tpu_custom_call.1} parent=31 // pred_check_branch
          %160 = sbr.rel (%p158) target = $region36
        $region35: #{tpu_custom_call.1} parent=31 // pred_region
          %161 = dma.done [#allocation3], 23040
        $region36: #{tpu_custom_call.1} parent=31 // pred_fallthru
          _
        %s162 = smul.u32 4, %s18
        %p163 = scmp.lt.s32.totalorder %s162, 15
        %s164 = scalar_select %p163, %s162, 15
        %s165 = smul.addr %s164, 8
        %s166 = scalar_lea.vmem %s0, %s165
        %p167 = pneg %p39
        %p168 = pneg %p36
        %p169 = pneg %p60
        %p170 = pneg %p57
        %p171 = pneg %p81
        %p172 = pneg %p78
        %p173 = pneg %p107
        %p174 = pneg %p104
        %s175 = sand.u32 %s94, 1
        %s176 = scalar_lea.sflag [#allocation4], %s175
        %s177 = sand.u32 %s94, 1
        %s178 = smul.addr %s177, 480
        %s179 = scalar_lea.vmem [#allocation5], %s178
        %s180 = smul.u32 4, %s18
        %p181 = scmp.lt.s32.totalorder %s180, 15
        %s182 = scalar_select %p181, %s180, 15
        %s183 = smul.addr %s182, 8
        %s184 = scalar_lea.vmem %s0, %s183
        %s185 = smul.u32 4, %s18
        %s186 = smul.u32 4, %s18
        %v187 = vld [vmem:[%s184] sm:$0xff]
        %v188 = vld [vmem:[%s184 + $0x8] sm:$0xff]
        %v189 = vld [vmem:[%s184 + $0x10] sm:$0xff]
        %v190 = vld [vmem:[%s184 + $0x18] sm:$0xff]
        %v191 = vld [vmem:[#allocation2] sm:$0xff]
        %v192 = vld [vmem:[#allocation2 + $0x8] sm:$0xff]
        %v193 = vld [vmem:[#allocation2 + $0x10] sm:$0xff]
        %v194 = vld [vmem:[#allocation2 + $0x18] sm:$0xff]
        %v195 = vld [vmem:[#allocation2 + $0x20] sm:$0xff]
        %v196 = vld [vmem:[#allocation2 + $0x28] sm:$0xff]
        %v197 = vld [vmem:[#allocation2 + $0x30] sm:$0xff]
        %v198 = vld [vmem:[#allocation2 + $0x38] sm:$0xff]
        %v199 = vld [vmem:[#allocation2 + $0x40] sm:$0xff]
        %v200 = vld [vmem:[#allocation2 + $0x48] sm:$0xff]
        %v201 = vld [vmem:[#allocation2 + $0x50] sm:$0xff]
        %v202 = vld [vmem:[#allocation2 + $0x58] sm:$0xff]
        %v203 = vld [vmem:[#allocation2 + $0x60] sm:$0xff]
        %v204 = vld [vmem:[#allocation2 + $0x68] sm:$0xff]
        %v205 = vld [vmem:[#allocation2 + $0x70] sm:$0xff]
        %v206 = vld [vmem:[#allocation2 + $0x78] sm:$0xff]
        %v207 = vld [vmem:[#allocation2 + $0x80] sm:$0xff]
        %v208 = vld [vmem:[#allocation2 + $0x88] sm:$0xff]
        %v209 = vld [vmem:[#allocation2 + $0x90] sm:$0xff]
        %v210 = vld [vmem:[#allocation2 + $0x98] sm:$0xff]
        %v211 = vld [vmem:[#allocation2 + $0xa0] sm:$0xff]
        %v212 = vld [vmem:[#allocation2 + $0xa8] sm:$0xff]
        %v213 = vld [vmem:[#allocation2 + $0xb0] sm:$0xff]
        %v214 = vld [vmem:[#allocation2 + $0xb8] sm:$0xff]
        %v215 = vld [vmem:[#allocation2 + $0xc0] sm:$0xff]
        %v216 = vld [vmem:[#allocation2 + $0xc8] sm:$0xff]
        %v217 = vld [vmem:[#allocation2 + $0xd0] sm:$0xff]
        %v218 = vld [vmem:[#allocation2 + $0xd8] sm:$0xff]
        %v219 = vld [vmem:[#allocation2 + $0xe0] sm:$0xff]
        %v220 = vld [vmem:[#allocation2 + $0xe8] sm:$0xff]
        %v221 = vld [vmem:[#allocation2 + $0xf0] sm:$0xff]
        %v222 = vld [vmem:[#allocation2 + $0xf8] sm:$0xff]
        %v223 = vld [vmem:[#allocation2 + $0x100] sm:$0xff]
        %v224 = vld [vmem:[#allocation2 + $0x108] sm:$0xff]
        %v225 = vld [vmem:[#allocation2 + $0x110] sm:$0xff]
        %v226 = vld [vmem:[#allocation2 + $0x118] sm:$0xff]
        %v227 = vld [vmem:[#allocation2 + $0x120] sm:$0xff]
        %v228 = vld [vmem:[#allocation2 + $0x128] sm:$0xff]
        %v229 = vld [vmem:[#allocation2 + $0x130] sm:$0xff]
        %v230 = vld [vmem:[#allocation2 + $0x138] sm:$0xff]
        %v231 = vld [vmem:[#allocation2 + $0x140] sm:$0xff]
        %v232 = vld [vmem:[#allocation2 + $0x148] sm:$0xff]
        %v233 = vld [vmem:[#allocation2 + $0x150] sm:$0xff]
        %v234 = vld [vmem:[#allocation2 + $0x158] sm:$0xff]
        %v235 = vld [vmem:[#allocation2 + $0x160] sm:$0xff]
        %v236 = vld [vmem:[#allocation2 + $0x168] sm:$0xff]
        %v237 = vld [vmem:[#allocation2 + $0x170] sm:$0xff]
        %v238 = vld [vmem:[#allocation2 + $0x178] sm:$0xff]
        %v239 = vld [vmem:[#allocation2 + $0x180] sm:$0xff]
        %v240 = vld [vmem:[#allocation2 + $0x188] sm:$0xff]
        %v241 = vld [vmem:[#allocation2 + $0x190] sm:$0xff]
        %v242 = vld [vmem:[#allocation2 + $0x198] sm:$0xff]
        %v243 = vld [vmem:[#allocation2 + $0x1a0] sm:$0xff]
        %v244 = vld [vmem:[#allocation2 + $0x1a8] sm:$0xff]
        %v245 = vld [vmem:[#allocation2 + $0x1b0] sm:$0xff]
        %v246 = vld [vmem:[#allocation2 + $0x1b8] sm:$0xff]
        %v247 = vld [vmem:[#allocation2 + $0x1c0] sm:$0xff]
        %v248 = vld [vmem:[#allocation2 + $0x1c8] sm:$0xff]
        %v249 = vld [vmem:[#allocation2 + $0x1d0] sm:$0xff]
        %v250 = vld [vmem:[#allocation2 + $0x1d8] sm:$0xff]
        %v251 = vld [vmem:[#allocation2 + $0x1e0] sm:$0xff]
        %v252 = vld [vmem:[#allocation2 + $0x1e8] sm:$0xff]
        %v253 = vld [vmem:[#allocation2 + $0x1f0] sm:$0xff]
        %v254 = vld [vmem:[#allocation2 + $0x1f8] sm:$0xff]
        %v255 = vld [vmem:[#allocation2 + $0x200] sm:$0xff]
        %v256 = vld [vmem:[#allocation2 + $0x208] sm:$0xff]
        %v257 = vld [vmem:[#allocation2 + $0x210] sm:$0xff]
        %v258 = vld [vmem:[#allocation2 + $0x218] sm:$0xff]
        %v259 = vld [vmem:[#allocation2 + $0x220] sm:$0xff]
        %v260 = vld [vmem:[#allocation2 + $0x228] sm:$0xff]
        %v261 = vld [vmem:[#allocation2 + $0x230] sm:$0xff]
        %v262 = vld [vmem:[#allocation2 + $0x238] sm:$0xff]
        %v263 = vld [vmem:[#allocation2 + $0x240] sm:$0xff]
        %v264 = vld [vmem:[#allocation2 + $0x248] sm:$0xff]
        %v265 = vld [vmem:[#allocation2 + $0x250] sm:$0xff]
        %v266 = vld [vmem:[#allocation2 + $0x258] sm:$0xff]
        %v267 = vld [vmem:[#allocation2 + $0x260] sm:$0xff]
        %v268 = vld [vmem:[#allocation2 + $0x268] sm:$0xff]
        %v269 = vld [vmem:[#allocation2 + $0x270] sm:$0xff]
        %v270 = vld [vmem:[#allocation2 + $0x278] sm:$0xff]
        %v271 = vld [vmem:[#allocation2 + $0x280] sm:$0xff]
        %v272 = vld [vmem:[#allocation2 + $0x288] sm:$0xff]
        %v273 = vld [vmem:[#allocation2 + $0x290] sm:$0xff]
        %v274 = vld [vmem:[#allocation2 + $0x298] sm:$0xff]
        %v275 = vld [vmem:[#allocation2 + $0x2a0] sm:$0xff]
        %v276 = vld [vmem:[#allocation2 + $0x2a8] sm:$0xff]
        %v277 = vld [vmem:[#allocation2 + $0x2b0] sm:$0xff]
        %v278 = vld [vmem:[#allocation2 + $0x2b8] sm:$0xff]
        %v279 = vld [vmem:[#allocation2 + $0x2c0] sm:$0xff]
        %v280 = vld [vmem:[#allocation2 + $0x2c8] sm:$0xff]
        %v281 = vld [vmem:[#allocation2 + $0x2d0] sm:$0xff]
        %v282 = vld [vmem:[#allocation2 + $0x2d8] sm:$0xff]
        %v283 = vld [vmem:[#allocation2 + $0x2e0] sm:$0xff]
        %v284 = vld [vmem:[#allocation2 + $0x2e8] sm:$0xff]
        %v285 = vld [vmem:[#allocation2 + $0x2f0] sm:$0xff]
        %v286 = vld [vmem:[#allocation2 + $0x2f8] sm:$0xff]
        %v287 = vld [vmem:[#allocation2 + $0x300] sm:$0xff]
        %v288 = vld [vmem:[#allocation2 + $0x308] sm:$0xff]
        %v289 = vld [vmem:[#allocation2 + $0x310] sm:$0xff]
        %v290 = vld [vmem:[#allocation2 + $0x318] sm:$0xff]
        %v291 = vld [vmem:[#allocation2 + $0x320] sm:$0xff]
        %v292 = vld [vmem:[#allocation2 + $0x328] sm:$0xff]
        %v293 = vld [vmem:[#allocation2 + $0x330] sm:$0xff]
        %v294 = vld [vmem:[#allocation2 + $0x338] sm:$0xff]
        %v295 = vld [vmem:[#allocation2 + $0x340] sm:$0xff]
        %v296 = vld [vmem:[#allocation2 + $0x348] sm:$0xff]
        %v297 = vld [vmem:[#allocation2 + $0x350] sm:$0xff]
        %v298 = vld [vmem:[#allocation2 + $0x358] sm:$0xff]
        %v299 = vld [vmem:[#allocation2 + $0x360] sm:$0xff]
        %v300 = vld [vmem:[#allocation2 + $0x368] sm:$0xff]
        %v301 = vld [vmem:[#allocation2 + $0x370] sm:$0xff]
        %v302 = vld [vmem:[#allocation2 + $0x378] sm:$0xff]
        %v303 = vld [vmem:[#allocation2 + $0x380] sm:$0xff]
        %v304 = vld [vmem:[#allocation2 + $0x388] sm:$0xff]
        %v305 = vld [vmem:[#allocation2 + $0x390] sm:$0xff]
        %v306 = vld [vmem:[#allocation2 + $0x398] sm:$0xff]
        %v307 = vld [vmem:[#allocation2 + $0x3a0] sm:$0xff]
        %v308 = vld [vmem:[#allocation2 + $0x3a8] sm:$0xff]
        %v309 = vld [vmem:[#allocation2 + $0x3b0] sm:$0xff]
        %v310 = vld [vmem:[#allocation2 + $0x3b8] sm:$0xff]
        %v311 = vld [vmem:[#allocation2 + $0x3c0] sm:$0xff]
        %v312 = vld [vmem:[#allocation2 + $0x3c8] sm:$0xff]
        %v313 = vld [vmem:[#allocation2 + $0x3d0] sm:$0xff]
        %v314 = vld [vmem:[#allocation2 + $0x3d8] sm:$0xff]
        %v315 = vld [vmem:[#allocation2 + $0x3e0] sm:$0xff]
        %v316 = vld [vmem:[#allocation2 + $0x3e8] sm:$0xff]
        %v317 = vld [vmem:[#allocation2 + $0x3f0] sm:$0xff]
        %v318 = vld [vmem:[#allocation2 + $0x3f8] sm:$0xff]
        %v319 = vld [vmem:[#allocation2 + $0x400] sm:$0xff]
        %v320 = vld [vmem:[#allocation2 + $0x408] sm:$0xff]
        %v321 = vld [vmem:[#allocation2 + $0x410] sm:$0xff]
        %v322 = vld [vmem:[#allocation2 + $0x418] sm:$0xff]
        %v323 = vld [vmem:[#allocation2 + $0x420] sm:$0xff]
        %v324 = vld [vmem:[#allocation2 + $0x428] sm:$0xff]
        %v325 = vld [vmem:[#allocation2 + $0x430] sm:$0xff]
        %v326 = vld [vmem:[#allocation2 + $0x438] sm:$0xff]
        %v327 = vld [vmem:[#allocation2 + $0x440] sm:$0xff]
        %v328 = vld [vmem:[#allocation2 + $0x448] sm:$0xff]
        %v329 = vld [vmem:[#allocation2 + $0x450] sm:$0xff]
        %v330 = vld [vmem:[#allocation2 + $0x458] sm:$0xff]
        %v331 = vld [vmem:[#allocation2 + $0x460] sm:$0xff]
        %v332 = vld [vmem:[#allocation2 + $0x468] sm:$0xff]
        %v333 = vld [vmem:[#allocation2 + $0x470] sm:$0xff]
        %v334 = vld [vmem:[#allocation2 + $0x478] sm:$0xff]
        %v335 = vld [vmem:[#allocation2 + $0x480] sm:$0xff]
        %v336 = vld [vmem:[#allocation2 + $0x488] sm:$0xff]
        %v337 = vld [vmem:[#allocation2 + $0x490] sm:$0xff]
        %v338 = vld [vmem:[#allocation2 + $0x498] sm:$0xff]
        %v339 = vld [vmem:[#allocation2 + $0x4a0] sm:$0xff]
        %v340 = vld [vmem:[#allocation2 + $0x4a8] sm:$0xff]
        %v341 = vld [vmem:[#allocation2 + $0x4b0] sm:$0xff]
        %v342 = vld [vmem:[#allocation2 + $0x4b8] sm:$0xff]
        %v343 = vld [vmem:[#allocation2 + $0x4c0] sm:$0xff]
        %v344 = vld [vmem:[#allocation2 + $0x4c8] sm:$0xff]
        %v345 = vld [vmem:[#allocation2 + $0x4d0] sm:$0xff]
        %v346 = vld [vmem:[#allocation2 + $0x4d8] sm:$0xff]
        %v347 = vld [vmem:[#allocation2 + $0x4e0] sm:$0xff]
        %v348 = vld [vmem:[#allocation2 + $0x4e8] sm:$0xff]
        %v349 = vld [vmem:[#allocation2 + $0x4f0] sm:$0xff]
        %v350 = vld [vmem:[#allocation2 + $0x4f8] sm:$0xff]
        %v351 = vld [vmem:[#allocation2 + $0x500] sm:$0xff]
        %v352 = vld [vmem:[#allocation2 + $0x508] sm:$0xff]
        %v353 = vld [vmem:[#allocation2 + $0x510] sm:$0xff]
        %v354 = vld [vmem:[#allocation2 + $0x518] sm:$0xff]
        %v355 = vld [vmem:[#allocation2 + $0x520] sm:$0xff]
        %v356 = vld [vmem:[#allocation2 + $0x528] sm:$0xff]
        %v357 = vld [vmem:[#allocation2 + $0x530] sm:$0xff]
        %v358 = vld [vmem:[#allocation2 + $0x538] sm:$0xff]
        %v359 = vld [vmem:[#allocation2 + $0x540] sm:$0xff]
        %v360 = vld [vmem:[#allocation2 + $0x548] sm:$0xff]
        %v361 = vld [vmem:[#allocation2 + $0x550] sm:$0xff]
        %v362 = vld [vmem:[#allocation2 + $0x558] sm:$0xff]
        %v363 = vld [vmem:[#allocation2 + $0x560] sm:$0xff]
        %v364 = vld [vmem:[#allocation2 + $0x568] sm:$0xff]
        %v365 = vld [vmem:[#allocation2 + $0x570] sm:$0xff]
        %v366 = vld [vmem:[#allocation2 + $0x578] sm:$0xff]
        %v367 = vld [vmem:[#allocation2 + $0x580] sm:$0xff]
        %v368 = vld [vmem:[#allocation2 + $0x588] sm:$0xff]
        %v369 = vld [vmem:[#allocation2 + $0x590] sm:$0xff]
        %v370 = vld [vmem:[#allocation2 + $0x598] sm:$0xff]
        %v371 = vld [vmem:[%s2] sm:$0xff]
        %v372 = vld [vmem:[%s2 + $0x8] sm:$0xff]
        %v375 = vlaneseq
        %v376 = vshrl.u32 %v375, 7
        %v377 = vsub.s32 0, %v376
        %v378 = vrot.slane %v371, %v377
        %v379 = vlaneseq
        %v380 = vshrl.u32 %v379, 7
        %v381 = vsub.s32 1, %v380
        %v382 = vrot.slane %v371, %v381
        %v383 = vlaneseq
        %v384 = vshrl.u32 %v383, 7
        %v385 = vsub.s32 2, %v384
        %v386 = vrot.slane %v371, %v385
        %v387 = vlaneseq
        %v388 = vshrl.u32 %v387, 7
        %v389 = vsub.s32 3, %v388
        %v390 = vrot.slane %v371, %v389
        %v391 = vlaneseq
        %v392 = vshrl.u32 %v391, 7
        %v393 = vsub.s32 4, %v392
        %v394 = vrot.slane %v371, %v393
        %v395 = vlaneseq
        %v396 = vshrl.u32 %v395, 7
        %v397 = vsub.s32 5, %v396
        %v398 = vrot.slane %v371, %v397
        %v399 = vlaneseq
        %v400 = vshrl.u32 %v399, 7
        %v401 = vsub.s32 6, %v400
        %v402 = vrot.slane %v371, %v401
        %v403 = vlaneseq
        %v404 = vshrl.u32 %v403, 7
        %v405 = vsub.s32 7, %v404
        %v406 = vrot.slane %v371, %v405
        %v407 = vlaneseq
        %v408 = vshrl.u32 %v407, 7
        %v409 = vsub.s32 0, %v408
        %v410 = vrot.slane %v372, %v409
        %v411 = vlaneseq
        %v412 = vshrl.u32 %v411, 7
        %v413 = vsub.s32 1, %v412
        %v414 = vrot.slane %v372, %v413
        %v415 = vlaneseq
        %v416 = vshrl.u32 %v415, 7
        %v417 = vsub.s32 2, %v416
        %v418 = vrot.slane %v372, %v417
        %v419 = vlaneseq
        %v420 = vshrl.u32 %v419, 7
        %v421 = vsub.s32 3, %v420
        %v422 = vrot.slane %v372, %v421
        %v423 = vlaneseq
        %v424 = vshrl.u32 %v423, 7
        %v425 = vsub.s32 4, %v424
        %v426 = vrot.slane %v372, %v425
        %v427 = vlaneseq
        %v428 = vshrl.u32 %v427, 7
        %v429 = vsub.s32 5, %v428
        %v430 = vrot.slane %v372, %v429
        %v431 = vlaneseq
        %v432 = vshrl.u32 %v431, 7
        %v433 = vsub.s32 6, %v432
        %v434 = vrot.slane %v372, %v433
        %vm450 = vcmask 785408
        %v452 = vsel %vm450, %v187, 0
        %v455 = vsel %vm450, %v188, 0
        %v458 = vsel %vm450, %v189, 0
        %v461 = vsel %vm450, %v190, 0
        %463 = vmatprep.subr.mxu0 %v192
        %464 = vmatpush1.msra.mxu0 %v191
        %465 = vmatprep.subr.mxu0 %v207
        %466 = vmatpush1.msra.mxu0 %v206
        %467 = vmatprep.subr.mxu0 %v222
        %468 = vmatpush1.msra.mxu0 %v221
        %469 = vmatprep.subr.mxu0 %v237
        %470 = vmatpush1.msra.mxu0 %v236
        %471 = vmatprep.subr.mxu0 %v252
        %472 = vmatpush1.msra.mxu0 %v251
        %473 = vmatprep.subr.mxu0 %v267
        %474 = vmatpush1.msra.mxu0 %v266
        %475 = vmatprep.subr.mxu0 %v282
        %476 = vmatpush1.msra.mxu0 %v281
        %477 = vmatprep.subr.mxu0 %v297
        %478 = vmatpush1.msra.mxu0 %v296
        %479 = vmatprep.subr.mxu0 %v312
        %480 = vmatpush1.msra.mxu0 %v311
        %481 = vmatprep.subr.mxu0 %v327
        %482 = vmatpush1.msra.mxu0 %v326
        %483 = vmatprep.subr.mxu0 %v342
        %484 = vmatpush1.msra.mxu0 %v341
        %485 = vmatprep.subr.mxu0 %v357
        %486 = vmatpush1.msra.mxu0 %v356
        %487 = vmatprep.subr.mxu0 0.0
        %488 = vmatpush1.msra.mxu0 0.0
        %489 = vmatprep.subr.mxu0 0.0
        %490 = vmatpush1.msra.mxu0 0.0
        %491 = vmatprep.subr.mxu0 0.0
        %492 = vmatpush1.msra.mxu0 0.0
        %493 = vmatprep.subr.mxu0 0.0
        %494 = vmatpush1.msra.mxu0 0.0
        %495 = vmatprep.subr.mxu0 0.0
        %496 = vmatpush1.msra.mxu0 0.0
        %497 = vmatprep.subr.mxu0 0.0
        %498 = vmatpush1.msra.mxu0 0.0
        %499 = vmatprep.subr.mxu0 0.0
        %500 = vmatpush1.msra.mxu0 0.0
        %501 = vmatprep.subr.mxu0 0.0
        %502 = vmatpush1.msra.mxu0 0.0
        %503 = vmatprep.subr.mxu0 0.0
        %504 = vmatpush1.msra.mxu0 0.0
        %505 = vmatprep.subr.mxu0 0.0
        %506 = vmatpush1.msra.mxu0 0.0
        %507 = vmatprep.subr.mxu0 0.0
        %508 = vmatpush1.msra.mxu0 0.0
        %509 = vmatprep.subr.mxu0 0.0
        %510 = vmatpush1.msra.mxu0 0.0
        %511 = vmatprep.subr.mxu0 0.0
        %512 = vmatpush1.msra.mxu0 0.0
        %513 = vmatprep.subr.mxu0 0.0
        %514 = vmatpush1.msra.mxu0 0.0
        %515 = vmatprep.subr.mxu0 0.0
        %516 = vmatpush1.msra.mxu0 0.0
        %517 = vmatprep.subr.mxu0 0.0
        %518 = vmatpush1.msra.mxu0 0.0
        %519 = vmatprep.subr.mxu0 0.0
        %520 = vmatpush1.msra.mxu0 0.0
        %521 = vmatprep.subr.mxu0 0.0
        %522 = vmatpush1.msra.mxu0 0.0
        %523 = vmatprep.subr.mxu0 0.0
        %524 = vmatpush1.msra.mxu0 0.0
        %525 = vmatprep.subr.mxu0 0.0
        %526 = vmatpush1.msra.mxu0 0.0
        %527 = vmatprep.mubr.f32.mxu0 0.0
        %528 = vmatmul.mubr.f32.gmra.mrb[0].mxu0 %v452
        %v529 = vpop.f32.mrb[0].mxu0
        %v530 = vadd.f32 %v378, %v529
        %v531 = vpop.f32.mrb[0].mxu0
        %v532 = vadd.f32 %v382, %v531
        %533 = vmatprep.mubr.f32.mxu0 0.0
        %534 = vmatmul.mubr.f32.gmra.mrb[0].mxu0 %v455
        %v535 = vpop.f32.mrb[0].mxu0
        %v536 = vadd.f32 %v378, %v535
        %v537 = vpop.f32.mrb[0].mxu0
        %v538 = vadd.f32 %v382, %v537
        %539 = vmatprep.mubr.f32.mxu0 0.0
        %540 = vmatmul.mubr.f32.gmra.mrb[0].mxu0 %v458
        %v541 = vpop.f32.mrb[0].mxu0
        %v542 = vadd.f32 %v378, %v541
        %v543 = vpop.f32.mrb[0].mxu0
        %v544 = vadd.f32 %v382, %v543
        %545 = vmatprep.mubr.f32.mxu0 0.0
        %546 = vmatmul.mubr.f32.gmra.mrb[0].mxu0 %v461
        %v547 = vpop.f32.mrb[0].mxu0
        %v548 = vadd.f32 %v378, %v547
        %v549 = vpop.f32.mrb[0].mxu0
        %v550 = vadd.f32 %v382, %v549
        %551 = vdwg.mxu0
        %552 = vmatprep.subr.mxu0 %v194
        %553 = vmatpush1.msra.mxu0 %v193
        %554 = vmatprep.subr.mxu0 %v209
        %555 = vmatpush1.msra.mxu0 %v208
        %556 = vmatprep.subr.mxu0 %v224
        %557 = vmatpush1.msra.mxu0 %v223
        %558 = vmatprep.subr.mxu0 %v239
        %559 = vmatpush1.msra.mxu0 %v238
        %560 = vmatprep.subr.mxu0 %v254
        %561 = vmatpush1.msra.mxu0 %v253
        %562 = vmatprep.subr.mxu0 %v269
        %563 = vmatpush1.msra.mxu0 %v268
        %564 = vmatprep.subr.mxu0 %v284
        %565 = vmatpush1.msra.mxu0 %v283
        %566 = vmatprep.subr.mxu0 %v299
        %567 = vmatpush1.msra.mxu0 %v298
        %568 = vmatprep.subr.mxu0 %v314
        %569 = vmatpush1.msra.mxu0 %v313
        %570 = vmatprep.subr.mxu0 %v329
        %571 = vmatpush1.msra.mxu0 %v328
        %572 = vmatprep.subr.mxu0 %v344
        %573 = vmatpush1.msra.mxu0 %v343
        %574 = vmatprep.subr.mxu0 %v359
        %575 = vmatpush1.msra.mxu0 %v358
        %576 = vmatprep.subr.mxu0 0.0
        %577 = vmatpush1.msra.mxu0 0.0
        %578 = vmatprep.subr.mxu0 0.0
        %579 = vmatpush1.msra.mxu0 0.0
        %580 = vmatprep.subr.mxu0 0.0
        %581 = vmatpush1.msra.mxu0 0.0
        %582 = vmatprep.subr.mxu0 0.0
        %583 = vmatpush1.msra.mxu0 0.0
        %584 = vmatprep.subr.mxu0 0.0
        %585 = vmatpush1.msra.mxu0 0.0
        %586 = vmatprep.subr.mxu0 0.0
        %587 = vmatpush1.msra.mxu0 0.0
        %588 = vmatprep.subr.mxu0 0.0
        %589 = vmatpush1.msra.mxu0 0.0
        %590 = vmatprep.subr.mxu0 0.0
        %591 = vmatpush1.msra.mxu0 0.0
        %592 = vmatprep.subr.mxu0 0.0
        %593 = vmatpush1.msra.mxu0 0.0
        %594 = vmatprep.subr.mxu0 0.0
        %595 = vmatpush1.msra.mxu0 0.0
        %596 = vmatprep.subr.mxu0 0.0
        %597 = vmatpush1.msra.mxu0 0.0
        %598 = vmatprep.subr.mxu0 0.0
        %599 = vmatpush1.msra.mxu0 0.0
        %600 = vmatprep.subr.mxu0 0.0
        %601 = vmatpush1.msra.mxu0 0.0
        %602 = vmatprep.subr.mxu0 0.0
        %603 = vmatpush1.msra.mxu0 0.0
        %604 = vmatprep.subr.mxu0 0.0
        %605 = vmatpush1.msra.mxu0 0.0
        %606 = vmatprep.subr.mxu0 0.0
        %607 = vmatpush1.msra.mxu0 0.0
        %608 = vmatprep.subr.mxu0 0.0
        %609 = vmatpush1.msra.mxu0 0.0
        %610 = vmatprep.subr.mxu0 0.0
        %611 = vmatpush1.msra.mxu0 0.0
        %612 = vmatprep.subr.mxu0 0.0
        %613 = vmatpush1.msra.mxu0 0.0
        %614 = vmatprep.subr.mxu0 0.0
        %615 = vmatpush1.msra.mxu0 0.0
        %616 = vmatprep.mubr.f32.mxu0 0.0
        %617 = vmatmul.mubr.f32.gmra.mrb[0].mxu0 %v452
        %v618 = vpop.f32.mrb[0].mxu0
        %v619 = vadd.f32 %v386, %v618
        %v620 = vpop.f32.mrb[0].mxu0
        %v621 = vadd.f32 %v390, %v620
        %622 = vmatprep.mubr.f32.mxu0 0.0
        %623 = vmatmul.mubr.f32.gmra.mrb[0].mxu0 %v455
        %v624 = vpop.f32.mrb[0].mxu0
        %v625 = vadd.f32 %v386, %v624
        %v626 = vpop.f32.mrb[0].mxu0
        %v627 = vadd.f32 %v390, %v626
        %628 = vmatprep.mubr.f32.mxu0 0.0
        %629 = vmatmul.mubr.f32.gmra.mrb[0].mxu0 %v458
        %v630 = vpop.f32.mrb[0].mxu0
        %v631 = vadd.f32 %v386, %v630
        %v632 = vpop.f32.mrb[0].mxu0
        %v633 = vadd.f32 %v390, %v632
        %634 = vmatprep.mubr.f32.mxu0 0.0
        %635 = vmatmul.mubr.f32.gmra.mrb[0].mxu0 %v461
        %v636 = vpop.f32.mrb[0].mxu0
        %v637 = vadd.f32 %v386, %v636
        %v638 = vpop.f32.mrb[0].mxu0
        %v639 = vadd.f32 %v390, %v638
        %640 = vdwg.mxu0
        %641 = vmatprep.subr.mxu0 %v196
        %642 = vmatpush1.msra.mxu0 %v195
        %643 = vmatprep.subr.mxu0 %v211
        %644 = vmatpush1.msra.mxu0 %v210
        %645 = vmatprep.subr.mxu0 %v226
        %646 = vmatpush1.msra.mxu0 %v225
        %647 = vmatprep.subr.mxu0 %v241
        %648 = vmatpush1.msra.mxu0 %v240
        %649 = vmatprep.subr.mxu0 %v256
        %650 = vmatpush1.msra.mxu0 %v255
        %651 = vmatprep.subr.mxu0 %v271
        %652 = vmatpush1.msra.mxu0 %v270
        %653 = vmatprep.subr.mxu0 %v286
        %654 = vmatpush1.msra.mxu0 %v285
        %655 = vmatprep.subr.mxu0 %v301
        %656 = vmatpush1.msra.mxu0 %v300
        %657 = vmatprep.subr.mxu0 %v316
        %658 = vmatpush1.msra.mxu0 %v315
        %659 = vmatprep.subr.mxu0 %v331
        %660 = vmatpush1.msra.mxu0 %v330
        %661 = vmatprep.subr.mxu0 %v346
        %662 = vmatpush1.msra.mxu0 %v345
        %663 = vmatprep.subr.mxu0 %v361
        %664 = vmatpush1.msra.mxu0 %v360
        %665 = vmatprep.subr.mxu0 0.0
        %666 = vmatpush1.msra.mxu0 0.0
        %667 = vmatprep.subr.mxu0 0.0
        %668 = vmatpush1.msra.mxu0 0.0
        %669 = vmatprep.subr.mxu0 0.0
        %670 = vmatpush1.msra.mxu0 0.0
        %671 = vmatprep.subr.mxu0 0.0
        %672 = vmatpush1.msra.mxu0 0.0
        %673 = vmatprep.subr.mxu0 0.0
        %674 = vmatpush1.msra.mxu0 0.0
        %675 = vmatprep.subr.mxu0 0.0
        %676 = vmatpush1.msra.mxu0 0.0
        %677 = vmatprep.subr.mxu0 0.0
        %678 = vmatpush1.msra.mxu0 0.0
        %679 = vmatprep.subr.mxu0 0.0
        %680 = vmatpush1.msra.mxu0 0.0
        %681 = vmatprep.subr.mxu0 0.0
        %682 = vmatpush1.msra.mxu0 0.0
        %683 = vmatprep.subr.mxu0 0.0
        %684 = vmatpush1.msra.mxu0 0.0
        %685 = vmatprep.subr.mxu0 0.0
        %686 = vmatpush1.msra.mxu0 0.0
        %687 = vmatprep.subr.mxu0 0.0
        %688 = vmatpush1.msra.mxu0 0.0
        %689 = vmatprep.subr.mxu0 0.0
        %690 = vmatpush1.msra.mxu0 0.0
        %691 = vmatprep.subr.mxu0 0.0
        %692 = vmatpush1.msra.mxu0 0.0
        %693 = vmatprep.subr.mxu0 0.0
        %694 = vmatpush1.msra.mxu0 0.0
        %695 = vmatprep.subr.mxu0 0.0
        %696 = vmatpush1.msra.mxu0 0.0
        %697 = vmatprep.subr.mxu0 0.0
        %698 = vmatpush1.msra.mxu0 0.0
        %699 = vmatprep.subr.mxu0 0.0
        %700 = vmatpush1.msra.mxu0 0.0
        %701 = vmatprep.subr.mxu0 0.0
        %702 = vmatpush1.msra.mxu0 0.0
        %703 = vmatprep.subr.mxu0 0.0
        %704 = vmatpush1.msra.mxu0 0.0
        %705 = vmatprep.mubr.f32.mxu0 0.0
        %706 = vmatmul.mubr.f32.gmra.mrb[0].mxu0 %v452
        %v707 = vpop.f32.mrb[0].mxu0
        %v708 = vadd.f32 %v394, %v707
        %v709 = vpop.f32.mrb[0].mxu0
        %v710 = vadd.f32 %v398, %v709
        %711 = vmatprep.mubr.f32.mxu0 0.0
        %712 = vmatmul.mubr.f32.gmra.mrb[0].mxu0 %v455
        %v713 = vpop.f32.mrb[0].mxu0
        %v714 = vadd.f32 %v394, %v713
        %v715 = vpop.f32.mrb[0].mxu0
        %v716 = vadd.f32 %v398, %v715
        %717 = vmatprep.mubr.f32.mxu0 0.0
        %718 = vmatmul.mubr.f32.gmra.mrb[0].mxu0 %v458
        %v719 = vpop.f32.mrb[0].mxu0
        %v720 = vadd.f32 %v394, %v719
        %v721 = vpop.f32.mrb[0].mxu0
        %v722 = vadd.f32 %v398, %v721
        %723 = vmatprep.mubr.f32.mxu0 0.0
        %724 = vmatmul.mubr.f32.gmra.mrb[0].mxu0 %v461
        %v725 = vpop.f32.mrb[0].mxu0
        %v726 = vadd.f32 %v394, %v725
        %v727 = vpop.f32.mrb[0].mxu0
        %v728 = vadd.f32 %v398, %v727
        %729 = vdwg.mxu0
        %730 = vmatprep.subr.mxu0 %v198
        %731 = vmatpush1.msra.mxu0 %v197
        %732 = vmatprep.subr.mxu0 %v213
        %733 = vmatpush1.msra.mxu0 %v212
        %734 = vmatprep.subr.mxu0 %v228
        %735 = vmatpush1.msra.mxu0 %v227
        %736 = vmatprep.subr.mxu0 %v243
        %737 = vmatpush1.msra.mxu0 %v242
        %738 = vmatprep.subr.mxu0 %v258
        %739 = vmatpush1.msra.mxu0 %v257
        %740 = vmatprep.subr.mxu0 %v273
        %741 = vmatpush1.msra.mxu0 %v272
        %742 = vmatprep.subr.mxu0 %v288
        %743 = vmatpush1.msra.mxu0 %v287
        %744 = vmatprep.subr.mxu0 %v303
        %745 = vmatpush1.msra.mxu0 %v302
        %746 = vmatprep.subr.mxu0 %v318
        %747 = vmatpush1.msra.mxu0 %v317
        %748 = vmatprep.subr.mxu0 %v333
        %749 = vmatpush1.msra.mxu0 %v332
        %750 = vmatprep.subr.mxu0 %v348
        %751 = vmatpush1.msra.mxu0 %v347
        %752 = vmatprep.subr.mxu0 %v363
        %753 = vmatpush1.msra.mxu0 %v362
        %754 = vmatprep.subr.mxu0 0.0
        %755 = vmatpush1.msra.mxu0 0.0
        %756 = vmatprep.subr.mxu0 0.0
        %757 = vmatpush1.msra.mxu0 0.0
        %758 = vmatprep.subr.mxu0 0.0
        %759 = vmatpush1.msra.mxu0 0.0
        %760 = vmatprep.subr.mxu0 0.0
        %761 = vmatpush1.msra.mxu0 0.0
        %762 = vmatprep.subr.mxu0 0.0
        %763 = vmatpush1.msra.mxu0 0.0
        %764 = vmatprep.subr.mxu0 0.0
        %765 = vmatpush1.msra.mxu0 0.0
        %766 = vmatprep.subr.mxu0 0.0
        %767 = vmatpush1.msra.mxu0 0.0
        %768 = vmatprep.subr.mxu0 0.0
        %769 = vmatpush1.msra.mxu0 0.0
        %770 = vmatprep.subr.mxu0 0.0
        %771 = vmatpush1.msra.mxu0 0.0
        %772 = vmatprep.subr.mxu0 0.0
        %773 = vmatpush1.msra.mxu0 0.0
        %774 = vmatprep.subr.mxu0 0.0
        %775 = vmatpush1.msra.mxu0 0.0
        %776 = vmatprep.subr.mxu0 0.0
        %777 = vmatpush1.msra.mxu0 0.0
        %778 = vmatprep.subr.mxu0 0.0
        %779 = vmatpush1.msra.mxu0 0.0
        %780 = vmatprep.subr.mxu0 0.0
        %781 = vmatpush1.msra.mxu0 0.0
        %782 = vmatprep.subr.mxu0 0.0
        %783 = vmatpush1.msra.mxu0 0.0
        %784 = vmatprep.subr.mxu0 0.0
        %785 = vmatpush1.msra.mxu0 0.0
        %786 = vmatprep.subr.mxu0 0.0
        %787 = vmatpush1.msra.mxu0 0.0
        %788 = vmatprep.subr.mxu0 0.0
        %789 = vmatpush1.msra.mxu0 0.0
        %790 = vmatprep.subr.mxu0 0.0
        %791 = vmatpush1.msra.mxu0 0.0
        %792 = vmatprep.subr.mxu0 0.0
        %793 = vmatpush1.msra.mxu0 0.0
        %794 = vmatprep.mubr.f32.mxu0 0.0
        %795 = vmatmul.mubr.f32.gmra.mrb[0].mxu0 %v452
        %v796 = vpop.f32.mrb[0].mxu0
        %v797 = vadd.f32 %v402, %v796
        %v798 = vpop.f32.mrb[0].mxu0
        %v799 = vadd.f32 %v406, %v798
        %800 = vmatprep.mubr.f32.mxu0 0.0
        %801 = vmatmul.mubr.f32.gmra.mrb[0].mxu0 %v455
        %v802 = vpop.f32.mrb[0].mxu0
        %v803 = vadd.f32 %v402, %v802
        %v804 = vpop.f32.mrb[0].mxu0
        %v805 = vadd.f32 %v406, %v804
        %806 = vmatprep.mubr.f32.mxu0 0.0
        %807 = vmatmul.mubr.f32.gmra.mrb[0].mxu0 %v458
        %v808 = vpop.f32.mrb[0].mxu0
        %v809 = vadd.f32 %v402, %v808
        %v810 = vpop.f32.mrb[0].mxu0
        %v811 = vadd.f32 %v406, %v810
        %812 = vmatprep.mubr.f32.mxu0 0.0
        %813 = vmatmul.mubr.f32.gmra.mrb[0].mxu0 %v461
        %v814 = vpop.f32.mrb[0].mxu0
        %v815 = vadd.f32 %v402, %v814
        %v816 = vpop.f32.mrb[0].mxu0
        %v817 = vadd.f32 %v406, %v816
        %818 = vdwg.mxu0
        %819 = vmatprep.subr.mxu0 %v200
        %820 = vmatpush1.msra.mxu0 %v199
        %821 = vmatprep.subr.mxu0 %v215
        %822 = vmatpush1.msra.mxu0 %v214
        %823 = vmatprep.subr.mxu0 %v230
        %824 = vmatpush1.msra.mxu0 %v229
        %825 = vmatprep.subr.mxu0 %v245
        %826 = vmatpush1.msra.mxu0 %v244
        %827 = vmatprep.subr.mxu0 %v260
        %828 = vmatpush1.msra.mxu0 %v259
        %829 = vmatprep.subr.mxu0 %v275
        %830 = vmatpush1.msra.mxu0 %v274
        %831 = vmatprep.subr.mxu0 %v290
        %832 = vmatpush1.msra.mxu0 %v289
        %833 = vmatprep.subr.mxu0 %v305
        %834 = vmatpush1.msra.mxu0 %v304
        %835 = vmatprep.subr.mxu0 %v320
        %836 = vmatpush1.msra.mxu0 %v319
        %837 = vmatprep.subr.mxu0 %v335
        %838 = vmatpush1.msra.mxu0 %v334
        %839 = vmatprep.subr.mxu0 %v350
        %840 = vmatpush1.msra.mxu0 %v349
        %841 = vmatprep.subr.mxu0 %v365
        %842 = vmatpush1.msra.mxu0 %v364
        %843 = vmatprep.subr.mxu0 0.0
        %844 = vmatpush1.msra.mxu0 0.0
        %845 = vmatprep.subr.mxu0 0.0
        %846 = vmatpush1.msra.mxu0 0.0
        %847 = vmatprep.subr.mxu0 0.0
        %848 = vmatpush1.msra.mxu0 0.0
        %849 = vmatprep.subr.mxu0 0.0
        %850 = vmatpush1.msra.mxu0 0.0
        %851 = vmatprep.subr.mxu0 0.0
        %852 = vmatpush1.msra.mxu0 0.0
        %853 = vmatprep.subr.mxu0 0.0
        %854 = vmatpush1.msra.mxu0 0.0
        %855 = vmatprep.subr.mxu0 0.0
        %856 = vmatpush1.msra.mxu0 0.0
        %857 = vmatprep.subr.mxu0 0.0
        %858 = vmatpush1.msra.mxu0 0.0
        %859 = vmatprep.subr.mxu0 0.0
        %860 = vmatpush1.msra.mxu0 0.0
        %861 = vmatprep.subr.mxu0 0.0
        %862 = vmatpush1.msra.mxu0 0.0
        %863 = vmatprep.subr.mxu0 0.0
        %864 = vmatpush1.msra.mxu0 0.0
        %865 = vmatprep.subr.mxu0 0.0
        %866 = vmatpush1.msra.mxu0 0.0
        %867 = vmatprep.subr.mxu0 0.0
        %868 = vmatpush1.msra.mxu0 0.0
        %869 = vmatprep.subr.mxu0 0.0
        %870 = vmatpush1.msra.mxu0 0.0
        %871 = vmatprep.subr.mxu0 0.0
        %872 = vmatpush1.msra.mxu0 0.0
        %873 = vmatprep.subr.mxu0 0.0
        %874 = vmatpush1.msra.mxu0 0.0
        %875 = vmatprep.subr.mxu0 0.0
        %876 = vmatpush1.msra.mxu0 0.0
        %877 = vmatprep.subr.mxu0 0.0
        %878 = vmatpush1.msra.mxu0 0.0
        %879 = vmatprep.subr.mxu0 0.0
        %880 = vmatpush1.msra.mxu0 0.0
        %881 = vmatprep.subr.mxu0 0.0
        %882 = vmatpush1.msra.mxu0 0.0
        %883 = vmatprep.mubr.f32.mxu0 0.0
        %884 = vmatmul.mubr.f32.gmra.mrb[0].mxu0 %v452
        %v885 = vpop.f32.mrb[0].mxu0
        %v886 = vadd.f32 %v410, %v885
        %v887 = vpop.f32.mrb[0].mxu0
        %v888 = vadd.f32 %v414, %v887
        %889 = vmatprep.mubr.f32.mxu0 0.0
        %890 = vmatmul.mubr.f32.gmra.mrb[0].mxu0 %v455
        %v891 = vpop.f32.mrb[0].mxu0
        %v892 = vadd.f32 %v410, %v891
        %v893 = vpop.f32.mrb[0].mxu0
        %v894 = vadd.f32 %v414, %v893
        %895 = vmatprep.mubr.f32.mxu0 0.0
        %896 = vmatmul.mubr.f32.gmra.mrb[0].mxu0 %v458
        %v897 = vpop.f32.mrb[0].mxu0
        %v898 = vadd.f32 %v410, %v897
        %v899 = vpop.f32.mrb[0].mxu0
        %v900 = vadd.f32 %v414, %v899
        %901 = vmatprep.mubr.f32.mxu0 0.0
        %902 = vmatmul.mubr.f32.gmra.mrb[0].mxu0 %v461
        %v903 = vpop.f32.mrb[0].mxu0
        %v904 = vadd.f32 %v410, %v903
        %v905 = vpop.f32.mrb[0].mxu0
        %v906 = vadd.f32 %v414, %v905
        %907 = vdwg.mxu0
        %908 = vmatprep.subr.mxu0 %v202
        %909 = vmatpush1.msra.mxu0 %v201
        %910 = vmatprep.subr.mxu0 %v217
        %911 = vmatpush1.msra.mxu0 %v216
        %912 = vmatprep.subr.mxu0 %v232
        %913 = vmatpush1.msra.mxu0 %v231
        %914 = vmatprep.subr.mxu0 %v247
        %915 = vmatpush1.msra.mxu0 %v246
        %916 = vmatprep.subr.mxu0 %v262
        %917 = vmatpush1.msra.mxu0 %v261
        %918 = vmatprep.subr.mxu0 %v277
        %919 = vmatpush1.msra.mxu0 %v276
        %920 = vmatprep.subr.mxu0 %v292
        %921 = vmatpush1.msra.mxu0 %v291
        %922 = vmatprep.subr.mxu0 %v307
        %923 = vmatpush1.msra.mxu0 %v306
        %924 = vmatprep.subr.mxu0 %v322
        %925 = vmatpush1.msra.mxu0 %v321
        %926 = vmatprep.subr.mxu0 %v337
        %927 = vmatpush1.msra.mxu0 %v336
        %928 = vmatprep.subr.mxu0 %v352
        %929 = vmatpush1.msra.mxu0 %v351
        %930 = vmatprep.subr.mxu0 %v367
        %931 = vmatpush1.msra.mxu0 %v366
        %932 = vmatprep.subr.mxu0 0.0
        %933 = vmatpush1.msra.mxu0 0.0
        %934 = vmatprep.subr.mxu0 0.0
        %935 = vmatpush1.msra.mxu0 0.0
        %936 = vmatprep.subr.mxu0 0.0
        %937 = vmatpush1.msra.mxu0 0.0
        %938 = vmatprep.subr.mxu0 0.0
        %939 = vmatpush1.msra.mxu0 0.0
        %940 = vmatprep.subr.mxu0 0.0
        %941 = vmatpush1.msra.mxu0 0.0
        %942 = vmatprep.subr.mxu0 0.0
        %943 = vmatpush1.msra.mxu0 0.0
        %944 = vmatprep.subr.mxu0 0.0
        %945 = vmatpush1.msra.mxu0 0.0
        %946 = vmatprep.subr.mxu0 0.0
        %947 = vmatpush1.msra.mxu0 0.0
        %948 = vmatprep.subr.mxu0 0.0
        %949 = vmatpush1.msra.mxu0 0.0
        %950 = vmatprep.subr.mxu0 0.0
        %951 = vmatpush1.msra.mxu0 0.0
        %952 = vmatprep.subr.mxu0 0.0
        %953 = vmatpush1.msra.mxu0 0.0
        %954 = vmatprep.subr.mxu0 0.0
        %955 = vmatpush1.msra.mxu0 0.0
        %956 = vmatprep.subr.mxu0 0.0
        %957 = vmatpush1.msra.mxu0 0.0
        %958 = vmatprep.subr.mxu0 0.0
        %959 = vmatpush1.msra.mxu0 0.0
        %960 = vmatprep.subr.mxu0 0.0
        %961 = vmatpush1.msra.mxu0 0.0
        %962 = vmatprep.subr.mxu0 0.0
        %963 = vmatpush1.msra.mxu0 0.0
        %964 = vmatprep.subr.mxu0 0.0
        %965 = vmatpush1.msra.mxu0 0.0
        %966 = vmatprep.subr.mxu0 0.0
        %967 = vmatpush1.msra.mxu0 0.0
        %968 = vmatprep.subr.mxu0 0.0
        %969 = vmatpush1.msra.mxu0 0.0
        %970 = vmatprep.subr.mxu0 0.0
        %971 = vmatpush1.msra.mxu0 0.0
        %972 = vmatprep.mubr.f32.mxu0 0.0
        %973 = vmatmul.mubr.f32.gmra.mrb[0].mxu0 %v452
        %v974 = vpop.f32.mrb[0].mxu0
        %v975 = vadd.f32 %v418, %v974
        %v976 = vpop.f32.mrb[0].mxu0
        %v977 = vadd.f32 %v422, %v976
        %978 = vmatprep.mubr.f32.mxu0 0.0
        %979 = vmatmul.mubr.f32.gmra.mrb[0].mxu0 %v455
        %v980 = vpop.f32.mrb[0].mxu0
        %v981 = vadd.f32 %v418, %v980
        %v982 = vpop.f32.mrb[0].mxu0
        %v983 = vadd.f32 %v422, %v982
        %984 = vmatprep.mubr.f32.mxu0 0.0
        %985 = vmatmul.mubr.f32.gmra.mrb[0].mxu0 %v458
        %v986 = vpop.f32.mrb[0].mxu0
        %v987 = vadd.f32 %v418, %v986
        %v988 = vpop.f32.mrb[0].mxu0
        %v989 = vadd.f32 %v422, %v988
        %990 = vmatprep.mubr.f32.mxu0 0.0
        %991 = vmatmul.mubr.f32.gmra.mrb[0].mxu0 %v461
        %v992 = vpop.f32.mrb[0].mxu0
        %v993 = vadd.f32 %v418, %v992
        %v994 = vpop.f32.mrb[0].mxu0
        %v995 = vadd.f32 %v422, %v994
        %996 = vdwg.mxu0
        %997 = vmatprep.subr.mxu0 %v204
        %998 = vmatpush1.msra.mxu0 %v203
        %999 = vmatprep.subr.mxu0 %v219
        %1000 = vmatpush1.msra.mxu0 %v218
        %1001 = vmatprep.subr.mxu0 %v234
        %1002 = vmatpush1.msra.mxu0 %v233
        %1003 = vmatprep.subr.mxu0 %v249
        %1004 = vmatpush1.msra.mxu0 %v248
        %1005 = vmatprep.subr.mxu0 %v264
        %1006 = vmatpush1.msra.mxu0 %v263
        %1007 = vmatprep.subr.mxu0 %v279
        %1008 = vmatpush1.msra.mxu0 %v278
        %1009 = vmatprep.subr.mxu0 %v294
        %1010 = vmatpush1.msra.mxu0 %v293
        %1011 = vmatprep.subr.mxu0 %v309
        %1012 = vmatpush1.msra.mxu0 %v308
        %1013 = vmatprep.subr.mxu0 %v324
        %1014 = vmatpush1.msra.mxu0 %v323
        %1015 = vmatprep.subr.mxu0 %v339
        %1016 = vmatpush1.msra.mxu0 %v338
        %1017 = vmatprep.subr.mxu0 %v354
        %1018 = vmatpush1.msra.mxu0 %v353
        %1019 = vmatprep.subr.mxu0 %v369
        %1020 = vmatpush1.msra.mxu0 %v368
        %1021 = vmatprep.subr.mxu0 0.0
        %1022 = vmatpush1.msra.mxu0 0.0
        %1023 = vmatprep.subr.mxu0 0.0
        %1024 = vmatpush1.msra.mxu0 0.0
        %1025 = vmatprep.subr.mxu0 0.0
        %1026 = vmatpush1.msra.mxu0 0.0
        %1027 = vmatprep.subr.mxu0 0.0
        %1028 = vmatpush1.msra.mxu0 0.0
        %1029 = vmatprep.subr.mxu0 0.0
        %1030 = vmatpush1.msra.mxu0 0.0
        %1031 = vmatprep.subr.mxu0 0.0
        %1032 = vmatpush1.msra.mxu0 0.0
        %1033 = vmatprep.subr.mxu0 0.0
        %1034 = vmatpush1.msra.mxu0 0.0
        %1035 = vmatprep.subr.mxu0 0.0
        %1036 = vmatpush1.msra.mxu0 0.0
        %1037 = vmatprep.subr.mxu0 0.0
        %1038 = vmatpush1.msra.mxu0 0.0
        %1039 = vmatprep.subr.mxu0 0.0
        %1040 = vmatpush1.msra.mxu0 0.0
        %1041 = vmatprep.subr.mxu0 0.0
        %1042 = vmatpush1.msra.mxu0 0.0
        %1043 = vmatprep.subr.mxu0 0.0
        %1044 = vmatpush1.msra.mxu0 0.0
        %1045 = vmatprep.subr.mxu0 0.0
        %1046 = vmatpush1.msra.mxu0 0.0
        %1047 = vmatprep.subr.mxu0 0.0
        %1048 = vmatpush1.msra.mxu0 0.0
        %1049 = vmatprep.subr.mxu0 0.0
        %1050 = vmatpush1.msra.mxu0 0.0
        %1051 = vmatprep.subr.mxu0 0.0
        %1052 = vmatpush1.msra.mxu0 0.0
        %1053 = vmatprep.subr.mxu0 0.0
        %1054 = vmatpush1.msra.mxu0 0.0
        %1055 = vmatprep.subr.mxu0 0.0
        %1056 = vmatpush1.msra.mxu0 0.0
        %1057 = vmatprep.subr.mxu0 0.0
        %1058 = vmatpush1.msra.mxu0 0.0
        %1059 = vmatprep.subr.mxu0 0.0
        %1060 = vmatpush1.msra.mxu0 0.0
        %1061 = vmatprep.mubr.f32.mxu0 0.0
        %1062 = vmatmul.mubr.f32.gmra.mrb[0].mxu0 %v452
        %v1063 = vpop.f32.mrb[0].mxu0
        %v1064 = vadd.f32 %v426, %v1063
        %v1065 = vpop.f32.mrb[0].mxu0
        %v1066 = vadd.f32 %v430, %v1065
        %1067 = vmatprep.mubr.f32.mxu0 0.0
        %1068 = vmatmul.mubr.f32.gmra.mrb[0].mxu0 %v455
        %v1069 = vpop.f32.mrb[0].mxu0
        %v1070 = vadd.f32 %v426, %v1069
        %v1071 = vpop.f32.mrb[0].mxu0
        %v1072 = vadd.f32 %v430, %v1071
        %1073 = vmatprep.mubr.f32.mxu0 0.0
        %1074 = vmatmul.mubr.f32.gmra.mrb[0].mxu0 %v458
        %v1075 = vpop.f32.mrb[0].mxu0
        %v1076 = vadd.f32 %v426, %v1075
        %v1077 = vpop.f32.mrb[0].mxu0
        %v1078 = vadd.f32 %v430, %v1077
        %1079 = vmatprep.mubr.f32.mxu0 0.0
        %1080 = vmatmul.mubr.f32.gmra.mrb[0].mxu0 %v461
        %v1081 = vpop.f32.mrb[0].mxu0
        %v1082 = vadd.f32 %v426, %v1081
        %v1083 = vpop.f32.mrb[0].mxu0
        %v1084 = vadd.f32 %v430, %v1083
        %1085 = vdwg.mxu0
        %1086 = vmatprep.subr.mxu0 0.0
        %1087 = vmatpush1.msra.mxu0 %v205
        %1088 = vmatprep.subr.mxu0 0.0
        %1089 = vmatpush1.msra.mxu0 %v220
        %1090 = vmatprep.subr.mxu0 0.0
        %1091 = vmatpush1.msra.mxu0 %v235
        %1092 = vmatprep.subr.mxu0 0.0
        %1093 = vmatpush1.msra.mxu0 %v250
        %1094 = vmatprep.subr.mxu0 0.0
        %1095 = vmatpush1.msra.mxu0 %v265
        %1096 = vmatprep.subr.mxu0 0.0
        %1097 = vmatpush1.msra.mxu0 %v280
        %1098 = vmatprep.subr.mxu0 0.0
        %1099 = vmatpush1.msra.mxu0 %v295
        %1100 = vmatprep.subr.mxu0 0.0
        %1101 = vmatpush1.msra.mxu0 %v310
        %1102 = vmatprep.subr.mxu0 0.0
        %1103 = vmatpush1.msra.mxu0 %v325
        %1104 = vmatprep.subr.mxu0 0.0
        %1105 = vmatpush1.msra.mxu0 %v340
        %1106 = vmatprep.subr.mxu0 0.0
        %1107 = vmatpush1.msra.mxu0 %v355
        %1108 = vmatprep.subr.mxu0 0.0
        %1109 = vmatpush1.msra.mxu0 %v370
        %1110 = vmatprep.subr.mxu0 0.0
        %1111 = vmatpush1.msra.mxu0 0.0
        %1112 = vmatprep.subr.mxu0 0.0
        %1113 = vmatpush1.msra.mxu0 0.0
        %1114 = vmatprep.subr.mxu0 0.0
        %1115 = vmatpush1.msra.mxu0 0.0
        %1116 = vmatprep.subr.mxu0 0.0
        %1117 = vmatpush1.msra.mxu0 0.0
        %1118 = vmatprep.subr.mxu0 0.0
        %1119 = vmatpush1.msra.mxu0 0.0
        %1120 = vmatprep.subr.mxu0 0.0
        %1121 = vmatpush1.msra.mxu0 0.0
        %1122 = vmatprep.subr.mxu0 0.0
        %1123 = vmatpush1.msra.mxu0 0.0
        %1124 = vmatprep.subr.mxu0 0.0
        %1125 = vmatpush1.msra.mxu0 0.0
        %1126 = vmatprep.subr.mxu0 0.0
        %1127 = vmatpush1.msra.mxu0 0.0
        %1128 = vmatprep.subr.mxu0 0.0
        %1129 = vmatpush1.msra.mxu0 0.0
        %1130 = vmatprep.subr.mxu0 0.0
        %1131 = vmatpush1.msra.mxu0 0.0
        %1132 = vmatprep.subr.mxu0 0.0
        %1133 = vmatpush1.msra.mxu0 0.0
        %1134 = vmatprep.subr.mxu0 0.0
        %1135 = vmatpush1.msra.mxu0 0.0
        %1136 = vmatprep.subr.mxu0 0.0
        %1137 = vmatpush1.msra.mxu0 0.0
        %1138 = vmatprep.subr.mxu0 0.0
        %1139 = vmatpush1.msra.mxu0 0.0
        %1140 = vmatprep.subr.mxu0 0.0
        %1141 = vmatpush1.msra.mxu0 0.0
        %1142 = vmatprep.subr.mxu0 0.0
        %1143 = vmatpush1.msra.mxu0 0.0
        %1144 = vmatprep.subr.mxu0 0.0
        %1145 = vmatpush1.msra.mxu0 0.0
        %1146 = vmatprep.subr.mxu0 0.0
        %1147 = vmatpush1.msra.mxu0 0.0
        %1148 = vmatprep.subr.mxu0 0.0
        %1149 = vmatpush1.msra.mxu0 0.0
        %1150 = vmatprep.mubr.f32.mxu0 0.0
        %1151 = vmatmul.mubr.f32.gmra.mrb[0].mxu0 %v452
        %v1152 = vpop.f32.mrb[0].mxu0
        %v1153 = vadd.f32 %v434, %v1152
        %v1154 = vpop.f32.mrb[0].mxu0
        %1155 = vmatprep.mubr.f32.mxu0 0.0
        %1156 = vmatmul.mubr.f32.gmra.mrb[0].mxu0 %v455
        %v1157 = vpop.f32.mrb[0].mxu0
        %v1158 = vadd.f32 %v434, %v1157
        %v1159 = vpop.f32.mrb[0].mxu0
        %1160 = vmatprep.mubr.f32.mxu0 0.0
        %1161 = vmatmul.mubr.f32.gmra.mrb[0].mxu0 %v458
        %v1162 = vpop.f32.mrb[0].mxu0
        %v1163 = vadd.f32 %v434, %v1162
        %v1164 = vpop.f32.mrb[0].mxu0
        %1165 = vmatprep.mubr.f32.mxu0 0.0
        %1166 = vmatmul.mubr.f32.gmra.mrb[0].mxu0 %v461
        %v1167 = vpop.f32.mrb[0].mxu0
        %v1168 = vadd.f32 %v434, %v1167
        %v1169 = vpop.f32.mrb[0].mxu0
        %1170 = vdwg.mxu0
        %v1171 = vand.u32 2147483647, %v530
        %vm1172 = vcmp.le.f32.partialorder %v1171, 0.7853982
        %vm1173 = vcmp.lt.s32.totalorder %v530, 0
        %v1174 = vand.u32 %v530, 2139095040
        %v1175 = vshrl.u32 %v1174, 23
        %v1176 = vsub.s32 %v1175, 127
        %v1177 = vand.u32 2147483647, %v530
        %v1178 = vand.u32 %v1177, 8388607
        %v1179 = vor.u32 %v1178, 8388608
        %v1180 = vsub.s32 0, %v1179
        %v1181 = vadd.s32 %v1176, 1
        %vm1182 = vcmp.gt.s32.totalorder %v1181, 0
        %v1183 = vsel %vm1182, %v1181, 0
        %v1184 = vshrl.u32 %v1183, 5
        %v1185 = vand.u32 %v1183, 31
        %v1186 = vsub.s32 32, %v1185
        %v1187 = vshrl.u32 683565275, %v1186
        %v1188 = vshll.u32 683565275, %v1185
        %v1189 = vshrl.u32 2475754826, %v1186
        %v1190 = vor.u32 %v1188, %v1189
        %v1191 = vshll.u32 2475754826, %v1185
        %v1192 = vshrl.u32 2131351028, %v1186
        %v1193 = vor.u32 %v1191, %v1192
        %v1194 = vshll.u32 2131351028, %v1185
        %v1195 = vshrl.u32 2102212464, %v1186
        %v1196 = vor.u32 %v1194, %v1195
        %v1197 = vshll.u32 2102212464, %v1185
        %v1198 = vshrl.u32 920167782, %v1186
        %v1199 = vor.u32 %v1197, %v1198
        %v1200 = vshll.u32 920167782, %v1185
        %v1201 = vshrl.u32 1326507024, %v1186
        %v1202 = vor.u32 %v1200, %v1201
        %vm1203 = vcmp.lt.s32.totalorder %v1184, 1
        %vm1204 = vcmp.lt.s32.totalorder %v1184, 2
        %vm1205 = vcmp.lt.s32.totalorder %v1184, 3
        %vm1206 = vcmp.lt.s32.totalorder %v1184, 4
        %v1207 = vsel %vm1203, %v1187, %v1190
        %v1208 = vsel %vm1206, %v1196, 2102212464
        %v1209 = vsel %vm1205, %v1193, %v1208
        %v1210 = vsel %vm1204, %v1207, %v1209
        %v1211 = vsel %vm1203, %v1190, %v1193
        %v1212 = vsel %vm1206, %v1199, 920167782
        %v1213 = vsel %vm1205, %v1196, %v1212
        %v1214 = vsel %vm1204, %v1211, %v1213
        %v1215 = vsel %vm1203, %v1193, %v1196
        %v1216 = vsel %vm1206, %v1202, 1326507024
        %v1217 = vsel %vm1205, %v1199, %v1216
        %v1218 = vsel %vm1204, %v1215, %v1217
        %v1219 = vshll.u32 %v1179, 8
        %v1220 = vmul.u32.u64.compose %v1219, %v1218
        %v1221 = vextract.low.u32 %v1220
        %v1222 = vextract.high.u32 %v1220
        %v1223 = vmul.u32.u64.compose %v1219, %v1214
        %v1224 = vextract.low.u32 %v1223
        %v1225 = vextract.high.u32 %v1223
        %v1226 = vmul.u32 %v1219, %v1210
        %v1227 = vadd.s32 %v1222, %v1224
        %vm1228 = vc.u32 %v1222, %v1224
        %v1229 = vadd.s32 %v1225, 1
        %v1230 = vsel %vm1228, %v1229, %v1225
        %v1231 = vadd.s32 %v1226, %v1230
        %v1232 = vadd.s32 %v1231, 536870912
        %v1233 = vshrl.u32 %v1232, 30
        %v1234 = vshll.u32 %v1233, 30
        %v1235 = vsub.s32 %v1231, %v1234
        %vm1236 = vcmp.lt.s32.totalorder %v1235, 0
        %v1237 = vsub.s32 0, %v1235
        %v1238 = vsel %vm1236, %v1237, %v1235
        %v1239 = vclz %v1238
        %v1240 = vsub.s32 %v1239, 2
        %vm1241 = vcmp.gt.s32.totalorder 0, %v1240
        %v1242 = vsel %vm1241, 0, %v1240
        %v1243 = vsub.s32 32, %v1242
        %v1244 = vshll.u32 %v1235, %v1242
        %v1245 = vshrl.u32 %v1227, %v1243
        %v1246 = vor.u32 %v1244, %v1245
        %v1247 = vsub.s32 4294967266, %v1242
        %v1248 = vadd.s32 %v1247, 127
        %v1249 = vshll.u32 %v1248, 23
        %v1250 = vor.u32 4788187, %v1249
        %v1251 = vand.u32 2147483647, %v1250
        %v1253 = vcvt.s32.f32 %v1246
        %v1254 = vmul.f32 %v1253, %v1251
        %v1255 = vxor.u32 %v1254, 2147483648
        %v1256 = vsel %vm1173, %v1255, %v1254
        %v1257 = vsub.s32 4, %v1233
        %v1258 = vsel %vm1173, %v1257, %v1233
        %v1259 = vsel %vm1172, %v530, %v1256
        %v1260 = vsel %vm1172, 0, %v1258
        %v1261 = vcosq.f32.pop %v1259
        %v1262 = vsinq.f32.pop %v1259
        %vm1263 = vweird.f32 %v530
        %v1264 = vadd.s32 %v1260, 3
        %v1265 = vand.u32 %v1264, 3
        %vm1266 = vcmp.lt.s32.totalorder %v1265, 2
        %vm1267 = vcmp.eq.s32.totalorder %v1265, 0
        %v1268 = vxor.u32 %v1262, 2147483648
        %v1269 = vsel %vm1267, %v1261, %v1268
        %vm1270 = vcmp.eq.s32.totalorder %v1265, 2
        %v1271 = vxor.u32 %v1261, 2147483648
        %v1272 = vsel %vm1270, %v1271, %v1262
        %v1273 = vsel %vm1266, %v1269, %v1272
        %v1274 = vsel %vm1263, nan, %v1273
        %v1275 = vand.u32 2147483647, %v532
        %vm1276 = vcmp.le.f32.partialorder %v1275, 0.7853982
        %vm1277 = vcmp.lt.s32.totalorder %v532, 0
        %v1278 = vand.u32 %v532, 2139095040
        %v1279 = vshrl.u32 %v1278, 23
        %v1280 = vsub.s32 %v1279, 127
        %v1281 = vand.u32 2147483647, %v532
        %v1282 = vand.u32 %v1281, 8388607
        %v1283 = vor.u32 %v1282, 8388608
        %v1284 = vsub.s32 0, %v1283
        %v1285 = vadd.s32 %v1280, 1
        %vm1286 = vcmp.gt.s32.totalorder %v1285, 0
        %v1287 = vsel %vm1286, %v1285, 0
        %v1288 = vshrl.u32 %v1287, 5
        %v1289 = vand.u32 %v1287, 31
        %v1290 = vsub.s32 32, %v1289
        %v1291 = vshrl.u32 683565275, %v1290
        %v1292 = vshll.u32 683565275, %v1289
        %v1293 = vshrl.u32 2475754826, %v1290
        %v1294 = vor.u32 %v1292, %v1293
        %v1295 = vshll.u32 2475754826, %v1289
        %v1296 = vshrl.u32 2131351028, %v1290
        %v1297 = vor.u32 %v1295, %v1296
        %v1298 = vshll.u32 2131351028, %v1289
        %v1299 = vshrl.u32 2102212464, %v1290
        %v1300 = vor.u32 %v1298, %v1299
        %v1301 = vshll.u32 2102212464, %v1289
        %v1302 = vshrl.u32 920167782, %v1290
        %v1303 = vor.u32 %v1301, %v1302
        %v1304 = vshll.u32 920167782, %v1289
        %v1305 = vshrl.u32 1326507024, %v1290
        %v1306 = vor.u32 %v1304, %v1305
        %vm1307 = vcmp.lt.s32.totalorder %v1288, 1
        %vm1308 = vcmp.lt.s32.totalorder %v1288, 2
        %vm1309 = vcmp.lt.s32.totalorder %v1288, 3
        %vm1310 = vcmp.lt.s32.totalorder %v1288, 4
        %v1311 = vsel %vm1307, %v1291, %v1294
        %v1312 = vsel %vm1310, %v1300, 2102212464
        %v1313 = vsel %vm1309, %v1297, %v1312
        %v1314 = vsel %vm1308, %v1311, %v1313
        %v1315 = vsel %vm1307, %v1294, %v1297
        %v1316 = vsel %vm1310, %v1303, 920167782
        %v1317 = vsel %vm1309, %v1300, %v1316
        %v1318 = vsel %vm1308, %v1315, %v1317
        %v1319 = vsel %vm1307, %v1297, %v1300
        %v1320 = vsel %vm1310, %v1306, 1326507024
        %v1321 = vsel %vm1309, %v1303, %v1320
        %v1322 = vsel %vm1308, %v1319, %v1321
        %v1323 = vshll.u32 %v1283, 8
        %v1324 = vmul.u32.u64.compose %v1323, %v1322
        %v1325 = vextract.low.u32 %v1324
        %v1326 = vextract.high.u32 %v1324
        %v1327 = vmul.u32.u64.compose %v1323, %v1318
        %v1328 = vextract.low.u32 %v1327
        %v1329 = vextract.high.u32 %v1327
        %v1330 = vmul.u32 %v1323, %v1314
        %v1331 = vadd.s32 %v1326, %v1328
        %vm1332 = vc.u32 %v1326, %v1328
        %v1333 = vadd.s32 %v1329, 1
        %v1334 = vsel %vm1332, %v1333, %v1329
        %v1335 = vadd.s32 %v1330, %v1334
        %v1336 = vadd.s32 %v1335, 536870912
        %v1337 = vshrl.u32 %v1336, 30
        %v1338 = vshll.u32 %v1337, 30
        %v1339 = vsub.s32 %v1335, %v1338
        %vm1340 = vcmp.lt.s32.totalorder %v1339, 0
        %v1341 = vsub.s32 0, %v1339
        %v1342 = vsel %vm1340, %v1341, %v1339
        %v1343 = vclz %v1342
        %v1344 = vsub.s32 %v1343, 2
        %vm1345 = vcmp.gt.s32.totalorder 0, %v1344
        %v1346 = vsel %vm1345, 0, %v1344
        %v1347 = vsub.s32 32, %v1346
        %v1348 = vshll.u32 %v1339, %v1346
        %v1349 = vshrl.u32 %v1331, %v1347
        %v1350 = vor.u32 %v1348, %v1349
        %v1351 = vsub.s32 4294967266, %v1346
        %v1352 = vadd.s32 %v1351, 127
        %v1353 = vshll.u32 %v1352, 23
        %v1354 = vor.u32 4788187, %v1353
        %v1355 = vand.u32 2147483647, %v1354
        %v1357 = vcvt.s32.f32 %v1350
        %v1358 = vmul.f32 %v1357, %v1355
        %v1359 = vxor.u32 %v1358, 2147483648
        %v1360 = vsel %vm1277, %v1359, %v1358
        %v1361 = vsub.s32 4, %v1337
        %v1362 = vsel %vm1277, %v1361, %v1337
        %v1363 = vsel %vm1276, %v532, %v1360
        %v1364 = vsel %vm1276, 0, %v1362
        %v1365 = vcosq.f32.pop %v1363
        %v1366 = vsinq.f32.pop %v1363
        %vm1367 = vweird.f32 %v532
        %v1368 = vadd.s32 %v1364, 3
        %v1369 = vand.u32 %v1368, 3
        %vm1370 = vcmp.lt.s32.totalorder %v1369, 2
        %vm1371 = vcmp.eq.s32.totalorder %v1369, 0
        %v1372 = vxor.u32 %v1366, 2147483648
        %v1373 = vsel %vm1371, %v1365, %v1372
        %vm1374 = vcmp.eq.s32.totalorder %v1369, 2
        %v1375 = vxor.u32 %v1365, 2147483648
        %v1376 = vsel %vm1374, %v1375, %v1366
        %v1377 = vsel %vm1370, %v1373, %v1376
        %v1378 = vsel %vm1367, nan, %v1377
        %v1379 = vand.u32 2147483647, %v619
        %vm1380 = vcmp.le.f32.partialorder %v1379, 0.7853982
        %vm1381 = vcmp.lt.s32.totalorder %v619, 0
        %v1382 = vand.u32 %v619, 2139095040
        %v1383 = vshrl.u32 %v1382, 23
        %v1384 = vsub.s32 %v1383, 127
        %v1385 = vand.u32 2147483647, %v619
        %v1386 = vand.u32 %v1385, 8388607
        %v1387 = vor.u32 %v1386, 8388608
        %v1388 = vsub.s32 0, %v1387
        %v1389 = vadd.s32 %v1384, 1
        %vm1390 = vcmp.gt.s32.totalorder %v1389, 0
        %v1391 = vsel %vm1390, %v1389, 0
        %v1392 = vshrl.u32 %v1391, 5
        %v1393 = vand.u32 %v1391, 31
        %v1394 = vsub.s32 32, %v1393
        %v1395 = vshrl.u32 683565275, %v1394
        %v1396 = vshll.u32 683565275, %v1393
        %v1397 = vshrl.u32 2475754826, %v1394
        %v1398 = vor.u32 %v1396, %v1397
        %v1399 = vshll.u32 2475754826, %v1393
        %v1400 = vshrl.u32 2131351028, %v1394
        %v1401 = vor.u32 %v1399, %v1400
        %v1402 = vshll.u32 2131351028, %v1393
        %v1403 = vshrl.u32 2102212464, %v1394
        %v1404 = vor.u32 %v1402, %v1403
        %v1405 = vshll.u32 2102212464, %v1393
        %v1406 = vshrl.u32 920167782, %v1394
        %v1407 = vor.u32 %v1405, %v1406
        %v1408 = vshll.u32 920167782, %v1393
        %v1409 = vshrl.u32 1326507024, %v1394
        %v1410 = vor.u32 %v1408, %v1409
        %vm1411 = vcmp.lt.s32.totalorder %v1392, 1
        %vm1412 = vcmp.lt.s32.totalorder %v1392, 2
        %vm1413 = vcmp.lt.s32.totalorder %v1392, 3
        %vm1414 = vcmp.lt.s32.totalorder %v1392, 4
        %v1415 = vsel %vm1411, %v1395, %v1398
        %v1416 = vsel %vm1414, %v1404, 2102212464
        %v1417 = vsel %vm1413, %v1401, %v1416
        %v1418 = vsel %vm1412, %v1415, %v1417
        %v1419 = vsel %vm1411, %v1398, %v1401
        %v1420 = vsel %vm1414, %v1407, 920167782
        %v1421 = vsel %vm1413, %v1404, %v1420
        %v1422 = vsel %vm1412, %v1419, %v1421
        %v1423 = vsel %vm1411, %v1401, %v1404
        %v1424 = vsel %vm1414, %v1410, 1326507024
        %v1425 = vsel %vm1413, %v1407, %v1424
        %v1426 = vsel %vm1412, %v1423, %v1425
        %v1427 = vshll.u32 %v1387, 8
        %v1428 = vmul.u32.u64.compose %v1427, %v1426
        %v1429 = vextract.low.u32 %v1428
        %v1430 = vextract.high.u32 %v1428
        %v1431 = vmul.u32.u64.compose %v1427, %v1422
        %v1432 = vextract.low.u32 %v1431
        %v1433 = vextract.high.u32 %v1431
        %v1434 = vmul.u32 %v1427, %v1418
        %v1435 = vadd.s32 %v1430, %v1432
        %vm1436 = vc.u32 %v1430, %v1432
        %v1437 = vadd.s32 %v1433, 1
        %v1438 = vsel %vm1436, %v1437, %v1433
        %v1439 = vadd.s32 %v1434, %v1438
        %v1440 = vadd.s32 %v1439, 536870912
        %v1441 = vshrl.u32 %v1440, 30
        %v1442 = vshll.u32 %v1441, 30
        %v1443 = vsub.s32 %v1439, %v1442
        %vm1444 = vcmp.lt.s32.totalorder %v1443, 0
        %v1445 = vsub.s32 0, %v1443
        %v1446 = vsel %vm1444, %v1445, %v1443
        %v1447 = vclz %v1446
        %v1448 = vsub.s32 %v1447, 2
        %vm1449 = vcmp.gt.s32.totalorder 0, %v1448
        %v1450 = vsel %vm1449, 0, %v1448
        %v1451 = vsub.s32 32, %v1450
        %v1452 = vshll.u32 %v1443, %v1450
        %v1453 = vshrl.u32 %v1435, %v1451
        %v1454 = vor.u32 %v1452, %v1453
        %v1455 = vsub.s32 4294967266, %v1450
        %v1456 = vadd.s32 %v1455, 127
        %v1457 = vshll.u32 %v1456, 23
        %v1458 = vor.u32 4788187, %v1457
        %v1459 = vand.u32 2147483647, %v1458
        %v1461 = vcvt.s32.f32 %v1454
        %v1462 = vmul.f32 %v1461, %v1459
        %v1463 = vxor.u32 %v1462, 2147483648
        %v1464 = vsel %vm1381, %v1463, %v1462
        %v1465 = vsub.s32 4, %v1441
        %v1466 = vsel %vm1381, %v1465, %v1441
        %v1467 = vsel %vm1380, %v619, %v1464
        %v1468 = vsel %vm1380, 0, %v1466
        %v1469 = vcosq.f32.pop %v1467
        %v1470 = vsinq.f32.pop %v1467
        %vm1471 = vweird.f32 %v619
        %v1472 = vadd.s32 %v1468, 3
        %v1473 = vand.u32 %v1472, 3
        %vm1474 = vcmp.lt.s32.totalorder %v1473, 2
        %vm1475 = vcmp.eq.s32.totalorder %v1473, 0
        %v1476 = vxor.u32 %v1470, 2147483648
        %v1477 = vsel %vm1475, %v1469, %v1476
        %vm1478 = vcmp.eq.s32.totalorder %v1473, 2
        %v1479 = vxor.u32 %v1469, 2147483648
        %v1480 = vsel %vm1478, %v1479, %v1470
        %v1481 = vsel %vm1474, %v1477, %v1480
        %v1482 = vsel %vm1471, nan, %v1481
        %v1483 = vand.u32 2147483647, %v621
        %vm1484 = vcmp.le.f32.partialorder %v1483, 0.7853982
        %vm1485 = vcmp.lt.s32.totalorder %v621, 0
        %v1486 = vand.u32 %v621, 2139095040
        %v1487 = vshrl.u32 %v1486, 23
        %v1488 = vsub.s32 %v1487, 127
        %v1489 = vand.u32 2147483647, %v621
        %v1490 = vand.u32 %v1489, 8388607
        %v1491 = vor.u32 %v1490, 8388608
        %v1492 = vsub.s32 0, %v1491
        %v1493 = vadd.s32 %v1488, 1
        %vm1494 = vcmp.gt.s32.totalorder %v1493, 0
        %v1495 = vsel %vm1494, %v1493, 0
        %v1496 = vshrl.u32 %v1495, 5
        %v1497 = vand.u32 %v1495, 31
        %v1498 = vsub.s32 32, %v1497
        %v1499 = vshrl.u32 683565275, %v1498
        %v1500 = vshll.u32 683565275, %v1497
        %v1501 = vshrl.u32 2475754826, %v1498
        %v1502 = vor.u32 %v1500, %v1501
        %v1503 = vshll.u32 2475754826, %v1497
        %v1504 = vshrl.u32 2131351028, %v1498
        %v1505 = vor.u32 %v1503, %v1504
        %v1506 = vshll.u32 2131351028, %v1497
        %v1507 = vshrl.u32 2102212464, %v1498
        %v1508 = vor.u32 %v1506, %v1507
        %v1509 = vshll.u32 2102212464, %v1497
        %v1510 = vshrl.u32 920167782, %v1498
        %v1511 = vor.u32 %v1509, %v1510
        %v1512 = vshll.u32 920167782, %v1497
        %v1513 = vshrl.u32 1326507024, %v1498
        %v1514 = vor.u32 %v1512, %v1513
        %vm1515 = vcmp.lt.s32.totalorder %v1496, 1
        %vm1516 = vcmp.lt.s32.totalorder %v1496, 2
        %vm1517 = vcmp.lt.s32.totalorder %v1496, 3
        %vm1518 = vcmp.lt.s32.totalorder %v1496, 4
        %v1519 = vsel %vm1515, %v1499, %v1502
        %v1520 = vsel %vm1518, %v1508, 2102212464
        %v1521 = vsel %vm1517, %v1505, %v1520
        %v1522 = vsel %vm1516, %v1519, %v1521
        %v1523 = vsel %vm1515, %v1502, %v1505
        %v1524 = vsel %vm1518, %v1511, 920167782
        %v1525 = vsel %vm1517, %v1508, %v1524
        %v1526 = vsel %vm1516, %v1523, %v1525
        %v1527 = vsel %vm1515, %v1505, %v1508
        %v1528 = vsel %vm1518, %v1514, 1326507024
        %v1529 = vsel %vm1517, %v1511, %v1528
        %v1530 = vsel %vm1516, %v1527, %v1529
        %v1531 = vshll.u32 %v1491, 8
        %v1532 = vmul.u32.u64.compose %v1531, %v1530
        %v1533 = vextract.low.u32 %v1532
        %v1534 = vextract.high.u32 %v1532
        %v1535 = vmul.u32.u64.compose %v1531, %v1526
        %v1536 = vextract.low.u32 %v1535
        %v1537 = vextract.high.u32 %v1535
        %v1538 = vmul.u32 %v1531, %v1522
        %v1539 = vadd.s32 %v1534, %v1536
        %vm1540 = vc.u32 %v1534, %v1536
        %v1541 = vadd.s32 %v1537, 1
        %v1542 = vsel %vm1540, %v1541, %v1537
        %v1543 = vadd.s32 %v1538, %v1542
        %v1544 = vadd.s32 %v1543, 536870912
        %v1545 = vshrl.u32 %v1544, 30
        %v1546 = vshll.u32 %v1545, 30
        %v1547 = vsub.s32 %v1543, %v1546
        %vm1548 = vcmp.lt.s32.totalorder %v1547, 0
        %v1549 = vsub.s32 0, %v1547
        %v1550 = vsel %vm1548, %v1549, %v1547
        %v1551 = vclz %v1550
        %v1552 = vsub.s32 %v1551, 2
        %vm1553 = vcmp.gt.s32.totalorder 0, %v1552
        %v1554 = vsel %vm1553, 0, %v1552
        %v1555 = vsub.s32 32, %v1554
        %v1556 = vshll.u32 %v1547, %v1554
        %v1557 = vshrl.u32 %v1539, %v1555
        %v1558 = vor.u32 %v1556, %v1557
        %v1559 = vsub.s32 4294967266, %v1554
        %v1560 = vadd.s32 %v1559, 127
        %v1561 = vshll.u32 %v1560, 23
        %v1562 = vor.u32 4788187, %v1561
        %v1563 = vand.u32 2147483647, %v1562
        %v1565 = vcvt.s32.f32 %v1558
        %v1566 = vmul.f32 %v1565, %v1563
        %v1567 = vxor.u32 %v1566, 2147483648
        %v1568 = vsel %vm1485, %v1567, %v1566
        %v1569 = vsub.s32 4, %v1545
        %v1570 = vsel %vm1485, %v1569, %v1545
        %v1571 = vsel %vm1484, %v621, %v1568
        %v1572 = vsel %vm1484, 0, %v1570
        %v1573 = vcosq.f32.pop %v1571
        %v1574 = vsinq.f32.pop %v1571
        %vm1575 = vweird.f32 %v621
        %v1576 = vadd.s32 %v1572, 3
        %v1577 = vand.u32 %v1576, 3
        %vm1578 = vcmp.lt.s32.totalorder %v1577, 2
        %vm1579 = vcmp.eq.s32.totalorder %v1577, 0
        %v1580 = vxor.u32 %v1574, 2147483648
        %v1581 = vsel %vm1579, %v1573, %v1580
        %vm1582 = vcmp.eq.s32.totalorder %v1577, 2
        %v1583 = vxor.u32 %v1573, 2147483648
        %v1584 = vsel %vm1582, %v1583, %v1574
        %v1585 = vsel %vm1578, %v1581, %v1584
        %v1586 = vsel %vm1575, nan, %v1585
        %v1587 = vand.u32 2147483647, %v708
        %vm1588 = vcmp.le.f32.partialorder %v1587, 0.7853982
        %vm1589 = vcmp.lt.s32.totalorder %v708, 0
        %v1590 = vand.u32 %v708, 2139095040
        %v1591 = vshrl.u32 %v1590, 23
        %v1592 = vsub.s32 %v1591, 127
        %v1593 = vand.u32 2147483647, %v708
        %v1594 = vand.u32 %v1593, 8388607
        %v1595 = vor.u32 %v1594, 8388608
        %v1596 = vsub.s32 0, %v1595
        %v1597 = vadd.s32 %v1592, 1
        %vm1598 = vcmp.gt.s32.totalorder %v1597, 0
        %v1599 = vsel %vm1598, %v1597, 0
        %v1600 = vshrl.u32 %v1599, 5
        %v1601 = vand.u32 %v1599, 31
        %v1602 = vsub.s32 32, %v1601
        %v1603 = vshrl.u32 683565275, %v1602
        %v1604 = vshll.u32 683565275, %v1601
        %v1605 = vshrl.u32 2475754826, %v1602
        %v1606 = vor.u32 %v1604, %v1605
        %v1607 = vshll.u32 2475754826, %v1601
        %v1608 = vshrl.u32 2131351028, %v1602
        %v1609 = vor.u32 %v1607, %v1608
        %v1610 = vshll.u32 2131351028, %v1601
        %v1611 = vshrl.u32 2102212464, %v1602
        %v1612 = vor.u32 %v1610, %v1611
        %v1613 = vshll.u32 2102212464, %v1601
        %v1614 = vshrl.u32 920167782, %v1602
        %v1615 = vor.u32 %v1613, %v1614
        %v1616 = vshll.u32 920167782, %v1601
        %v1617 = vshrl.u32 1326507024, %v1602
        %v1618 = vor.u32 %v1616, %v1617
        %vm1619 = vcmp.lt.s32.totalorder %v1600, 1
        %vm1620 = vcmp.lt.s32.totalorder %v1600, 2
        %vm1621 = vcmp.lt.s32.totalorder %v1600, 3
        %vm1622 = vcmp.lt.s32.totalorder %v1600, 4
        %v1623 = vsel %vm1619, %v1603, %v1606
        %v1624 = vsel %vm1622, %v1612, 2102212464
        %v1625 = vsel %vm1621, %v1609, %v1624
        %v1626 = vsel %vm1620, %v1623, %v1625
        %v1627 = vsel %vm1619, %v1606, %v1609
        %v1628 = vsel %vm1622, %v1615, 920167782
        %v1629 = vsel %vm1621, %v1612, %v1628
        %v1630 = vsel %vm1620, %v1627, %v1629
        %v1631 = vsel %vm1619, %v1609, %v1612
        %v1632 = vsel %vm1622, %v1618, 1326507024
        %v1633 = vsel %vm1621, %v1615, %v1632
        %v1634 = vsel %vm1620, %v1631, %v1633
        %v1635 = vshll.u32 %v1595, 8
        %v1636 = vmul.u32.u64.compose %v1635, %v1634
        %v1637 = vextract.low.u32 %v1636
        %v1638 = vextract.high.u32 %v1636
        %v1639 = vmul.u32.u64.compose %v1635, %v1630
        %v1640 = vextract.low.u32 %v1639
        %v1641 = vextract.high.u32 %v1639
        %v1642 = vmul.u32 %v1635, %v1626
        %v1643 = vadd.s32 %v1638, %v1640
        %vm1644 = vc.u32 %v1638, %v1640
        %v1645 = vadd.s32 %v1641, 1
        %v1646 = vsel %vm1644, %v1645, %v1641
        %v1647 = vadd.s32 %v1642, %v1646
        %v1648 = vadd.s32 %v1647, 536870912
        %v1649 = vshrl.u32 %v1648, 30
        %v1650 = vshll.u32 %v1649, 30
        %v1651 = vsub.s32 %v1647, %v1650
        %vm1652 = vcmp.lt.s32.totalorder %v1651, 0
        %v1653 = vsub.s32 0, %v1651
        %v1654 = vsel %vm1652, %v1653, %v1651
        %v1655 = vclz %v1654
        %v1656 = vsub.s32 %v1655, 2
        %vm1657 = vcmp.gt.s32.totalorder 0, %v1656
        %v1658 = vsel %vm1657, 0, %v1656
        %v1659 = vsub.s32 32, %v1658
        %v1660 = vshll.u32 %v1651, %v1658
        %v1661 = vshrl.u32 %v1643, %v1659
        %v1662 = vor.u32 %v1660, %v1661
        %v1663 = vsub.s32 4294967266, %v1658
        %v1664 = vadd.s32 %v1663, 127
        %v1665 = vshll.u32 %v1664, 23
        %v1666 = vor.u32 4788187, %v1665
        %v1667 = vand.u32 2147483647, %v1666
        %v1669 = vcvt.s32.f32 %v1662
        %v1670 = vmul.f32 %v1669, %v1667
        %v1671 = vxor.u32 %v1670, 2147483648
        %v1672 = vsel %vm1589, %v1671, %v1670
        %v1673 = vsub.s32 4, %v1649
        %v1674 = vsel %vm1589, %v1673, %v1649
        %v1675 = vsel %vm1588, %v708, %v1672
        %v1676 = vsel %vm1588, 0, %v1674
        %v1677 = vcosq.f32.pop %v1675
        %v1678 = vsinq.f32.pop %v1675
        %vm1679 = vweird.f32 %v708
        %v1680 = vadd.s32 %v1676, 3
        %v1681 = vand.u32 %v1680, 3
        %vm1682 = vcmp.lt.s32.totalorder %v1681, 2
        %vm1683 = vcmp.eq.s32.totalorder %v1681, 0
        %v1684 = vxor.u32 %v1678, 2147483648
        %v1685 = vsel %vm1683, %v1677, %v1684
        %vm1686 = vcmp.eq.s32.totalorder %v1681, 2
        %v1687 = vxor.u32 %v1677, 2147483648
        %v1688 = vsel %vm1686, %v1687, %v1678
        %v1689 = vsel %vm1682, %v1685, %v1688
        %v1690 = vsel %vm1679, nan, %v1689
        %v1691 = vand.u32 2147483647, %v710
        %vm1692 = vcmp.le.f32.partialorder %v1691, 0.7853982
        %vm1693 = vcmp.lt.s32.totalorder %v710, 0
        %v1694 = vand.u32 %v710, 2139095040
        %v1695 = vshrl.u32 %v1694, 23
        %v1696 = vsub.s32 %v1695, 127
        %v1697 = vand.u32 2147483647, %v710
        %v1698 = vand.u32 %v1697, 8388607
        %v1699 = vor.u32 %v1698, 8388608
        %v1700 = vsub.s32 0, %v1699
        %v1701 = vadd.s32 %v1696, 1
        %vm1702 = vcmp.gt.s32.totalorder %v1701, 0
        %v1703 = vsel %vm1702, %v1701, 0
        %v1704 = vshrl.u32 %v1703, 5
        %v1705 = vand.u32 %v1703, 31
        %v1706 = vsub.s32 32, %v1705
        %v1707 = vshrl.u32 683565275, %v1706
        %v1708 = vshll.u32 683565275, %v1705
        %v1709 = vshrl.u32 2475754826, %v1706
        %v1710 = vor.u32 %v1708, %v1709
        %v1711 = vshll.u32 2475754826, %v1705
        %v1712 = vshrl.u32 2131351028, %v1706
        %v1713 = vor.u32 %v1711, %v1712
        %v1714 = vshll.u32 2131351028, %v1705
        %v1715 = vshrl.u32 2102212464, %v1706
        %v1716 = vor.u32 %v1714, %v1715
        %v1717 = vshll.u32 2102212464, %v1705
        %v1718 = vshrl.u32 920167782, %v1706
        %v1719 = vor.u32 %v1717, %v1718
        %v1720 = vshll.u32 920167782, %v1705
        %v1721 = vshrl.u32 1326507024, %v1706
        %v1722 = vor.u32 %v1720, %v1721
        %vm1723 = vcmp.lt.s32.totalorder %v1704, 1
        %vm1724 = vcmp.lt.s32.totalorder %v1704, 2
        %vm1725 = vcmp.lt.s32.totalorder %v1704, 3
        %vm1726 = vcmp.lt.s32.totalorder %v1704, 4
        %v1727 = vsel %vm1723, %v1707, %v1710
        %v1728 = vsel %vm1726, %v1716, 2102212464
        %v1729 = vsel %vm1725, %v1713, %v1728
        %v1730 = vsel %vm1724, %v1727, %v1729
        %v1731 = vsel %vm1723, %v1710, %v1713
        %v1732 = vsel %vm1726, %v1719, 920167782
        %v1733 = vsel %vm1725, %v1716, %v1732
        %v1734 = vsel %vm1724, %v1731, %v1733
        %v1735 = vsel %vm1723, %v1713, %v1716
        %v1736 = vsel %vm1726, %v1722, 1326507024
        %v1737 = vsel %vm1725, %v1719, %v1736
        %v1738 = vsel %vm1724, %v1735, %v1737
        %v1739 = vshll.u32 %v1699, 8
        %v1740 = vmul.u32.u64.compose %v1739, %v1738
        %v1741 = vextract.low.u32 %v1740
        %v1742 = vextract.high.u32 %v1740
        %v1743 = vmul.u32.u64.compose %v1739, %v1734
        %v1744 = vextract.low.u32 %v1743
        %v1745 = vextract.high.u32 %v1743
        %v1746 = vmul.u32 %v1739, %v1730
        %v1747 = vadd.s32 %v1742, %v1744
        %vm1748 = vc.u32 %v1742, %v1744
        %v1749 = vadd.s32 %v1745, 1
        %v1750 = vsel %vm1748, %v1749, %v1745
        %v1751 = vadd.s32 %v1746, %v1750
        %v1752 = vadd.s32 %v1751, 536870912
        %v1753 = vshrl.u32 %v1752, 30
        %v1754 = vshll.u32 %v1753, 30
        %v1755 = vsub.s32 %v1751, %v1754
        %vm1756 = vcmp.lt.s32.totalorder %v1755, 0
        %v1757 = vsub.s32 0, %v1755
        %v1758 = vsel %vm1756, %v1757, %v1755
        %v1759 = vclz %v1758
        %v1760 = vsub.s32 %v1759, 2
        %vm1761 = vcmp.gt.s32.totalorder 0, %v1760
        %v1762 = vsel %vm1761, 0, %v1760
        %v1763 = vsub.s32 32, %v1762
        %v1764 = vshll.u32 %v1755, %v1762
        %v1765 = vshrl.u32 %v1747, %v1763
        %v1766 = vor.u32 %v1764, %v1765
        %v1767 = vsub.s32 4294967266, %v1762
        %v1768 = vadd.s32 %v1767, 127
        %v1769 = vshll.u32 %v1768, 23
        %v1770 = vor.u32 4788187, %v1769
        %v1771 = vand.u32 2147483647, %v1770
        %v1773 = vcvt.s32.f32 %v1766
        %v1774 = vmul.f32 %v1773, %v1771
        %v1775 = vxor.u32 %v1774, 2147483648
        %v1776 = vsel %vm1693, %v1775, %v1774
        %v1777 = vsub.s32 4, %v1753
        %v1778 = vsel %vm1693, %v1777, %v1753
        %v1779 = vsel %vm1692, %v710, %v1776
        %v1780 = vsel %vm1692, 0, %v1778
        %v1781 = vcosq.f32.pop %v1779
        %v1782 = vsinq.f32.pop %v1779
        %vm1783 = vweird.f32 %v710
        %v1784 = vadd.s32 %v1780, 3
        %v1785 = vand.u32 %v1784, 3
        %vm1786 = vcmp.lt.s32.totalorder %v1785, 2
        %vm1787 = vcmp.eq.s32.totalorder %v1785, 0
        %v1788 = vxor.u32 %v1782, 2147483648
        %v1789 = vsel %vm1787, %v1781, %v1788
        %vm1790 = vcmp.eq.s32.totalorder %v1785, 2
        %v1791 = vxor.u32 %v1781, 2147483648
        %v1792 = vsel %vm1790, %v1791, %v1782
        %v1793 = vsel %vm1786, %v1789, %v1792
        %v1794 = vsel %vm1783, nan, %v1793
        %v1795 = vand.u32 2147483647, %v797
        %vm1796 = vcmp.le.f32.partialorder %v1795, 0.7853982
        %vm1797 = vcmp.lt.s32.totalorder %v797, 0
        %v1798 = vand.u32 %v797, 2139095040
        %v1799 = vshrl.u32 %v1798, 23
        %v1800 = vsub.s32 %v1799, 127
        %v1801 = vand.u32 2147483647, %v797
        %v1802 = vand.u32 %v1801, 8388607
        %v1803 = vor.u32 %v1802, 8388608
        %v1804 = vsub.s32 0, %v1803
        %v1805 = vadd.s32 %v1800, 1
        %vm1806 = vcmp.gt.s32.totalorder %v1805, 0
        %v1807 = vsel %vm1806, %v1805, 0
        %v1808 = vshrl.u32 %v1807, 5
        %v1809 = vand.u32 %v1807, 31
        %v1810 = vsub.s32 32, %v1809
        %v1811 = vshrl.u32 683565275, %v1810
        %v1812 = vshll.u32 683565275, %v1809
        %v1813 = vshrl.u32 2475754826, %v1810
        %v1814 = vor.u32 %v1812, %v1813
        %v1815 = vshll.u32 2475754826, %v1809
        %v1816 = vshrl.u32 2131351028, %v1810
        %v1817 = vor.u32 %v1815, %v1816
        %v1818 = vshll.u32 2131351028, %v1809
        %v1819 = vshrl.u32 2102212464, %v1810
        %v1820 = vor.u32 %v1818, %v1819
        %v1821 = vshll.u32 2102212464, %v1809
        %v1822 = vshrl.u32 920167782, %v1810
        %v1823 = vor.u32 %v1821, %v1822
        %v1824 = vshll.u32 920167782, %v1809
        %v1825 = vshrl.u32 1326507024, %v1810
        %v1826 = vor.u32 %v1824, %v1825
        %vm1827 = vcmp.lt.s32.totalorder %v1808, 1
        %vm1828 = vcmp.lt.s32.totalorder %v1808, 2
        %vm1829 = vcmp.lt.s32.totalorder %v1808, 3
        %vm1830 = vcmp.lt.s32.totalorder %v1808, 4
        %v1831 = vsel %vm1827, %v1811, %v1814
        %v1832 = vsel %vm1830, %v1820, 2102212464
        %v1833 = vsel %vm1829, %v1817, %v1832
        %v1834 = vsel %vm1828, %v1831, %v1833
        %v1835 = vsel %vm1827, %v1814, %v1817
        %v1836 = vsel %vm1830, %v1823, 920167782
        %v1837 = vsel %vm1829, %v1820, %v1836
        %v1838 = vsel %vm1828, %v1835, %v1837
        %v1839 = vsel %vm1827, %v1817, %v1820
        %v1840 = vsel %vm1830, %v1826, 1326507024
        %v1841 = vsel %vm1829, %v1823, %v1840
        %v1842 = vsel %vm1828, %v1839, %v1841
        %v1843 = vshll.u32 %v1803, 8
        %v1844 = vmul.u32.u64.compose %v1843, %v1842
        %v1845 = vextract.low.u32 %v1844
        %v1846 = vextract.high.u32 %v1844
        %v1847 = vmul.u32.u64.compose %v1843, %v1838
        %v1848 = vextract.low.u32 %v1847
        %v1849 = vextract.high.u32 %v1847
        %v1850 = vmul.u32 %v1843, %v1834
        %v1851 = vadd.s32 %v1846, %v1848
        %vm1852 = vc.u32 %v1846, %v1848
        %v1853 = vadd.s32 %v1849, 1
        %v1854 = vsel %vm1852, %v1853, %v1849
        %v1855 = vadd.s32 %v1850, %v1854
        %v1856 = vadd.s32 %v1855, 536870912
        %v1857 = vshrl.u32 %v1856, 30
        %v1858 = vshll.u32 %v1857, 30
        %v1859 = vsub.s32 %v1855, %v1858
        %vm1860 = vcmp.lt.s32.totalorder %v1859, 0
        %v1861 = vsub.s32 0, %v1859
        %v1862 = vsel %vm1860, %v1861, %v1859
        %v1863 = vclz %v1862
        %v1864 = vsub.s32 %v1863, 2
        %vm1865 = vcmp.gt.s32.totalorder 0, %v1864
        %v1866 = vsel %vm1865, 0, %v1864
        %v1867 = vsub.s32 32, %v1866
        %v1868 = vshll.u32 %v1859, %v1866
        %v1869 = vshrl.u32 %v1851, %v1867
        %v1870 = vor.u32 %v1868, %v1869
        %v1871 = vsub.s32 4294967266, %v1866
        %v1872 = vadd.s32 %v1871, 127
        %v1873 = vshll.u32 %v1872, 23
        %v1874 = vor.u32 4788187, %v1873
        %v1875 = vand.u32 2147483647, %v1874
        %v1877 = vcvt.s32.f32 %v1870
        %v1878 = vmul.f32 %v1877, %v1875
        %v1879 = vxor.u32 %v1878, 2147483648
        %v1880 = vsel %vm1797, %v1879, %v1878
        %v1881 = vsub.s32 4, %v1857
        %v1882 = vsel %vm1797, %v1881, %v1857
        %v1883 = vsel %vm1796, %v797, %v1880
        %v1884 = vsel %vm1796, 0, %v1882
        %v1885 = vcosq.f32.pop %v1883
        %v1886 = vsinq.f32.pop %v1883
        %vm1887 = vweird.f32 %v797
        %v1888 = vadd.s32 %v1884, 3
        %v1889 = vand.u32 %v1888, 3
        %vm1890 = vcmp.lt.s32.totalorder %v1889, 2
        %vm1891 = vcmp.eq.s32.totalorder %v1889, 0
        %v1892 = vxor.u32 %v1886, 2147483648
        %v1893 = vsel %vm1891, %v1885, %v1892
        %vm1894 = vcmp.eq.s32.totalorder %v1889, 2
        %v1895 = vxor.u32 %v1885, 2147483648
        %v1896 = vsel %vm1894, %v1895, %v1886
        %v1897 = vsel %vm1890, %v1893, %v1896
        %v1898 = vsel %vm1887, nan, %v1897
        %v1899 = vand.u32 2147483647, %v799
        %vm1900 = vcmp.le.f32.partialorder %v1899, 0.7853982
        %vm1901 = vcmp.lt.s32.totalorder %v799, 0
        %v1902 = vand.u32 %v799, 2139095040
        %v1903 = vshrl.u32 %v1902, 23
        %v1904 = vsub.s32 %v1903, 127
        %v1905 = vand.u32 2147483647, %v799
        %v1906 = vand.u32 %v1905, 8388607
        %v1907 = vor.u32 %v1906, 8388608
        %v1908 = vsub.s32 0, %v1907
        %v1909 = vadd.s32 %v1904, 1
        %vm1910 = vcmp.gt.s32.totalorder %v1909, 0
        %v1911 = vsel %vm1910, %v1909, 0
        %v1912 = vshrl.u32 %v1911, 5
        %v1913 = vand.u32 %v1911, 31
        %v1914 = vsub.s32 32, %v1913
        %v1915 = vshrl.u32 683565275, %v1914
        %v1916 = vshll.u32 683565275, %v1913
        %v1917 = vshrl.u32 2475754826, %v1914
        %v1918 = vor.u32 %v1916, %v1917
        %v1919 = vshll.u32 2475754826, %v1913
        %v1920 = vshrl.u32 2131351028, %v1914
        %v1921 = vor.u32 %v1919, %v1920
        %v1922 = vshll.u32 2131351028, %v1913
        %v1923 = vshrl.u32 2102212464, %v1914
        %v1924 = vor.u32 %v1922, %v1923
        %v1925 = vshll.u32 2102212464, %v1913
        %v1926 = vshrl.u32 920167782, %v1914
        %v1927 = vor.u32 %v1925, %v1926
        %v1928 = vshll.u32 920167782, %v1913
        %v1929 = vshrl.u32 1326507024, %v1914
        %v1930 = vor.u32 %v1928, %v1929
        %vm1931 = vcmp.lt.s32.totalorder %v1912, 1
        %vm1932 = vcmp.lt.s32.totalorder %v1912, 2
        %vm1933 = vcmp.lt.s32.totalorder %v1912, 3
        %vm1934 = vcmp.lt.s32.totalorder %v1912, 4
        %v1935 = vsel %vm1931, %v1915, %v1918
        %v1936 = vsel %vm1934, %v1924, 2102212464
        %v1937 = vsel %vm1933, %v1921, %v1936
        %v1938 = vsel %vm1932, %v1935, %v1937
        %v1939 = vsel %vm1931, %v1918, %v1921
        %v1940 = vsel %vm1934, %v1927, 920167782
        %v1941 = vsel %vm1933, %v1924, %v1940
        %v1942 = vsel %vm1932, %v1939, %v1941
        %v1943 = vsel %vm1931, %v1921, %v1924
        %v1944 = vsel %vm1934, %v1930, 1326507024
        %v1945 = vsel %vm1933, %v1927, %v1944
        %v1946 = vsel %vm1932, %v1943, %v1945
        %v1947 = vshll.u32 %v1907, 8
        %v1948 = vmul.u32.u64.compose %v1947, %v1946
        %v1949 = vextract.low.u32 %v1948
        %v1950 = vextract.high.u32 %v1948
        %v1951 = vmul.u32.u64.compose %v1947, %v1942
        %v1952 = vextract.low.u32 %v1951
        %v1953 = vextract.high.u32 %v1951
        %v1954 = vmul.u32 %v1947, %v1938
        %v1955 = vadd.s32 %v1950, %v1952
        %vm1956 = vc.u32 %v1950, %v1952
        %v1957 = vadd.s32 %v1953, 1
        %v1958 = vsel %vm1956, %v1957, %v1953
        %v1959 = vadd.s32 %v1954, %v1958
        %v1960 = vadd.s32 %v1959, 536870912
        %v1961 = vshrl.u32 %v1960, 30
        %v1962 = vshll.u32 %v1961, 30
        %v1963 = vsub.s32 %v1959, %v1962
        %vm1964 = vcmp.lt.s32.totalorder %v1963, 0
        %v1965 = vsub.s32 0, %v1963
        %v1966 = vsel %vm1964, %v1965, %v1963
        %v1967 = vclz %v1966
        %v1968 = vsub.s32 %v1967, 2
        %vm1969 = vcmp.gt.s32.totalorder 0, %v1968
        %v1970 = vsel %vm1969, 0, %v1968
        %v1971 = vsub.s32 32, %v1970
        %v1972 = vshll.u32 %v1963, %v1970
        %v1973 = vshrl.u32 %v1955, %v1971
        %v1974 = vor.u32 %v1972, %v1973
        %v1975 = vsub.s32 4294967266, %v1970
        %v1976 = vadd.s32 %v1975, 127
        %v1977 = vshll.u32 %v1976, 23
        %v1978 = vor.u32 4788187, %v1977
        %v1979 = vand.u32 2147483647, %v1978
        %v1981 = vcvt.s32.f32 %v1974
        %v1982 = vmul.f32 %v1981, %v1979
        %v1983 = vxor.u32 %v1982, 2147483648
        %v1984 = vsel %vm1901, %v1983, %v1982
        %v1985 = vsub.s32 4, %v1961
        %v1986 = vsel %vm1901, %v1985, %v1961
        %v1987 = vsel %vm1900, %v799, %v1984
        %v1988 = vsel %vm1900, 0, %v1986
        %v1989 = vcosq.f32.pop %v1987
        %v1990 = vsinq.f32.pop %v1987
        %vm1991 = vweird.f32 %v799
        %v1992 = vadd.s32 %v1988, 3
        %v1993 = vand.u32 %v1992, 3
        %vm1994 = vcmp.lt.s32.totalorder %v1993, 2
        %vm1995 = vcmp.eq.s32.totalorder %v1993, 0
        %v1996 = vxor.u32 %v1990, 2147483648
        %v1997 = vsel %vm1995, %v1989, %v1996
        %vm1998 = vcmp.eq.s32.totalorder %v1993, 2
        %v1999 = vxor.u32 %v1989, 2147483648
        %v2000 = vsel %vm1998, %v1999, %v1990
        %v2001 = vsel %vm1994, %v1997, %v2000
        %v2002 = vsel %vm1991, nan, %v2001
        %v2003 = vand.u32 2147483647, %v886
        %vm2004 = vcmp.le.f32.partialorder %v2003, 0.7853982
        %vm2005 = vcmp.lt.s32.totalorder %v886, 0
        %v2006 = vand.u32 %v886, 2139095040
        %v2007 = vshrl.u32 %v2006, 23
        %v2008 = vsub.s32 %v2007, 127
        %v2009 = vand.u32 2147483647, %v886
        %v2010 = vand.u32 %v2009, 8388607
        %v2011 = vor.u32 %v2010, 8388608
        %v2012 = vsub.s32 0, %v2011
        %v2013 = vadd.s32 %v2008, 1
        %vm2014 = vcmp.gt.s32.totalorder %v2013, 0
        %v2015 = vsel %vm2014, %v2013, 0
        %v2016 = vshrl.u32 %v2015, 5
        %v2017 = vand.u32 %v2015, 31
        %v2018 = vsub.s32 32, %v2017
        %v2019 = vshrl.u32 683565275, %v2018
        %v2020 = vshll.u32 683565275, %v2017
        %v2021 = vshrl.u32 2475754826, %v2018
        %v2022 = vor.u32 %v2020, %v2021
        %v2023 = vshll.u32 2475754826, %v2017
        %v2024 = vshrl.u32 2131351028, %v2018
        %v2025 = vor.u32 %v2023, %v2024
        %v2026 = vshll.u32 2131351028, %v2017
        %v2027 = vshrl.u32 2102212464, %v2018
        %v2028 = vor.u32 %v2026, %v2027
        %v2029 = vshll.u32 2102212464, %v2017
        %v2030 = vshrl.u32 920167782, %v2018
        %v2031 = vor.u32 %v2029, %v2030
        %v2032 = vshll.u32 920167782, %v2017
        %v2033 = vshrl.u32 1326507024, %v2018
        %v2034 = vor.u32 %v2032, %v2033
        %vm2035 = vcmp.lt.s32.totalorder %v2016, 1
        %vm2036 = vcmp.lt.s32.totalorder %v2016, 2
        %vm2037 = vcmp.lt.s32.totalorder %v2016, 3
        %vm2038 = vcmp.lt.s32.totalorder %v2016, 4
        %v2039 = vsel %vm2035, %v2019, %v2022
        %v2040 = vsel %vm2038, %v2028, 2102212464
        %v2041 = vsel %vm2037, %v2025, %v2040
        %v2042 = vsel %vm2036, %v2039, %v2041
        %v2043 = vsel %vm2035, %v2022, %v2025
        %v2044 = vsel %vm2038, %v2031, 920167782
        %v2045 = vsel %vm2037, %v2028, %v2044
        %v2046 = vsel %vm2036, %v2043, %v2045
        %v2047 = vsel %vm2035, %v2025, %v2028
        %v2048 = vsel %vm2038, %v2034, 1326507024
        %v2049 = vsel %vm2037, %v2031, %v2048
        %v2050 = vsel %vm2036, %v2047, %v2049
        %v2051 = vshll.u32 %v2011, 8
        %v2052 = vmul.u32.u64.compose %v2051, %v2050
        %v2053 = vextract.low.u32 %v2052
        %v2054 = vextract.high.u32 %v2052
        %v2055 = vmul.u32.u64.compose %v2051, %v2046
        %v2056 = vextract.low.u32 %v2055
        %v2057 = vextract.high.u32 %v2055
        %v2058 = vmul.u32 %v2051, %v2042
        %v2059 = vadd.s32 %v2054, %v2056
        %vm2060 = vc.u32 %v2054, %v2056
        %v2061 = vadd.s32 %v2057, 1
        %v2062 = vsel %vm2060, %v2061, %v2057
        %v2063 = vadd.s32 %v2058, %v2062
        %v2064 = vadd.s32 %v2063, 536870912
        %v2065 = vshrl.u32 %v2064, 30
        %v2066 = vshll.u32 %v2065, 30
        %v2067 = vsub.s32 %v2063, %v2066
        %vm2068 = vcmp.lt.s32.totalorder %v2067, 0
        %v2069 = vsub.s32 0, %v2067
        %v2070 = vsel %vm2068, %v2069, %v2067
        %v2071 = vclz %v2070
        %v2072 = vsub.s32 %v2071, 2
        %vm2073 = vcmp.gt.s32.totalorder 0, %v2072
        %v2074 = vsel %vm2073, 0, %v2072
        %v2075 = vsub.s32 32, %v2074
        %v2076 = vshll.u32 %v2067, %v2074
        %v2077 = vshrl.u32 %v2059, %v2075
        %v2078 = vor.u32 %v2076, %v2077
        %v2079 = vsub.s32 4294967266, %v2074
        %v2080 = vadd.s32 %v2079, 127
        %v2081 = vshll.u32 %v2080, 23
        %v2082 = vor.u32 4788187, %v2081
        %v2083 = vand.u32 2147483647, %v2082
        %v2085 = vcvt.s32.f32 %v2078
        %v2086 = vmul.f32 %v2085, %v2083
        %v2087 = vxor.u32 %v2086, 2147483648
        %v2088 = vsel %vm2005, %v2087, %v2086
        %v2089 = vsub.s32 4, %v2065
        %v2090 = vsel %vm2005, %v2089, %v2065
        %v2091 = vsel %vm2004, %v886, %v2088
        %v2092 = vsel %vm2004, 0, %v2090
        %v2093 = vcosq.f32.pop %v2091
        %v2094 = vsinq.f32.pop %v2091
        %vm2095 = vweird.f32 %v886
        %v2096 = vadd.s32 %v2092, 3
        %v2097 = vand.u32 %v2096, 3
        %vm2098 = vcmp.lt.s32.totalorder %v2097, 2
        %vm2099 = vcmp.eq.s32.totalorder %v2097, 0
        %v2100 = vxor.u32 %v2094, 2147483648
        %v2101 = vsel %vm2099, %v2093, %v2100
        %vm2102 = vcmp.eq.s32.totalorder %v2097, 2
        %v2103 = vxor.u32 %v2093, 2147483648
        %v2104 = vsel %vm2102, %v2103, %v2094
        %v2105 = vsel %vm2098, %v2101, %v2104
        %v2106 = vsel %vm2095, nan, %v2105
        %v2107 = vand.u32 2147483647, %v888
        %vm2108 = vcmp.le.f32.partialorder %v2107, 0.7853982
        %vm2109 = vcmp.lt.s32.totalorder %v888, 0
        %v2110 = vand.u32 %v888, 2139095040
        %v2111 = vshrl.u32 %v2110, 23
        %v2112 = vsub.s32 %v2111, 127
        %v2113 = vand.u32 2147483647, %v888
        %v2114 = vand.u32 %v2113, 8388607
        %v2115 = vor.u32 %v2114, 8388608
        %v2116 = vsub.s32 0, %v2115
        %v2117 = vadd.s32 %v2112, 1
        %vm2118 = vcmp.gt.s32.totalorder %v2117, 0
        %v2119 = vsel %vm2118, %v2117, 0
        %v2120 = vshrl.u32 %v2119, 5
        %v2121 = vand.u32 %v2119, 31
        %v2122 = vsub.s32 32, %v2121
        %v2123 = vshrl.u32 683565275, %v2122
        %v2124 = vshll.u32 683565275, %v2121
        %v2125 = vshrl.u32 2475754826, %v2122
        %v2126 = vor.u32 %v2124, %v2125
        %v2127 = vshll.u32 2475754826, %v2121
        %v2128 = vshrl.u32 2131351028, %v2122
        %v2129 = vor.u32 %v2127, %v2128
        %v2130 = vshll.u32 2131351028, %v2121
        %v2131 = vshrl.u32 2102212464, %v2122
        %v2132 = vor.u32 %v2130, %v2131
        %v2133 = vshll.u32 2102212464, %v2121
        %v2134 = vshrl.u32 920167782, %v2122
        %v2135 = vor.u32 %v2133, %v2134
        %v2136 = vshll.u32 920167782, %v2121
        %v2137 = vshrl.u32 1326507024, %v2122
        %v2138 = vor.u32 %v2136, %v2137
        %vm2139 = vcmp.lt.s32.totalorder %v2120, 1
        %vm2140 = vcmp.lt.s32.totalorder %v2120, 2
        %vm2141 = vcmp.lt.s32.totalorder %v2120, 3
        %vm2142 = vcmp.lt.s32.totalorder %v2120, 4
        %v2143 = vsel %vm2139, %v2123, %v2126
        %v2144 = vsel %vm2142, %v2132, 2102212464
        %v2145 = vsel %vm2141, %v2129, %v2144
        %v2146 = vsel %vm2140, %v2143, %v2145
        %v2147 = vsel %vm2139, %v2126, %v2129
        %v2148 = vsel %vm2142, %v2135, 920167782
        %v2149 = vsel %vm2141, %v2132, %v2148
        %v2150 = vsel %vm2140, %v2147, %v2149
        %v2151 = vsel %vm2139, %v2129, %v2132
        %v2152 = vsel %vm2142, %v2138, 1326507024
        %v2153 = vsel %vm2141, %v2135, %v2152
        %v2154 = vsel %vm2140, %v2151, %v2153
        %v2155 = vshll.u32 %v2115, 8
        %v2156 = vmul.u32.u64.compose %v2155, %v2154
        %v2157 = vextract.low.u32 %v2156
        %v2158 = vextract.high.u32 %v2156
        %v2159 = vmul.u32.u64.compose %v2155, %v2150
        %v2160 = vextract.low.u32 %v2159
        %v2161 = vextract.high.u32 %v2159
        %v2162 = vmul.u32 %v2155, %v2146
        %v2163 = vadd.s32 %v2158, %v2160
        %vm2164 = vc.u32 %v2158, %v2160
        %v2165 = vadd.s32 %v2161, 1
        %v2166 = vsel %vm2164, %v2165, %v2161
        %v2167 = vadd.s32 %v2162, %v2166
        %v2168 = vadd.s32 %v2167, 536870912
        %v2169 = vshrl.u32 %v2168, 30
        %v2170 = vshll.u32 %v2169, 30
        %v2171 = vsub.s32 %v2167, %v2170
        %vm2172 = vcmp.lt.s32.totalorder %v2171, 0
        %v2173 = vsub.s32 0, %v2171
        %v2174 = vsel %vm2172, %v2173, %v2171
        %v2175 = vclz %v2174
        %v2176 = vsub.s32 %v2175, 2
        %vm2177 = vcmp.gt.s32.totalorder 0, %v2176
        %v2178 = vsel %vm2177, 0, %v2176
        %v2179 = vsub.s32 32, %v2178
        %v2180 = vshll.u32 %v2171, %v2178
        %v2181 = vshrl.u32 %v2163, %v2179
        %v2182 = vor.u32 %v2180, %v2181
        %v2183 = vsub.s32 4294967266, %v2178
        %v2184 = vadd.s32 %v2183, 127
        %v2185 = vshll.u32 %v2184, 23
        %v2186 = vor.u32 4788187, %v2185
        %v2187 = vand.u32 2147483647, %v2186
        %v2189 = vcvt.s32.f32 %v2182
        %v2190 = vmul.f32 %v2189, %v2187
        %v2191 = vxor.u32 %v2190, 2147483648
        %v2192 = vsel %vm2109, %v2191, %v2190
        %v2193 = vsub.s32 4, %v2169
        %v2194 = vsel %vm2109, %v2193, %v2169
        %v2195 = vsel %vm2108, %v888, %v2192
        %v2196 = vsel %vm2108, 0, %v2194
        %v2197 = vcosq.f32.pop %v2195
        %v2198 = vsinq.f32.pop %v2195
        %vm2199 = vweird.f32 %v888
        %v2200 = vadd.s32 %v2196, 3
        %v2201 = vand.u32 %v2200, 3
        %vm2202 = vcmp.lt.s32.totalorder %v2201, 2
        %vm2203 = vcmp.eq.s32.totalorder %v2201, 0
        %v2204 = vxor.u32 %v2198, 2147483648
        %v2205 = vsel %vm2203, %v2197, %v2204
        %vm2206 = vcmp.eq.s32.totalorder %v2201, 2
        %v2207 = vxor.u32 %v2197, 2147483648
        %v2208 = vsel %vm2206, %v2207, %v2198
        %v2209 = vsel %vm2202, %v2205, %v2208
        %v2210 = vsel %vm2199, nan, %v2209
        %v2211 = vand.u32 2147483647, %v975
        %vm2212 = vcmp.le.f32.partialorder %v2211, 0.7853982
        %vm2213 = vcmp.lt.s32.totalorder %v975, 0
        %v2214 = vand.u32 %v975, 2139095040
        %v2215 = vshrl.u32 %v2214, 23
        %v2216 = vsub.s32 %v2215, 127
        %v2217 = vand.u32 2147483647, %v975
        %v2218 = vand.u32 %v2217, 8388607
        %v2219 = vor.u32 %v2218, 8388608
        %v2220 = vsub.s32 0, %v2219
        %v2221 = vadd.s32 %v2216, 1
        %vm2222 = vcmp.gt.s32.totalorder %v2221, 0
        %v2223 = vsel %vm2222, %v2221, 0
        %v2224 = vshrl.u32 %v2223, 5
        %v2225 = vand.u32 %v2223, 31
        %v2226 = vsub.s32 32, %v2225
        %v2227 = vshrl.u32 683565275, %v2226
        %v2228 = vshll.u32 683565275, %v2225
        %v2229 = vshrl.u32 2475754826, %v2226
        %v2230 = vor.u32 %v2228, %v2229
        %v2231 = vshll.u32 2475754826, %v2225
        %v2232 = vshrl.u32 2131351028, %v2226
        %v2233 = vor.u32 %v2231, %v2232
        %v2234 = vshll.u32 2131351028, %v2225
        %v2235 = vshrl.u32 2102212464, %v2226
        %v2236 = vor.u32 %v2234, %v2235
        %v2237 = vshll.u32 2102212464, %v2225
        %v2238 = vshrl.u32 920167782, %v2226
        %v2239 = vor.u32 %v2237, %v2238
        %v2240 = vshll.u32 920167782, %v2225
        %v2241 = vshrl.u32 1326507024, %v2226
        %v2242 = vor.u32 %v2240, %v2241
        %vm2243 = vcmp.lt.s32.totalorder %v2224, 1
        %vm2244 = vcmp.lt.s32.totalorder %v2224, 2
        %vm2245 = vcmp.lt.s32.totalorder %v2224, 3
        %vm2246 = vcmp.lt.s32.totalorder %v2224, 4
        %v2247 = vsel %vm2243, %v2227, %v2230
        %v2248 = vsel %vm2246, %v2236, 2102212464
        %v2249 = vsel %vm2245, %v2233, %v2248
        %v2250 = vsel %vm2244, %v2247, %v2249
        %v2251 = vsel %vm2243, %v2230, %v2233
        %v2252 = vsel %vm2246, %v2239, 920167782
        %v2253 = vsel %vm2245, %v2236, %v2252
        %v2254 = vsel %vm2244, %v2251, %v2253
        %v2255 = vsel %vm2243, %v2233, %v2236
        %v2256 = vsel %vm2246, %v2242, 1326507024
        %v2257 = vsel %vm2245, %v2239, %v2256
        %v2258 = vsel %vm2244, %v2255, %v2257
        %v2259 = vshll.u32 %v2219, 8
        %v2260 = vmul.u32.u64.compose %v2259, %v2258
        %v2261 = vextract.low.u32 %v2260
        %v2262 = vextract.high.u32 %v2260
        %v2263 = vmul.u32.u64.compose %v2259, %v2254
        %v2264 = vextract.low.u32 %v2263
        %v2265 = vextract.high.u32 %v2263
        %v2266 = vmul.u32 %v2259, %v2250
        %v2267 = vadd.s32 %v2262, %v2264
        %vm2268 = vc.u32 %v2262, %v2264
        %v2269 = vadd.s32 %v2265, 1
        %v2270 = vsel %vm2268, %v2269, %v2265
        %v2271 = vadd.s32 %v2266, %v2270
        %v2272 = vadd.s32 %v2271, 536870912
        %v2273 = vshrl.u32 %v2272, 30
        %v2274 = vshll.u32 %v2273, 30
        %v2275 = vsub.s32 %v2271, %v2274
        %vm2276 = vcmp.lt.s32.totalorder %v2275, 0
        %v2277 = vsub.s32 0, %v2275
        %v2278 = vsel %vm2276, %v2277, %v2275
        %v2279 = vclz %v2278
        %v2280 = vsub.s32 %v2279, 2
        %vm2281 = vcmp.gt.s32.totalorder 0, %v2280
        %v2282 = vsel %vm2281, 0, %v2280
        %v2283 = vsub.s32 32, %v2282
        %v2284 = vshll.u32 %v2275, %v2282
        %v2285 = vshrl.u32 %v2267, %v2283
        %v2286 = vor.u32 %v2284, %v2285
        %v2287 = vsub.s32 4294967266, %v2282
        %v2288 = vadd.s32 %v2287, 127
        %v2289 = vshll.u32 %v2288, 23
        %v2290 = vor.u32 4788187, %v2289
        %v2291 = vand.u32 2147483647, %v2290
        %v2293 = vcvt.s32.f32 %v2286
        %v2294 = vmul.f32 %v2293, %v2291
        %v2295 = vxor.u32 %v2294, 2147483648
        %v2296 = vsel %vm2213, %v2295, %v2294
        %v2297 = vsub.s32 4, %v2273
        %v2298 = vsel %vm2213, %v2297, %v2273
        %v2299 = vsel %vm2212, %v975, %v2296
        %v2300 = vsel %vm2212, 0, %v2298
        %v2301 = vcosq.f32.pop %v2299
        %v2302 = vsinq.f32.pop %v2299
        %vm2303 = vweird.f32 %v975
        %v2304 = vadd.s32 %v2300, 3
        %v2305 = vand.u32 %v2304, 3
        %vm2306 = vcmp.lt.s32.totalorder %v2305, 2
        %vm2307 = vcmp.eq.s32.totalorder %v2305, 0
        %v2308 = vxor.u32 %v2302, 2147483648
        %v2309 = vsel %vm2307, %v2301, %v2308
        %vm2310 = vcmp.eq.s32.totalorder %v2305, 2
        %v2311 = vxor.u32 %v2301, 2147483648
        %v2312 = vsel %vm2310, %v2311, %v2302
        %v2313 = vsel %vm2306, %v2309, %v2312
        %v2314 = vsel %vm2303, nan, %v2313
        %v2315 = vand.u32 2147483647, %v977
        %vm2316 = vcmp.le.f32.partialorder %v2315, 0.7853982
        %vm2317 = vcmp.lt.s32.totalorder %v977, 0
        %v2318 = vand.u32 %v977, 2139095040
        %v2319 = vshrl.u32 %v2318, 23
        %v2320 = vsub.s32 %v2319, 127
        %v2321 = vand.u32 2147483647, %v977
        %v2322 = vand.u32 %v2321, 8388607
        %v2323 = vor.u32 %v2322, 8388608
        %v2324 = vsub.s32 0, %v2323
        %v2325 = vadd.s32 %v2320, 1
        %vm2326 = vcmp.gt.s32.totalorder %v2325, 0
        %v2327 = vsel %vm2326, %v2325, 0
        %v2328 = vshrl.u32 %v2327, 5
        %v2329 = vand.u32 %v2327, 31
        %v2330 = vsub.s32 32, %v2329
        %v2331 = vshrl.u32 683565275, %v2330
        %v2332 = vshll.u32 683565275, %v2329
        %v2333 = vshrl.u32 2475754826, %v2330
        %v2334 = vor.u32 %v2332, %v2333
        %v2335 = vshll.u32 2475754826, %v2329
        %v2336 = vshrl.u32 2131351028, %v2330
        %v2337 = vor.u32 %v2335, %v2336
        %v2338 = vshll.u32 2131351028, %v2329
        %v2339 = vshrl.u32 2102212464, %v2330
        %v2340 = vor.u32 %v2338, %v2339
        %v2341 = vshll.u32 2102212464, %v2329
        %v2342 = vshrl.u32 920167782, %v2330
        %v2343 = vor.u32 %v2341, %v2342
        %v2344 = vshll.u32 920167782, %v2329
        %v2345 = vshrl.u32 1326507024, %v2330
        %v2346 = vor.u32 %v2344, %v2345
        %vm2347 = vcmp.lt.s32.totalorder %v2328, 1
        %vm2348 = vcmp.lt.s32.totalorder %v2328, 2
        %vm2349 = vcmp.lt.s32.totalorder %v2328, 3
        %vm2350 = vcmp.lt.s32.totalorder %v2328, 4
        %v2351 = vsel %vm2347, %v2331, %v2334
        %v2352 = vsel %vm2350, %v2340, 2102212464
        %v2353 = vsel %vm2349, %v2337, %v2352
        %v2354 = vsel %vm2348, %v2351, %v2353
        %v2355 = vsel %vm2347, %v2334, %v2337
        %v2356 = vsel %vm2350, %v2343, 920167782
        %v2357 = vsel %vm2349, %v2340, %v2356
        %v2358 = vsel %vm2348, %v2355, %v2357
        %v2359 = vsel %vm2347, %v2337, %v2340
        %v2360 = vsel %vm2350, %v2346, 1326507024
        %v2361 = vsel %vm2349, %v2343, %v2360
        %v2362 = vsel %vm2348, %v2359, %v2361
        %v2363 = vshll.u32 %v2323, 8
        %v2364 = vmul.u32.u64.compose %v2363, %v2362
        %v2365 = vextract.low.u32 %v2364
        %v2366 = vextract.high.u32 %v2364
        %v2367 = vmul.u32.u64.compose %v2363, %v2358
        %v2368 = vextract.low.u32 %v2367
        %v2369 = vextract.high.u32 %v2367
        %v2370 = vmul.u32 %v2363, %v2354
        %v2371 = vadd.s32 %v2366, %v2368
        %vm2372 = vc.u32 %v2366, %v2368
        %v2373 = vadd.s32 %v2369, 1
        %v2374 = vsel %vm2372, %v2373, %v2369
        %v2375 = vadd.s32 %v2370, %v2374
        %v2376 = vadd.s32 %v2375, 536870912
        %v2377 = vshrl.u32 %v2376, 30
        %v2378 = vshll.u32 %v2377, 30
        %v2379 = vsub.s32 %v2375, %v2378
        %vm2380 = vcmp.lt.s32.totalorder %v2379, 0
        %v2381 = vsub.s32 0, %v2379
        %v2382 = vsel %vm2380, %v2381, %v2379
        %v2383 = vclz %v2382
        %v2384 = vsub.s32 %v2383, 2
        %vm2385 = vcmp.gt.s32.totalorder 0, %v2384
        %v2386 = vsel %vm2385, 0, %v2384
        %v2387 = vsub.s32 32, %v2386
        %v2388 = vshll.u32 %v2379, %v2386
        %v2389 = vshrl.u32 %v2371, %v2387
        %v2390 = vor.u32 %v2388, %v2389
        %v2391 = vsub.s32 4294967266, %v2386
        %v2392 = vadd.s32 %v2391, 127
        %v2393 = vshll.u32 %v2392, 23
        %v2394 = vor.u32 4788187, %v2393
        %v2395 = vand.u32 2147483647, %v2394
        %v2397 = vcvt.s32.f32 %v2390
        %v2398 = vmul.f32 %v2397, %v2395
        %v2399 = vxor.u32 %v2398, 2147483648
        %v2400 = vsel %vm2317, %v2399, %v2398
        %v2401 = vsub.s32 4, %v2377
        %v2402 = vsel %vm2317, %v2401, %v2377
        %v2403 = vsel %vm2316, %v977, %v2400
        %v2404 = vsel %vm2316, 0, %v2402
        %v2405 = vcosq.f32.pop %v2403
        %v2406 = vsinq.f32.pop %v2403
        %vm2407 = vweird.f32 %v977
        %v2408 = vadd.s32 %v2404, 3
        %v2409 = vand.u32 %v2408, 3
        %vm2410 = vcmp.lt.s32.totalorder %v2409, 2
        %vm2411 = vcmp.eq.s32.totalorder %v2409, 0
        %v2412 = vxor.u32 %v2406, 2147483648
        %v2413 = vsel %vm2411, %v2405, %v2412
        %vm2414 = vcmp.eq.s32.totalorder %v2409, 2
        %v2415 = vxor.u32 %v2405, 2147483648
        %v2416 = vsel %vm2414, %v2415, %v2406
        %v2417 = vsel %vm2410, %v2413, %v2416
        %v2418 = vsel %vm2407, nan, %v2417
        %v2419 = vand.u32 2147483647, %v1064
        %vm2420 = vcmp.le.f32.partialorder %v2419, 0.7853982
        %vm2421 = vcmp.lt.s32.totalorder %v1064, 0
        %v2422 = vand.u32 %v1064, 2139095040
        %v2423 = vshrl.u32 %v2422, 23
        %v2424 = vsub.s32 %v2423, 127
        %v2425 = vand.u32 2147483647, %v1064
        %v2426 = vand.u32 %v2425, 8388607
        %v2427 = vor.u32 %v2426, 8388608
        %v2428 = vsub.s32 0, %v2427
        %v2429 = vadd.s32 %v2424, 1
        %vm2430 = vcmp.gt.s32.totalorder %v2429, 0
        %v2431 = vsel %vm2430, %v2429, 0
        %v2432 = vshrl.u32 %v2431, 5
        %v2433 = vand.u32 %v2431, 31
        %v2434 = vsub.s32 32, %v2433
        %v2435 = vshrl.u32 683565275, %v2434
        %v2436 = vshll.u32 683565275, %v2433
        %v2437 = vshrl.u32 2475754826, %v2434
        %v2438 = vor.u32 %v2436, %v2437
        %v2439 = vshll.u32 2475754826, %v2433
        %v2440 = vshrl.u32 2131351028, %v2434
        %v2441 = vor.u32 %v2439, %v2440
        %v2442 = vshll.u32 2131351028, %v2433
        %v2443 = vshrl.u32 2102212464, %v2434
        %v2444 = vor.u32 %v2442, %v2443
        %v2445 = vshll.u32 2102212464, %v2433
        %v2446 = vshrl.u32 920167782, %v2434
        %v2447 = vor.u32 %v2445, %v2446
        %v2448 = vshll.u32 920167782, %v2433
        %v2449 = vshrl.u32 1326507024, %v2434
        %v2450 = vor.u32 %v2448, %v2449
        %vm2451 = vcmp.lt.s32.totalorder %v2432, 1
        %vm2452 = vcmp.lt.s32.totalorder %v2432, 2
        %vm2453 = vcmp.lt.s32.totalorder %v2432, 3
        %vm2454 = vcmp.lt.s32.totalorder %v2432, 4
        %v2455 = vsel %vm2451, %v2435, %v2438
        %v2456 = vsel %vm2454, %v2444, 2102212464
        %v2457 = vsel %vm2453, %v2441, %v2456
        %v2458 = vsel %vm2452, %v2455, %v2457
        %v2459 = vsel %vm2451, %v2438, %v2441
        %v2460 = vsel %vm2454, %v2447, 920167782
        %v2461 = vsel %vm2453, %v2444, %v2460
        %v2462 = vsel %vm2452, %v2459, %v2461
        %v2463 = vsel %vm2451, %v2441, %v2444
        %v2464 = vsel %vm2454, %v2450, 1326507024
        %v2465 = vsel %vm2453, %v2447, %v2464
        %v2466 = vsel %vm2452, %v2463, %v2465
        %v2467 = vshll.u32 %v2427, 8
        %v2468 = vmul.u32.u64.compose %v2467, %v2466
        %v2469 = vextract.low.u32 %v2468
        %v2470 = vextract.high.u32 %v2468
        %v2471 = vmul.u32.u64.compose %v2467, %v2462
        %v2472 = vextract.low.u32 %v2471
        %v2473 = vextract.high.u32 %v2471
        %v2474 = vmul.u32 %v2467, %v2458
        %v2475 = vadd.s32 %v2470, %v2472
        %vm2476 = vc.u32 %v2470, %v2472
        %v2477 = vadd.s32 %v2473, 1
        %v2478 = vsel %vm2476, %v2477, %v2473
        %v2479 = vadd.s32 %v2474, %v2478
        %v2480 = vadd.s32 %v2479, 536870912
        %v2481 = vshrl.u32 %v2480, 30
        %v2482 = vshll.u32 %v2481, 30
        %v2483 = vsub.s32 %v2479, %v2482
        %vm2484 = vcmp.lt.s32.totalorder %v2483, 0
        %v2485 = vsub.s32 0, %v2483
        %v2486 = vsel %vm2484, %v2485, %v2483
        %v2487 = vclz %v2486
        %v2488 = vsub.s32 %v2487, 2
        %vm2489 = vcmp.gt.s32.totalorder 0, %v2488
        %v2490 = vsel %vm2489, 0, %v2488
        %v2491 = vsub.s32 32, %v2490
        %v2492 = vshll.u32 %v2483, %v2490
        %v2493 = vshrl.u32 %v2475, %v2491
        %v2494 = vor.u32 %v2492, %v2493
        %v2495 = vsub.s32 4294967266, %v2490
        %v2496 = vadd.s32 %v2495, 127
        %v2497 = vshll.u32 %v2496, 23
        %v2498 = vor.u32 4788187, %v2497
        %v2499 = vand.u32 2147483647, %v2498
        %v2501 = vcvt.s32.f32 %v2494
        %v2502 = vmul.f32 %v2501, %v2499
        %v2503 = vxor.u32 %v2502, 2147483648
        %v2504 = vsel %vm2421, %v2503, %v2502
        %v2505 = vsub.s32 4, %v2481
        %v2506 = vsel %vm2421, %v2505, %v2481
        %v2507 = vsel %vm2420, %v1064, %v2504
        %v2508 = vsel %vm2420, 0, %v2506
        %v2509 = vcosq.f32.pop %v2507
        %v2510 = vsinq.f32.pop %v2507
        %vm2511 = vweird.f32 %v1064
        %v2512 = vadd.s32 %v2508, 3
        %v2513 = vand.u32 %v2512, 3
        %vm2514 = vcmp.lt.s32.totalorder %v2513, 2
        %vm2515 = vcmp.eq.s32.totalorder %v2513, 0
        %v2516 = vxor.u32 %v2510, 2147483648
        %v2517 = vsel %vm2515, %v2509, %v2516
        %vm2518 = vcmp.eq.s32.totalorder %v2513, 2
        %v2519 = vxor.u32 %v2509, 2147483648
        %v2520 = vsel %vm2518, %v2519, %v2510
        %v2521 = vsel %vm2514, %v2517, %v2520
        %v2522 = vsel %vm2511, nan, %v2521
        %v2523 = vand.u32 2147483647, %v1066
        %vm2524 = vcmp.le.f32.partialorder %v2523, 0.7853982
        %vm2525 = vcmp.lt.s32.totalorder %v1066, 0
        %v2526 = vand.u32 %v1066, 2139095040
        %v2527 = vshrl.u32 %v2526, 23
        %v2528 = vsub.s32 %v2527, 127
        %v2529 = vand.u32 2147483647, %v1066
        %v2530 = vand.u32 %v2529, 8388607
        %v2531 = vor.u32 %v2530, 8388608
        %v2532 = vsub.s32 0, %v2531
        %v2533 = vadd.s32 %v2528, 1
        %vm2534 = vcmp.gt.s32.totalorder %v2533, 0
        %v2535 = vsel %vm2534, %v2533, 0
        %v2536 = vshrl.u32 %v2535, 5
        %v2537 = vand.u32 %v2535, 31
        %v2538 = vsub.s32 32, %v2537
        %v2539 = vshrl.u32 683565275, %v2538
        %v2540 = vshll.u32 683565275, %v2537
        %v2541 = vshrl.u32 2475754826, %v2538
        %v2542 = vor.u32 %v2540, %v2541
        %v2543 = vshll.u32 2475754826, %v2537
        %v2544 = vshrl.u32 2131351028, %v2538
        %v2545 = vor.u32 %v2543, %v2544
        %v2546 = vshll.u32 2131351028, %v2537
        %v2547 = vshrl.u32 2102212464, %v2538
        %v2548 = vor.u32 %v2546, %v2547
        %v2549 = vshll.u32 2102212464, %v2537
        %v2550 = vshrl.u32 920167782, %v2538
        %v2551 = vor.u32 %v2549, %v2550
        %v2552 = vshll.u32 920167782, %v2537
        %v2553 = vshrl.u32 1326507024, %v2538
        %v2554 = vor.u32 %v2552, %v2553
        %vm2555 = vcmp.lt.s32.totalorder %v2536, 1
        %vm2556 = vcmp.lt.s32.totalorder %v2536, 2
        %vm2557 = vcmp.lt.s32.totalorder %v2536, 3
        %vm2558 = vcmp.lt.s32.totalorder %v2536, 4
        %v2559 = vsel %vm2555, %v2539, %v2542
        %v2560 = vsel %vm2558, %v2548, 2102212464
        %v2561 = vsel %vm2557, %v2545, %v2560
        %v2562 = vsel %vm2556, %v2559, %v2561
        %v2563 = vsel %vm2555, %v2542, %v2545
        %v2564 = vsel %vm2558, %v2551, 920167782
        %v2565 = vsel %vm2557, %v2548, %v2564
        %v2566 = vsel %vm2556, %v2563, %v2565
        %v2567 = vsel %vm2555, %v2545, %v2548
        %v2568 = vsel %vm2558, %v2554, 1326507024
        %v2569 = vsel %vm2557, %v2551, %v2568
        %v2570 = vsel %vm2556, %v2567, %v2569
        %v2571 = vshll.u32 %v2531, 8
        %v2572 = vmul.u32.u64.compose %v2571, %v2570
        %v2573 = vextract.low.u32 %v2572
        %v2574 = vextract.high.u32 %v2572
        %v2575 = vmul.u32.u64.compose %v2571, %v2566
        %v2576 = vextract.low.u32 %v2575
        %v2577 = vextract.high.u32 %v2575
        %v2578 = vmul.u32 %v2571, %v2562
        %v2579 = vadd.s32 %v2574, %v2576
        %vm2580 = vc.u32 %v2574, %v2576
        %v2581 = vadd.s32 %v2577, 1
        %v2582 = vsel %vm2580, %v2581, %v2577
        %v2583 = vadd.s32 %v2578, %v2582
        %v2584 = vadd.s32 %v2583, 536870912
        %v2585 = vshrl.u32 %v2584, 30
        %v2586 = vshll.u32 %v2585, 30
        %v2587 = vsub.s32 %v2583, %v2586
        %vm2588 = vcmp.lt.s32.totalorder %v2587, 0
        %v2589 = vsub.s32 0, %v2587
        %v2590 = vsel %vm2588, %v2589, %v2587
        %v2591 = vclz %v2590
        %v2592 = vsub.s32 %v2591, 2
        %vm2593 = vcmp.gt.s32.totalorder 0, %v2592
        %v2594 = vsel %vm2593, 0, %v2592
        %v2595 = vsub.s32 32, %v2594
        %v2596 = vshll.u32 %v2587, %v2594
        %v2597 = vshrl.u32 %v2579, %v2595
        %v2598 = vor.u32 %v2596, %v2597
        %v2599 = vsub.s32 4294967266, %v2594
        %v2600 = vadd.s32 %v2599, 127
        %v2601 = vshll.u32 %v2600, 23
        %v2602 = vor.u32 4788187, %v2601
        %v2603 = vand.u32 2147483647, %v2602
        %v2605 = vcvt.s32.f32 %v2598
        %v2606 = vmul.f32 %v2605, %v2603
        %v2607 = vxor.u32 %v2606, 2147483648
        %v2608 = vsel %vm2525, %v2607, %v2606
        %v2609 = vsub.s32 4, %v2585
        %v2610 = vsel %vm2525, %v2609, %v2585
        %v2611 = vsel %vm2524, %v1066, %v2608
        %v2612 = vsel %vm2524, 0, %v2610
        %v2613 = vcosq.f32.pop %v2611
        %v2614 = vsinq.f32.pop %v2611
        %vm2615 = vweird.f32 %v1066
        %v2616 = vadd.s32 %v2612, 3
        %v2617 = vand.u32 %v2616, 3
        %vm2618 = vcmp.lt.s32.totalorder %v2617, 2
        %vm2619 = vcmp.eq.s32.totalorder %v2617, 0
        %v2620 = vxor.u32 %v2614, 2147483648
        %v2621 = vsel %vm2619, %v2613, %v2620
        %vm2622 = vcmp.eq.s32.totalorder %v2617, 2
        %v2623 = vxor.u32 %v2613, 2147483648
        %v2624 = vsel %vm2622, %v2623, %v2614
        %v2625 = vsel %vm2618, %v2621, %v2624
        %v2626 = vsel %vm2615, nan, %v2625
        %v2627 = vand.u32 2147483647, %v1153
        %vm2628 = vcmp.le.f32.partialorder %v2627, 0.7853982
        %vm2629 = vcmp.lt.s32.totalorder %v1153, 0
        %v2630 = vand.u32 %v1153, 2139095040
        %v2631 = vshrl.u32 %v2630, 23
        %v2632 = vsub.s32 %v2631, 127
        %v2633 = vand.u32 2147483647, %v1153
        %v2634 = vand.u32 %v2633, 8388607
        %v2635 = vor.u32 %v2634, 8388608
        %v2636 = vsub.s32 0, %v2635
        %v2637 = vadd.s32 %v2632, 1
        %vm2638 = vcmp.gt.s32.totalorder %v2637, 0
        %v2639 = vsel %vm2638, %v2637, 0
        %v2640 = vshrl.u32 %v2639, 5
        %v2641 = vand.u32 %v2639, 31
        %v2642 = vsub.s32 32, %v2641
        %v2643 = vshrl.u32 683565275, %v2642
        %v2644 = vshll.u32 683565275, %v2641
        %v2645 = vshrl.u32 2475754826, %v2642
        %v2646 = vor.u32 %v2644, %v2645
        %v2647 = vshll.u32 2475754826, %v2641
        %v2648 = vshrl.u32 2131351028, %v2642
        %v2649 = vor.u32 %v2647, %v2648
        %v2650 = vshll.u32 2131351028, %v2641
        %v2651 = vshrl.u32 2102212464, %v2642
        %v2652 = vor.u32 %v2650, %v2651
        %v2653 = vshll.u32 2102212464, %v2641
        %v2654 = vshrl.u32 920167782, %v2642
        %v2655 = vor.u32 %v2653, %v2654
        %v2656 = vshll.u32 920167782, %v2641
        %v2657 = vshrl.u32 1326507024, %v2642
        %v2658 = vor.u32 %v2656, %v2657
        %vm2659 = vcmp.lt.s32.totalorder %v2640, 1
        %vm2660 = vcmp.lt.s32.totalorder %v2640, 2
        %vm2661 = vcmp.lt.s32.totalorder %v2640, 3
        %vm2662 = vcmp.lt.s32.totalorder %v2640, 4
        %v2663 = vsel %vm2659, %v2643, %v2646
        %v2664 = vsel %vm2662, %v2652, 2102212464
        %v2665 = vsel %vm2661, %v2649, %v2664
        %v2666 = vsel %vm2660, %v2663, %v2665
        %v2667 = vsel %vm2659, %v2646, %v2649
        %v2668 = vsel %vm2662, %v2655, 920167782
        %v2669 = vsel %vm2661, %v2652, %v2668
        %v2670 = vsel %vm2660, %v2667, %v2669
        %v2671 = vsel %vm2659, %v2649, %v2652
        %v2672 = vsel %vm2662, %v2658, 1326507024
        %v2673 = vsel %vm2661, %v2655, %v2672
        %v2674 = vsel %vm2660, %v2671, %v2673
        %v2675 = vshll.u32 %v2635, 8
        %v2676 = vmul.u32.u64.compose %v2675, %v2674
        %v2677 = vextract.low.u32 %v2676
        %v2678 = vextract.high.u32 %v2676
        %v2679 = vmul.u32.u64.compose %v2675, %v2670
        %v2680 = vextract.low.u32 %v2679
        %v2681 = vextract.high.u32 %v2679
        %v2682 = vmul.u32 %v2675, %v2666
        %v2683 = vadd.s32 %v2678, %v2680
        %vm2684 = vc.u32 %v2678, %v2680
        %v2685 = vadd.s32 %v2681, 1
        %v2686 = vsel %vm2684, %v2685, %v2681
        %v2687 = vadd.s32 %v2682, %v2686
        %v2688 = vadd.s32 %v2687, 536870912
        %v2689 = vshrl.u32 %v2688, 30
        %v2690 = vshll.u32 %v2689, 30
        %v2691 = vsub.s32 %v2687, %v2690
        %vm2692 = vcmp.lt.s32.totalorder %v2691, 0
        %v2693 = vsub.s32 0, %v2691
        %v2694 = vsel %vm2692, %v2693, %v2691
        %v2695 = vclz %v2694
        %v2696 = vsub.s32 %v2695, 2
        %vm2697 = vcmp.gt.s32.totalorder 0, %v2696
        %v2698 = vsel %vm2697, 0, %v2696
        %v2699 = vsub.s32 32, %v2698
        %v2700 = vshll.u32 %v2691, %v2698
        %v2701 = vshrl.u32 %v2683, %v2699
        %v2702 = vor.u32 %v2700, %v2701
        %v2703 = vsub.s32 4294967266, %v2698
        %v2704 = vadd.s32 %v2703, 127
        %v2705 = vshll.u32 %v2704, 23
        %v2706 = vor.u32 4788187, %v2705
        %v2707 = vand.u32 2147483647, %v2706
        %v2709 = vcvt.s32.f32 %v2702
        %v2710 = vmul.f32 %v2709, %v2707
        %v2711 = vxor.u32 %v2710, 2147483648
        %v2712 = vsel %vm2629, %v2711, %v2710
        %v2713 = vsub.s32 4, %v2689
        %v2714 = vsel %vm2629, %v2713, %v2689
        %v2715 = vsel %vm2628, %v1153, %v2712
        %v2716 = vsel %vm2628, 0, %v2714
        %v2717 = vcosq.f32.pop %v2715
        %v2718 = vsinq.f32.pop %v2715
        %vm2719 = vweird.f32 %v1153
        %v2720 = vadd.s32 %v2716, 3
        %v2721 = vand.u32 %v2720, 3
        %vm2722 = vcmp.lt.s32.totalorder %v2721, 2
        %vm2723 = vcmp.eq.s32.totalorder %v2721, 0
        %v2724 = vxor.u32 %v2718, 2147483648
        %v2725 = vsel %vm2723, %v2717, %v2724
        %vm2726 = vcmp.eq.s32.totalorder %v2721, 2
        %v2727 = vxor.u32 %v2717, 2147483648
        %v2728 = vsel %vm2726, %v2727, %v2718
        %v2729 = vsel %vm2722, %v2725, %v2728
        %v2730 = vsel %vm2719, nan, %v2729
        %v2731 = vand.u32 2147483647, %v536
        %vm2732 = vcmp.le.f32.partialorder %v2731, 0.7853982
        %vm2733 = vcmp.lt.s32.totalorder %v536, 0
        %v2734 = vand.u32 %v536, 2139095040
        %v2735 = vshrl.u32 %v2734, 23
        %v2736 = vsub.s32 %v2735, 127
        %v2737 = vand.u32 2147483647, %v536
        %v2738 = vand.u32 %v2737, 8388607
        %v2739 = vor.u32 %v2738, 8388608
        %v2740 = vsub.s32 0, %v2739
        %v2741 = vadd.s32 %v2736, 1
        %vm2742 = vcmp.gt.s32.totalorder %v2741, 0
        %v2743 = vsel %vm2742, %v2741, 0
        %v2744 = vshrl.u32 %v2743, 5
        %v2745 = vand.u32 %v2743, 31
        %v2746 = vsub.s32 32, %v2745
        %v2747 = vshrl.u32 683565275, %v2746
        %v2748 = vshll.u32 683565275, %v2745
        %v2749 = vshrl.u32 2475754826, %v2746
        %v2750 = vor.u32 %v2748, %v2749
        %v2751 = vshll.u32 2475754826, %v2745
        %v2752 = vshrl.u32 2131351028, %v2746
        %v2753 = vor.u32 %v2751, %v2752
        %v2754 = vshll.u32 2131351028, %v2745
        %v2755 = vshrl.u32 2102212464, %v2746
        %v2756 = vor.u32 %v2754, %v2755
        %v2757 = vshll.u32 2102212464, %v2745
        %v2758 = vshrl.u32 920167782, %v2746
        %v2759 = vor.u32 %v2757, %v2758
        %v2760 = vshll.u32 920167782, %v2745
        %v2761 = vshrl.u32 1326507024, %v2746
        %v2762 = vor.u32 %v2760, %v2761
        %vm2763 = vcmp.lt.s32.totalorder %v2744, 1
        %vm2764 = vcmp.lt.s32.totalorder %v2744, 2
        %vm2765 = vcmp.lt.s32.totalorder %v2744, 3
        %vm2766 = vcmp.lt.s32.totalorder %v2744, 4
        %v2767 = vsel %vm2763, %v2747, %v2750
        %v2768 = vsel %vm2766, %v2756, 2102212464
        %v2769 = vsel %vm2765, %v2753, %v2768
        %v2770 = vsel %vm2764, %v2767, %v2769
        %v2771 = vsel %vm2763, %v2750, %v2753
        %v2772 = vsel %vm2766, %v2759, 920167782
        %v2773 = vsel %vm2765, %v2756, %v2772
        %v2774 = vsel %vm2764, %v2771, %v2773
        %v2775 = vsel %vm2763, %v2753, %v2756
        %v2776 = vsel %vm2766, %v2762, 1326507024
        %v2777 = vsel %vm2765, %v2759, %v2776
        %v2778 = vsel %vm2764, %v2775, %v2777
        %v2779 = vshll.u32 %v2739, 8
        %v2780 = vmul.u32.u64.compose %v2779, %v2778
        %v2781 = vextract.low.u32 %v2780
        %v2782 = vextract.high.u32 %v2780
        %v2783 = vmul.u32.u64.compose %v2779, %v2774
        %v2784 = vextract.low.u32 %v2783
        %v2785 = vextract.high.u32 %v2783
        %v2786 = vmul.u32 %v2779, %v2770
        %v2787 = vadd.s32 %v2782, %v2784
        %vm2788 = vc.u32 %v2782, %v2784
        %v2789 = vadd.s32 %v2785, 1
        %v2790 = vsel %vm2788, %v2789, %v2785
        %v2791 = vadd.s32 %v2786, %v2790
        %v2792 = vadd.s32 %v2791, 536870912
        %v2793 = vshrl.u32 %v2792, 30
        %v2794 = vshll.u32 %v2793, 30
        %v2795 = vsub.s32 %v2791, %v2794
        %vm2796 = vcmp.lt.s32.totalorder %v2795, 0
        %v2797 = vsub.s32 0, %v2795
        %v2798 = vsel %vm2796, %v2797, %v2795
        %v2799 = vclz %v2798
        %v2800 = vsub.s32 %v2799, 2
        %vm2801 = vcmp.gt.s32.totalorder 0, %v2800
        %v2802 = vsel %vm2801, 0, %v2800
        %v2803 = vsub.s32 32, %v2802
        %v2804 = vshll.u32 %v2795, %v2802
        %v2805 = vshrl.u32 %v2787, %v2803
        %v2806 = vor.u32 %v2804, %v2805
        %v2807 = vsub.s32 4294967266, %v2802
        %v2808 = vadd.s32 %v2807, 127
        %v2809 = vshll.u32 %v2808, 23
        %v2810 = vor.u32 4788187, %v2809
        %v2811 = vand.u32 2147483647, %v2810
        %v2813 = vcvt.s32.f32 %v2806
        %v2814 = vmul.f32 %v2813, %v2811
        %v2815 = vxor.u32 %v2814, 2147483648
        %v2816 = vsel %vm2733, %v2815, %v2814
        %v2817 = vsub.s32 4, %v2793
        %v2818 = vsel %vm2733, %v2817, %v2793
        %v2819 = vsel %vm2732, %v536, %v2816
        %v2820 = vsel %vm2732, 0, %v2818
        %v2821 = vcosq.f32.pop %v2819
        %v2822 = vsinq.f32.pop %v2819
        %vm2823 = vweird.f32 %v536
        %v2824 = vadd.s32 %v2820, 3
        %v2825 = vand.u32 %v2824, 3
        %vm2826 = vcmp.lt.s32.totalorder %v2825, 2
        %vm2827 = vcmp.eq.s32.totalorder %v2825, 0
        %v2828 = vxor.u32 %v2822, 2147483648
        %v2829 = vsel %vm2827, %v2821, %v2828
        %vm2830 = vcmp.eq.s32.totalorder %v2825, 2
        %v2831 = vxor.u32 %v2821, 2147483648
        %v2832 = vsel %vm2830, %v2831, %v2822
        %v2833 = vsel %vm2826, %v2829, %v2832
        %v2834 = vsel %vm2823, nan, %v2833
        %v2835 = vand.u32 2147483647, %v538
        %vm2836 = vcmp.le.f32.partialorder %v2835, 0.7853982
        %vm2837 = vcmp.lt.s32.totalorder %v538, 0
        %v2838 = vand.u32 %v538, 2139095040
        %v2839 = vshrl.u32 %v2838, 23
        %v2840 = vsub.s32 %v2839, 127
        %v2841 = vand.u32 2147483647, %v538
        %v2842 = vand.u32 %v2841, 8388607
        %v2843 = vor.u32 %v2842, 8388608
        %v2844 = vsub.s32 0, %v2843
        %v2845 = vadd.s32 %v2840, 1
        %vm2846 = vcmp.gt.s32.totalorder %v2845, 0
        %v2847 = vsel %vm2846, %v2845, 0
        %v2848 = vshrl.u32 %v2847, 5
        %v2849 = vand.u32 %v2847, 31
        %v2850 = vsub.s32 32, %v2849
        %v2851 = vshrl.u32 683565275, %v2850
        %v2852 = vshll.u32 683565275, %v2849
        %v2853 = vshrl.u32 2475754826, %v2850
        %v2854 = vor.u32 %v2852, %v2853
        %v2855 = vshll.u32 2475754826, %v2849
        %v2856 = vshrl.u32 2131351028, %v2850
        %v2857 = vor.u32 %v2855, %v2856
        %v2858 = vshll.u32 2131351028, %v2849
        %v2859 = vshrl.u32 2102212464, %v2850
        %v2860 = vor.u32 %v2858, %v2859
        %v2861 = vshll.u32 2102212464, %v2849
        %v2862 = vshrl.u32 920167782, %v2850
        %v2863 = vor.u32 %v2861, %v2862
        %v2864 = vshll.u32 920167782, %v2849
        %v2865 = vshrl.u32 1326507024, %v2850
        %v2866 = vor.u32 %v2864, %v2865
        %vm2867 = vcmp.lt.s32.totalorder %v2848, 1
        %vm2868 = vcmp.lt.s32.totalorder %v2848, 2
        %vm2869 = vcmp.lt.s32.totalorder %v2848, 3
        %vm2870 = vcmp.lt.s32.totalorder %v2848, 4
        %v2871 = vsel %vm2867, %v2851, %v2854
        %v2872 = vsel %vm2870, %v2860, 2102212464
        %v2873 = vsel %vm2869, %v2857, %v2872
        %v2874 = vsel %vm2868, %v2871, %v2873
        %v2875 = vsel %vm2867, %v2854, %v2857
        %v2876 = vsel %vm2870, %v2863, 920167782
        %v2877 = vsel %vm2869, %v2860, %v2876
        %v2878 = vsel %vm2868, %v2875, %v2877
        %v2879 = vsel %vm2867, %v2857, %v2860
        %v2880 = vsel %vm2870, %v2866, 1326507024
        %v2881 = vsel %vm2869, %v2863, %v2880
        %v2882 = vsel %vm2868, %v2879, %v2881
        %v2883 = vshll.u32 %v2843, 8
        %v2884 = vmul.u32.u64.compose %v2883, %v2882
        %v2885 = vextract.low.u32 %v2884
        %v2886 = vextract.high.u32 %v2884
        %v2887 = vmul.u32.u64.compose %v2883, %v2878
        %v2888 = vextract.low.u32 %v2887
        %v2889 = vextract.high.u32 %v2887
        %v2890 = vmul.u32 %v2883, %v2874
        %v2891 = vadd.s32 %v2886, %v2888
        %vm2892 = vc.u32 %v2886, %v2888
        %v2893 = vadd.s32 %v2889, 1
        %v2894 = vsel %vm2892, %v2893, %v2889
        %v2895 = vadd.s32 %v2890, %v2894
        %v2896 = vadd.s32 %v2895, 536870912
        %v2897 = vshrl.u32 %v2896, 30
        %v2898 = vshll.u32 %v2897, 30
        %v2899 = vsub.s32 %v2895, %v2898
        %vm2900 = vcmp.lt.s32.totalorder %v2899, 0
        %v2901 = vsub.s32 0, %v2899
        %v2902 = vsel %vm2900, %v2901, %v2899
        %v2903 = vclz %v2902
        %v2904 = vsub.s32 %v2903, 2
        %vm2905 = vcmp.gt.s32.totalorder 0, %v2904
        %v2906 = vsel %vm2905, 0, %v2904
        %v2907 = vsub.s32 32, %v2906
        %v2908 = vshll.u32 %v2899, %v2906
        %v2909 = vshrl.u32 %v2891, %v2907
        %v2910 = vor.u32 %v2908, %v2909
        %v2911 = vsub.s32 4294967266, %v2906
        %v2912 = vadd.s32 %v2911, 127
        %v2913 = vshll.u32 %v2912, 23
        %v2914 = vor.u32 4788187, %v2913
        %v2915 = vand.u32 2147483647, %v2914
        %v2917 = vcvt.s32.f32 %v2910
        %v2918 = vmul.f32 %v2917, %v2915
        %v2919 = vxor.u32 %v2918, 2147483648
        %v2920 = vsel %vm2837, %v2919, %v2918
        %v2921 = vsub.s32 4, %v2897
        %v2922 = vsel %vm2837, %v2921, %v2897
        %v2923 = vsel %vm2836, %v538, %v2920
        %v2924 = vsel %vm2836, 0, %v2922
        %v2925 = vcosq.f32.pop %v2923
        %v2926 = vsinq.f32.pop %v2923
        %vm2927 = vweird.f32 %v538
        %v2928 = vadd.s32 %v2924, 3
        %v2929 = vand.u32 %v2928, 3
        %vm2930 = vcmp.lt.s32.totalorder %v2929, 2
        %vm2931 = vcmp.eq.s32.totalorder %v2929, 0
        %v2932 = vxor.u32 %v2926, 2147483648
        %v2933 = vsel %vm2931, %v2925, %v2932
        %vm2934 = vcmp.eq.s32.totalorder %v2929, 2
        %v2935 = vxor.u32 %v2925, 2147483648
        %v2936 = vsel %vm2934, %v2935, %v2926
        %v2937 = vsel %vm2930, %v2933, %v2936
        %v2938 = vsel %vm2927, nan, %v2937
        %v2939 = vand.u32 2147483647, %v625
        %vm2940 = vcmp.le.f32.partialorder %v2939, 0.7853982
        %vm2941 = vcmp.lt.s32.totalorder %v625, 0
        %v2942 = vand.u32 %v625, 2139095040
        %v2943 = vshrl.u32 %v2942, 23
        %v2944 = vsub.s32 %v2943, 127
        %v2945 = vand.u32 2147483647, %v625
        %v2946 = vand.u32 %v2945, 8388607
        %v2947 = vor.u32 %v2946, 8388608
        %v2948 = vsub.s32 0, %v2947
        %v2949 = vadd.s32 %v2944, 1
        %vm2950 = vcmp.gt.s32.totalorder %v2949, 0
        %v2951 = vsel %vm2950, %v2949, 0
        %v2952 = vshrl.u32 %v2951, 5
        %v2953 = vand.u32 %v2951, 31
        %v2954 = vsub.s32 32, %v2953
        %v2955 = vshrl.u32 683565275, %v2954
        %v2956 = vshll.u32 683565275, %v2953
        %v2957 = vshrl.u32 2475754826, %v2954
        %v2958 = vor.u32 %v2956, %v2957
        %v2959 = vshll.u32 2475754826, %v2953
        %v2960 = vshrl.u32 2131351028, %v2954
        %v2961 = vor.u32 %v2959, %v2960
        %v2962 = vshll.u32 2131351028, %v2953
        %v2963 = vshrl.u32 2102212464, %v2954
        %v2964 = vor.u32 %v2962, %v2963
        %v2965 = vshll.u32 2102212464, %v2953
        %v2966 = vshrl.u32 920167782, %v2954
        %v2967 = vor.u32 %v2965, %v2966
        %v2968 = vshll.u32 920167782, %v2953
        %v2969 = vshrl.u32 1326507024, %v2954
        %v2970 = vor.u32 %v2968, %v2969
        %vm2971 = vcmp.lt.s32.totalorder %v2952, 1
        %vm2972 = vcmp.lt.s32.totalorder %v2952, 2
        %vm2973 = vcmp.lt.s32.totalorder %v2952, 3
        %vm2974 = vcmp.lt.s32.totalorder %v2952, 4
        %v2975 = vsel %vm2971, %v2955, %v2958
        %v2976 = vsel %vm2974, %v2964, 2102212464
        %v2977 = vsel %vm2973, %v2961, %v2976
        %v2978 = vsel %vm2972, %v2975, %v2977
        %v2979 = vsel %vm2971, %v2958, %v2961
        %v2980 = vsel %vm2974, %v2967, 920167782
        %v2981 = vsel %vm2973, %v2964, %v2980
        %v2982 = vsel %vm2972, %v2979, %v2981
        %v2983 = vsel %vm2971, %v2961, %v2964
        %v2984 = vsel %vm2974, %v2970, 1326507024
        %v2985 = vsel %vm2973, %v2967, %v2984
        %v2986 = vsel %vm2972, %v2983, %v2985
        %v2987 = vshll.u32 %v2947, 8
        %v2988 = vmul.u32.u64.compose %v2987, %v2986
        %v2989 = vextract.low.u32 %v2988
        %v2990 = vextract.high.u32 %v2988
        %v2991 = vmul.u32.u64.compose %v2987, %v2982
        %v2992 = vextract.low.u32 %v2991
        %v2993 = vextract.high.u32 %v2991
        %v2994 = vmul.u32 %v2987, %v2978
        %v2995 = vadd.s32 %v2990, %v2992
        %vm2996 = vc.u32 %v2990, %v2992
        %v2997 = vadd.s32 %v2993, 1
        %v2998 = vsel %vm2996, %v2997, %v2993
        %v2999 = vadd.s32 %v2994, %v2998
        %v3000 = vadd.s32 %v2999, 536870912
        %v3001 = vshrl.u32 %v3000, 30
        %v3002 = vshll.u32 %v3001, 30
        %v3003 = vsub.s32 %v2999, %v3002
        %vm3004 = vcmp.lt.s32.totalorder %v3003, 0
        %v3005 = vsub.s32 0, %v3003
        %v3006 = vsel %vm3004, %v3005, %v3003
        %v3007 = vclz %v3006
        %v3008 = vsub.s32 %v3007, 2
        %vm3009 = vcmp.gt.s32.totalorder 0, %v3008
        %v3010 = vsel %vm3009, 0, %v3008
        %v3011 = vsub.s32 32, %v3010
        %v3012 = vshll.u32 %v3003, %v3010
        %v3013 = vshrl.u32 %v2995, %v3011
        %v3014 = vor.u32 %v3012, %v3013
        %v3015 = vsub.s32 4294967266, %v3010
        %v3016 = vadd.s32 %v3015, 127
        %v3017 = vshll.u32 %v3016, 23
        %v3018 = vor.u32 4788187, %v3017
        %v3019 = vand.u32 2147483647, %v3018
        %v3021 = vcvt.s32.f32 %v3014
        %v3022 = vmul.f32 %v3021, %v3019
        %v3023 = vxor.u32 %v3022, 2147483648
        %v3024 = vsel %vm2941, %v3023, %v3022
        %v3025 = vsub.s32 4, %v3001
        %v3026 = vsel %vm2941, %v3025, %v3001
        %v3027 = vsel %vm2940, %v625, %v3024
        %v3028 = vsel %vm2940, 0, %v3026
        %v3029 = vcosq.f32.pop %v3027
        %v3030 = vsinq.f32.pop %v3027
        %vm3031 = vweird.f32 %v625
        %v3032 = vadd.s32 %v3028, 3
        %v3033 = vand.u32 %v3032, 3
        %vm3034 = vcmp.lt.s32.totalorder %v3033, 2
        %vm3035 = vcmp.eq.s32.totalorder %v3033, 0
        %v3036 = vxor.u32 %v3030, 2147483648
        %v3037 = vsel %vm3035, %v3029, %v3036
        %vm3038 = vcmp.eq.s32.totalorder %v3033, 2
        %v3039 = vxor.u32 %v3029, 2147483648
        %v3040 = vsel %vm3038, %v3039, %v3030
        %v3041 = vsel %vm3034, %v3037, %v3040
        %v3042 = vsel %vm3031, nan, %v3041
        %v3043 = vand.u32 2147483647, %v627
        %vm3044 = vcmp.le.f32.partialorder %v3043, 0.7853982
        %vm3045 = vcmp.lt.s32.totalorder %v627, 0
        %v3046 = vand.u32 %v627, 2139095040
        %v3047 = vshrl.u32 %v3046, 23
        %v3048 = vsub.s32 %v3047, 127
        %v3049 = vand.u32 2147483647, %v627
        %v3050 = vand.u32 %v3049, 8388607
        %v3051 = vor.u32 %v3050, 8388608
        %v3052 = vsub.s32 0, %v3051
        %v3053 = vadd.s32 %v3048, 1
        %vm3054 = vcmp.gt.s32.totalorder %v3053, 0
        %v3055 = vsel %vm3054, %v3053, 0
        %v3056 = vshrl.u32 %v3055, 5
        %v3057 = vand.u32 %v3055, 31
        %v3058 = vsub.s32 32, %v3057
        %v3059 = vshrl.u32 683565275, %v3058
        %v3060 = vshll.u32 683565275, %v3057
        %v3061 = vshrl.u32 2475754826, %v3058
        %v3062 = vor.u32 %v3060, %v3061
        %v3063 = vshll.u32 2475754826, %v3057
        %v3064 = vshrl.u32 2131351028, %v3058
        %v3065 = vor.u32 %v3063, %v3064
        %v3066 = vshll.u32 2131351028, %v3057
        %v3067 = vshrl.u32 2102212464, %v3058
        %v3068 = vor.u32 %v3066, %v3067
        %v3069 = vshll.u32 2102212464, %v3057
        %v3070 = vshrl.u32 920167782, %v3058
        %v3071 = vor.u32 %v3069, %v3070
        %v3072 = vshll.u32 920167782, %v3057
        %v3073 = vshrl.u32 1326507024, %v3058
        %v3074 = vor.u32 %v3072, %v3073
        %vm3075 = vcmp.lt.s32.totalorder %v3056, 1
        %vm3076 = vcmp.lt.s32.totalorder %v3056, 2
        %vm3077 = vcmp.lt.s32.totalorder %v3056, 3
        %vm3078 = vcmp.lt.s32.totalorder %v3056, 4
        %v3079 = vsel %vm3075, %v3059, %v3062
        %v3080 = vsel %vm3078, %v3068, 2102212464
        %v3081 = vsel %vm3077, %v3065, %v3080
        %v3082 = vsel %vm3076, %v3079, %v3081
        %v3083 = vsel %vm3075, %v3062, %v3065
        %v3084 = vsel %vm3078, %v3071, 920167782
        %v3085 = vsel %vm3077, %v3068, %v3084
        %v3086 = vsel %vm3076, %v3083, %v3085
        %v3087 = vsel %vm3075, %v3065, %v3068
        %v3088 = vsel %vm3078, %v3074, 1326507024
        %v3089 = vsel %vm3077, %v3071, %v3088
        %v3090 = vsel %vm3076, %v3087, %v3089
        %v3091 = vshll.u32 %v3051, 8
        %v3092 = vmul.u32.u64.compose %v3091, %v3090
        %v3093 = vextract.low.u32 %v3092
        %v3094 = vextract.high.u32 %v3092
        %v3095 = vmul.u32.u64.compose %v3091, %v3086
        %v3096 = vextract.low.u32 %v3095
        %v3097 = vextract.high.u32 %v3095
        %v3098 = vmul.u32 %v3091, %v3082
        %v3099 = vadd.s32 %v3094, %v3096
        %vm3100 = vc.u32 %v3094, %v3096
        %v3101 = vadd.s32 %v3097, 1
        %v3102 = vsel %vm3100, %v3101, %v3097
        %v3103 = vadd.s32 %v3098, %v3102
        %v3104 = vadd.s32 %v3103, 536870912
        %v3105 = vshrl.u32 %v3104, 30
        %v3106 = vshll.u32 %v3105, 30
        %v3107 = vsub.s32 %v3103, %v3106
        %vm3108 = vcmp.lt.s32.totalorder %v3107, 0
        %v3109 = vsub.s32 0, %v3107
        %v3110 = vsel %vm3108, %v3109, %v3107
        %v3111 = vclz %v3110
        %v3112 = vsub.s32 %v3111, 2
        %vm3113 = vcmp.gt.s32.totalorder 0, %v3112
        %v3114 = vsel %vm3113, 0, %v3112
        %v3115 = vsub.s32 32, %v3114
        %v3116 = vshll.u32 %v3107, %v3114
        %v3117 = vshrl.u32 %v3099, %v3115
        %v3118 = vor.u32 %v3116, %v3117
        %v3119 = vsub.s32 4294967266, %v3114
        %v3120 = vadd.s32 %v3119, 127
        %v3121 = vshll.u32 %v3120, 23
        %v3122 = vor.u32 4788187, %v3121
        %v3123 = vand.u32 2147483647, %v3122
        %v3125 = vcvt.s32.f32 %v3118
        %v3126 = vmul.f32 %v3125, %v3123
        %v3127 = vxor.u32 %v3126, 2147483648
        %v3128 = vsel %vm3045, %v3127, %v3126
        %v3129 = vsub.s32 4, %v3105
        %v3130 = vsel %vm3045, %v3129, %v3105
        %v3131 = vsel %vm3044, %v627, %v3128
        %v3132 = vsel %vm3044, 0, %v3130
        %v3133 = vcosq.f32.pop %v3131
        %v3134 = vsinq.f32.pop %v3131
        %vm3135 = vweird.f32 %v627
        %v3136 = vadd.s32 %v3132, 3
        %v3137 = vand.u32 %v3136, 3
        %vm3138 = vcmp.lt.s32.totalorder %v3137, 2
        %vm3139 = vcmp.eq.s32.totalorder %v3137, 0
        %v3140 = vxor.u32 %v3134, 2147483648
        %v3141 = vsel %vm3139, %v3133, %v3140
        %vm3142 = vcmp.eq.s32.totalorder %v3137, 2
        %v3143 = vxor.u32 %v3133, 2147483648
        %v3144 = vsel %vm3142, %v3143, %v3134
        %v3145 = vsel %vm3138, %v3141, %v3144
        %v3146 = vsel %vm3135, nan, %v3145
        %v3147 = vand.u32 2147483647, %v714
        %vm3148 = vcmp.le.f32.partialorder %v3147, 0.7853982
        %vm3149 = vcmp.lt.s32.totalorder %v714, 0
        %v3150 = vand.u32 %v714, 2139095040
        %v3151 = vshrl.u32 %v3150, 23
        %v3152 = vsub.s32 %v3151, 127
        %v3153 = vand.u32 2147483647, %v714
        %v3154 = vand.u32 %v3153, 8388607
        %v3155 = vor.u32 %v3154, 8388608
        %v3156 = vsub.s32 0, %v3155
        %v3157 = vadd.s32 %v3152, 1
        %vm3158 = vcmp.gt.s32.totalorder %v3157, 0
        %v3159 = vsel %vm3158, %v3157, 0
        %v3160 = vshrl.u32 %v3159, 5
        %v3161 = vand.u32 %v3159, 31
        %v3162 = vsub.s32 32, %v3161
        %v3163 = vshrl.u32 683565275, %v3162
        %v3164 = vshll.u32 683565275, %v3161
        %v3165 = vshrl.u32 2475754826, %v3162
        %v3166 = vor.u32 %v3164, %v3165
        %v3167 = vshll.u32 2475754826, %v3161
        %v3168 = vshrl.u32 2131351028, %v3162
        %v3169 = vor.u32 %v3167, %v3168
        %v3170 = vshll.u32 2131351028, %v3161
        %v3171 = vshrl.u32 2102212464, %v3162
        %v3172 = vor.u32 %v3170, %v3171
        %v3173 = vshll.u32 2102212464, %v3161
        %v3174 = vshrl.u32 920167782, %v3162
        %v3175 = vor.u32 %v3173, %v3174
        %v3176 = vshll.u32 920167782, %v3161
        %v3177 = vshrl.u32 1326507024, %v3162
        %v3178 = vor.u32 %v3176, %v3177
        %vm3179 = vcmp.lt.s32.totalorder %v3160, 1
        %vm3180 = vcmp.lt.s32.totalorder %v3160, 2
        %vm3181 = vcmp.lt.s32.totalorder %v3160, 3
        %vm3182 = vcmp.lt.s32.totalorder %v3160, 4
        %v3183 = vsel %vm3179, %v3163, %v3166
        %v3184 = vsel %vm3182, %v3172, 2102212464
        %v3185 = vsel %vm3181, %v3169, %v3184
        %v3186 = vsel %vm3180, %v3183, %v3185
        %v3187 = vsel %vm3179, %v3166, %v3169
        %v3188 = vsel %vm3182, %v3175, 920167782
        %v3189 = vsel %vm3181, %v3172, %v3188
        %v3190 = vsel %vm3180, %v3187, %v3189
        %v3191 = vsel %vm3179, %v3169, %v3172
        %v3192 = vsel %vm3182, %v3178, 1326507024
        %v3193 = vsel %vm3181, %v3175, %v3192
        %v3194 = vsel %vm3180, %v3191, %v3193
        %v3195 = vshll.u32 %v3155, 8
        %v3196 = vmul.u32.u64.compose %v3195, %v3194
        %v3197 = vextract.low.u32 %v3196
        %v3198 = vextract.high.u32 %v3196
        %v3199 = vmul.u32.u64.compose %v3195, %v3190
        %v3200 = vextract.low.u32 %v3199
        %v3201 = vextract.high.u32 %v3199
        %v3202 = vmul.u32 %v3195, %v3186
        %v3203 = vadd.s32 %v3198, %v3200
        %vm3204 = vc.u32 %v3198, %v3200
        %v3205 = vadd.s32 %v3201, 1
        %v3206 = vsel %vm3204, %v3205, %v3201
        %v3207 = vadd.s32 %v3202, %v3206
        %v3208 = vadd.s32 %v3207, 536870912
        %v3209 = vshrl.u32 %v3208, 30
        %v3210 = vshll.u32 %v3209, 30
        %v3211 = vsub.s32 %v3207, %v3210
        %vm3212 = vcmp.lt.s32.totalorder %v3211, 0
        %v3213 = vsub.s32 0, %v3211
        %v3214 = vsel %vm3212, %v3213, %v3211
        %v3215 = vclz %v3214
        %v3216 = vsub.s32 %v3215, 2
        %vm3217 = vcmp.gt.s32.totalorder 0, %v3216
        %v3218 = vsel %vm3217, 0, %v3216
        %v3219 = vsub.s32 32, %v3218
        %v3220 = vshll.u32 %v3211, %v3218
        %v3221 = vshrl.u32 %v3203, %v3219
        %v3222 = vor.u32 %v3220, %v3221
        %v3223 = vsub.s32 4294967266, %v3218
        %v3224 = vadd.s32 %v3223, 127
        %v3225 = vshll.u32 %v3224, 23
        %v3226 = vor.u32 4788187, %v3225
        %v3227 = vand.u32 2147483647, %v3226
        %v3229 = vcvt.s32.f32 %v3222
        %v3230 = vmul.f32 %v3229, %v3227
        %v3231 = vxor.u32 %v3230, 2147483648
        %v3232 = vsel %vm3149, %v3231, %v3230
        %v3233 = vsub.s32 4, %v3209
        %v3234 = vsel %vm3149, %v3233, %v3209
        %v3235 = vsel %vm3148, %v714, %v3232
        %v3236 = vsel %vm3148, 0, %v3234
        %v3237 = vcosq.f32.pop %v3235
        %v3238 = vsinq.f32.pop %v3235
        %vm3239 = vweird.f32 %v714
        %v3240 = vadd.s32 %v3236, 3
        %v3241 = vand.u32 %v3240, 3
        %vm3242 = vcmp.lt.s32.totalorder %v3241, 2
        %vm3243 = vcmp.eq.s32.totalorder %v3241, 0
        %v3244 = vxor.u32 %v3238, 2147483648
        %v3245 = vsel %vm3243, %v3237, %v3244
        %vm3246 = vcmp.eq.s32.totalorder %v3241, 2
        %v3247 = vxor.u32 %v3237, 2147483648
        %v3248 = vsel %vm3246, %v3247, %v3238
        %v3249 = vsel %vm3242, %v3245, %v3248
        %v3250 = vsel %vm3239, nan, %v3249
        %v3251 = vand.u32 2147483647, %v716
        %vm3252 = vcmp.le.f32.partialorder %v3251, 0.7853982
        %vm3253 = vcmp.lt.s32.totalorder %v716, 0
        %v3254 = vand.u32 %v716, 2139095040
        %v3255 = vshrl.u32 %v3254, 23
        %v3256 = vsub.s32 %v3255, 127
        %v3257 = vand.u32 2147483647, %v716
        %v3258 = vand.u32 %v3257, 8388607
        %v3259 = vor.u32 %v3258, 8388608
        %v3260 = vsub.s32 0, %v3259
        %v3261 = vadd.s32 %v3256, 1
        %vm3262 = vcmp.gt.s32.totalorder %v3261, 0
        %v3263 = vsel %vm3262, %v3261, 0
        %v3264 = vshrl.u32 %v3263, 5
        %v3265 = vand.u32 %v3263, 31
        %v3266 = vsub.s32 32, %v3265
        %v3267 = vshrl.u32 683565275, %v3266
        %v3268 = vshll.u32 683565275, %v3265
        %v3269 = vshrl.u32 2475754826, %v3266
        %v3270 = vor.u32 %v3268, %v3269
        %v3271 = vshll.u32 2475754826, %v3265
        %v3272 = vshrl.u32 2131351028, %v3266
        %v3273 = vor.u32 %v3271, %v3272
        %v3274 = vshll.u32 2131351028, %v3265
        %v3275 = vshrl.u32 2102212464, %v3266
        %v3276 = vor.u32 %v3274, %v3275
        %v3277 = vshll.u32 2102212464, %v3265
        %v3278 = vshrl.u32 920167782, %v3266
        %v3279 = vor.u32 %v3277, %v3278
        %v3280 = vshll.u32 920167782, %v3265
        %v3281 = vshrl.u32 1326507024, %v3266
        %v3282 = vor.u32 %v3280, %v3281
        %vm3283 = vcmp.lt.s32.totalorder %v3264, 1
        %vm3284 = vcmp.lt.s32.totalorder %v3264, 2
        %vm3285 = vcmp.lt.s32.totalorder %v3264, 3
        %vm3286 = vcmp.lt.s32.totalorder %v3264, 4
        %v3287 = vsel %vm3283, %v3267, %v3270
        %v3288 = vsel %vm3286, %v3276, 2102212464
        %v3289 = vsel %vm3285, %v3273, %v3288
        %v3290 = vsel %vm3284, %v3287, %v3289
        %v3291 = vsel %vm3283, %v3270, %v3273
        %v3292 = vsel %vm3286, %v3279, 920167782
        %v3293 = vsel %vm3285, %v3276, %v3292
        %v3294 = vsel %vm3284, %v3291, %v3293
        %v3295 = vsel %vm3283, %v3273, %v3276
        %v3296 = vsel %vm3286, %v3282, 1326507024
        %v3297 = vsel %vm3285, %v3279, %v3296
        %v3298 = vsel %vm3284, %v3295, %v3297
        %v3299 = vshll.u32 %v3259, 8
        %v3300 = vmul.u32.u64.compose %v3299, %v3298
        %v3301 = vextract.low.u32 %v3300
        %v3302 = vextract.high.u32 %v3300
        %v3303 = vmul.u32.u64.compose %v3299, %v3294
        %v3304 = vextract.low.u32 %v3303
        %v3305 = vextract.high.u32 %v3303
        %v3306 = vmul.u32 %v3299, %v3290
        %v3307 = vadd.s32 %v3302, %v3304
        %vm3308 = vc.u32 %v3302, %v3304
        %v3309 = vadd.s32 %v3305, 1
        %v3310 = vsel %vm3308, %v3309, %v3305
        %v3311 = vadd.s32 %v3306, %v3310
        %v3312 = vadd.s32 %v3311, 536870912
        %v3313 = vshrl.u32 %v3312, 30
        %v3314 = vshll.u32 %v3313, 30
        %v3315 = vsub.s32 %v3311, %v3314
        %vm3316 = vcmp.lt.s32.totalorder %v3315, 0
        %v3317 = vsub.s32 0, %v3315
        %v3318 = vsel %vm3316, %v3317, %v3315
        %v3319 = vclz %v3318
        %v3320 = vsub.s32 %v3319, 2
        %vm3321 = vcmp.gt.s32.totalorder 0, %v3320
        %v3322 = vsel %vm3321, 0, %v3320
        %v3323 = vsub.s32 32, %v3322
        %v3324 = vshll.u32 %v3315, %v3322
        %v3325 = vshrl.u32 %v3307, %v3323
        %v3326 = vor.u32 %v3324, %v3325
        %v3327 = vsub.s32 4294967266, %v3322
        %v3328 = vadd.s32 %v3327, 127
        %v3329 = vshll.u32 %v3328, 23
        %v3330 = vor.u32 4788187, %v3329
        %v3331 = vand.u32 2147483647, %v3330
        %v3333 = vcvt.s32.f32 %v3326
        %v3334 = vmul.f32 %v3333, %v3331
        %v3335 = vxor.u32 %v3334, 2147483648
        %v3336 = vsel %vm3253, %v3335, %v3334
        %v3337 = vsub.s32 4, %v3313
        %v3338 = vsel %vm3253, %v3337, %v3313
        %v3339 = vsel %vm3252, %v716, %v3336
        %v3340 = vsel %vm3252, 0, %v3338
        %v3341 = vcosq.f32.pop %v3339
        %v3342 = vsinq.f32.pop %v3339
        %vm3343 = vweird.f32 %v716
        %v3344 = vadd.s32 %v3340, 3
        %v3345 = vand.u32 %v3344, 3
        %vm3346 = vcmp.lt.s32.totalorder %v3345, 2
        %vm3347 = vcmp.eq.s32.totalorder %v3345, 0
        %v3348 = vxor.u32 %v3342, 2147483648
        %v3349 = vsel %vm3347, %v3341, %v3348
        %vm3350 = vcmp.eq.s32.totalorder %v3345, 2
        %v3351 = vxor.u32 %v3341, 2147483648
        %v3352 = vsel %vm3350, %v3351, %v3342
        %v3353 = vsel %vm3346, %v3349, %v3352
        %v3354 = vsel %vm3343, nan, %v3353
        %v3355 = vand.u32 2147483647, %v803
        %vm3356 = vcmp.le.f32.partialorder %v3355, 0.7853982
        %vm3357 = vcmp.lt.s32.totalorder %v803, 0
        %v3358 = vand.u32 %v803, 2139095040
        %v3359 = vshrl.u32 %v3358, 23
        %v3360 = vsub.s32 %v3359, 127
        %v3361 = vand.u32 2147483647, %v803
        %v3362 = vand.u32 %v3361, 8388607
        %v3363 = vor.u32 %v3362, 8388608
        %v3364 = vsub.s32 0, %v3363
        %v3365 = vadd.s32 %v3360, 1
        %vm3366 = vcmp.gt.s32.totalorder %v3365, 0
        %v3367 = vsel %vm3366, %v3365, 0
        %v3368 = vshrl.u32 %v3367, 5
        %v3369 = vand.u32 %v3367, 31
        %v3370 = vsub.s32 32, %v3369
        %v3371 = vshrl.u32 683565275, %v3370
        %v3372 = vshll.u32 683565275, %v3369
        %v3373 = vshrl.u32 2475754826, %v3370
        %v3374 = vor.u32 %v3372, %v3373
        %v3375 = vshll.u32 2475754826, %v3369
        %v3376 = vshrl.u32 2131351028, %v3370
        %v3377 = vor.u32 %v3375, %v3376
        %v3378 = vshll.u32 2131351028, %v3369
        %v3379 = vshrl.u32 2102212464, %v3370
        %v3380 = vor.u32 %v3378, %v3379
        %v3381 = vshll.u32 2102212464, %v3369
        %v3382 = vshrl.u32 920167782, %v3370
        %v3383 = vor.u32 %v3381, %v3382
        %v3384 = vshll.u32 920167782, %v3369
        %v3385 = vshrl.u32 1326507024, %v3370
        %v3386 = vor.u32 %v3384, %v3385
        %vm3387 = vcmp.lt.s32.totalorder %v3368, 1
        %vm3388 = vcmp.lt.s32.totalorder %v3368, 2
        %vm3389 = vcmp.lt.s32.totalorder %v3368, 3
        %vm3390 = vcmp.lt.s32.totalorder %v3368, 4
        %v3391 = vsel %vm3387, %v3371, %v3374
        %v3392 = vsel %vm3390, %v3380, 2102212464
        %v3393 = vsel %vm3389, %v3377, %v3392
        %v3394 = vsel %vm3388, %v3391, %v3393
        %v3395 = vsel %vm3387, %v3374, %v3377
        %v3396 = vsel %vm3390, %v3383, 920167782
        %v3397 = vsel %vm3389, %v3380, %v3396
        %v3398 = vsel %vm3388, %v3395, %v3397
        %v3399 = vsel %vm3387, %v3377, %v3380
        %v3400 = vsel %vm3390, %v3386, 1326507024
        %v3401 = vsel %vm3389, %v3383, %v3400
        %v3402 = vsel %vm3388, %v3399, %v3401
        %v3403 = vshll.u32 %v3363, 8
        %v3404 = vmul.u32.u64.compose %v3403, %v3402
        %v3405 = vextract.low.u32 %v3404
        %v3406 = vextract.high.u32 %v3404
        %v3407 = vmul.u32.u64.compose %v3403, %v3398
        %v3408 = vextract.low.u32 %v3407
        %v3409 = vextract.high.u32 %v3407
        %v3410 = vmul.u32 %v3403, %v3394
        %v3411 = vadd.s32 %v3406, %v3408
        %vm3412 = vc.u32 %v3406, %v3408
        %v3413 = vadd.s32 %v3409, 1
        %v3414 = vsel %vm3412, %v3413, %v3409
        %v3415 = vadd.s32 %v3410, %v3414
        %v3416 = vadd.s32 %v3415, 536870912
        %v3417 = vshrl.u32 %v3416, 30
        %v3418 = vshll.u32 %v3417, 30
        %v3419 = vsub.s32 %v3415, %v3418
        %vm3420 = vcmp.lt.s32.totalorder %v3419, 0
        %v3421 = vsub.s32 0, %v3419
        %v3422 = vsel %vm3420, %v3421, %v3419
        %v3423 = vclz %v3422
        %v3424 = vsub.s32 %v3423, 2
        %vm3425 = vcmp.gt.s32.totalorder 0, %v3424
        %v3426 = vsel %vm3425, 0, %v3424
        %v3427 = vsub.s32 32, %v3426
        %v3428 = vshll.u32 %v3419, %v3426
        %v3429 = vshrl.u32 %v3411, %v3427
        %v3430 = vor.u32 %v3428, %v3429
        %v3431 = vsub.s32 4294967266, %v3426
        %v3432 = vadd.s32 %v3431, 127
        %v3433 = vshll.u32 %v3432, 23
        %v3434 = vor.u32 4788187, %v3433
        %v3435 = vand.u32 2147483647, %v3434
        %v3437 = vcvt.s32.f32 %v3430
        %v3438 = vmul.f32 %v3437, %v3435
        %v3439 = vxor.u32 %v3438, 2147483648
        %v3440 = vsel %vm3357, %v3439, %v3438
        %v3441 = vsub.s32 4, %v3417
        %v3442 = vsel %vm3357, %v3441, %v3417
        %v3443 = vsel %vm3356, %v803, %v3440
        %v3444 = vsel %vm3356, 0, %v3442
        %v3445 = vcosq.f32.pop %v3443
        %v3446 = vsinq.f32.pop %v3443
        %vm3447 = vweird.f32 %v803
        %v3448 = vadd.s32 %v3444, 3
        %v3449 = vand.u32 %v3448, 3
        %vm3450 = vcmp.lt.s32.totalorder %v3449, 2
        %vm3451 = vcmp.eq.s32.totalorder %v3449, 0
        %v3452 = vxor.u32 %v3446, 2147483648
        %v3453 = vsel %vm3451, %v3445, %v3452
        %vm3454 = vcmp.eq.s32.totalorder %v3449, 2
        %v3455 = vxor.u32 %v3445, 2147483648
        %v3456 = vsel %vm3454, %v3455, %v3446
        %v3457 = vsel %vm3450, %v3453, %v3456
        %v3458 = vsel %vm3447, nan, %v3457
        %v3459 = vand.u32 2147483647, %v805
        %vm3460 = vcmp.le.f32.partialorder %v3459, 0.7853982
        %vm3461 = vcmp.lt.s32.totalorder %v805, 0
        %v3462 = vand.u32 %v805, 2139095040
        %v3463 = vshrl.u32 %v3462, 23
        %v3464 = vsub.s32 %v3463, 127
        %v3465 = vand.u32 2147483647, %v805
        %v3466 = vand.u32 %v3465, 8388607
        %v3467 = vor.u32 %v3466, 8388608
        %v3468 = vsub.s32 0, %v3467
        %v3469 = vadd.s32 %v3464, 1
        %vm3470 = vcmp.gt.s32.totalorder %v3469, 0
        %v3471 = vsel %vm3470, %v3469, 0
        %v3472 = vshrl.u32 %v3471, 5
        %v3473 = vand.u32 %v3471, 31
        %v3474 = vsub.s32 32, %v3473
        %v3475 = vshrl.u32 683565275, %v3474
        %v3476 = vshll.u32 683565275, %v3473
        %v3477 = vshrl.u32 2475754826, %v3474
        %v3478 = vor.u32 %v3476, %v3477
        %v3479 = vshll.u32 2475754826, %v3473
        %v3480 = vshrl.u32 2131351028, %v3474
        %v3481 = vor.u32 %v3479, %v3480
        %v3482 = vshll.u32 2131351028, %v3473
        %v3483 = vshrl.u32 2102212464, %v3474
        %v3484 = vor.u32 %v3482, %v3483
        %v3485 = vshll.u32 2102212464, %v3473
        %v3486 = vshrl.u32 920167782, %v3474
        %v3487 = vor.u32 %v3485, %v3486
        %v3488 = vshll.u32 920167782, %v3473
        %v3489 = vshrl.u32 1326507024, %v3474
        %v3490 = vor.u32 %v3488, %v3489
        %vm3491 = vcmp.lt.s32.totalorder %v3472, 1
        %vm3492 = vcmp.lt.s32.totalorder %v3472, 2
        %vm3493 = vcmp.lt.s32.totalorder %v3472, 3
        %vm3494 = vcmp.lt.s32.totalorder %v3472, 4
        %v3495 = vsel %vm3491, %v3475, %v3478
        %v3496 = vsel %vm3494, %v3484, 2102212464
        %v3497 = vsel %vm3493, %v3481, %v3496
        %v3498 = vsel %vm3492, %v3495, %v3497
        %v3499 = vsel %vm3491, %v3478, %v3481
        %v3500 = vsel %vm3494, %v3487, 920167782
        %v3501 = vsel %vm3493, %v3484, %v3500
        %v3502 = vsel %vm3492, %v3499, %v3501
        %v3503 = vsel %vm3491, %v3481, %v3484
        %v3504 = vsel %vm3494, %v3490, 1326507024
        %v3505 = vsel %vm3493, %v3487, %v3504
        %v3506 = vsel %vm3492, %v3503, %v3505
        %v3507 = vshll.u32 %v3467, 8
        %v3508 = vmul.u32.u64.compose %v3507, %v3506
        %v3509 = vextract.low.u32 %v3508
        %v3510 = vextract.high.u32 %v3508
        %v3511 = vmul.u32.u64.compose %v3507, %v3502
        %v3512 = vextract.low.u32 %v3511
        %v3513 = vextract.high.u32 %v3511
        %v3514 = vmul.u32 %v3507, %v3498
        %v3515 = vadd.s32 %v3510, %v3512
        %vm3516 = vc.u32 %v3510, %v3512
        %v3517 = vadd.s32 %v3513, 1
        %v3518 = vsel %vm3516, %v3517, %v3513
        %v3519 = vadd.s32 %v3514, %v3518
        %v3520 = vadd.s32 %v3519, 536870912
        %v3521 = vshrl.u32 %v3520, 30
        %v3522 = vshll.u32 %v3521, 30
        %v3523 = vsub.s32 %v3519, %v3522
        %vm3524 = vcmp.lt.s32.totalorder %v3523, 0
        %v3525 = vsub.s32 0, %v3523
        %v3526 = vsel %vm3524, %v3525, %v3523
        %v3527 = vclz %v3526
        %v3528 = vsub.s32 %v3527, 2
        %vm3529 = vcmp.gt.s32.totalorder 0, %v3528
        %v3530 = vsel %vm3529, 0, %v3528
        %v3531 = vsub.s32 32, %v3530
        %v3532 = vshll.u32 %v3523, %v3530
        %v3533 = vshrl.u32 %v3515, %v3531
        %v3534 = vor.u32 %v3532, %v3533
        %v3535 = vsub.s32 4294967266, %v3530
        %v3536 = vadd.s32 %v3535, 127
        %v3537 = vshll.u32 %v3536, 23
        %v3538 = vor.u32 4788187, %v3537
        %v3539 = vand.u32 2147483647, %v3538
        %v3541 = vcvt.s32.f32 %v3534
        %v3542 = vmul.f32 %v3541, %v3539
        %v3543 = vxor.u32 %v3542, 2147483648
        %v3544 = vsel %vm3461, %v3543, %v3542
        %v3545 = vsub.s32 4, %v3521
        %v3546 = vsel %vm3461, %v3545, %v3521
        %v3547 = vsel %vm3460, %v805, %v3544
        %v3548 = vsel %vm3460, 0, %v3546
        %v3549 = vcosq.f32.pop %v3547
        %v3550 = vsinq.f32.pop %v3547
        %vm3551 = vweird.f32 %v805
        %v3552 = vadd.s32 %v3548, 3
        %v3553 = vand.u32 %v3552, 3
        %vm3554 = vcmp.lt.s32.totalorder %v3553, 2
        %vm3555 = vcmp.eq.s32.totalorder %v3553, 0
        %v3556 = vxor.u32 %v3550, 2147483648
        %v3557 = vsel %vm3555, %v3549, %v3556
        %vm3558 = vcmp.eq.s32.totalorder %v3553, 2
        %v3559 = vxor.u32 %v3549, 2147483648
        %v3560 = vsel %vm3558, %v3559, %v3550
        %v3561 = vsel %vm3554, %v3557, %v3560
        %v3562 = vsel %vm3551, nan, %v3561
        %v3563 = vand.u32 2147483647, %v892
        %vm3564 = vcmp.le.f32.partialorder %v3563, 0.7853982
        %vm3565 = vcmp.lt.s32.totalorder %v892, 0
        %v3566 = vand.u32 %v892, 2139095040
        %v3567 = vshrl.u32 %v3566, 23
        %v3568 = vsub.s32 %v3567, 127
        %v3569 = vand.u32 2147483647, %v892
        %v3570 = vand.u32 %v3569, 8388607
        %v3571 = vor.u32 %v3570, 8388608
        %v3572 = vsub.s32 0, %v3571
        %v3573 = vadd.s32 %v3568, 1
        %vm3574 = vcmp.gt.s32.totalorder %v3573, 0
        %v3575 = vsel %vm3574, %v3573, 0
        %v3576 = vshrl.u32 %v3575, 5
        %v3577 = vand.u32 %v3575, 31
        %v3578 = vsub.s32 32, %v3577
        %v3579 = vshrl.u32 683565275, %v3578
        %v3580 = vshll.u32 683565275, %v3577
        %v3581 = vshrl.u32 2475754826, %v3578
        %v3582 = vor.u32 %v3580, %v3581
        %v3583 = vshll.u32 2475754826, %v3577
        %v3584 = vshrl.u32 2131351028, %v3578
        %v3585 = vor.u32 %v3583, %v3584
        %v3586 = vshll.u32 2131351028, %v3577
        %v3587 = vshrl.u32 2102212464, %v3578
        %v3588 = vor.u32 %v3586, %v3587
        %v3589 = vshll.u32 2102212464, %v3577
        %v3590 = vshrl.u32 920167782, %v3578
        %v3591 = vor.u32 %v3589, %v3590
        %v3592 = vshll.u32 920167782, %v3577
        %v3593 = vshrl.u32 1326507024, %v3578
        %v3594 = vor.u32 %v3592, %v3593
        %vm3595 = vcmp.lt.s32.totalorder %v3576, 1
        %vm3596 = vcmp.lt.s32.totalorder %v3576, 2
        %vm3597 = vcmp.lt.s32.totalorder %v3576, 3
        %vm3598 = vcmp.lt.s32.totalorder %v3576, 4
        %v3599 = vsel %vm3595, %v3579, %v3582
        %v3600 = vsel %vm3598, %v3588, 2102212464
        %v3601 = vsel %vm3597, %v3585, %v3600
        %v3602 = vsel %vm3596, %v3599, %v3601
        %v3603 = vsel %vm3595, %v3582, %v3585
        %v3604 = vsel %vm3598, %v3591, 920167782
        %v3605 = vsel %vm3597, %v3588, %v3604
        %v3606 = vsel %vm3596, %v3603, %v3605
        %v3607 = vsel %vm3595, %v3585, %v3588
        %v3608 = vsel %vm3598, %v3594, 1326507024
        %v3609 = vsel %vm3597, %v3591, %v3608
        %v3610 = vsel %vm3596, %v3607, %v3609
        %v3611 = vshll.u32 %v3571, 8
        %v3612 = vmul.u32.u64.compose %v3611, %v3610
        %v3613 = vextract.low.u32 %v3612
        %v3614 = vextract.high.u32 %v3612
        %v3615 = vmul.u32.u64.compose %v3611, %v3606
        %v3616 = vextract.low.u32 %v3615
        %v3617 = vextract.high.u32 %v3615
        %v3618 = vmul.u32 %v3611, %v3602
        %v3619 = vadd.s32 %v3614, %v3616
        %vm3620 = vc.u32 %v3614, %v3616
        %v3621 = vadd.s32 %v3617, 1
        %v3622 = vsel %vm3620, %v3621, %v3617
        %v3623 = vadd.s32 %v3618, %v3622
        %v3624 = vadd.s32 %v3623, 536870912
        %v3625 = vshrl.u32 %v3624, 30
        %v3626 = vshll.u32 %v3625, 30
        %v3627 = vsub.s32 %v3623, %v3626
        %vm3628 = vcmp.lt.s32.totalorder %v3627, 0
        %v3629 = vsub.s32 0, %v3627
        %v3630 = vsel %vm3628, %v3629, %v3627
        %v3631 = vclz %v3630
        %v3632 = vsub.s32 %v3631, 2
        %vm3633 = vcmp.gt.s32.totalorder 0, %v3632
        %v3634 = vsel %vm3633, 0, %v3632
        %v3635 = vsub.s32 32, %v3634
        %v3636 = vshll.u32 %v3627, %v3634
        %v3637 = vshrl.u32 %v3619, %v3635
        %v3638 = vor.u32 %v3636, %v3637
        %v3639 = vsub.s32 4294967266, %v3634
        %v3640 = vadd.s32 %v3639, 127
        %v3641 = vshll.u32 %v3640, 23
        %v3642 = vor.u32 4788187, %v3641
        %v3643 = vand.u32 2147483647, %v3642
        %v3645 = vcvt.s32.f32 %v3638
        %v3646 = vmul.f32 %v3645, %v3643
        %v3647 = vxor.u32 %v3646, 2147483648
        %v3648 = vsel %vm3565, %v3647, %v3646
        %v3649 = vsub.s32 4, %v3625
        %v3650 = vsel %vm3565, %v3649, %v3625
        %v3651 = vsel %vm3564, %v892, %v3648
        %v3652 = vsel %vm3564, 0, %v3650
        %v3653 = vcosq.f32.pop %v3651
        %v3654 = vsinq.f32.pop %v3651
        %vm3655 = vweird.f32 %v892
        %v3656 = vadd.s32 %v3652, 3
        %v3657 = vand.u32 %v3656, 3
        %vm3658 = vcmp.lt.s32.totalorder %v3657, 2
        %vm3659 = vcmp.eq.s32.totalorder %v3657, 0
        %v3660 = vxor.u32 %v3654, 2147483648
        %v3661 = vsel %vm3659, %v3653, %v3660
        %vm3662 = vcmp.eq.s32.totalorder %v3657, 2
        %v3663 = vxor.u32 %v3653, 2147483648
        %v3664 = vsel %vm3662, %v3663, %v3654
        %v3665 = vsel %vm3658, %v3661, %v3664
        %v3666 = vsel %vm3655, nan, %v3665
        %v3667 = vand.u32 2147483647, %v894
        %vm3668 = vcmp.le.f32.partialorder %v3667, 0.7853982
        %vm3669 = vcmp.lt.s32.totalorder %v894, 0
        %v3670 = vand.u32 %v894, 2139095040
        %v3671 = vshrl.u32 %v3670, 23
        %v3672 = vsub.s32 %v3671, 127
        %v3673 = vand.u32 2147483647, %v894
        %v3674 = vand.u32 %v3673, 8388607
        %v3675 = vor.u32 %v3674, 8388608
        %v3676 = vsub.s32 0, %v3675
        %v3677 = vadd.s32 %v3672, 1
        %vm3678 = vcmp.gt.s32.totalorder %v3677, 0
        %v3679 = vsel %vm3678, %v3677, 0
        %v3680 = vshrl.u32 %v3679, 5
        %v3681 = vand.u32 %v3679, 31
        %v3682 = vsub.s32 32, %v3681
        %v3683 = vshrl.u32 683565275, %v3682
        %v3684 = vshll.u32 683565275, %v3681
        %v3685 = vshrl.u32 2475754826, %v3682
        %v3686 = vor.u32 %v3684, %v3685
        %v3687 = vshll.u32 2475754826, %v3681
        %v3688 = vshrl.u32 2131351028, %v3682
        %v3689 = vor.u32 %v3687, %v3688
        %v3690 = vshll.u32 2131351028, %v3681
        %v3691 = vshrl.u32 2102212464, %v3682
        %v3692 = vor.u32 %v3690, %v3691
        %v3693 = vshll.u32 2102212464, %v3681
        %v3694 = vshrl.u32 920167782, %v3682
        %v3695 = vor.u32 %v3693, %v3694
        %v3696 = vshll.u32 920167782, %v3681
        %v3697 = vshrl.u32 1326507024, %v3682
        %v3698 = vor.u32 %v3696, %v3697
        %vm3699 = vcmp.lt.s32.totalorder %v3680, 1
        %vm3700 = vcmp.lt.s32.totalorder %v3680, 2
        %vm3701 = vcmp.lt.s32.totalorder %v3680, 3
        %vm3702 = vcmp.lt.s32.totalorder %v3680, 4
        %v3703 = vsel %vm3699, %v3683, %v3686
        %v3704 = vsel %vm3702, %v3692, 2102212464
        %v3705 = vsel %vm3701, %v3689, %v3704
        %v3706 = vsel %vm3700, %v3703, %v3705
        %v3707 = vsel %vm3699, %v3686, %v3689
        %v3708 = vsel %vm3702, %v3695, 920167782
        %v3709 = vsel %vm3701, %v3692, %v3708
        %v3710 = vsel %vm3700, %v3707, %v3709
        %v3711 = vsel %vm3699, %v3689, %v3692
        %v3712 = vsel %vm3702, %v3698, 1326507024
        %v3713 = vsel %vm3701, %v3695, %v3712
        %v3714 = vsel %vm3700, %v3711, %v3713
        %v3715 = vshll.u32 %v3675, 8
        %v3716 = vmul.u32.u64.compose %v3715, %v3714
        %v3717 = vextract.low.u32 %v3716
        %v3718 = vextract.high.u32 %v3716
        %v3719 = vmul.u32.u64.compose %v3715, %v3710
        %v3720 = vextract.low.u32 %v3719
        %v3721 = vextract.high.u32 %v3719
        %v3722 = vmul.u32 %v3715, %v3706
        %v3723 = vadd.s32 %v3718, %v3720
        %vm3724 = vc.u32 %v3718, %v3720
        %v3725 = vadd.s32 %v3721, 1
        %v3726 = vsel %vm3724, %v3725, %v3721
        %v3727 = vadd.s32 %v3722, %v3726
        %v3728 = vadd.s32 %v3727, 536870912
        %v3729 = vshrl.u32 %v3728, 30
        %v3730 = vshll.u32 %v3729, 30
        %v3731 = vsub.s32 %v3727, %v3730
        %vm3732 = vcmp.lt.s32.totalorder %v3731, 0
        %v3733 = vsub.s32 0, %v3731
        %v3734 = vsel %vm3732, %v3733, %v3731
        %v3735 = vclz %v3734
        %v3736 = vsub.s32 %v3735, 2
        %vm3737 = vcmp.gt.s32.totalorder 0, %v3736
        %v3738 = vsel %vm3737, 0, %v3736
        %v3739 = vsub.s32 32, %v3738
        %v3740 = vshll.u32 %v3731, %v3738
        %v3741 = vshrl.u32 %v3723, %v3739
        %v3742 = vor.u32 %v3740, %v3741
        %v3743 = vsub.s32 4294967266, %v3738
        %v3744 = vadd.s32 %v3743, 127
        %v3745 = vshll.u32 %v3744, 23
        %v3746 = vor.u32 4788187, %v3745
        %v3747 = vand.u32 2147483647, %v3746
        %v3749 = vcvt.s32.f32 %v3742
        %v3750 = vmul.f32 %v3749, %v3747
        %v3751 = vxor.u32 %v3750, 2147483648
        %v3752 = vsel %vm3669, %v3751, %v3750
        %v3753 = vsub.s32 4, %v3729
        %v3754 = vsel %vm3669, %v3753, %v3729
        %v3755 = vsel %vm3668, %v894, %v3752
        %v3756 = vsel %vm3668, 0, %v3754
        %v3757 = vcosq.f32.pop %v3755
        %v3758 = vsinq.f32.pop %v3755
        %vm3759 = vweird.f32 %v894
        %v3760 = vadd.s32 %v3756, 3
        %v3761 = vand.u32 %v3760, 3
        %vm3762 = vcmp.lt.s32.totalorder %v3761, 2
        %vm3763 = vcmp.eq.s32.totalorder %v3761, 0
        %v3764 = vxor.u32 %v3758, 2147483648
        %v3765 = vsel %vm3763, %v3757, %v3764
        %vm3766 = vcmp.eq.s32.totalorder %v3761, 2
        %v3767 = vxor.u32 %v3757, 2147483648
        %v3768 = vsel %vm3766, %v3767, %v3758
        %v3769 = vsel %vm3762, %v3765, %v3768
        %v3770 = vsel %vm3759, nan, %v3769
        %v3771 = vand.u32 2147483647, %v981
        %vm3772 = vcmp.le.f32.partialorder %v3771, 0.7853982
        %vm3773 = vcmp.lt.s32.totalorder %v981, 0
        %v3774 = vand.u32 %v981, 2139095040
        %v3775 = vshrl.u32 %v3774, 23
        %v3776 = vsub.s32 %v3775, 127
        %v3777 = vand.u32 2147483647, %v981
        %v3778 = vand.u32 %v3777, 8388607
        %v3779 = vor.u32 %v3778, 8388608
        %v3780 = vsub.s32 0, %v3779
        %v3781 = vadd.s32 %v3776, 1
        %vm3782 = vcmp.gt.s32.totalorder %v3781, 0
        %v3783 = vsel %vm3782, %v3781, 0
        %v3784 = vshrl.u32 %v3783, 5
        %v3785 = vand.u32 %v3783, 31
        %v3786 = vsub.s32 32, %v3785
        %v3787 = vshrl.u32 683565275, %v3786
        %v3788 = vshll.u32 683565275, %v3785
        %v3789 = vshrl.u32 2475754826, %v3786
        %v3790 = vor.u32 %v3788, %v3789
        %v3791 = vshll.u32 2475754826, %v3785
        %v3792 = vshrl.u32 2131351028, %v3786
        %v3793 = vor.u32 %v3791, %v3792
        %v3794 = vshll.u32 2131351028, %v3785
        %v3795 = vshrl.u32 2102212464, %v3786
        %v3796 = vor.u32 %v3794, %v3795
        %v3797 = vshll.u32 2102212464, %v3785
        %v3798 = vshrl.u32 920167782, %v3786
        %v3799 = vor.u32 %v3797, %v3798
        %v3800 = vshll.u32 920167782, %v3785
        %v3801 = vshrl.u32 1326507024, %v3786
        %v3802 = vor.u32 %v3800, %v3801
        %vm3803 = vcmp.lt.s32.totalorder %v3784, 1
        %vm3804 = vcmp.lt.s32.totalorder %v3784, 2
        %vm3805 = vcmp.lt.s32.totalorder %v3784, 3
        %vm3806 = vcmp.lt.s32.totalorder %v3784, 4
        %v3807 = vsel %vm3803, %v3787, %v3790
        %v3808 = vsel %vm3806, %v3796, 2102212464
        %v3809 = vsel %vm3805, %v3793, %v3808
        %v3810 = vsel %vm3804, %v3807, %v3809
        %v3811 = vsel %vm3803, %v3790, %v3793
        %v3812 = vsel %vm3806, %v3799, 920167782
        %v3813 = vsel %vm3805, %v3796, %v3812
        %v3814 = vsel %vm3804, %v3811, %v3813
        %v3815 = vsel %vm3803, %v3793, %v3796
        %v3816 = vsel %vm3806, %v3802, 1326507024
        %v3817 = vsel %vm3805, %v3799, %v3816
        %v3818 = vsel %vm3804, %v3815, %v3817
        %v3819 = vshll.u32 %v3779, 8
        %v3820 = vmul.u32.u64.compose %v3819, %v3818
        %v3821 = vextract.low.u32 %v3820
        %v3822 = vextract.high.u32 %v3820
        %v3823 = vmul.u32.u64.compose %v3819, %v3814
        %v3824 = vextract.low.u32 %v3823
        %v3825 = vextract.high.u32 %v3823
        %v3826 = vmul.u32 %v3819, %v3810
        %v3827 = vadd.s32 %v3822, %v3824
        %vm3828 = vc.u32 %v3822, %v3824
        %v3829 = vadd.s32 %v3825, 1
        %v3830 = vsel %vm3828, %v3829, %v3825
        %v3831 = vadd.s32 %v3826, %v3830
        %v3832 = vadd.s32 %v3831, 536870912
        %v3833 = vshrl.u32 %v3832, 30
        %v3834 = vshll.u32 %v3833, 30
        %v3835 = vsub.s32 %v3831, %v3834
        %vm3836 = vcmp.lt.s32.totalorder %v3835, 0
        %v3837 = vsub.s32 0, %v3835
        %v3838 = vsel %vm3836, %v3837, %v3835
        %v3839 = vclz %v3838
        %v3840 = vsub.s32 %v3839, 2
        %vm3841 = vcmp.gt.s32.totalorder 0, %v3840
        %v3842 = vsel %vm3841, 0, %v3840
        %v3843 = vsub.s32 32, %v3842
        %v3844 = vshll.u32 %v3835, %v3842
        %v3845 = vshrl.u32 %v3827, %v3843
        %v3846 = vor.u32 %v3844, %v3845
        %v3847 = vsub.s32 4294967266, %v3842
        %v3848 = vadd.s32 %v3847, 127
        %v3849 = vshll.u32 %v3848, 23
        %v3850 = vor.u32 4788187, %v3849
        %v3851 = vand.u32 2147483647, %v3850
        %v3853 = vcvt.s32.f32 %v3846
        %v3854 = vmul.f32 %v3853, %v3851
        %v3855 = vxor.u32 %v3854, 2147483648
        %v3856 = vsel %vm3773, %v3855, %v3854
        %v3857 = vsub.s32 4, %v3833
        %v3858 = vsel %vm3773, %v3857, %v3833
        %v3859 = vsel %vm3772, %v981, %v3856
        %v3860 = vsel %vm3772, 0, %v3858
        %v3861 = vcosq.f32.pop %v3859
        %v3862 = vsinq.f32.pop %v3859
        %vm3863 = vweird.f32 %v981
        %v3864 = vadd.s32 %v3860, 3
        %v3865 = vand.u32 %v3864, 3
        %vm3866 = vcmp.lt.s32.totalorder %v3865, 2
        %vm3867 = vcmp.eq.s32.totalorder %v3865, 0
        %v3868 = vxor.u32 %v3862, 2147483648
        %v3869 = vsel %vm3867, %v3861, %v3868
        %vm3870 = vcmp.eq.s32.totalorder %v3865, 2
        %v3871 = vxor.u32 %v3861, 2147483648
        %v3872 = vsel %vm3870, %v3871, %v3862
        %v3873 = vsel %vm3866, %v3869, %v3872
        %v3874 = vsel %vm3863, nan, %v3873
        %v3875 = vand.u32 2147483647, %v983
        %vm3876 = vcmp.le.f32.partialorder %v3875, 0.7853982
        %vm3877 = vcmp.lt.s32.totalorder %v983, 0
        %v3878 = vand.u32 %v983, 2139095040
        %v3879 = vshrl.u32 %v3878, 23
        %v3880 = vsub.s32 %v3879, 127
        %v3881 = vand.u32 2147483647, %v983
        %v3882 = vand.u32 %v3881, 8388607
        %v3883 = vor.u32 %v3882, 8388608
        %v3884 = vsub.s32 0, %v3883
        %v3885 = vadd.s32 %v3880, 1
        %vm3886 = vcmp.gt.s32.totalorder %v3885, 0
        %v3887 = vsel %vm3886, %v3885, 0
        %v3888 = vshrl.u32 %v3887, 5
        %v3889 = vand.u32 %v3887, 31
        %v3890 = vsub.s32 32, %v3889
        %v3891 = vshrl.u32 683565275, %v3890
        %v3892 = vshll.u32 683565275, %v3889
        %v3893 = vshrl.u32 2475754826, %v3890
        %v3894 = vor.u32 %v3892, %v3893
        %v3895 = vshll.u32 2475754826, %v3889
        %v3896 = vshrl.u32 2131351028, %v3890
        %v3897 = vor.u32 %v3895, %v3896
        %v3898 = vshll.u32 2131351028, %v3889
        %v3899 = vshrl.u32 2102212464, %v3890
        %v3900 = vor.u32 %v3898, %v3899
        %v3901 = vshll.u32 2102212464, %v3889
        %v3902 = vshrl.u32 920167782, %v3890
        %v3903 = vor.u32 %v3901, %v3902
        %v3904 = vshll.u32 920167782, %v3889
        %v3905 = vshrl.u32 1326507024, %v3890
        %v3906 = vor.u32 %v3904, %v3905
        %vm3907 = vcmp.lt.s32.totalorder %v3888, 1
        %vm3908 = vcmp.lt.s32.totalorder %v3888, 2
        %vm3909 = vcmp.lt.s32.totalorder %v3888, 3
        %vm3910 = vcmp.lt.s32.totalorder %v3888, 4
        %v3911 = vsel %vm3907, %v3891, %v3894
        %v3912 = vsel %vm3910, %v3900, 2102212464
        %v3913 = vsel %vm3909, %v3897, %v3912
        %v3914 = vsel %vm3908, %v3911, %v3913
        %v3915 = vsel %vm3907, %v3894, %v3897
        %v3916 = vsel %vm3910, %v3903, 920167782
        %v3917 = vsel %vm3909, %v3900, %v3916
        %v3918 = vsel %vm3908, %v3915, %v3917
        %v3919 = vsel %vm3907, %v3897, %v3900
        %v3920 = vsel %vm3910, %v3906, 1326507024
        %v3921 = vsel %vm3909, %v3903, %v3920
        %v3922 = vsel %vm3908, %v3919, %v3921
        %v3923 = vshll.u32 %v3883, 8
        %v3924 = vmul.u32.u64.compose %v3923, %v3922
        %v3925 = vextract.low.u32 %v3924
        %v3926 = vextract.high.u32 %v3924
        %v3927 = vmul.u32.u64.compose %v3923, %v3918
        %v3928 = vextract.low.u32 %v3927
        %v3929 = vextract.high.u32 %v3927
        %v3930 = vmul.u32 %v3923, %v3914
        %v3931 = vadd.s32 %v3926, %v3928
        %vm3932 = vc.u32 %v3926, %v3928
        %v3933 = vadd.s32 %v3929, 1
        %v3934 = vsel %vm3932, %v3933, %v3929
        %v3935 = vadd.s32 %v3930, %v3934
        %v3936 = vadd.s32 %v3935, 536870912
        %v3937 = vshrl.u32 %v3936, 30
        %v3938 = vshll.u32 %v3937, 30
        %v3939 = vsub.s32 %v3935, %v3938
        %vm3940 = vcmp.lt.s32.totalorder %v3939, 0
        %v3941 = vsub.s32 0, %v3939
        %v3942 = vsel %vm3940, %v3941, %v3939
        %v3943 = vclz %v3942
        %v3944 = vsub.s32 %v3943, 2
        %vm3945 = vcmp.gt.s32.totalorder 0, %v3944
        %v3946 = vsel %vm3945, 0, %v3944
        %v3947 = vsub.s32 32, %v3946
        %v3948 = vshll.u32 %v3939, %v3946
        %v3949 = vshrl.u32 %v3931, %v3947
        %v3950 = vor.u32 %v3948, %v3949
        %v3951 = vsub.s32 4294967266, %v3946
        %v3952 = vadd.s32 %v3951, 127
        %v3953 = vshll.u32 %v3952, 23
        %v3954 = vor.u32 4788187, %v3953
        %v3955 = vand.u32 2147483647, %v3954
        %v3957 = vcvt.s32.f32 %v3950
        %v3958 = vmul.f32 %v3957, %v3955
        %v3959 = vxor.u32 %v3958, 2147483648
        %v3960 = vsel %vm3877, %v3959, %v3958
        %v3961 = vsub.s32 4, %v3937
        %v3962 = vsel %vm3877, %v3961, %v3937
        %v3963 = vsel %vm3876, %v983, %v3960
        %v3964 = vsel %vm3876, 0, %v3962
        %v3965 = vcosq.f32.pop %v3963
        %v3966 = vsinq.f32.pop %v3963
        %vm3967 = vweird.f32 %v983
        %v3968 = vadd.s32 %v3964, 3
        %v3969 = vand.u32 %v3968, 3
        %vm3970 = vcmp.lt.s32.totalorder %v3969, 2
        %vm3971 = vcmp.eq.s32.totalorder %v3969, 0
        %v3972 = vxor.u32 %v3966, 2147483648
        %v3973 = vsel %vm3971, %v3965, %v3972
        %vm3974 = vcmp.eq.s32.totalorder %v3969, 2
        %v3975 = vxor.u32 %v3965, 2147483648
        %v3976 = vsel %vm3974, %v3975, %v3966
        %v3977 = vsel %vm3970, %v3973, %v3976
        %v3978 = vsel %vm3967, nan, %v3977
        %v3979 = vand.u32 2147483647, %v1070
        %vm3980 = vcmp.le.f32.partialorder %v3979, 0.7853982
        %vm3981 = vcmp.lt.s32.totalorder %v1070, 0
        %v3982 = vand.u32 %v1070, 2139095040
        %v3983 = vshrl.u32 %v3982, 23
        %v3984 = vsub.s32 %v3983, 127
        %v3985 = vand.u32 2147483647, %v1070
        %v3986 = vand.u32 %v3985, 8388607
        %v3987 = vor.u32 %v3986, 8388608
        %v3988 = vsub.s32 0, %v3987
        %v3989 = vadd.s32 %v3984, 1
        %vm3990 = vcmp.gt.s32.totalorder %v3989, 0
        %v3991 = vsel %vm3990, %v3989, 0
        %v3992 = vshrl.u32 %v3991, 5
        %v3993 = vand.u32 %v3991, 31
        %v3994 = vsub.s32 32, %v3993
        %v3995 = vshrl.u32 683565275, %v3994
        %v3996 = vshll.u32 683565275, %v3993
        %v3997 = vshrl.u32 2475754826, %v3994
        %v3998 = vor.u32 %v3996, %v3997
        %v3999 = vshll.u32 2475754826, %v3993
        %v4000 = vshrl.u32 2131351028, %v3994
        %v4001 = vor.u32 %v3999, %v4000
        %v4002 = vshll.u32 2131351028, %v3993
        %v4003 = vshrl.u32 2102212464, %v3994
        %v4004 = vor.u32 %v4002, %v4003
        %v4005 = vshll.u32 2102212464, %v3993
        %v4006 = vshrl.u32 920167782, %v3994
        %v4007 = vor.u32 %v4005, %v4006
        %v4008 = vshll.u32 920167782, %v3993
        %v4009 = vshrl.u32 1326507024, %v3994
        %v4010 = vor.u32 %v4008, %v4009
        %vm4011 = vcmp.lt.s32.totalorder %v3992, 1
        %vm4012 = vcmp.lt.s32.totalorder %v3992, 2
        %vm4013 = vcmp.lt.s32.totalorder %v3992, 3
        %vm4014 = vcmp.lt.s32.totalorder %v3992, 4
        %v4015 = vsel %vm4011, %v3995, %v3998
        %v4016 = vsel %vm4014, %v4004, 2102212464
        %v4017 = vsel %vm4013, %v4001, %v4016
        %v4018 = vsel %vm4012, %v4015, %v4017
        %v4019 = vsel %vm4011, %v3998, %v4001
        %v4020 = vsel %vm4014, %v4007, 920167782
        %v4021 = vsel %vm4013, %v4004, %v4020
        %v4022 = vsel %vm4012, %v4019, %v4021
        %v4023 = vsel %vm4011, %v4001, %v4004
        %v4024 = vsel %vm4014, %v4010, 1326507024
        %v4025 = vsel %vm4013, %v4007, %v4024
        %v4026 = vsel %vm4012, %v4023, %v4025
        %v4027 = vshll.u32 %v3987, 8
        %v4028 = vmul.u32.u64.compose %v4027, %v4026
        %v4029 = vextract.low.u32 %v4028
        %v4030 = vextract.high.u32 %v4028
        %v4031 = vmul.u32.u64.compose %v4027, %v4022
        %v4032 = vextract.low.u32 %v4031
        %v4033 = vextract.high.u32 %v4031
        %v4034 = vmul.u32 %v4027, %v4018
        %v4035 = vadd.s32 %v4030, %v4032
        %vm4036 = vc.u32 %v4030, %v4032
        %v4037 = vadd.s32 %v4033, 1
        %v4038 = vsel %vm4036, %v4037, %v4033
        %v4039 = vadd.s32 %v4034, %v4038
        %v4040 = vadd.s32 %v4039, 536870912
        %v4041 = vshrl.u32 %v4040, 30
        %v4042 = vshll.u32 %v4041, 30
        %v4043 = vsub.s32 %v4039, %v4042
        %vm4044 = vcmp.lt.s32.totalorder %v4043, 0
        %v4045 = vsub.s32 0, %v4043
        %v4046 = vsel %vm4044, %v4045, %v4043
        %v4047 = vclz %v4046
        %v4048 = vsub.s32 %v4047, 2
        %vm4049 = vcmp.gt.s32.totalorder 0, %v4048
        %v4050 = vsel %vm4049, 0, %v4048
        %v4051 = vsub.s32 32, %v4050
        %v4052 = vshll.u32 %v4043, %v4050
        %v4053 = vshrl.u32 %v4035, %v4051
        %v4054 = vor.u32 %v4052, %v4053
        %v4055 = vsub.s32 4294967266, %v4050
        %v4056 = vadd.s32 %v4055, 127
        %v4057 = vshll.u32 %v4056, 23
        %v4058 = vor.u32 4788187, %v4057
        %v4059 = vand.u32 2147483647, %v4058
        %v4061 = vcvt.s32.f32 %v4054
        %v4062 = vmul.f32 %v4061, %v4059
        %v4063 = vxor.u32 %v4062, 2147483648
        %v4064 = vsel %vm3981, %v4063, %v4062
        %v4065 = vsub.s32 4, %v4041
        %v4066 = vsel %vm3981, %v4065, %v4041
        %v4067 = vsel %vm3980, %v1070, %v4064
        %v4068 = vsel %vm3980, 0, %v4066
        %v4069 = vcosq.f32.pop %v4067
        %v4070 = vsinq.f32.pop %v4067
        %vm4071 = vweird.f32 %v1070
        %v4072 = vadd.s32 %v4068, 3
        %v4073 = vand.u32 %v4072, 3
        %vm4074 = vcmp.lt.s32.totalorder %v4073, 2
        %vm4075 = vcmp.eq.s32.totalorder %v4073, 0
        %v4076 = vxor.u32 %v4070, 2147483648
        %v4077 = vsel %vm4075, %v4069, %v4076
        %vm4078 = vcmp.eq.s32.totalorder %v4073, 2
        %v4079 = vxor.u32 %v4069, 2147483648
        %v4080 = vsel %vm4078, %v4079, %v4070
        %v4081 = vsel %vm4074, %v4077, %v4080
        %v4082 = vsel %vm4071, nan, %v4081
        %v4083 = vand.u32 2147483647, %v1072
        %vm4084 = vcmp.le.f32.partialorder %v4083, 0.7853982
        %vm4085 = vcmp.lt.s32.totalorder %v1072, 0
        %v4086 = vand.u32 %v1072, 2139095040
        %v4087 = vshrl.u32 %v4086, 23
        %v4088 = vsub.s32 %v4087, 127
        %v4089 = vand.u32 2147483647, %v1072
        %v4090 = vand.u32 %v4089, 8388607
        %v4091 = vor.u32 %v4090, 8388608
        %v4092 = vsub.s32 0, %v4091
        %v4093 = vadd.s32 %v4088, 1
        %vm4094 = vcmp.gt.s32.totalorder %v4093, 0
        %v4095 = vsel %vm4094, %v4093, 0
        %v4096 = vshrl.u32 %v4095, 5
        %v4097 = vand.u32 %v4095, 31
        %v4098 = vsub.s32 32, %v4097
        %v4099 = vshrl.u32 683565275, %v4098
        %v4100 = vshll.u32 683565275, %v4097
        %v4101 = vshrl.u32 2475754826, %v4098
        %v4102 = vor.u32 %v4100, %v4101
        %v4103 = vshll.u32 2475754826, %v4097
        %v4104 = vshrl.u32 2131351028, %v4098
        %v4105 = vor.u32 %v4103, %v4104
        %v4106 = vshll.u32 2131351028, %v4097
        %v4107 = vshrl.u32 2102212464, %v4098
        %v4108 = vor.u32 %v4106, %v4107
        %v4109 = vshll.u32 2102212464, %v4097
        %v4110 = vshrl.u32 920167782, %v4098
        %v4111 = vor.u32 %v4109, %v4110
        %v4112 = vshll.u32 920167782, %v4097
        %v4113 = vshrl.u32 1326507024, %v4098
        %v4114 = vor.u32 %v4112, %v4113
        %vm4115 = vcmp.lt.s32.totalorder %v4096, 1
        %vm4116 = vcmp.lt.s32.totalorder %v4096, 2
        %vm4117 = vcmp.lt.s32.totalorder %v4096, 3
        %vm4118 = vcmp.lt.s32.totalorder %v4096, 4
        %v4119 = vsel %vm4115, %v4099, %v4102
        %v4120 = vsel %vm4118, %v4108, 2102212464
        %v4121 = vsel %vm4117, %v4105, %v4120
        %v4122 = vsel %vm4116, %v4119, %v4121
        %v4123 = vsel %vm4115, %v4102, %v4105
        %v4124 = vsel %vm4118, %v4111, 920167782
        %v4125 = vsel %vm4117, %v4108, %v4124
        %v4126 = vsel %vm4116, %v4123, %v4125
        %v4127 = vsel %vm4115, %v4105, %v4108
        %v4128 = vsel %vm4118, %v4114, 1326507024
        %v4129 = vsel %vm4117, %v4111, %v4128
        %v4130 = vsel %vm4116, %v4127, %v4129
        %v4131 = vshll.u32 %v4091, 8
        %v4132 = vmul.u32.u64.compose %v4131, %v4130
        %v4133 = vextract.low.u32 %v4132
        %v4134 = vextract.high.u32 %v4132
        %v4135 = vmul.u32.u64.compose %v4131, %v4126
        %v4136 = vextract.low.u32 %v4135
        %v4137 = vextract.high.u32 %v4135
        %v4138 = vmul.u32 %v4131, %v4122
        %v4139 = vadd.s32 %v4134, %v4136
        %vm4140 = vc.u32 %v4134, %v4136
        %v4141 = vadd.s32 %v4137, 1
        %v4142 = vsel %vm4140, %v4141, %v4137
        %v4143 = vadd.s32 %v4138, %v4142
        %v4144 = vadd.s32 %v4143, 536870912
        %v4145 = vshrl.u32 %v4144, 30
        %v4146 = vshll.u32 %v4145, 30
        %v4147 = vsub.s32 %v4143, %v4146
        %vm4148 = vcmp.lt.s32.totalorder %v4147, 0
        %v4149 = vsub.s32 0, %v4147
        %v4150 = vsel %vm4148, %v4149, %v4147
        %v4151 = vclz %v4150
        %v4152 = vsub.s32 %v4151, 2
        %vm4153 = vcmp.gt.s32.totalorder 0, %v4152
        %v4154 = vsel %vm4153, 0, %v4152
        %v4155 = vsub.s32 32, %v4154
        %v4156 = vshll.u32 %v4147, %v4154
        %v4157 = vshrl.u32 %v4139, %v4155
        %v4158 = vor.u32 %v4156, %v4157
        %v4159 = vsub.s32 4294967266, %v4154
        %v4160 = vadd.s32 %v4159, 127
        %v4161 = vshll.u32 %v4160, 23
        %v4162 = vor.u32 4788187, %v4161
        %v4163 = vand.u32 2147483647, %v4162
        %v4165 = vcvt.s32.f32 %v4158
        %v4166 = vmul.f32 %v4165, %v4163
        %v4167 = vxor.u32 %v4166, 2147483648
        %v4168 = vsel %vm4085, %v4167, %v4166
        %v4169 = vsub.s32 4, %v4145
        %v4170 = vsel %vm4085, %v4169, %v4145
        %v4171 = vsel %vm4084, %v1072, %v4168
        %v4172 = vsel %vm4084, 0, %v4170
        %v4173 = vcosq.f32.pop %v4171
        %v4174 = vsinq.f32.pop %v4171
        %vm4175 = vweird.f32 %v1072
        %v4176 = vadd.s32 %v4172, 3
        %v4177 = vand.u32 %v4176, 3
        %vm4178 = vcmp.lt.s32.totalorder %v4177, 2
        %vm4179 = vcmp.eq.s32.totalorder %v4177, 0
        %v4180 = vxor.u32 %v4174, 2147483648
        %v4181 = vsel %vm4179, %v4173, %v4180
        %vm4182 = vcmp.eq.s32.totalorder %v4177, 2
        %v4183 = vxor.u32 %v4173, 2147483648
        %v4184 = vsel %vm4182, %v4183, %v4174
        %v4185 = vsel %vm4178, %v4181, %v4184
        %v4186 = vsel %vm4175, nan, %v4185
        %v4187 = vand.u32 2147483647, %v1158
        %vm4188 = vcmp.le.f32.partialorder %v4187, 0.7853982
        %vm4189 = vcmp.lt.s32.totalorder %v1158, 0
        %v4190 = vand.u32 %v1158, 2139095040
        %v4191 = vshrl.u32 %v4190, 23
        %v4192 = vsub.s32 %v4191, 127
        %v4193 = vand.u32 2147483647, %v1158
        %v4194 = vand.u32 %v4193, 8388607
        %v4195 = vor.u32 %v4194, 8388608
        %v4196 = vsub.s32 0, %v4195
        %v4197 = vadd.s32 %v4192, 1
        %vm4198 = vcmp.gt.s32.totalorder %v4197, 0
        %v4199 = vsel %vm4198, %v4197, 0
        %v4200 = vshrl.u32 %v4199, 5
        %v4201 = vand.u32 %v4199, 31
        %v4202 = vsub.s32 32, %v4201
        %v4203 = vshrl.u32 683565275, %v4202
        %v4204 = vshll.u32 683565275, %v4201
        %v4205 = vshrl.u32 2475754826, %v4202
        %v4206 = vor.u32 %v4204, %v4205
        %v4207 = vshll.u32 2475754826, %v4201
        %v4208 = vshrl.u32 2131351028, %v4202
        %v4209 = vor.u32 %v4207, %v4208
        %v4210 = vshll.u32 2131351028, %v4201
        %v4211 = vshrl.u32 2102212464, %v4202
        %v4212 = vor.u32 %v4210, %v4211
        %v4213 = vshll.u32 2102212464, %v4201
        %v4214 = vshrl.u32 920167782, %v4202
        %v4215 = vor.u32 %v4213, %v4214
        %v4216 = vshll.u32 920167782, %v4201
        %v4217 = vshrl.u32 1326507024, %v4202
        %v4218 = vor.u32 %v4216, %v4217
        %vm4219 = vcmp.lt.s32.totalorder %v4200, 1
        %vm4220 = vcmp.lt.s32.totalorder %v4200, 2
        %vm4221 = vcmp.lt.s32.totalorder %v4200, 3
        %vm4222 = vcmp.lt.s32.totalorder %v4200, 4
        %v4223 = vsel %vm4219, %v4203, %v4206
        %v4224 = vsel %vm4222, %v4212, 2102212464
        %v4225 = vsel %vm4221, %v4209, %v4224
        %v4226 = vsel %vm4220, %v4223, %v4225
        %v4227 = vsel %vm4219, %v4206, %v4209
        %v4228 = vsel %vm4222, %v4215, 920167782
        %v4229 = vsel %vm4221, %v4212, %v4228
        %v4230 = vsel %vm4220, %v4227, %v4229
        %v4231 = vsel %vm4219, %v4209, %v4212
        %v4232 = vsel %vm4222, %v4218, 1326507024
        %v4233 = vsel %vm4221, %v4215, %v4232
        %v4234 = vsel %vm4220, %v4231, %v4233
        %v4235 = vshll.u32 %v4195, 8
        %v4236 = vmul.u32.u64.compose %v4235, %v4234
        %v4237 = vextract.low.u32 %v4236
        %v4238 = vextract.high.u32 %v4236
        %v4239 = vmul.u32.u64.compose %v4235, %v4230
        %v4240 = vextract.low.u32 %v4239
        %v4241 = vextract.high.u32 %v4239
        %v4242 = vmul.u32 %v4235, %v4226
        %v4243 = vadd.s32 %v4238, %v4240
        %vm4244 = vc.u32 %v4238, %v4240
        %v4245 = vadd.s32 %v4241, 1
        %v4246 = vsel %vm4244, %v4245, %v4241
        %v4247 = vadd.s32 %v4242, %v4246
        %v4248 = vadd.s32 %v4247, 536870912
        %v4249 = vshrl.u32 %v4248, 30
        %v4250 = vshll.u32 %v4249, 30
        %v4251 = vsub.s32 %v4247, %v4250
        %vm4252 = vcmp.lt.s32.totalorder %v4251, 0
        %v4253 = vsub.s32 0, %v4251
        %v4254 = vsel %vm4252, %v4253, %v4251
        %v4255 = vclz %v4254
        %v4256 = vsub.s32 %v4255, 2
        %vm4257 = vcmp.gt.s32.totalorder 0, %v4256
        %v4258 = vsel %vm4257, 0, %v4256
        %v4259 = vsub.s32 32, %v4258
        %v4260 = vshll.u32 %v4251, %v4258
        %v4261 = vshrl.u32 %v4243, %v4259
        %v4262 = vor.u32 %v4260, %v4261
        %v4263 = vsub.s32 4294967266, %v4258
        %v4264 = vadd.s32 %v4263, 127
        %v4265 = vshll.u32 %v4264, 23
        %v4266 = vor.u32 4788187, %v4265
        %v4267 = vand.u32 2147483647, %v4266
        %v4269 = vcvt.s32.f32 %v4262
        %v4270 = vmul.f32 %v4269, %v4267
        %v4271 = vxor.u32 %v4270, 2147483648
        %v4272 = vsel %vm4189, %v4271, %v4270
        %v4273 = vsub.s32 4, %v4249
        %v4274 = vsel %vm4189, %v4273, %v4249
        %v4275 = vsel %vm4188, %v1158, %v4272
        %v4276 = vsel %vm4188, 0, %v4274
        %v4277 = vcosq.f32.pop %v4275
        %v4278 = vsinq.f32.pop %v4275
        %vm4279 = vweird.f32 %v1158
        %v4280 = vadd.s32 %v4276, 3
        %v4281 = vand.u32 %v4280, 3
        %vm4282 = vcmp.lt.s32.totalorder %v4281, 2
        %vm4283 = vcmp.eq.s32.totalorder %v4281, 0
        %v4284 = vxor.u32 %v4278, 2147483648
        %v4285 = vsel %vm4283, %v4277, %v4284
        %vm4286 = vcmp.eq.s32.totalorder %v4281, 2
        %v4287 = vxor.u32 %v4277, 2147483648
        %v4288 = vsel %vm4286, %v4287, %v4278
        %v4289 = vsel %vm4282, %v4285, %v4288
        %v4290 = vsel %vm4279, nan, %v4289
        %v4291 = vand.u32 2147483647, %v542
        %vm4292 = vcmp.le.f32.partialorder %v4291, 0.7853982
        %vm4293 = vcmp.lt.s32.totalorder %v542, 0
        %v4294 = vand.u32 %v542, 2139095040
        %v4295 = vshrl.u32 %v4294, 23
        %v4296 = vsub.s32 %v4295, 127
        %v4297 = vand.u32 2147483647, %v542
        %v4298 = vand.u32 %v4297, 8388607
        %v4299 = vor.u32 %v4298, 8388608
        %v4300 = vsub.s32 0, %v4299
        %v4301 = vadd.s32 %v4296, 1
        %vm4302 = vcmp.gt.s32.totalorder %v4301, 0
        %v4303 = vsel %vm4302, %v4301, 0
        %v4304 = vshrl.u32 %v4303, 5
        %v4305 = vand.u32 %v4303, 31
        %v4306 = vsub.s32 32, %v4305
        %v4307 = vshrl.u32 683565275, %v4306
        %v4308 = vshll.u32 683565275, %v4305
        %v4309 = vshrl.u32 2475754826, %v4306
        %v4310 = vor.u32 %v4308, %v4309
        %v4311 = vshll.u32 2475754826, %v4305
        %v4312 = vshrl.u32 2131351028, %v4306
        %v4313 = vor.u32 %v4311, %v4312
        %v4314 = vshll.u32 2131351028, %v4305
        %v4315 = vshrl.u32 2102212464, %v4306
        %v4316 = vor.u32 %v4314, %v4315
        %v4317 = vshll.u32 2102212464, %v4305
        %v4318 = vshrl.u32 920167782, %v4306
        %v4319 = vor.u32 %v4317, %v4318
        %v4320 = vshll.u32 920167782, %v4305
        %v4321 = vshrl.u32 1326507024, %v4306
        %v4322 = vor.u32 %v4320, %v4321
        %vm4323 = vcmp.lt.s32.totalorder %v4304, 1
        %vm4324 = vcmp.lt.s32.totalorder %v4304, 2
        %vm4325 = vcmp.lt.s32.totalorder %v4304, 3
        %vm4326 = vcmp.lt.s32.totalorder %v4304, 4
        %v4327 = vsel %vm4323, %v4307, %v4310
        %v4328 = vsel %vm4326, %v4316, 2102212464
        %v4329 = vsel %vm4325, %v4313, %v4328
        %v4330 = vsel %vm4324, %v4327, %v4329
        %v4331 = vsel %vm4323, %v4310, %v4313
        %v4332 = vsel %vm4326, %v4319, 920167782
        %v4333 = vsel %vm4325, %v4316, %v4332
        %v4334 = vsel %vm4324, %v4331, %v4333
        %v4335 = vsel %vm4323, %v4313, %v4316
        %v4336 = vsel %vm4326, %v4322, 1326507024
        %v4337 = vsel %vm4325, %v4319, %v4336
        %v4338 = vsel %vm4324, %v4335, %v4337
        %v4339 = vshll.u32 %v4299, 8
        %v4340 = vmul.u32.u64.compose %v4339, %v4338
        %v4341 = vextract.low.u32 %v4340
        %v4342 = vextract.high.u32 %v4340
        %v4343 = vmul.u32.u64.compose %v4339, %v4334
        %v4344 = vextract.low.u32 %v4343
        %v4345 = vextract.high.u32 %v4343
        %v4346 = vmul.u32 %v4339, %v4330
        %v4347 = vadd.s32 %v4342, %v4344
        %vm4348 = vc.u32 %v4342, %v4344
        %v4349 = vadd.s32 %v4345, 1
        %v4350 = vsel %vm4348, %v4349, %v4345
        %v4351 = vadd.s32 %v4346, %v4350
        %v4352 = vadd.s32 %v4351, 536870912
        %v4353 = vshrl.u32 %v4352, 30
        %v4354 = vshll.u32 %v4353, 30
        %v4355 = vsub.s32 %v4351, %v4354
        %vm4356 = vcmp.lt.s32.totalorder %v4355, 0
        %v4357 = vsub.s32 0, %v4355
        %v4358 = vsel %vm4356, %v4357, %v4355
        %v4359 = vclz %v4358
        %v4360 = vsub.s32 %v4359, 2
        %vm4361 = vcmp.gt.s32.totalorder 0, %v4360
        %v4362 = vsel %vm4361, 0, %v4360
        %v4363 = vsub.s32 32, %v4362
        %v4364 = vshll.u32 %v4355, %v4362
        %v4365 = vshrl.u32 %v4347, %v4363
        %v4366 = vor.u32 %v4364, %v4365
        %v4367 = vsub.s32 4294967266, %v4362
        %v4368 = vadd.s32 %v4367, 127
        %v4369 = vshll.u32 %v4368, 23
        %v4370 = vor.u32 4788187, %v4369
        %v4371 = vand.u32 2147483647, %v4370
        %v4373 = vcvt.s32.f32 %v4366
        %v4374 = vmul.f32 %v4373, %v4371
        %v4375 = vxor.u32 %v4374, 2147483648
        %v4376 = vsel %vm4293, %v4375, %v4374
        %v4377 = vsub.s32 4, %v4353
        %v4378 = vsel %vm4293, %v4377, %v4353
        %v4379 = vsel %vm4292, %v542, %v4376
        %v4380 = vsel %vm4292, 0, %v4378
        %v4381 = vcosq.f32.pop %v4379
        %v4382 = vsinq.f32.pop %v4379
        %vm4383 = vweird.f32 %v542
        %v4384 = vadd.s32 %v4380, 3
        %v4385 = vand.u32 %v4384, 3
        %vm4386 = vcmp.lt.s32.totalorder %v4385, 2
        %vm4387 = vcmp.eq.s32.totalorder %v4385, 0
        %v4388 = vxor.u32 %v4382, 2147483648
        %v4389 = vsel %vm4387, %v4381, %v4388
        %vm4390 = vcmp.eq.s32.totalorder %v4385, 2
        %v4391 = vxor.u32 %v4381, 2147483648
        %v4392 = vsel %vm4390, %v4391, %v4382
        %v4393 = vsel %vm4386, %v4389, %v4392
        %v4394 = vsel %vm4383, nan, %v4393
        %v4395 = vand.u32 2147483647, %v544
        %vm4396 = vcmp.le.f32.partialorder %v4395, 0.7853982
        %vm4397 = vcmp.lt.s32.totalorder %v544, 0
        %v4398 = vand.u32 %v544, 2139095040
        %v4399 = vshrl.u32 %v4398, 23
        %v4400 = vsub.s32 %v4399, 127
        %v4401 = vand.u32 2147483647, %v544
        %v4402 = vand.u32 %v4401, 8388607
        %v4403 = vor.u32 %v4402, 8388608
        %v4404 = vsub.s32 0, %v4403
        %v4405 = vadd.s32 %v4400, 1
        %vm4406 = vcmp.gt.s32.totalorder %v4405, 0
        %v4407 = vsel %vm4406, %v4405, 0
        %v4408 = vshrl.u32 %v4407, 5
        %v4409 = vand.u32 %v4407, 31
        %v4410 = vsub.s32 32, %v4409
        %v4411 = vshrl.u32 683565275, %v4410
        %v4412 = vshll.u32 683565275, %v4409
        %v4413 = vshrl.u32 2475754826, %v4410
        %v4414 = vor.u32 %v4412, %v4413
        %v4415 = vshll.u32 2475754826, %v4409
        %v4416 = vshrl.u32 2131351028, %v4410
        %v4417 = vor.u32 %v4415, %v4416
        %v4418 = vshll.u32 2131351028, %v4409
        %v4419 = vshrl.u32 2102212464, %v4410
        %v4420 = vor.u32 %v4418, %v4419
        %v4421 = vshll.u32 2102212464, %v4409
        %v4422 = vshrl.u32 920167782, %v4410
        %v4423 = vor.u32 %v4421, %v4422
        %v4424 = vshll.u32 920167782, %v4409
        %v4425 = vshrl.u32 1326507024, %v4410
        %v4426 = vor.u32 %v4424, %v4425
        %vm4427 = vcmp.lt.s32.totalorder %v4408, 1
        %vm4428 = vcmp.lt.s32.totalorder %v4408, 2
        %vm4429 = vcmp.lt.s32.totalorder %v4408, 3
        %vm4430 = vcmp.lt.s32.totalorder %v4408, 4
        %v4431 = vsel %vm4427, %v4411, %v4414
        %v4432 = vsel %vm4430, %v4420, 2102212464
        %v4433 = vsel %vm4429, %v4417, %v4432
        %v4434 = vsel %vm4428, %v4431, %v4433
        %v4435 = vsel %vm4427, %v4414, %v4417
        %v4436 = vsel %vm4430, %v4423, 920167782
        %v4437 = vsel %vm4429, %v4420, %v4436
        %v4438 = vsel %vm4428, %v4435, %v4437
        %v4439 = vsel %vm4427, %v4417, %v4420
        %v4440 = vsel %vm4430, %v4426, 1326507024
        %v4441 = vsel %vm4429, %v4423, %v4440
        %v4442 = vsel %vm4428, %v4439, %v4441
        %v4443 = vshll.u32 %v4403, 8
        %v4444 = vmul.u32.u64.compose %v4443, %v4442
        %v4445 = vextract.low.u32 %v4444
        %v4446 = vextract.high.u32 %v4444
        %v4447 = vmul.u32.u64.compose %v4443, %v4438
        %v4448 = vextract.low.u32 %v4447
        %v4449 = vextract.high.u32 %v4447
        %v4450 = vmul.u32 %v4443, %v4434
        %v4451 = vadd.s32 %v4446, %v4448
        %vm4452 = vc.u32 %v4446, %v4448
        %v4453 = vadd.s32 %v4449, 1
        %v4454 = vsel %vm4452, %v4453, %v4449
        %v4455 = vadd.s32 %v4450, %v4454
        %v4456 = vadd.s32 %v4455, 536870912
        %v4457 = vshrl.u32 %v4456, 30
        %v4458 = vshll.u32 %v4457, 30
        %v4459 = vsub.s32 %v4455, %v4458
        %vm4460 = vcmp.lt.s32.totalorder %v4459, 0
        %v4461 = vsub.s32 0, %v4459
        %v4462 = vsel %vm4460, %v4461, %v4459
        %v4463 = vclz %v4462
        %v4464 = vsub.s32 %v4463, 2
        %vm4465 = vcmp.gt.s32.totalorder 0, %v4464
        %v4466 = vsel %vm4465, 0, %v4464
        %v4467 = vsub.s32 32, %v4466
        %v4468 = vshll.u32 %v4459, %v4466
        %v4469 = vshrl.u32 %v4451, %v4467
        %v4470 = vor.u32 %v4468, %v4469
        %v4471 = vsub.s32 4294967266, %v4466
        %v4472 = vadd.s32 %v4471, 127
        %v4473 = vshll.u32 %v4472, 23
        %v4474 = vor.u32 4788187, %v4473
        %v4475 = vand.u32 2147483647, %v4474
        %v4477 = vcvt.s32.f32 %v4470
        %v4478 = vmul.f32 %v4477, %v4475
        %v4479 = vxor.u32 %v4478, 2147483648
        %v4480 = vsel %vm4397, %v4479, %v4478
        %v4481 = vsub.s32 4, %v4457
        %v4482 = vsel %vm4397, %v4481, %v4457
        %v4483 = vsel %vm4396, %v544, %v4480
        %v4484 = vsel %vm4396, 0, %v4482
        %v4485 = vcosq.f32.pop %v4483
        %v4486 = vsinq.f32.pop %v4483
        %vm4487 = vweird.f32 %v544
        %v4488 = vadd.s32 %v4484, 3
        %v4489 = vand.u32 %v4488, 3
        %vm4490 = vcmp.lt.s32.totalorder %v4489, 2
        %vm4491 = vcmp.eq.s32.totalorder %v4489, 0
        %v4492 = vxor.u32 %v4486, 2147483648
        %v4493 = vsel %vm4491, %v4485, %v4492
        %vm4494 = vcmp.eq.s32.totalorder %v4489, 2
        %v4495 = vxor.u32 %v4485, 2147483648
        %v4496 = vsel %vm4494, %v4495, %v4486
        %v4497 = vsel %vm4490, %v4493, %v4496
        %v4498 = vsel %vm4487, nan, %v4497
        %v4499 = vand.u32 2147483647, %v631
        %vm4500 = vcmp.le.f32.partialorder %v4499, 0.7853982
        %vm4501 = vcmp.lt.s32.totalorder %v631, 0
        %v4502 = vand.u32 %v631, 2139095040
        %v4503 = vshrl.u32 %v4502, 23
        %v4504 = vsub.s32 %v4503, 127
        %v4505 = vand.u32 2147483647, %v631
        %v4506 = vand.u32 %v4505, 8388607
        %v4507 = vor.u32 %v4506, 8388608
        %v4508 = vsub.s32 0, %v4507
        %v4509 = vadd.s32 %v4504, 1
        %vm4510 = vcmp.gt.s32.totalorder %v4509, 0
        %v4511 = vsel %vm4510, %v4509, 0
        %v4512 = vshrl.u32 %v4511, 5
        %v4513 = vand.u32 %v4511, 31
        %v4514 = vsub.s32 32, %v4513
        %v4515 = vshrl.u32 683565275, %v4514
        %v4516 = vshll.u32 683565275, %v4513
        %v4517 = vshrl.u32 2475754826, %v4514
        %v4518 = vor.u32 %v4516, %v4517
        %v4519 = vshll.u32 2475754826, %v4513
        %v4520 = vshrl.u32 2131351028, %v4514
        %v4521 = vor.u32 %v4519, %v4520
        %v4522 = vshll.u32 2131351028, %v4513
        %v4523 = vshrl.u32 2102212464, %v4514
        %v4524 = vor.u32 %v4522, %v4523
        %v4525 = vshll.u32 2102212464, %v4513
        %v4526 = vshrl.u32 920167782, %v4514
        %v4527 = vor.u32 %v4525, %v4526
        %v4528 = vshll.u32 920167782, %v4513
        %v4529 = vshrl.u32 1326507024, %v4514
        %v4530 = vor.u32 %v4528, %v4529
        %vm4531 = vcmp.lt.s32.totalorder %v4512, 1
        %vm4532 = vcmp.lt.s32.totalorder %v4512, 2
        %vm4533 = vcmp.lt.s32.totalorder %v4512, 3
        %vm4534 = vcmp.lt.s32.totalorder %v4512, 4
        %v4535 = vsel %vm4531, %v4515, %v4518
        %v4536 = vsel %vm4534, %v4524, 2102212464
        %v4537 = vsel %vm4533, %v4521, %v4536
        %v4538 = vsel %vm4532, %v4535, %v4537
        %v4539 = vsel %vm4531, %v4518, %v4521
        %v4540 = vsel %vm4534, %v4527, 920167782
        %v4541 = vsel %vm4533, %v4524, %v4540
        %v4542 = vsel %vm4532, %v4539, %v4541
        %v4543 = vsel %vm4531, %v4521, %v4524
        %v4544 = vsel %vm4534, %v4530, 1326507024
        %v4545 = vsel %vm4533, %v4527, %v4544
        %v4546 = vsel %vm4532, %v4543, %v4545
        %v4547 = vshll.u32 %v4507, 8
        %v4548 = vmul.u32.u64.compose %v4547, %v4546
        %v4549 = vextract.low.u32 %v4548
        %v4550 = vextract.high.u32 %v4548
        %v4551 = vmul.u32.u64.compose %v4547, %v4542
        %v4552 = vextract.low.u32 %v4551
        %v4553 = vextract.high.u32 %v4551
        %v4554 = vmul.u32 %v4547, %v4538
        %v4555 = vadd.s32 %v4550, %v4552
        %vm4556 = vc.u32 %v4550, %v4552
        %v4557 = vadd.s32 %v4553, 1
        %v4558 = vsel %vm4556, %v4557, %v4553
        %v4559 = vadd.s32 %v4554, %v4558
        %v4560 = vadd.s32 %v4559, 536870912
        %v4561 = vshrl.u32 %v4560, 30
        %v4562 = vshll.u32 %v4561, 30
        %v4563 = vsub.s32 %v4559, %v4562
        %vm4564 = vcmp.lt.s32.totalorder %v4563, 0
        %v4565 = vsub.s32 0, %v4563
        %v4566 = vsel %vm4564, %v4565, %v4563
        %v4567 = vclz %v4566
        %v4568 = vsub.s32 %v4567, 2
        %vm4569 = vcmp.gt.s32.totalorder 0, %v4568
        %v4570 = vsel %vm4569, 0, %v4568
        %v4571 = vsub.s32 32, %v4570
        %v4572 = vshll.u32 %v4563, %v4570
        %v4573 = vshrl.u32 %v4555, %v4571
        %v4574 = vor.u32 %v4572, %v4573
        %v4575 = vsub.s32 4294967266, %v4570
        %v4576 = vadd.s32 %v4575, 127
        %v4577 = vshll.u32 %v4576, 23
        %v4578 = vor.u32 4788187, %v4577
        %v4579 = vand.u32 2147483647, %v4578
        %v4581 = vcvt.s32.f32 %v4574
        %v4582 = vmul.f32 %v4581, %v4579
        %v4583 = vxor.u32 %v4582, 2147483648
        %v4584 = vsel %vm4501, %v4583, %v4582
        %v4585 = vsub.s32 4, %v4561
        %v4586 = vsel %vm4501, %v4585, %v4561
        %v4587 = vsel %vm4500, %v631, %v4584
        %v4588 = vsel %vm4500, 0, %v4586
        %v4589 = vcosq.f32.pop %v4587
        %v4590 = vsinq.f32.pop %v4587
        %vm4591 = vweird.f32 %v631
        %v4592 = vadd.s32 %v4588, 3
        %v4593 = vand.u32 %v4592, 3
        %vm4594 = vcmp.lt.s32.totalorder %v4593, 2
        %vm4595 = vcmp.eq.s32.totalorder %v4593, 0
        %v4596 = vxor.u32 %v4590, 2147483648
        %v4597 = vsel %vm4595, %v4589, %v4596
        %vm4598 = vcmp.eq.s32.totalorder %v4593, 2
        %v4599 = vxor.u32 %v4589, 2147483648
        %v4600 = vsel %vm4598, %v4599, %v4590
        %v4601 = vsel %vm4594, %v4597, %v4600
        %v4602 = vsel %vm4591, nan, %v4601
        %v4603 = vand.u32 2147483647, %v633
        %vm4604 = vcmp.le.f32.partialorder %v4603, 0.7853982
        %vm4605 = vcmp.lt.s32.totalorder %v633, 0
        %v4606 = vand.u32 %v633, 2139095040
        %v4607 = vshrl.u32 %v4606, 23
        %v4608 = vsub.s32 %v4607, 127
        %v4609 = vand.u32 2147483647, %v633
        %v4610 = vand.u32 %v4609, 8388607
        %v4611 = vor.u32 %v4610, 8388608
        %v4612 = vsub.s32 0, %v4611
        %v4613 = vadd.s32 %v4608, 1
        %vm4614 = vcmp.gt.s32.totalorder %v4613, 0
        %v4615 = vsel %vm4614, %v4613, 0
        %v4616 = vshrl.u32 %v4615, 5
        %v4617 = vand.u32 %v4615, 31
        %v4618 = vsub.s32 32, %v4617
        %v4619 = vshrl.u32 683565275, %v4618
        %v4620 = vshll.u32 683565275, %v4617
        %v4621 = vshrl.u32 2475754826, %v4618
        %v4622 = vor.u32 %v4620, %v4621
        %v4623 = vshll.u32 2475754826, %v4617
        %v4624 = vshrl.u32 2131351028, %v4618
        %v4625 = vor.u32 %v4623, %v4624
        %v4626 = vshll.u32 2131351028, %v4617
        %v4627 = vshrl.u32 2102212464, %v4618
        %v4628 = vor.u32 %v4626, %v4627
        %v4629 = vshll.u32 2102212464, %v4617
        %v4630 = vshrl.u32 920167782, %v4618
        %v4631 = vor.u32 %v4629, %v4630
        %v4632 = vshll.u32 920167782, %v4617
        %v4633 = vshrl.u32 1326507024, %v4618
        %v4634 = vor.u32 %v4632, %v4633
        %vm4635 = vcmp.lt.s32.totalorder %v4616, 1
        %vm4636 = vcmp.lt.s32.totalorder %v4616, 2
        %vm4637 = vcmp.lt.s32.totalorder %v4616, 3
        %vm4638 = vcmp.lt.s32.totalorder %v4616, 4
        %v4639 = vsel %vm4635, %v4619, %v4622
        %v4640 = vsel %vm4638, %v4628, 2102212464
        %v4641 = vsel %vm4637, %v4625, %v4640
        %v4642 = vsel %vm4636, %v4639, %v4641
        %v4643 = vsel %vm4635, %v4622, %v4625
        %v4644 = vsel %vm4638, %v4631, 920167782
        %v4645 = vsel %vm4637, %v4628, %v4644
        %v4646 = vsel %vm4636, %v4643, %v4645
        %v4647 = vsel %vm4635, %v4625, %v4628
        %v4648 = vsel %vm4638, %v4634, 1326507024
        %v4649 = vsel %vm4637, %v4631, %v4648
        %v4650 = vsel %vm4636, %v4647, %v4649
        %v4651 = vshll.u32 %v4611, 8
        %v4652 = vmul.u32.u64.compose %v4651, %v4650
        %v4653 = vextract.low.u32 %v4652
        %v4654 = vextract.high.u32 %v4652
        %v4655 = vmul.u32.u64.compose %v4651, %v4646
        %v4656 = vextract.low.u32 %v4655
        %v4657 = vextract.high.u32 %v4655
        %v4658 = vmul.u32 %v4651, %v4642
        %v4659 = vadd.s32 %v4654, %v4656
        %vm4660 = vc.u32 %v4654, %v4656
        %v4661 = vadd.s32 %v4657, 1
        %v4662 = vsel %vm4660, %v4661, %v4657
        %v4663 = vadd.s32 %v4658, %v4662
        %v4664 = vadd.s32 %v4663, 536870912
        %v4665 = vshrl.u32 %v4664, 30
        %v4666 = vshll.u32 %v4665, 30
        %v4667 = vsub.s32 %v4663, %v4666
        %vm4668 = vcmp.lt.s32.totalorder %v4667, 0
        %v4669 = vsub.s32 0, %v4667
        %v4670 = vsel %vm4668, %v4669, %v4667
        %v4671 = vclz %v4670
        %v4672 = vsub.s32 %v4671, 2
        %vm4673 = vcmp.gt.s32.totalorder 0, %v4672
        %v4674 = vsel %vm4673, 0, %v4672
        %v4675 = vsub.s32 32, %v4674
        %v4676 = vshll.u32 %v4667, %v4674
        %v4677 = vshrl.u32 %v4659, %v4675
        %v4678 = vor.u32 %v4676, %v4677
        %v4679 = vsub.s32 4294967266, %v4674
        %v4680 = vadd.s32 %v4679, 127
        %v4681 = vshll.u32 %v4680, 23
        %v4682 = vor.u32 4788187, %v4681
        %v4683 = vand.u32 2147483647, %v4682
        %v4685 = vcvt.s32.f32 %v4678
        %v4686 = vmul.f32 %v4685, %v4683
        %v4687 = vxor.u32 %v4686, 2147483648
        %v4688 = vsel %vm4605, %v4687, %v4686
        %v4689 = vsub.s32 4, %v4665
        %v4690 = vsel %vm4605, %v4689, %v4665
        %v4691 = vsel %vm4604, %v633, %v4688
        %v4692 = vsel %vm4604, 0, %v4690
        %v4693 = vcosq.f32.pop %v4691
        %v4694 = vsinq.f32.pop %v4691
        %vm4695 = vweird.f32 %v633
        %v4696 = vadd.s32 %v4692, 3
        %v4697 = vand.u32 %v4696, 3
        %vm4698 = vcmp.lt.s32.totalorder %v4697, 2
        %vm4699 = vcmp.eq.s32.totalorder %v4697, 0
        %v4700 = vxor.u32 %v4694, 2147483648
        %v4701 = vsel %vm4699, %v4693, %v4700
        %vm4702 = vcmp.eq.s32.totalorder %v4697, 2
        %v4703 = vxor.u32 %v4693, 2147483648
        %v4704 = vsel %vm4702, %v4703, %v4694
        %v4705 = vsel %vm4698, %v4701, %v4704
        %v4706 = vsel %vm4695, nan, %v4705
        %v4707 = vand.u32 2147483647, %v720
        %vm4708 = vcmp.le.f32.partialorder %v4707, 0.7853982
        %vm4709 = vcmp.lt.s32.totalorder %v720, 0
        %v4710 = vand.u32 %v720, 2139095040
        %v4711 = vshrl.u32 %v4710, 23
        %v4712 = vsub.s32 %v4711, 127
        %v4713 = vand.u32 2147483647, %v720
        %v4714 = vand.u32 %v4713, 8388607
        %v4715 = vor.u32 %v4714, 8388608
        %v4716 = vsub.s32 0, %v4715
        %v4717 = vadd.s32 %v4712, 1
        %vm4718 = vcmp.gt.s32.totalorder %v4717, 0
        %v4719 = vsel %vm4718, %v4717, 0
        %v4720 = vshrl.u32 %v4719, 5
        %v4721 = vand.u32 %v4719, 31
        %v4722 = vsub.s32 32, %v4721
        %v4723 = vshrl.u32 683565275, %v4722
        %v4724 = vshll.u32 683565275, %v4721
        %v4725 = vshrl.u32 2475754826, %v4722
        %v4726 = vor.u32 %v4724, %v4725
        %v4727 = vshll.u32 2475754826, %v4721
        %v4728 = vshrl.u32 2131351028, %v4722
        %v4729 = vor.u32 %v4727, %v4728
        %v4730 = vshll.u32 2131351028, %v4721
        %v4731 = vshrl.u32 2102212464, %v4722
        %v4732 = vor.u32 %v4730, %v4731
        %v4733 = vshll.u32 2102212464, %v4721
        %v4734 = vshrl.u32 920167782, %v4722
        %v4735 = vor.u32 %v4733, %v4734
        %v4736 = vshll.u32 920167782, %v4721
        %v4737 = vshrl.u32 1326507024, %v4722
        %v4738 = vor.u32 %v4736, %v4737
        %vm4739 = vcmp.lt.s32.totalorder %v4720, 1
        %vm4740 = vcmp.lt.s32.totalorder %v4720, 2
        %vm4741 = vcmp.lt.s32.totalorder %v4720, 3
        %vm4742 = vcmp.lt.s32.totalorder %v4720, 4
        %v4743 = vsel %vm4739, %v4723, %v4726
        %v4744 = vsel %vm4742, %v4732, 2102212464
        %v4745 = vsel %vm4741, %v4729, %v4744
        %v4746 = vsel %vm4740, %v4743, %v4745
        %v4747 = vsel %vm4739, %v4726, %v4729
        %v4748 = vsel %vm4742, %v4735, 920167782
        %v4749 = vsel %vm4741, %v4732, %v4748
        %v4750 = vsel %vm4740, %v4747, %v4749
        %v4751 = vsel %vm4739, %v4729, %v4732
        %v4752 = vsel %vm4742, %v4738, 1326507024
        %v4753 = vsel %vm4741, %v4735, %v4752
        %v4754 = vsel %vm4740, %v4751, %v4753
        %v4755 = vshll.u32 %v4715, 8
        %v4756 = vmul.u32.u64.compose %v4755, %v4754
        %v4757 = vextract.low.u32 %v4756
        %v4758 = vextract.high.u32 %v4756
        %v4759 = vmul.u32.u64.compose %v4755, %v4750
        %v4760 = vextract.low.u32 %v4759
        %v4761 = vextract.high.u32 %v4759
        %v4762 = vmul.u32 %v4755, %v4746
        %v4763 = vadd.s32 %v4758, %v4760
        %vm4764 = vc.u32 %v4758, %v4760
        %v4765 = vadd.s32 %v4761, 1
        %v4766 = vsel %vm4764, %v4765, %v4761
        %v4767 = vadd.s32 %v4762, %v4766
        %v4768 = vadd.s32 %v4767, 536870912
        %v4769 = vshrl.u32 %v4768, 30
        %v4770 = vshll.u32 %v4769, 30
        %v4771 = vsub.s32 %v4767, %v4770
        %vm4772 = vcmp.lt.s32.totalorder %v4771, 0
        %v4773 = vsub.s32 0, %v4771
        %v4774 = vsel %vm4772, %v4773, %v4771
        %v4775 = vclz %v4774
        %v4776 = vsub.s32 %v4775, 2
        %vm4777 = vcmp.gt.s32.totalorder 0, %v4776
        %v4778 = vsel %vm4777, 0, %v4776
        %v4779 = vsub.s32 32, %v4778
        %v4780 = vshll.u32 %v4771, %v4778
        %v4781 = vshrl.u32 %v4763, %v4779
        %v4782 = vor.u32 %v4780, %v4781
        %v4783 = vsub.s32 4294967266, %v4778
        %v4784 = vadd.s32 %v4783, 127
        %v4785 = vshll.u32 %v4784, 23
        %v4786 = vor.u32 4788187, %v4785
        %v4787 = vand.u32 2147483647, %v4786
        %v4789 = vcvt.s32.f32 %v4782
        %v4790 = vmul.f32 %v4789, %v4787
        %v4791 = vxor.u32 %v4790, 2147483648
        %v4792 = vsel %vm4709, %v4791, %v4790
        %v4793 = vsub.s32 4, %v4769
        %v4794 = vsel %vm4709, %v4793, %v4769
        %v4795 = vsel %vm4708, %v720, %v4792
        %v4796 = vsel %vm4708, 0, %v4794
        %v4797 = vcosq.f32.pop %v4795
        %v4798 = vsinq.f32.pop %v4795
        %vm4799 = vweird.f32 %v720
        %v4800 = vadd.s32 %v4796, 3
        %v4801 = vand.u32 %v4800, 3
        %vm4802 = vcmp.lt.s32.totalorder %v4801, 2
        %vm4803 = vcmp.eq.s32.totalorder %v4801, 0
        %v4804 = vxor.u32 %v4798, 2147483648
        %v4805 = vsel %vm4803, %v4797, %v4804
        %vm4806 = vcmp.eq.s32.totalorder %v4801, 2
        %v4807 = vxor.u32 %v4797, 2147483648
        %v4808 = vsel %vm4806, %v4807, %v4798
        %v4809 = vsel %vm4802, %v4805, %v4808
        %v4810 = vsel %vm4799, nan, %v4809
        %v4811 = vand.u32 2147483647, %v722
        %vm4812 = vcmp.le.f32.partialorder %v4811, 0.7853982
        %vm4813 = vcmp.lt.s32.totalorder %v722, 0
        %v4814 = vand.u32 %v722, 2139095040
        %v4815 = vshrl.u32 %v4814, 23
        %v4816 = vsub.s32 %v4815, 127
        %v4817 = vand.u32 2147483647, %v722
        %v4818 = vand.u32 %v4817, 8388607
        %v4819 = vor.u32 %v4818, 8388608
        %v4820 = vsub.s32 0, %v4819
        %v4821 = vadd.s32 %v4816, 1
        %vm4822 = vcmp.gt.s32.totalorder %v4821, 0
        %v4823 = vsel %vm4822, %v4821, 0
        %v4824 = vshrl.u32 %v4823, 5
        %v4825 = vand.u32 %v4823, 31
        %v4826 = vsub.s32 32, %v4825
        %v4827 = vshrl.u32 683565275, %v4826
        %v4828 = vshll.u32 683565275, %v4825
        %v4829 = vshrl.u32 2475754826, %v4826
        %v4830 = vor.u32 %v4828, %v4829
        %v4831 = vshll.u32 2475754826, %v4825
        %v4832 = vshrl.u32 2131351028, %v4826
        %v4833 = vor.u32 %v4831, %v4832
        %v4834 = vshll.u32 2131351028, %v4825
        %v4835 = vshrl.u32 2102212464, %v4826
        %v4836 = vor.u32 %v4834, %v4835
        %v4837 = vshll.u32 2102212464, %v4825
        %v4838 = vshrl.u32 920167782, %v4826
        %v4839 = vor.u32 %v4837, %v4838
        %v4840 = vshll.u32 920167782, %v4825
        %v4841 = vshrl.u32 1326507024, %v4826
        %v4842 = vor.u32 %v4840, %v4841
        %vm4843 = vcmp.lt.s32.totalorder %v4824, 1
        %vm4844 = vcmp.lt.s32.totalorder %v4824, 2
        %vm4845 = vcmp.lt.s32.totalorder %v4824, 3
        %vm4846 = vcmp.lt.s32.totalorder %v4824, 4
        %v4847 = vsel %vm4843, %v4827, %v4830
        %v4848 = vsel %vm4846, %v4836, 2102212464
        %v4849 = vsel %vm4845, %v4833, %v4848
        %v4850 = vsel %vm4844, %v4847, %v4849
        %v4851 = vsel %vm4843, %v4830, %v4833
        %v4852 = vsel %vm4846, %v4839, 920167782
        %v4853 = vsel %vm4845, %v4836, %v4852
        %v4854 = vsel %vm4844, %v4851, %v4853
        %v4855 = vsel %vm4843, %v4833, %v4836
        %v4856 = vsel %vm4846, %v4842, 1326507024
        %v4857 = vsel %vm4845, %v4839, %v4856
        %v4858 = vsel %vm4844, %v4855, %v4857
        %v4859 = vshll.u32 %v4819, 8
        %v4860 = vmul.u32.u64.compose %v4859, %v4858
        %v4861 = vextract.low.u32 %v4860
        %v4862 = vextract.high.u32 %v4860
        %v4863 = vmul.u32.u64.compose %v4859, %v4854
        %v4864 = vextract.low.u32 %v4863
        %v4865 = vextract.high.u32 %v4863
        %v4866 = vmul.u32 %v4859, %v4850
        %v4867 = vadd.s32 %v4862, %v4864
        %vm4868 = vc.u32 %v4862, %v4864
        %v4869 = vadd.s32 %v4865, 1
        %v4870 = vsel %vm4868, %v4869, %v4865
        %v4871 = vadd.s32 %v4866, %v4870
        %v4872 = vadd.s32 %v4871, 536870912
        %v4873 = vshrl.u32 %v4872, 30
        %v4874 = vshll.u32 %v4873, 30
        %v4875 = vsub.s32 %v4871, %v4874
        %vm4876 = vcmp.lt.s32.totalorder %v4875, 0
        %v4877 = vsub.s32 0, %v4875
        %v4878 = vsel %vm4876, %v4877, %v4875
        %v4879 = vclz %v4878
        %v4880 = vsub.s32 %v4879, 2
        %vm4881 = vcmp.gt.s32.totalorder 0, %v4880
        %v4882 = vsel %vm4881, 0, %v4880
        %v4883 = vsub.s32 32, %v4882
        %v4884 = vshll.u32 %v4875, %v4882
        %v4885 = vshrl.u32 %v4867, %v4883
        %v4886 = vor.u32 %v4884, %v4885
        %v4887 = vsub.s32 4294967266, %v4882
        %v4888 = vadd.s32 %v4887, 127
        %v4889 = vshll.u32 %v4888, 23
        %v4890 = vor.u32 4788187, %v4889
        %v4891 = vand.u32 2147483647, %v4890
        %v4893 = vcvt.s32.f32 %v4886
        %v4894 = vmul.f32 %v4893, %v4891
        %v4895 = vxor.u32 %v4894, 2147483648
        %v4896 = vsel %vm4813, %v4895, %v4894
        %v4897 = vsub.s32 4, %v4873
        %v4898 = vsel %vm4813, %v4897, %v4873
        %v4899 = vsel %vm4812, %v722, %v4896
        %v4900 = vsel %vm4812, 0, %v4898
        %v4901 = vcosq.f32.pop %v4899
        %v4902 = vsinq.f32.pop %v4899
        %vm4903 = vweird.f32 %v722
        %v4904 = vadd.s32 %v4900, 3
        %v4905 = vand.u32 %v4904, 3
        %vm4906 = vcmp.lt.s32.totalorder %v4905, 2
        %vm4907 = vcmp.eq.s32.totalorder %v4905, 0
        %v4908 = vxor.u32 %v4902, 2147483648
        %v4909 = vsel %vm4907, %v4901, %v4908
        %vm4910 = vcmp.eq.s32.totalorder %v4905, 2
        %v4911 = vxor.u32 %v4901, 2147483648
        %v4912 = vsel %vm4910, %v4911, %v4902
        %v4913 = vsel %vm4906, %v4909, %v4912
        %v4914 = vsel %vm4903, nan, %v4913
        %v4915 = vand.u32 2147483647, %v809
        %vm4916 = vcmp.le.f32.partialorder %v4915, 0.7853982
        %vm4917 = vcmp.lt.s32.totalorder %v809, 0
        %v4918 = vand.u32 %v809, 2139095040
        %v4919 = vshrl.u32 %v4918, 23
        %v4920 = vsub.s32 %v4919, 127
        %v4921 = vand.u32 2147483647, %v809
        %v4922 = vand.u32 %v4921, 8388607
        %v4923 = vor.u32 %v4922, 8388608
        %v4924 = vsub.s32 0, %v4923
        %v4925 = vadd.s32 %v4920, 1
        %vm4926 = vcmp.gt.s32.totalorder %v4925, 0
        %v4927 = vsel %vm4926, %v4925, 0
        %v4928 = vshrl.u32 %v4927, 5
        %v4929 = vand.u32 %v4927, 31
        %v4930 = vsub.s32 32, %v4929
        %v4931 = vshrl.u32 683565275, %v4930
        %v4932 = vshll.u32 683565275, %v4929
        %v4933 = vshrl.u32 2475754826, %v4930
        %v4934 = vor.u32 %v4932, %v4933
        %v4935 = vshll.u32 2475754826, %v4929
        %v4936 = vshrl.u32 2131351028, %v4930
        %v4937 = vor.u32 %v4935, %v4936
        %v4938 = vshll.u32 2131351028, %v4929
        %v4939 = vshrl.u32 2102212464, %v4930
        %v4940 = vor.u32 %v4938, %v4939
        %v4941 = vshll.u32 2102212464, %v4929
        %v4942 = vshrl.u32 920167782, %v4930
        %v4943 = vor.u32 %v4941, %v4942
        %v4944 = vshll.u32 920167782, %v4929
        %v4945 = vshrl.u32 1326507024, %v4930
        %v4946 = vor.u32 %v4944, %v4945
        %vm4947 = vcmp.lt.s32.totalorder %v4928, 1
        %vm4948 = vcmp.lt.s32.totalorder %v4928, 2
        %vm4949 = vcmp.lt.s32.totalorder %v4928, 3
        %vm4950 = vcmp.lt.s32.totalorder %v4928, 4
        %v4951 = vsel %vm4947, %v4931, %v4934
        %v4952 = vsel %vm4950, %v4940, 2102212464
        %v4953 = vsel %vm4949, %v4937, %v4952
        %v4954 = vsel %vm4948, %v4951, %v4953
        %v4955 = vsel %vm4947, %v4934, %v4937
        %v4956 = vsel %vm4950, %v4943, 920167782
        %v4957 = vsel %vm4949, %v4940, %v4956
        %v4958 = vsel %vm4948, %v4955, %v4957
        %v4959 = vsel %vm4947, %v4937, %v4940
        %v4960 = vsel %vm4950, %v4946, 1326507024
        %v4961 = vsel %vm4949, %v4943, %v4960
        %v4962 = vsel %vm4948, %v4959, %v4961
        %v4963 = vshll.u32 %v4923, 8
        %v4964 = vmul.u32.u64.compose %v4963, %v4962
        %v4965 = vextract.low.u32 %v4964
        %v4966 = vextract.high.u32 %v4964
        %v4967 = vmul.u32.u64.compose %v4963, %v4958
        %v4968 = vextract.low.u32 %v4967
        %v4969 = vextract.high.u32 %v4967
        %v4970 = vmul.u32 %v4963, %v4954
        %v4971 = vadd.s32 %v4966, %v4968
        %vm4972 = vc.u32 %v4966, %v4968
        %v4973 = vadd.s32 %v4969, 1
        %v4974 = vsel %vm4972, %v4973, %v4969
        %v4975 = vadd.s32 %v4970, %v4974
        %v4976 = vadd.s32 %v4975, 536870912
        %v4977 = vshrl.u32 %v4976, 30
        %v4978 = vshll.u32 %v4977, 30
        %v4979 = vsub.s32 %v4975, %v4978
        %vm4980 = vcmp.lt.s32.totalorder %v4979, 0
        %v4981 = vsub.s32 0, %v4979
        %v4982 = vsel %vm4980, %v4981, %v4979
        %v4983 = vclz %v4982
        %v4984 = vsub.s32 %v4983, 2
        %vm4985 = vcmp.gt.s32.totalorder 0, %v4984
        %v4986 = vsel %vm4985, 0, %v4984
        %v4987 = vsub.s32 32, %v4986
        %v4988 = vshll.u32 %v4979, %v4986
        %v4989 = vshrl.u32 %v4971, %v4987
        %v4990 = vor.u32 %v4988, %v4989
        %v4991 = vsub.s32 4294967266, %v4986
        %v4992 = vadd.s32 %v4991, 127
        %v4993 = vshll.u32 %v4992, 23
        %v4994 = vor.u32 4788187, %v4993
        %v4995 = vand.u32 2147483647, %v4994
        %v4997 = vcvt.s32.f32 %v4990
        %v4998 = vmul.f32 %v4997, %v4995
        %v4999 = vxor.u32 %v4998, 2147483648
        %v5000 = vsel %vm4917, %v4999, %v4998
        %v5001 = vsub.s32 4, %v4977
        %v5002 = vsel %vm4917, %v5001, %v4977
        %v5003 = vsel %vm4916, %v809, %v5000
        %v5004 = vsel %vm4916, 0, %v5002
        %v5005 = vcosq.f32.pop %v5003
        %v5006 = vsinq.f32.pop %v5003
        %vm5007 = vweird.f32 %v809
        %v5008 = vadd.s32 %v5004, 3
        %v5009 = vand.u32 %v5008, 3
        %vm5010 = vcmp.lt.s32.totalorder %v5009, 2
        %vm5011 = vcmp.eq.s32.totalorder %v5009, 0
        %v5012 = vxor.u32 %v5006, 2147483648
        %v5013 = vsel %vm5011, %v5005, %v5012
        %vm5014 = vcmp.eq.s32.totalorder %v5009, 2
        %v5015 = vxor.u32 %v5005, 2147483648
        %v5016 = vsel %vm5014, %v5015, %v5006
        %v5017 = vsel %vm5010, %v5013, %v5016
        %v5018 = vsel %vm5007, nan, %v5017
        %v5019 = vand.u32 2147483647, %v811
        %vm5020 = vcmp.le.f32.partialorder %v5019, 0.7853982
        %vm5021 = vcmp.lt.s32.totalorder %v811, 0
        %v5022 = vand.u32 %v811, 2139095040
        %v5023 = vshrl.u32 %v5022, 23
        %v5024 = vsub.s32 %v5023, 127
        %v5025 = vand.u32 2147483647, %v811
        %v5026 = vand.u32 %v5025, 8388607
        %v5027 = vor.u32 %v5026, 8388608
        %v5028 = vsub.s32 0, %v5027
        %v5029 = vadd.s32 %v5024, 1
        %vm5030 = vcmp.gt.s32.totalorder %v5029, 0
        %v5031 = vsel %vm5030, %v5029, 0
        %v5032 = vshrl.u32 %v5031, 5
        %v5033 = vand.u32 %v5031, 31
        %v5034 = vsub.s32 32, %v5033
        %v5035 = vshrl.u32 683565275, %v5034
        %v5036 = vshll.u32 683565275, %v5033
        %v5037 = vshrl.u32 2475754826, %v5034
        %v5038 = vor.u32 %v5036, %v5037
        %v5039 = vshll.u32 2475754826, %v5033
        %v5040 = vshrl.u32 2131351028, %v5034
        %v5041 = vor.u32 %v5039, %v5040
        %v5042 = vshll.u32 2131351028, %v5033
        %v5043 = vshrl.u32 2102212464, %v5034
        %v5044 = vor.u32 %v5042, %v5043
        %v5045 = vshll.u32 2102212464, %v5033
        %v5046 = vshrl.u32 920167782, %v5034
        %v5047 = vor.u32 %v5045, %v5046
        %v5048 = vshll.u32 920167782, %v5033
        %v5049 = vshrl.u32 1326507024, %v5034
        %v5050 = vor.u32 %v5048, %v5049
        %vm5051 = vcmp.lt.s32.totalorder %v5032, 1
        %vm5052 = vcmp.lt.s32.totalorder %v5032, 2
        %vm5053 = vcmp.lt.s32.totalorder %v5032, 3
        %vm5054 = vcmp.lt.s32.totalorder %v5032, 4
        %v5055 = vsel %vm5051, %v5035, %v5038
        %v5056 = vsel %vm5054, %v5044, 2102212464
        %v5057 = vsel %vm5053, %v5041, %v5056
        %v5058 = vsel %vm5052, %v5055, %v5057
        %v5059 = vsel %vm5051, %v5038, %v5041
        %v5060 = vsel %vm5054, %v5047, 920167782
        %v5061 = vsel %vm5053, %v5044, %v5060
        %v5062 = vsel %vm5052, %v5059, %v5061
        %v5063 = vsel %vm5051, %v5041, %v5044
        %v5064 = vsel %vm5054, %v5050, 1326507024
        %v5065 = vsel %vm5053, %v5047, %v5064
        %v5066 = vsel %vm5052, %v5063, %v5065
        %v5067 = vshll.u32 %v5027, 8
        %v5068 = vmul.u32.u64.compose %v5067, %v5066
        %v5069 = vextract.low.u32 %v5068
        %v5070 = vextract.high.u32 %v5068
        %v5071 = vmul.u32.u64.compose %v5067, %v5062
        %v5072 = vextract.low.u32 %v5071
        %v5073 = vextract.high.u32 %v5071
        %v5074 = vmul.u32 %v5067, %v5058
        %v5075 = vadd.s32 %v5070, %v5072
        %vm5076 = vc.u32 %v5070, %v5072
        %v5077 = vadd.s32 %v5073, 1
        %v5078 = vsel %vm5076, %v5077, %v5073
        %v5079 = vadd.s32 %v5074, %v5078
        %v5080 = vadd.s32 %v5079, 536870912
        %v5081 = vshrl.u32 %v5080, 30
        %v5082 = vshll.u32 %v5081, 30
        %v5083 = vsub.s32 %v5079, %v5082
        %vm5084 = vcmp.lt.s32.totalorder %v5083, 0
        %v5085 = vsub.s32 0, %v5083
        %v5086 = vsel %vm5084, %v5085, %v5083
        %v5087 = vclz %v5086
        %v5088 = vsub.s32 %v5087, 2
        %vm5089 = vcmp.gt.s32.totalorder 0, %v5088
        %v5090 = vsel %vm5089, 0, %v5088
        %v5091 = vsub.s32 32, %v5090
        %v5092 = vshll.u32 %v5083, %v5090
        %v5093 = vshrl.u32 %v5075, %v5091
        %v5094 = vor.u32 %v5092, %v5093
        %v5095 = vsub.s32 4294967266, %v5090
        %v5096 = vadd.s32 %v5095, 127
        %v5097 = vshll.u32 %v5096, 23
        %v5098 = vor.u32 4788187, %v5097
        %v5099 = vand.u32 2147483647, %v5098
        %v5101 = vcvt.s32.f32 %v5094
        %v5102 = vmul.f32 %v5101, %v5099
        %v5103 = vxor.u32 %v5102, 2147483648
        %v5104 = vsel %vm5021, %v5103, %v5102
        %v5105 = vsub.s32 4, %v5081
        %v5106 = vsel %vm5021, %v5105, %v5081
        %v5107 = vsel %vm5020, %v811, %v5104
        %v5108 = vsel %vm5020, 0, %v5106
        %v5109 = vcosq.f32.pop %v5107
        %v5110 = vsinq.f32.pop %v5107
        %vm5111 = vweird.f32 %v811
        %v5112 = vadd.s32 %v5108, 3
        %v5113 = vand.u32 %v5112, 3
        %vm5114 = vcmp.lt.s32.totalorder %v5113, 2
        %vm5115 = vcmp.eq.s32.totalorder %v5113, 0
        %v5116 = vxor.u32 %v5110, 2147483648
        %v5117 = vsel %vm5115, %v5109, %v5116
        %vm5118 = vcmp.eq.s32.totalorder %v5113, 2
        %v5119 = vxor.u32 %v5109, 2147483648
        %v5120 = vsel %vm5118, %v5119, %v5110
        %v5121 = vsel %vm5114, %v5117, %v5120
        %v5122 = vsel %vm5111, nan, %v5121
        %v5123 = vand.u32 2147483647, %v898
        %vm5124 = vcmp.le.f32.partialorder %v5123, 0.7853982
        %vm5125 = vcmp.lt.s32.totalorder %v898, 0
        %v5126 = vand.u32 %v898, 2139095040
        %v5127 = vshrl.u32 %v5126, 23
        %v5128 = vsub.s32 %v5127, 127
        %v5129 = vand.u32 2147483647, %v898
        %v5130 = vand.u32 %v5129, 8388607
        %v5131 = vor.u32 %v5130, 8388608
        %v5132 = vsub.s32 0, %v5131
        %v5133 = vadd.s32 %v5128, 1
        %vm5134 = vcmp.gt.s32.totalorder %v5133, 0
        %v5135 = vsel %vm5134, %v5133, 0
        %v5136 = vshrl.u32 %v5135, 5
        %v5137 = vand.u32 %v5135, 31
        %v5138 = vsub.s32 32, %v5137
        %v5139 = vshrl.u32 683565275, %v5138
        %v5140 = vshll.u32 683565275, %v5137
        %v5141 = vshrl.u32 2475754826, %v5138
        %v5142 = vor.u32 %v5140, %v5141
        %v5143 = vshll.u32 2475754826, %v5137
        %v5144 = vshrl.u32 2131351028, %v5138
        %v5145 = vor.u32 %v5143, %v5144
        %v5146 = vshll.u32 2131351028, %v5137
        %v5147 = vshrl.u32 2102212464, %v5138
        %v5148 = vor.u32 %v5146, %v5147
        %v5149 = vshll.u32 2102212464, %v5137
        %v5150 = vshrl.u32 920167782, %v5138
        %v5151 = vor.u32 %v5149, %v5150
        %v5152 = vshll.u32 920167782, %v5137
        %v5153 = vshrl.u32 1326507024, %v5138
        %v5154 = vor.u32 %v5152, %v5153
        %vm5155 = vcmp.lt.s32.totalorder %v5136, 1
        %vm5156 = vcmp.lt.s32.totalorder %v5136, 2
        %vm5157 = vcmp.lt.s32.totalorder %v5136, 3
        %vm5158 = vcmp.lt.s32.totalorder %v5136, 4
        %v5159 = vsel %vm5155, %v5139, %v5142
        %v5160 = vsel %vm5158, %v5148, 2102212464
        %v5161 = vsel %vm5157, %v5145, %v5160
        %v5162 = vsel %vm5156, %v5159, %v5161
        %v5163 = vsel %vm5155, %v5142, %v5145
        %v5164 = vsel %vm5158, %v5151, 920167782
        %v5165 = vsel %vm5157, %v5148, %v5164
        %v5166 = vsel %vm5156, %v5163, %v5165
        %v5167 = vsel %vm5155, %v5145, %v5148
        %v5168 = vsel %vm5158, %v5154, 1326507024
        %v5169 = vsel %vm5157, %v5151, %v5168
        %v5170 = vsel %vm5156, %v5167, %v5169
        %v5171 = vshll.u32 %v5131, 8
        %v5172 = vmul.u32.u64.compose %v5171, %v5170
        %v5173 = vextract.low.u32 %v5172
        %v5174 = vextract.high.u32 %v5172
        %v5175 = vmul.u32.u64.compose %v5171, %v5166
        %v5176 = vextract.low.u32 %v5175
        %v5177 = vextract.high.u32 %v5175
        %v5178 = vmul.u32 %v5171, %v5162
        %v5179 = vadd.s32 %v5174, %v5176
        %vm5180 = vc.u32 %v5174, %v5176
        %v5181 = vadd.s32 %v5177, 1
        %v5182 = vsel %vm5180, %v5181, %v5177
        %v5183 = vadd.s32 %v5178, %v5182
        %v5184 = vadd.s32 %v5183, 536870912
        %v5185 = vshrl.u32 %v5184, 30
        %v5186 = vshll.u32 %v5185, 30
        %v5187 = vsub.s32 %v5183, %v5186
        %vm5188 = vcmp.lt.s32.totalorder %v5187, 0
        %v5189 = vsub.s32 0, %v5187
        %v5190 = vsel %vm5188, %v5189, %v5187
        %v5191 = vclz %v5190
        %v5192 = vsub.s32 %v5191, 2
        %vm5193 = vcmp.gt.s32.totalorder 0, %v5192
        %v5194 = vsel %vm5193, 0, %v5192
        %v5195 = vsub.s32 32, %v5194
        %v5196 = vshll.u32 %v5187, %v5194
        %v5197 = vshrl.u32 %v5179, %v5195
        %v5198 = vor.u32 %v5196, %v5197
        %v5199 = vsub.s32 4294967266, %v5194
        %v5200 = vadd.s32 %v5199, 127
        %v5201 = vshll.u32 %v5200, 23
        %v5202 = vor.u32 4788187, %v5201
        %v5203 = vand.u32 2147483647, %v5202
        %v5205 = vcvt.s32.f32 %v5198
        %v5206 = vmul.f32 %v5205, %v5203
        %v5207 = vxor.u32 %v5206, 2147483648
        %v5208 = vsel %vm5125, %v5207, %v5206
        %v5209 = vsub.s32 4, %v5185
        %v5210 = vsel %vm5125, %v5209, %v5185
        %v5211 = vsel %vm5124, %v898, %v5208
        %v5212 = vsel %vm5124, 0, %v5210
        %v5213 = vcosq.f32.pop %v5211
        %v5214 = vsinq.f32.pop %v5211
        %vm5215 = vweird.f32 %v898
        %v5216 = vadd.s32 %v5212, 3
        %v5217 = vand.u32 %v5216, 3
        %vm5218 = vcmp.lt.s32.totalorder %v5217, 2
        %vm5219 = vcmp.eq.s32.totalorder %v5217, 0
        %v5220 = vxor.u32 %v5214, 2147483648
        %v5221 = vsel %vm5219, %v5213, %v5220
        %vm5222 = vcmp.eq.s32.totalorder %v5217, 2
        %v5223 = vxor.u32 %v5213, 2147483648
        %v5224 = vsel %vm5222, %v5223, %v5214
        %v5225 = vsel %vm5218, %v5221, %v5224
        %v5226 = vsel %vm5215, nan, %v5225
        %v5227 = vand.u32 2147483647, %v900
        %vm5228 = vcmp.le.f32.partialorder %v5227, 0.7853982
        %vm5229 = vcmp.lt.s32.totalorder %v900, 0
        %v5230 = vand.u32 %v900, 2139095040
        %v5231 = vshrl.u32 %v5230, 23
        %v5232 = vsub.s32 %v5231, 127
        %v5233 = vand.u32 2147483647, %v900
        %v5234 = vand.u32 %v5233, 8388607
        %v5235 = vor.u32 %v5234, 8388608
        %v5236 = vsub.s32 0, %v5235
        %v5237 = vadd.s32 %v5232, 1
        %vm5238 = vcmp.gt.s32.totalorder %v5237, 0
        %v5239 = vsel %vm5238, %v5237, 0
        %v5240 = vshrl.u32 %v5239, 5
        %v5241 = vand.u32 %v5239, 31
        %v5242 = vsub.s32 32, %v5241
        %v5243 = vshrl.u32 683565275, %v5242
        %v5244 = vshll.u32 683565275, %v5241
        %v5245 = vshrl.u32 2475754826, %v5242
        %v5246 = vor.u32 %v5244, %v5245
        %v5247 = vshll.u32 2475754826, %v5241
        %v5248 = vshrl.u32 2131351028, %v5242
        %v5249 = vor.u32 %v5247, %v5248
        %v5250 = vshll.u32 2131351028, %v5241
        %v5251 = vshrl.u32 2102212464, %v5242
        %v5252 = vor.u32 %v5250, %v5251
        %v5253 = vshll.u32 2102212464, %v5241
        %v5254 = vshrl.u32 920167782, %v5242
        %v5255 = vor.u32 %v5253, %v5254
        %v5256 = vshll.u32 920167782, %v5241
        %v5257 = vshrl.u32 1326507024, %v5242
        %v5258 = vor.u32 %v5256, %v5257
        %vm5259 = vcmp.lt.s32.totalorder %v5240, 1
        %vm5260 = vcmp.lt.s32.totalorder %v5240, 2
        %vm5261 = vcmp.lt.s32.totalorder %v5240, 3
        %vm5262 = vcmp.lt.s32.totalorder %v5240, 4
        %v5263 = vsel %vm5259, %v5243, %v5246
        %v5264 = vsel %vm5262, %v5252, 2102212464
        %v5265 = vsel %vm5261, %v5249, %v5264
        %v5266 = vsel %vm5260, %v5263, %v5265
        %v5267 = vsel %vm5259, %v5246, %v5249
        %v5268 = vsel %vm5262, %v5255, 920167782
        %v5269 = vsel %vm5261, %v5252, %v5268
        %v5270 = vsel %vm5260, %v5267, %v5269
        %v5271 = vsel %vm5259, %v5249, %v5252
        %v5272 = vsel %vm5262, %v5258, 1326507024
        %v5273 = vsel %vm5261, %v5255, %v5272
        %v5274 = vsel %vm5260, %v5271, %v5273
        %v5275 = vshll.u32 %v5235, 8
        %v5276 = vmul.u32.u64.compose %v5275, %v5274
        %v5277 = vextract.low.u32 %v5276
        %v5278 = vextract.high.u32 %v5276
        %v5279 = vmul.u32.u64.compose %v5275, %v5270
        %v5280 = vextract.low.u32 %v5279
        %v5281 = vextract.high.u32 %v5279
        %v5282 = vmul.u32 %v5275, %v5266
        %v5283 = vadd.s32 %v5278, %v5280
        %vm5284 = vc.u32 %v5278, %v5280
        %v5285 = vadd.s32 %v5281, 1
        %v5286 = vsel %vm5284, %v5285, %v5281
        %v5287 = vadd.s32 %v5282, %v5286
        %v5288 = vadd.s32 %v5287, 536870912
        %v5289 = vshrl.u32 %v5288, 30
        %v5290 = vshll.u32 %v5289, 30
        %v5291 = vsub.s32 %v5287, %v5290
        %vm5292 = vcmp.lt.s32.totalorder %v5291, 0
        %v5293 = vsub.s32 0, %v5291
        %v5294 = vsel %vm5292, %v5293, %v5291
        %v5295 = vclz %v5294
        %v5296 = vsub.s32 %v5295, 2
        %vm5297 = vcmp.gt.s32.totalorder 0, %v5296
        %v5298 = vsel %vm5297, 0, %v5296
        %v5299 = vsub.s32 32, %v5298
        %v5300 = vshll.u32 %v5291, %v5298
        %v5301 = vshrl.u32 %v5283, %v5299
        %v5302 = vor.u32 %v5300, %v5301
        %v5303 = vsub.s32 4294967266, %v5298
        %v5304 = vadd.s32 %v5303, 127
        %v5305 = vshll.u32 %v5304, 23
        %v5306 = vor.u32 4788187, %v5305
        %v5307 = vand.u32 2147483647, %v5306
        %v5309 = vcvt.s32.f32 %v5302
        %v5310 = vmul.f32 %v5309, %v5307
        %v5311 = vxor.u32 %v5310, 2147483648
        %v5312 = vsel %vm5229, %v5311, %v5310
        %v5313 = vsub.s32 4, %v5289
        %v5314 = vsel %vm5229, %v5313, %v5289
        %v5315 = vsel %vm5228, %v900, %v5312
        %v5316 = vsel %vm5228, 0, %v5314
        %v5317 = vcosq.f32.pop %v5315
        %v5318 = vsinq.f32.pop %v5315
        %vm5319 = vweird.f32 %v900
        %v5320 = vadd.s32 %v5316, 3
        %v5321 = vand.u32 %v5320, 3
        %vm5322 = vcmp.lt.s32.totalorder %v5321, 2
        %vm5323 = vcmp.eq.s32.totalorder %v5321, 0
        %v5324 = vxor.u32 %v5318, 2147483648
        %v5325 = vsel %vm5323, %v5317, %v5324
        %vm5326 = vcmp.eq.s32.totalorder %v5321, 2
        %v5327 = vxor.u32 %v5317, 2147483648
        %v5328 = vsel %vm5326, %v5327, %v5318
        %v5329 = vsel %vm5322, %v5325, %v5328
        %v5330 = vsel %vm5319, nan, %v5329
        %v5331 = vand.u32 2147483647, %v987
        %vm5332 = vcmp.le.f32.partialorder %v5331, 0.7853982
        %vm5333 = vcmp.lt.s32.totalorder %v987, 0
        %v5334 = vand.u32 %v987, 2139095040
        %v5335 = vshrl.u32 %v5334, 23
        %v5336 = vsub.s32 %v5335, 127
        %v5337 = vand.u32 2147483647, %v987
        %v5338 = vand.u32 %v5337, 8388607
        %v5339 = vor.u32 %v5338, 8388608
        %v5340 = vsub.s32 0, %v5339
        %v5341 = vadd.s32 %v5336, 1
        %vm5342 = vcmp.gt.s32.totalorder %v5341, 0
        %v5343 = vsel %vm5342, %v5341, 0
        %v5344 = vshrl.u32 %v5343, 5
        %v5345 = vand.u32 %v5343, 31
        %v5346 = vsub.s32 32, %v5345
        %v5347 = vshrl.u32 683565275, %v5346
        %v5348 = vshll.u32 683565275, %v5345
        %v5349 = vshrl.u32 2475754826, %v5346
        %v5350 = vor.u32 %v5348, %v5349
        %v5351 = vshll.u32 2475754826, %v5345
        %v5352 = vshrl.u32 2131351028, %v5346
        %v5353 = vor.u32 %v5351, %v5352
        %v5354 = vshll.u32 2131351028, %v5345
        %v5355 = vshrl.u32 2102212464, %v5346
        %v5356 = vor.u32 %v5354, %v5355
        %v5357 = vshll.u32 2102212464, %v5345
        %v5358 = vshrl.u32 920167782, %v5346
        %v5359 = vor.u32 %v5357, %v5358
        %v5360 = vshll.u32 920167782, %v5345
        %v5361 = vshrl.u32 1326507024, %v5346
        %v5362 = vor.u32 %v5360, %v5361
        %vm5363 = vcmp.lt.s32.totalorder %v5344, 1
        %vm5364 = vcmp.lt.s32.totalorder %v5344, 2
        %vm5365 = vcmp.lt.s32.totalorder %v5344, 3
        %vm5366 = vcmp.lt.s32.totalorder %v5344, 4
        %v5367 = vsel %vm5363, %v5347, %v5350
        %v5368 = vsel %vm5366, %v5356, 2102212464
        %v5369 = vsel %vm5365, %v5353, %v5368
        %v5370 = vsel %vm5364, %v5367, %v5369
        %v5371 = vsel %vm5363, %v5350, %v5353
        %v5372 = vsel %vm5366, %v5359, 920167782
        %v5373 = vsel %vm5365, %v5356, %v5372
        %v5374 = vsel %vm5364, %v5371, %v5373
        %v5375 = vsel %vm5363, %v5353, %v5356
        %v5376 = vsel %vm5366, %v5362, 1326507024
        %v5377 = vsel %vm5365, %v5359, %v5376
        %v5378 = vsel %vm5364, %v5375, %v5377
        %v5379 = vshll.u32 %v5339, 8
        %v5380 = vmul.u32.u64.compose %v5379, %v5378
        %v5381 = vextract.low.u32 %v5380
        %v5382 = vextract.high.u32 %v5380
        %v5383 = vmul.u32.u64.compose %v5379, %v5374
        %v5384 = vextract.low.u32 %v5383
        %v5385 = vextract.high.u32 %v5383
        %v5386 = vmul.u32 %v5379, %v5370
        %v5387 = vadd.s32 %v5382, %v5384
        %vm5388 = vc.u32 %v5382, %v5384
        %v5389 = vadd.s32 %v5385, 1
        %v5390 = vsel %vm5388, %v5389, %v5385
        %v5391 = vadd.s32 %v5386, %v5390
        %v5392 = vadd.s32 %v5391, 536870912
        %v5393 = vshrl.u32 %v5392, 30
        %v5394 = vshll.u32 %v5393, 30
        %v5395 = vsub.s32 %v5391, %v5394
        %vm5396 = vcmp.lt.s32.totalorder %v5395, 0
        %v5397 = vsub.s32 0, %v5395
        %v5398 = vsel %vm5396, %v5397, %v5395
        %v5399 = vclz %v5398
        %v5400 = vsub.s32 %v5399, 2
        %vm5401 = vcmp.gt.s32.totalorder 0, %v5400
        %v5402 = vsel %vm5401, 0, %v5400
        %v5403 = vsub.s32 32, %v5402
        %v5404 = vshll.u32 %v5395, %v5402
        %v5405 = vshrl.u32 %v5387, %v5403
        %v5406 = vor.u32 %v5404, %v5405
        %v5407 = vsub.s32 4294967266, %v5402
        %v5408 = vadd.s32 %v5407, 127
        %v5409 = vshll.u32 %v5408, 23
        %v5410 = vor.u32 4788187, %v5409
        %v5411 = vand.u32 2147483647, %v5410
        %v5413 = vcvt.s32.f32 %v5406
        %v5414 = vmul.f32 %v5413, %v5411
        %v5415 = vxor.u32 %v5414, 2147483648
        %v5416 = vsel %vm5333, %v5415, %v5414
        %v5417 = vsub.s32 4, %v5393
        %v5418 = vsel %vm5333, %v5417, %v5393
        %v5419 = vsel %vm5332, %v987, %v5416
        %v5420 = vsel %vm5332, 0, %v5418
        %v5421 = vcosq.f32.pop %v5419
        %v5422 = vsinq.f32.pop %v5419
        %vm5423 = vweird.f32 %v987
        %v5424 = vadd.s32 %v5420, 3
        %v5425 = vand.u32 %v5424, 3
        %vm5426 = vcmp.lt.s32.totalorder %v5425, 2
        %vm5427 = vcmp.eq.s32.totalorder %v5425, 0
        %v5428 = vxor.u32 %v5422, 2147483648
        %v5429 = vsel %vm5427, %v5421, %v5428
        %vm5430 = vcmp.eq.s32.totalorder %v5425, 2
        %v5431 = vxor.u32 %v5421, 2147483648
        %v5432 = vsel %vm5430, %v5431, %v5422
        %v5433 = vsel %vm5426, %v5429, %v5432
        %v5434 = vsel %vm5423, nan, %v5433
        %v5435 = vand.u32 2147483647, %v989
        %vm5436 = vcmp.le.f32.partialorder %v5435, 0.7853982
        %vm5437 = vcmp.lt.s32.totalorder %v989, 0
        %v5438 = vand.u32 %v989, 2139095040
        %v5439 = vshrl.u32 %v5438, 23
        %v5440 = vsub.s32 %v5439, 127
        %v5441 = vand.u32 2147483647, %v989
        %v5442 = vand.u32 %v5441, 8388607
        %v5443 = vor.u32 %v5442, 8388608
        %v5444 = vsub.s32 0, %v5443
        %v5445 = vadd.s32 %v5440, 1
        %vm5446 = vcmp.gt.s32.totalorder %v5445, 0
        %v5447 = vsel %vm5446, %v5445, 0
        %v5448 = vshrl.u32 %v5447, 5
        %v5449 = vand.u32 %v5447, 31
        %v5450 = vsub.s32 32, %v5449
        %v5451 = vshrl.u32 683565275, %v5450
        %v5452 = vshll.u32 683565275, %v5449
        %v5453 = vshrl.u32 2475754826, %v5450
        %v5454 = vor.u32 %v5452, %v5453
        %v5455 = vshll.u32 2475754826, %v5449
        %v5456 = vshrl.u32 2131351028, %v5450
        %v5457 = vor.u32 %v5455, %v5456
        %v5458 = vshll.u32 2131351028, %v5449
        %v5459 = vshrl.u32 2102212464, %v5450
        %v5460 = vor.u32 %v5458, %v5459
        %v5461 = vshll.u32 2102212464, %v5449
        %v5462 = vshrl.u32 920167782, %v5450
        %v5463 = vor.u32 %v5461, %v5462
        %v5464 = vshll.u32 920167782, %v5449
        %v5465 = vshrl.u32 1326507024, %v5450
        %v5466 = vor.u32 %v5464, %v5465
        %vm5467 = vcmp.lt.s32.totalorder %v5448, 1
        %vm5468 = vcmp.lt.s32.totalorder %v5448, 2
        %vm5469 = vcmp.lt.s32.totalorder %v5448, 3
        %vm5470 = vcmp.lt.s32.totalorder %v5448, 4
        %v5471 = vsel %vm5467, %v5451, %v5454
        %v5472 = vsel %vm5470, %v5460, 2102212464
        %v5473 = vsel %vm5469, %v5457, %v5472
        %v5474 = vsel %vm5468, %v5471, %v5473
        %v5475 = vsel %vm5467, %v5454, %v5457
        %v5476 = vsel %vm5470, %v5463, 920167782
        %v5477 = vsel %vm5469, %v5460, %v5476
        %v5478 = vsel %vm5468, %v5475, %v5477
        %v5479 = vsel %vm5467, %v5457, %v5460
        %v5480 = vsel %vm5470, %v5466, 1326507024
        %v5481 = vsel %vm5469, %v5463, %v5480
        %v5482 = vsel %vm5468, %v5479, %v5481
        %v5483 = vshll.u32 %v5443, 8
        %v5484 = vmul.u32.u64.compose %v5483, %v5482
        %v5485 = vextract.low.u32 %v5484
        %v5486 = vextract.high.u32 %v5484
        %v5487 = vmul.u32.u64.compose %v5483, %v5478
        %v5488 = vextract.low.u32 %v5487
        %v5489 = vextract.high.u32 %v5487
        %v5490 = vmul.u32 %v5483, %v5474
        %v5491 = vadd.s32 %v5486, %v5488
        %vm5492 = vc.u32 %v5486, %v5488
        %v5493 = vadd.s32 %v5489, 1
        %v5494 = vsel %vm5492, %v5493, %v5489
        %v5495 = vadd.s32 %v5490, %v5494
        %v5496 = vadd.s32 %v5495, 536870912
        %v5497 = vshrl.u32 %v5496, 30
        %v5498 = vshll.u32 %v5497, 30
        %v5499 = vsub.s32 %v5495, %v5498
        %vm5500 = vcmp.lt.s32.totalorder %v5499, 0
        %v5501 = vsub.s32 0, %v5499
        %v5502 = vsel %vm5500, %v5501, %v5499
        %v5503 = vclz %v5502
        %v5504 = vsub.s32 %v5503, 2
        %vm5505 = vcmp.gt.s32.totalorder 0, %v5504
        %v5506 = vsel %vm5505, 0, %v5504
        %v5507 = vsub.s32 32, %v5506
        %v5508 = vshll.u32 %v5499, %v5506
        %v5509 = vshrl.u32 %v5491, %v5507
        %v5510 = vor.u32 %v5508, %v5509
        %v5511 = vsub.s32 4294967266, %v5506
        %v5512 = vadd.s32 %v5511, 127
        %v5513 = vshll.u32 %v5512, 23
        %v5514 = vor.u32 4788187, %v5513
        %v5515 = vand.u32 2147483647, %v5514
        %v5517 = vcvt.s32.f32 %v5510
        %v5518 = vmul.f32 %v5517, %v5515
        %v5519 = vxor.u32 %v5518, 2147483648
        %v5520 = vsel %vm5437, %v5519, %v5518
        %v5521 = vsub.s32 4, %v5497
        %v5522 = vsel %vm5437, %v5521, %v5497
        %v5523 = vsel %vm5436, %v989, %v5520
        %v5524 = vsel %vm5436, 0, %v5522
        %v5525 = vcosq.f32.pop %v5523
        %v5526 = vsinq.f32.pop %v5523
        %vm5527 = vweird.f32 %v989
        %v5528 = vadd.s32 %v5524, 3
        %v5529 = vand.u32 %v5528, 3
        %vm5530 = vcmp.lt.s32.totalorder %v5529, 2
        %vm5531 = vcmp.eq.s32.totalorder %v5529, 0
        %v5532 = vxor.u32 %v5526, 2147483648
        %v5533 = vsel %vm5531, %v5525, %v5532
        %vm5534 = vcmp.eq.s32.totalorder %v5529, 2
        %v5535 = vxor.u32 %v5525, 2147483648
        %v5536 = vsel %vm5534, %v5535, %v5526
        %v5537 = vsel %vm5530, %v5533, %v5536
        %v5538 = vsel %vm5527, nan, %v5537
        %v5539 = vand.u32 2147483647, %v1076
        %vm5540 = vcmp.le.f32.partialorder %v5539, 0.7853982
        %vm5541 = vcmp.lt.s32.totalorder %v1076, 0
        %v5542 = vand.u32 %v1076, 2139095040
        %v5543 = vshrl.u32 %v5542, 23
        %v5544 = vsub.s32 %v5543, 127
        %v5545 = vand.u32 2147483647, %v1076
        %v5546 = vand.u32 %v5545, 8388607
        %v5547 = vor.u32 %v5546, 8388608
        %v5548 = vsub.s32 0, %v5547
        %v5549 = vadd.s32 %v5544, 1
        %vm5550 = vcmp.gt.s32.totalorder %v5549, 0
        %v5551 = vsel %vm5550, %v5549, 0
        %v5552 = vshrl.u32 %v5551, 5
        %v5553 = vand.u32 %v5551, 31
        %v5554 = vsub.s32 32, %v5553
        %v5555 = vshrl.u32 683565275, %v5554
        %v5556 = vshll.u32 683565275, %v5553
        %v5557 = vshrl.u32 2475754826, %v5554
        %v5558 = vor.u32 %v5556, %v5557
        %v5559 = vshll.u32 2475754826, %v5553
        %v5560 = vshrl.u32 2131351028, %v5554
        %v5561 = vor.u32 %v5559, %v5560
        %v5562 = vshll.u32 2131351028, %v5553
        %v5563 = vshrl.u32 2102212464, %v5554
        %v5564 = vor.u32 %v5562, %v5563
        %v5565 = vshll.u32 2102212464, %v5553
        %v5566 = vshrl.u32 920167782, %v5554
        %v5567 = vor.u32 %v5565, %v5566
        %v5568 = vshll.u32 920167782, %v5553
        %v5569 = vshrl.u32 1326507024, %v5554
        %v5570 = vor.u32 %v5568, %v5569
        %vm5571 = vcmp.lt.s32.totalorder %v5552, 1
        %vm5572 = vcmp.lt.s32.totalorder %v5552, 2
        %vm5573 = vcmp.lt.s32.totalorder %v5552, 3
        %vm5574 = vcmp.lt.s32.totalorder %v5552, 4
        %v5575 = vsel %vm5571, %v5555, %v5558
        %v5576 = vsel %vm5574, %v5564, 2102212464
        %v5577 = vsel %vm5573, %v5561, %v5576
        %v5578 = vsel %vm5572, %v5575, %v5577
        %v5579 = vsel %vm5571, %v5558, %v5561
        %v5580 = vsel %vm5574, %v5567, 920167782
        %v5581 = vsel %vm5573, %v5564, %v5580
        %v5582 = vsel %vm5572, %v5579, %v5581
        %v5583 = vsel %vm5571, %v5561, %v5564
        %v5584 = vsel %vm5574, %v5570, 1326507024
        %v5585 = vsel %vm5573, %v5567, %v5584
        %v5586 = vsel %vm5572, %v5583, %v5585
        %v5587 = vshll.u32 %v5547, 8
        %v5588 = vmul.u32.u64.compose %v5587, %v5586
        %v5589 = vextract.low.u32 %v5588
        %v5590 = vextract.high.u32 %v5588
        %v5591 = vmul.u32.u64.compose %v5587, %v5582
        %v5592 = vextract.low.u32 %v5591
        %v5593 = vextract.high.u32 %v5591
        %v5594 = vmul.u32 %v5587, %v5578
        %v5595 = vadd.s32 %v5590, %v5592
        %vm5596 = vc.u32 %v5590, %v5592
        %v5597 = vadd.s32 %v5593, 1
        %v5598 = vsel %vm5596, %v5597, %v5593
        %v5599 = vadd.s32 %v5594, %v5598
        %v5600 = vadd.s32 %v5599, 536870912
        %v5601 = vshrl.u32 %v5600, 30
        %v5602 = vshll.u32 %v5601, 30
        %v5603 = vsub.s32 %v5599, %v5602
        %vm5604 = vcmp.lt.s32.totalorder %v5603, 0
        %v5605 = vsub.s32 0, %v5603
        %v5606 = vsel %vm5604, %v5605, %v5603
        %v5607 = vclz %v5606
        %v5608 = vsub.s32 %v5607, 2
        %vm5609 = vcmp.gt.s32.totalorder 0, %v5608
        %v5610 = vsel %vm5609, 0, %v5608
        %v5611 = vsub.s32 32, %v5610
        %v5612 = vshll.u32 %v5603, %v5610
        %v5613 = vshrl.u32 %v5595, %v5611
        %v5614 = vor.u32 %v5612, %v5613
        %v5615 = vsub.s32 4294967266, %v5610
        %v5616 = vadd.s32 %v5615, 127
        %v5617 = vshll.u32 %v5616, 23
        %v5618 = vor.u32 4788187, %v5617
        %v5619 = vand.u32 2147483647, %v5618
        %v5621 = vcvt.s32.f32 %v5614
        %v5622 = vmul.f32 %v5621, %v5619
        %v5623 = vxor.u32 %v5622, 2147483648
        %v5624 = vsel %vm5541, %v5623, %v5622
        %v5625 = vsub.s32 4, %v5601
        %v5626 = vsel %vm5541, %v5625, %v5601
        %v5627 = vsel %vm5540, %v1076, %v5624
        %v5628 = vsel %vm5540, 0, %v5626
        %v5629 = vcosq.f32.pop %v5627
        %v5630 = vsinq.f32.pop %v5627
        %vm5631 = vweird.f32 %v1076
        %v5632 = vadd.s32 %v5628, 3
        %v5633 = vand.u32 %v5632, 3
        %vm5634 = vcmp.lt.s32.totalorder %v5633, 2
        %vm5635 = vcmp.eq.s32.totalorder %v5633, 0
        %v5636 = vxor.u32 %v5630, 2147483648
        %v5637 = vsel %vm5635, %v5629, %v5636
        %vm5638 = vcmp.eq.s32.totalorder %v5633, 2
        %v5639 = vxor.u32 %v5629, 2147483648
        %v5640 = vsel %vm5638, %v5639, %v5630
        %v5641 = vsel %vm5634, %v5637, %v5640
        %v5642 = vsel %vm5631, nan, %v5641
        %v5643 = vand.u32 2147483647, %v1078
        %vm5644 = vcmp.le.f32.partialorder %v5643, 0.7853982
        %vm5645 = vcmp.lt.s32.totalorder %v1078, 0
        %v5646 = vand.u32 %v1078, 2139095040
        %v5647 = vshrl.u32 %v5646, 23
        %v5648 = vsub.s32 %v5647, 127
        %v5649 = vand.u32 2147483647, %v1078
        %v5650 = vand.u32 %v5649, 8388607
        %v5651 = vor.u32 %v5650, 8388608
        %v5652 = vsub.s32 0, %v5651
        %v5653 = vadd.s32 %v5648, 1
        %vm5654 = vcmp.gt.s32.totalorder %v5653, 0
        %v5655 = vsel %vm5654, %v5653, 0
        %v5656 = vshrl.u32 %v5655, 5
        %v5657 = vand.u32 %v5655, 31
        %v5658 = vsub.s32 32, %v5657
        %v5659 = vshrl.u32 683565275, %v5658
        %v5660 = vshll.u32 683565275, %v5657
        %v5661 = vshrl.u32 2475754826, %v5658
        %v5662 = vor.u32 %v5660, %v5661
        %v5663 = vshll.u32 2475754826, %v5657
        %v5664 = vshrl.u32 2131351028, %v5658
        %v5665 = vor.u32 %v5663, %v5664
        %v5666 = vshll.u32 2131351028, %v5657
        %v5667 = vshrl.u32 2102212464, %v5658
        %v5668 = vor.u32 %v5666, %v5667
        %v5669 = vshll.u32 2102212464, %v5657
        %v5670 = vshrl.u32 920167782, %v5658
        %v5671 = vor.u32 %v5669, %v5670
        %v5672 = vshll.u32 920167782, %v5657
        %v5673 = vshrl.u32 1326507024, %v5658
        %v5674 = vor.u32 %v5672, %v5673
        %vm5675 = vcmp.lt.s32.totalorder %v5656, 1
        %vm5676 = vcmp.lt.s32.totalorder %v5656, 2
        %vm5677 = vcmp.lt.s32.totalorder %v5656, 3
        %vm5678 = vcmp.lt.s32.totalorder %v5656, 4
        %v5679 = vsel %vm5675, %v5659, %v5662
        %v5680 = vsel %vm5678, %v5668, 2102212464
        %v5681 = vsel %vm5677, %v5665, %v5680
        %v5682 = vsel %vm5676, %v5679, %v5681
        %v5683 = vsel %vm5675, %v5662, %v5665
        %v5684 = vsel %vm5678, %v5671, 920167782
        %v5685 = vsel %vm5677, %v5668, %v5684
        %v5686 = vsel %vm5676, %v5683, %v5685
        %v5687 = vsel %vm5675, %v5665, %v5668
        %v5688 = vsel %vm5678, %v5674, 1326507024
        %v5689 = vsel %vm5677, %v5671, %v5688
        %v5690 = vsel %vm5676, %v5687, %v5689
        %v5691 = vshll.u32 %v5651, 8
        %v5692 = vmul.u32.u64.compose %v5691, %v5690
        %v5693 = vextract.low.u32 %v5692
        %v5694 = vextract.high.u32 %v5692
        %v5695 = vmul.u32.u64.compose %v5691, %v5686
        %v5696 = vextract.low.u32 %v5695
        %v5697 = vextract.high.u32 %v5695
        %v5698 = vmul.u32 %v5691, %v5682
        %v5699 = vadd.s32 %v5694, %v5696
        %vm5700 = vc.u32 %v5694, %v5696
        %v5701 = vadd.s32 %v5697, 1
        %v5702 = vsel %vm5700, %v5701, %v5697
        %v5703 = vadd.s32 %v5698, %v5702
        %v5704 = vadd.s32 %v5703, 536870912
        %v5705 = vshrl.u32 %v5704, 30
        %v5706 = vshll.u32 %v5705, 30
        %v5707 = vsub.s32 %v5703, %v5706
        %vm5708 = vcmp.lt.s32.totalorder %v5707, 0
        %v5709 = vsub.s32 0, %v5707
        %v5710 = vsel %vm5708, %v5709, %v5707
        %v5711 = vclz %v5710
        %v5712 = vsub.s32 %v5711, 2
        %vm5713 = vcmp.gt.s32.totalorder 0, %v5712
        %v5714 = vsel %vm5713, 0, %v5712
        %v5715 = vsub.s32 32, %v5714
        %v5716 = vshll.u32 %v5707, %v5714
        %v5717 = vshrl.u32 %v5699, %v5715
        %v5718 = vor.u32 %v5716, %v5717
        %v5719 = vsub.s32 4294967266, %v5714
        %v5720 = vadd.s32 %v5719, 127
        %v5721 = vshll.u32 %v5720, 23
        %v5722 = vor.u32 4788187, %v5721
        %v5723 = vand.u32 2147483647, %v5722
        %v5725 = vcvt.s32.f32 %v5718
        %v5726 = vmul.f32 %v5725, %v5723
        %v5727 = vxor.u32 %v5726, 2147483648
        %v5728 = vsel %vm5645, %v5727, %v5726
        %v5729 = vsub.s32 4, %v5705
        %v5730 = vsel %vm5645, %v5729, %v5705
        %v5731 = vsel %vm5644, %v1078, %v5728
        %v5732 = vsel %vm5644, 0, %v5730
        %v5733 = vcosq.f32.pop %v5731
        %v5734 = vsinq.f32.pop %v5731
        %vm5735 = vweird.f32 %v1078
        %v5736 = vadd.s32 %v5732, 3
        %v5737 = vand.u32 %v5736, 3
        %vm5738 = vcmp.lt.s32.totalorder %v5737, 2
        %vm5739 = vcmp.eq.s32.totalorder %v5737, 0
        %v5740 = vxor.u32 %v5734, 2147483648
        %v5741 = vsel %vm5739, %v5733, %v5740
        %vm5742 = vcmp.eq.s32.totalorder %v5737, 2
        %v5743 = vxor.u32 %v5733, 2147483648
        %v5744 = vsel %vm5742, %v5743, %v5734
        %v5745 = vsel %vm5738, %v5741, %v5744
        %v5746 = vsel %vm5735, nan, %v5745
        %v5747 = vand.u32 2147483647, %v1163
        %vm5748 = vcmp.le.f32.partialorder %v5747, 0.7853982
        %vm5749 = vcmp.lt.s32.totalorder %v1163, 0
        %v5750 = vand.u32 %v1163, 2139095040
        %v5751 = vshrl.u32 %v5750, 23
        %v5752 = vsub.s32 %v5751, 127
        %v5753 = vand.u32 2147483647, %v1163
        %v5754 = vand.u32 %v5753, 8388607
        %v5755 = vor.u32 %v5754, 8388608
        %v5756 = vsub.s32 0, %v5755
        %v5757 = vadd.s32 %v5752, 1
        %vm5758 = vcmp.gt.s32.totalorder %v5757, 0
        %v5759 = vsel %vm5758, %v5757, 0
        %v5760 = vshrl.u32 %v5759, 5
        %v5761 = vand.u32 %v5759, 31
        %v5762 = vsub.s32 32, %v5761
        %v5763 = vshrl.u32 683565275, %v5762
        %v5764 = vshll.u32 683565275, %v5761
        %v5765 = vshrl.u32 2475754826, %v5762
        %v5766 = vor.u32 %v5764, %v5765
        %v5767 = vshll.u32 2475754826, %v5761
        %v5768 = vshrl.u32 2131351028, %v5762
        %v5769 = vor.u32 %v5767, %v5768
        %v5770 = vshll.u32 2131351028, %v5761
        %v5771 = vshrl.u32 2102212464, %v5762
        %v5772 = vor.u32 %v5770, %v5771
        %v5773 = vshll.u32 2102212464, %v5761
        %v5774 = vshrl.u32 920167782, %v5762
        %v5775 = vor.u32 %v5773, %v5774
        %v5776 = vshll.u32 920167782, %v5761
        %v5777 = vshrl.u32 1326507024, %v5762
        %v5778 = vor.u32 %v5776, %v5777
        %vm5779 = vcmp.lt.s32.totalorder %v5760, 1
        %vm5780 = vcmp.lt.s32.totalorder %v5760, 2
        %vm5781 = vcmp.lt.s32.totalorder %v5760, 3
        %vm5782 = vcmp.lt.s32.totalorder %v5760, 4
        %v5783 = vsel %vm5779, %v5763, %v5766
        %v5784 = vsel %vm5782, %v5772, 2102212464
        %v5785 = vsel %vm5781, %v5769, %v5784
        %v5786 = vsel %vm5780, %v5783, %v5785
        %v5787 = vsel %vm5779, %v5766, %v5769
        %v5788 = vsel %vm5782, %v5775, 920167782
        %v5789 = vsel %vm5781, %v5772, %v5788
        %v5790 = vsel %vm5780, %v5787, %v5789
        %v5791 = vsel %vm5779, %v5769, %v5772
        %v5792 = vsel %vm5782, %v5778, 1326507024
        %v5793 = vsel %vm5781, %v5775, %v5792
        %v5794 = vsel %vm5780, %v5791, %v5793
        %v5795 = vshll.u32 %v5755, 8
        %v5796 = vmul.u32.u64.compose %v5795, %v5794
        %v5797 = vextract.low.u32 %v5796
        %v5798 = vextract.high.u32 %v5796
        %v5799 = vmul.u32.u64.compose %v5795, %v5790
        %v5800 = vextract.low.u32 %v5799
        %v5801 = vextract.high.u32 %v5799
        %v5802 = vmul.u32 %v5795, %v5786
        %v5803 = vadd.s32 %v5798, %v5800
        %vm5804 = vc.u32 %v5798, %v5800
        %v5805 = vadd.s32 %v5801, 1
        %v5806 = vsel %vm5804, %v5805, %v5801
        %v5807 = vadd.s32 %v5802, %v5806
        %v5808 = vadd.s32 %v5807, 536870912
        %v5809 = vshrl.u32 %v5808, 30
        %v5810 = vshll.u32 %v5809, 30
        %v5811 = vsub.s32 %v5807, %v5810
        %vm5812 = vcmp.lt.s32.totalorder %v5811, 0
        %v5813 = vsub.s32 0, %v5811
        %v5814 = vsel %vm5812, %v5813, %v5811
        %v5815 = vclz %v5814
        %v5816 = vsub.s32 %v5815, 2
        %vm5817 = vcmp.gt.s32.totalorder 0, %v5816
        %v5818 = vsel %vm5817, 0, %v5816
        %v5819 = vsub.s32 32, %v5818
        %v5820 = vshll.u32 %v5811, %v5818
        %v5821 = vshrl.u32 %v5803, %v5819
        %v5822 = vor.u32 %v5820, %v5821
        %v5823 = vsub.s32 4294967266, %v5818
        %v5824 = vadd.s32 %v5823, 127
        %v5825 = vshll.u32 %v5824, 23
        %v5826 = vor.u32 4788187, %v5825
        %v5827 = vand.u32 2147483647, %v5826
        %v5829 = vcvt.s32.f32 %v5822
        %v5830 = vmul.f32 %v5829, %v5827
        %v5831 = vxor.u32 %v5830, 2147483648
        %v5832 = vsel %vm5749, %v5831, %v5830
        %v5833 = vsub.s32 4, %v5809
        %v5834 = vsel %vm5749, %v5833, %v5809
        %v5835 = vsel %vm5748, %v1163, %v5832
        %v5836 = vsel %vm5748, 0, %v5834
        %v5837 = vcosq.f32.pop %v5835
        %v5838 = vsinq.f32.pop %v5835
        %vm5839 = vweird.f32 %v1163
        %v5840 = vadd.s32 %v5836, 3
        %v5841 = vand.u32 %v5840, 3
        %vm5842 = vcmp.lt.s32.totalorder %v5841, 2
        %vm5843 = vcmp.eq.s32.totalorder %v5841, 0
        %v5844 = vxor.u32 %v5838, 2147483648
        %v5845 = vsel %vm5843, %v5837, %v5844
        %vm5846 = vcmp.eq.s32.totalorder %v5841, 2
        %v5847 = vxor.u32 %v5837, 2147483648
        %v5848 = vsel %vm5846, %v5847, %v5838
        %v5849 = vsel %vm5842, %v5845, %v5848
        %v5850 = vsel %vm5839, nan, %v5849
        %v5851 = vand.u32 2147483647, %v548
        %vm5852 = vcmp.le.f32.partialorder %v5851, 0.7853982
        %vm5853 = vcmp.lt.s32.totalorder %v548, 0
        %v5854 = vand.u32 %v548, 2139095040
        %v5855 = vshrl.u32 %v5854, 23
        %v5856 = vsub.s32 %v5855, 127
        %v5857 = vand.u32 2147483647, %v548
        %v5858 = vand.u32 %v5857, 8388607
        %v5859 = vor.u32 %v5858, 8388608
        %v5860 = vsub.s32 0, %v5859
        %v5861 = vadd.s32 %v5856, 1
        %vm5862 = vcmp.gt.s32.totalorder %v5861, 0
        %v5863 = vsel %vm5862, %v5861, 0
        %v5864 = vshrl.u32 %v5863, 5
        %v5865 = vand.u32 %v5863, 31
        %v5866 = vsub.s32 32, %v5865
        %v5867 = vshrl.u32 683565275, %v5866
        %v5868 = vshll.u32 683565275, %v5865
        %v5869 = vshrl.u32 2475754826, %v5866
        %v5870 = vor.u32 %v5868, %v5869
        %v5871 = vshll.u32 2475754826, %v5865
        %v5872 = vshrl.u32 2131351028, %v5866
        %v5873 = vor.u32 %v5871, %v5872
        %v5874 = vshll.u32 2131351028, %v5865
        %v5875 = vshrl.u32 2102212464, %v5866
        %v5876 = vor.u32 %v5874, %v5875
        %v5877 = vshll.u32 2102212464, %v5865
        %v5878 = vshrl.u32 920167782, %v5866
        %v5879 = vor.u32 %v5877, %v5878
        %v5880 = vshll.u32 920167782, %v5865
        %v5881 = vshrl.u32 1326507024, %v5866
        %v5882 = vor.u32 %v5880, %v5881
        %vm5883 = vcmp.lt.s32.totalorder %v5864, 1
        %vm5884 = vcmp.lt.s32.totalorder %v5864, 2
        %vm5885 = vcmp.lt.s32.totalorder %v5864, 3
        %vm5886 = vcmp.lt.s32.totalorder %v5864, 4
        %v5887 = vsel %vm5883, %v5867, %v5870
        %v5888 = vsel %vm5886, %v5876, 2102212464
        %v5889 = vsel %vm5885, %v5873, %v5888
        %v5890 = vsel %vm5884, %v5887, %v5889
        %v5891 = vsel %vm5883, %v5870, %v5873
        %v5892 = vsel %vm5886, %v5879, 920167782
        %v5893 = vsel %vm5885, %v5876, %v5892
        %v5894 = vsel %vm5884, %v5891, %v5893
        %v5895 = vsel %vm5883, %v5873, %v5876
        %v5896 = vsel %vm5886, %v5882, 1326507024
        %v5897 = vsel %vm5885, %v5879, %v5896
        %v5898 = vsel %vm5884, %v5895, %v5897
        %v5899 = vshll.u32 %v5859, 8
        %v5900 = vmul.u32.u64.compose %v5899, %v5898
        %v5901 = vextract.low.u32 %v5900
        %v5902 = vextract.high.u32 %v5900
        %v5903 = vmul.u32.u64.compose %v5899, %v5894
        %v5904 = vextract.low.u32 %v5903
        %v5905 = vextract.high.u32 %v5903
        %v5906 = vmul.u32 %v5899, %v5890
        %v5907 = vadd.s32 %v5902, %v5904
        %vm5908 = vc.u32 %v5902, %v5904
        %v5909 = vadd.s32 %v5905, 1
        %v5910 = vsel %vm5908, %v5909, %v5905
        %v5911 = vadd.s32 %v5906, %v5910
        %v5912 = vadd.s32 %v5911, 536870912
        %v5913 = vshrl.u32 %v5912, 30
        %v5914 = vshll.u32 %v5913, 30
        %v5915 = vsub.s32 %v5911, %v5914
        %vm5916 = vcmp.lt.s32.totalorder %v5915, 0
        %v5917 = vsub.s32 0, %v5915
        %v5918 = vsel %vm5916, %v5917, %v5915
        %v5919 = vclz %v5918
        %v5920 = vsub.s32 %v5919, 2
        %vm5921 = vcmp.gt.s32.totalorder 0, %v5920
        %v5922 = vsel %vm5921, 0, %v5920
        %v5923 = vsub.s32 32, %v5922
        %v5924 = vshll.u32 %v5915, %v5922
        %v5925 = vshrl.u32 %v5907, %v5923
        %v5926 = vor.u32 %v5924, %v5925
        %v5927 = vsub.s32 4294967266, %v5922
        %v5928 = vadd.s32 %v5927, 127
        %v5929 = vshll.u32 %v5928, 23
        %v5930 = vor.u32 4788187, %v5929
        %v5931 = vand.u32 2147483647, %v5930
        %v5933 = vcvt.s32.f32 %v5926
        %v5934 = vmul.f32 %v5933, %v5931
        %v5935 = vxor.u32 %v5934, 2147483648
        %v5936 = vsel %vm5853, %v5935, %v5934
        %v5937 = vsub.s32 4, %v5913
        %v5938 = vsel %vm5853, %v5937, %v5913
        %v5939 = vsel %vm5852, %v548, %v5936
        %v5940 = vsel %vm5852, 0, %v5938
        %v5941 = vcosq.f32.pop %v5939
        %v5942 = vsinq.f32.pop %v5939
        %vm5943 = vweird.f32 %v548
        %v5944 = vadd.s32 %v5940, 3
        %v5945 = vand.u32 %v5944, 3
        %vm5946 = vcmp.lt.s32.totalorder %v5945, 2
        %vm5947 = vcmp.eq.s32.totalorder %v5945, 0
        %v5948 = vxor.u32 %v5942, 2147483648
        %v5949 = vsel %vm5947, %v5941, %v5948
        %vm5950 = vcmp.eq.s32.totalorder %v5945, 2
        %v5951 = vxor.u32 %v5941, 2147483648
        %v5952 = vsel %vm5950, %v5951, %v5942
        %v5953 = vsel %vm5946, %v5949, %v5952
        %v5954 = vsel %vm5943, nan, %v5953
        %v5955 = vand.u32 2147483647, %v550
        %vm5956 = vcmp.le.f32.partialorder %v5955, 0.7853982
        %vm5957 = vcmp.lt.s32.totalorder %v550, 0
        %v5958 = vand.u32 %v550, 2139095040
        %v5959 = vshrl.u32 %v5958, 23
        %v5960 = vsub.s32 %v5959, 127
        %v5961 = vand.u32 2147483647, %v550
        %v5962 = vand.u32 %v5961, 8388607
        %v5963 = vor.u32 %v5962, 8388608
        %v5964 = vsub.s32 0, %v5963
        %v5965 = vadd.s32 %v5960, 1
        %vm5966 = vcmp.gt.s32.totalorder %v5965, 0
        %v5967 = vsel %vm5966, %v5965, 0
        %v5968 = vshrl.u32 %v5967, 5
        %v5969 = vand.u32 %v5967, 31
        %v5970 = vsub.s32 32, %v5969
        %v5971 = vshrl.u32 683565275, %v5970
        %v5972 = vshll.u32 683565275, %v5969
        %v5973 = vshrl.u32 2475754826, %v5970
        %v5974 = vor.u32 %v5972, %v5973
        %v5975 = vshll.u32 2475754826, %v5969
        %v5976 = vshrl.u32 2131351028, %v5970
        %v5977 = vor.u32 %v5975, %v5976
        %v5978 = vshll.u32 2131351028, %v5969
        %v5979 = vshrl.u32 2102212464, %v5970
        %v5980 = vor.u32 %v5978, %v5979
        %v5981 = vshll.u32 2102212464, %v5969
        %v5982 = vshrl.u32 920167782, %v5970
        %v5983 = vor.u32 %v5981, %v5982
        %v5984 = vshll.u32 920167782, %v5969
        %v5985 = vshrl.u32 1326507024, %v5970
        %v5986 = vor.u32 %v5984, %v5985
        %vm5987 = vcmp.lt.s32.totalorder %v5968, 1
        %vm5988 = vcmp.lt.s32.totalorder %v5968, 2
        %vm5989 = vcmp.lt.s32.totalorder %v5968, 3
        %vm5990 = vcmp.lt.s32.totalorder %v5968, 4
        %v5991 = vsel %vm5987, %v5971, %v5974
        %v5992 = vsel %vm5990, %v5980, 2102212464
        %v5993 = vsel %vm5989, %v5977, %v5992
        %v5994 = vsel %vm5988, %v5991, %v5993
        %v5995 = vsel %vm5987, %v5974, %v5977
        %v5996 = vsel %vm5990, %v5983, 920167782
        %v5997 = vsel %vm5989, %v5980, %v5996
        %v5998 = vsel %vm5988, %v5995, %v5997
        %v5999 = vsel %vm5987, %v5977, %v5980
        %v6000 = vsel %vm5990, %v5986, 1326507024
        %v6001 = vsel %vm5989, %v5983, %v6000
        %v6002 = vsel %vm5988, %v5999, %v6001
        %v6003 = vshll.u32 %v5963, 8
        %v6004 = vmul.u32.u64.compose %v6003, %v6002
        %v6005 = vextract.low.u32 %v6004
        %v6006 = vextract.high.u32 %v6004
        %v6007 = vmul.u32.u64.compose %v6003, %v5998
        %v6008 = vextract.low.u32 %v6007
        %v6009 = vextract.high.u32 %v6007
        %v6010 = vmul.u32 %v6003, %v5994
        %v6011 = vadd.s32 %v6006, %v6008
        %vm6012 = vc.u32 %v6006, %v6008
        %v6013 = vadd.s32 %v6009, 1
        %v6014 = vsel %vm6012, %v6013, %v6009
        %v6015 = vadd.s32 %v6010, %v6014
        %v6016 = vadd.s32 %v6015, 536870912
        %v6017 = vshrl.u32 %v6016, 30
        %v6018 = vshll.u32 %v6017, 30
        %v6019 = vsub.s32 %v6015, %v6018
        %vm6020 = vcmp.lt.s32.totalorder %v6019, 0
        %v6021 = vsub.s32 0, %v6019
        %v6022 = vsel %vm6020, %v6021, %v6019
        %v6023 = vclz %v6022
        %v6024 = vsub.s32 %v6023, 2
        %vm6025 = vcmp.gt.s32.totalorder 0, %v6024
        %v6026 = vsel %vm6025, 0, %v6024
        %v6027 = vsub.s32 32, %v6026
        %v6028 = vshll.u32 %v6019, %v6026
        %v6029 = vshrl.u32 %v6011, %v6027
        %v6030 = vor.u32 %v6028, %v6029
        %v6031 = vsub.s32 4294967266, %v6026
        %v6032 = vadd.s32 %v6031, 127
        %v6033 = vshll.u32 %v6032, 23
        %v6034 = vor.u32 4788187, %v6033
        %v6035 = vand.u32 2147483647, %v6034
        %v6037 = vcvt.s32.f32 %v6030
        %v6038 = vmul.f32 %v6037, %v6035
        %v6039 = vxor.u32 %v6038, 2147483648
        %v6040 = vsel %vm5957, %v6039, %v6038
        %v6041 = vsub.s32 4, %v6017
        %v6042 = vsel %vm5957, %v6041, %v6017
        %v6043 = vsel %vm5956, %v550, %v6040
        %v6044 = vsel %vm5956, 0, %v6042
        %v6045 = vcosq.f32.pop %v6043
        %v6046 = vsinq.f32.pop %v6043
        %vm6047 = vweird.f32 %v550
        %v6048 = vadd.s32 %v6044, 3
        %v6049 = vand.u32 %v6048, 3
        %vm6050 = vcmp.lt.s32.totalorder %v6049, 2
        %vm6051 = vcmp.eq.s32.totalorder %v6049, 0
        %v6052 = vxor.u32 %v6046, 2147483648
        %v6053 = vsel %vm6051, %v6045, %v6052
        %vm6054 = vcmp.eq.s32.totalorder %v6049, 2
        %v6055 = vxor.u32 %v6045, 2147483648
        %v6056 = vsel %vm6054, %v6055, %v6046
        %v6057 = vsel %vm6050, %v6053, %v6056
        %v6058 = vsel %vm6047, nan, %v6057
        %v6059 = vand.u32 2147483647, %v637
        %vm6060 = vcmp.le.f32.partialorder %v6059, 0.7853982
        %vm6061 = vcmp.lt.s32.totalorder %v637, 0
        %v6062 = vand.u32 %v637, 2139095040
        %v6063 = vshrl.u32 %v6062, 23
        %v6064 = vsub.s32 %v6063, 127
        %v6065 = vand.u32 2147483647, %v637
        %v6066 = vand.u32 %v6065, 8388607
        %v6067 = vor.u32 %v6066, 8388608
        %v6068 = vsub.s32 0, %v6067
        %v6069 = vadd.s32 %v6064, 1
        %vm6070 = vcmp.gt.s32.totalorder %v6069, 0
        %v6071 = vsel %vm6070, %v6069, 0
        %v6072 = vshrl.u32 %v6071, 5
        %v6073 = vand.u32 %v6071, 31
        %v6074 = vsub.s32 32, %v6073
        %v6075 = vshrl.u32 683565275, %v6074
        %v6076 = vshll.u32 683565275, %v6073
        %v6077 = vshrl.u32 2475754826, %v6074
        %v6078 = vor.u32 %v6076, %v6077
        %v6079 = vshll.u32 2475754826, %v6073
        %v6080 = vshrl.u32 2131351028, %v6074
        %v6081 = vor.u32 %v6079, %v6080
        %v6082 = vshll.u32 2131351028, %v6073
        %v6083 = vshrl.u32 2102212464, %v6074
        %v6084 = vor.u32 %v6082, %v6083
        %v6085 = vshll.u32 2102212464, %v6073
        %v6086 = vshrl.u32 920167782, %v6074
        %v6087 = vor.u32 %v6085, %v6086
        %v6088 = vshll.u32 920167782, %v6073
        %v6089 = vshrl.u32 1326507024, %v6074
        %v6090 = vor.u32 %v6088, %v6089
        %vm6091 = vcmp.lt.s32.totalorder %v6072, 1
        %vm6092 = vcmp.lt.s32.totalorder %v6072, 2
        %vm6093 = vcmp.lt.s32.totalorder %v6072, 3
        %vm6094 = vcmp.lt.s32.totalorder %v6072, 4
        %v6095 = vsel %vm6091, %v6075, %v6078
        %v6096 = vsel %vm6094, %v6084, 2102212464
        %v6097 = vsel %vm6093, %v6081, %v6096
        %v6098 = vsel %vm6092, %v6095, %v6097
        %v6099 = vsel %vm6091, %v6078, %v6081
        %v6100 = vsel %vm6094, %v6087, 920167782
        %v6101 = vsel %vm6093, %v6084, %v6100
        %v6102 = vsel %vm6092, %v6099, %v6101
        %v6103 = vsel %vm6091, %v6081, %v6084
        %v6104 = vsel %vm6094, %v6090, 1326507024
        %v6105 = vsel %vm6093, %v6087, %v6104
        %v6106 = vsel %vm6092, %v6103, %v6105
        %v6107 = vshll.u32 %v6067, 8
        %v6108 = vmul.u32.u64.compose %v6107, %v6106
        %v6109 = vextract.low.u32 %v6108
        %v6110 = vextract.high.u32 %v6108
        %v6111 = vmul.u32.u64.compose %v6107, %v6102
        %v6112 = vextract.low.u32 %v6111
        %v6113 = vextract.high.u32 %v6111
        %v6114 = vmul.u32 %v6107, %v6098
        %v6115 = vadd.s32 %v6110, %v6112
        %vm6116 = vc.u32 %v6110, %v6112
        %v6117 = vadd.s32 %v6113, 1
        %v6118 = vsel %vm6116, %v6117, %v6113
        %v6119 = vadd.s32 %v6114, %v6118
        %v6120 = vadd.s32 %v6119, 536870912
        %v6121 = vshrl.u32 %v6120, 30
        %v6122 = vshll.u32 %v6121, 30
        %v6123 = vsub.s32 %v6119, %v6122
        %vm6124 = vcmp.lt.s32.totalorder %v6123, 0
        %v6125 = vsub.s32 0, %v6123
        %v6126 = vsel %vm6124, %v6125, %v6123
        %v6127 = vclz %v6126
        %v6128 = vsub.s32 %v6127, 2
        %vm6129 = vcmp.gt.s32.totalorder 0, %v6128
        %v6130 = vsel %vm6129, 0, %v6128
        %v6131 = vsub.s32 32, %v6130
        %v6132 = vshll.u32 %v6123, %v6130
        %v6133 = vshrl.u32 %v6115, %v6131
        %v6134 = vor.u32 %v6132, %v6133
        %v6135 = vsub.s32 4294967266, %v6130
        %v6136 = vadd.s32 %v6135, 127
        %v6137 = vshll.u32 %v6136, 23
        %v6138 = vor.u32 4788187, %v6137
        %v6139 = vand.u32 2147483647, %v6138
        %v6141 = vcvt.s32.f32 %v6134
        %v6142 = vmul.f32 %v6141, %v6139
        %v6143 = vxor.u32 %v6142, 2147483648
        %v6144 = vsel %vm6061, %v6143, %v6142
        %v6145 = vsub.s32 4, %v6121
        %v6146 = vsel %vm6061, %v6145, %v6121
        %v6147 = vsel %vm6060, %v637, %v6144
        %v6148 = vsel %vm6060, 0, %v6146
        %v6149 = vcosq.f32.pop %v6147
        %v6150 = vsinq.f32.pop %v6147
        %vm6151 = vweird.f32 %v637
        %v6152 = vadd.s32 %v6148, 3
        %v6153 = vand.u32 %v6152, 3
        %vm6154 = vcmp.lt.s32.totalorder %v6153, 2
        %vm6155 = vcmp.eq.s32.totalorder %v6153, 0
        %v6156 = vxor.u32 %v6150, 2147483648
        %v6157 = vsel %vm6155, %v6149, %v6156
        %vm6158 = vcmp.eq.s32.totalorder %v6153, 2
        %v6159 = vxor.u32 %v6149, 2147483648
        %v6160 = vsel %vm6158, %v6159, %v6150
        %v6161 = vsel %vm6154, %v6157, %v6160
        %v6162 = vsel %vm6151, nan, %v6161
        %v6163 = vand.u32 2147483647, %v639
        %vm6164 = vcmp.le.f32.partialorder %v6163, 0.7853982
        %vm6165 = vcmp.lt.s32.totalorder %v639, 0
        %v6166 = vand.u32 %v639, 2139095040
        %v6167 = vshrl.u32 %v6166, 23
        %v6168 = vsub.s32 %v6167, 127
        %v6169 = vand.u32 2147483647, %v639
        %v6170 = vand.u32 %v6169, 8388607
        %v6171 = vor.u32 %v6170, 8388608
        %v6172 = vsub.s32 0, %v6171
        %v6173 = vadd.s32 %v6168, 1
        %vm6174 = vcmp.gt.s32.totalorder %v6173, 0
        %v6175 = vsel %vm6174, %v6173, 0
        %v6176 = vshrl.u32 %v6175, 5
        %v6177 = vand.u32 %v6175, 31
        %v6178 = vsub.s32 32, %v6177
        %v6179 = vshrl.u32 683565275, %v6178
        %v6180 = vshll.u32 683565275, %v6177
        %v6181 = vshrl.u32 2475754826, %v6178
        %v6182 = vor.u32 %v6180, %v6181
        %v6183 = vshll.u32 2475754826, %v6177
        %v6184 = vshrl.u32 2131351028, %v6178
        %v6185 = vor.u32 %v6183, %v6184
        %v6186 = vshll.u32 2131351028, %v6177
        %v6187 = vshrl.u32 2102212464, %v6178
        %v6188 = vor.u32 %v6186, %v6187
        %v6189 = vshll.u32 2102212464, %v6177
        %v6190 = vshrl.u32 920167782, %v6178
        %v6191 = vor.u32 %v6189, %v6190
        %v6192 = vshll.u32 920167782, %v6177
        %v6193 = vshrl.u32 1326507024, %v6178
        %v6194 = vor.u32 %v6192, %v6193
        %vm6195 = vcmp.lt.s32.totalorder %v6176, 1
        %vm6196 = vcmp.lt.s32.totalorder %v6176, 2
        %vm6197 = vcmp.lt.s32.totalorder %v6176, 3
        %vm6198 = vcmp.lt.s32.totalorder %v6176, 4
        %v6199 = vsel %vm6195, %v6179, %v6182
        %v6200 = vsel %vm6198, %v6188, 2102212464
        %v6201 = vsel %vm6197, %v6185, %v6200
        %v6202 = vsel %vm6196, %v6199, %v6201
        %v6203 = vsel %vm6195, %v6182, %v6185
        %v6204 = vsel %vm6198, %v6191, 920167782
        %v6205 = vsel %vm6197, %v6188, %v6204
        %v6206 = vsel %vm6196, %v6203, %v6205
        %v6207 = vsel %vm6195, %v6185, %v6188
        %v6208 = vsel %vm6198, %v6194, 1326507024
        %v6209 = vsel %vm6197, %v6191, %v6208
        %v6210 = vsel %vm6196, %v6207, %v6209
        %v6211 = vshll.u32 %v6171, 8
        %v6212 = vmul.u32.u64.compose %v6211, %v6210
        %v6213 = vextract.low.u32 %v6212
        %v6214 = vextract.high.u32 %v6212
        %v6215 = vmul.u32.u64.compose %v6211, %v6206
        %v6216 = vextract.low.u32 %v6215
        %v6217 = vextract.high.u32 %v6215
        %v6218 = vmul.u32 %v6211, %v6202
        %v6219 = vadd.s32 %v6214, %v6216
        %vm6220 = vc.u32 %v6214, %v6216
        %v6221 = vadd.s32 %v6217, 1
        %v6222 = vsel %vm6220, %v6221, %v6217
        %v6223 = vadd.s32 %v6218, %v6222
        %v6224 = vadd.s32 %v6223, 536870912
        %v6225 = vshrl.u32 %v6224, 30
        %v6226 = vshll.u32 %v6225, 30
        %v6227 = vsub.s32 %v6223, %v6226
        %vm6228 = vcmp.lt.s32.totalorder %v6227, 0
        %v6229 = vsub.s32 0, %v6227
        %v6230 = vsel %vm6228, %v6229, %v6227
        %v6231 = vclz %v6230
        %v6232 = vsub.s32 %v6231, 2
        %vm6233 = vcmp.gt.s32.totalorder 0, %v6232
        %v6234 = vsel %vm6233, 0, %v6232
        %v6235 = vsub.s32 32, %v6234
        %v6236 = vshll.u32 %v6227, %v6234
        %v6237 = vshrl.u32 %v6219, %v6235
        %v6238 = vor.u32 %v6236, %v6237
        %v6239 = vsub.s32 4294967266, %v6234
        %v6240 = vadd.s32 %v6239, 127
        %v6241 = vshll.u32 %v6240, 23
        %v6242 = vor.u32 4788187, %v6241
        %v6243 = vand.u32 2147483647, %v6242
        %v6245 = vcvt.s32.f32 %v6238
        %v6246 = vmul.f32 %v6245, %v6243
        %v6247 = vxor.u32 %v6246, 2147483648
        %v6248 = vsel %vm6165, %v6247, %v6246
        %v6249 = vsub.s32 4, %v6225
        %v6250 = vsel %vm6165, %v6249, %v6225
        %v6251 = vsel %vm6164, %v639, %v6248
        %v6252 = vsel %vm6164, 0, %v6250
        %v6253 = vcosq.f32.pop %v6251
        %v6254 = vsinq.f32.pop %v6251
        %vm6255 = vweird.f32 %v639
        %v6256 = vadd.s32 %v6252, 3
        %v6257 = vand.u32 %v6256, 3
        %vm6258 = vcmp.lt.s32.totalorder %v6257, 2
        %vm6259 = vcmp.eq.s32.totalorder %v6257, 0
        %v6260 = vxor.u32 %v6254, 2147483648
        %v6261 = vsel %vm6259, %v6253, %v6260
        %vm6262 = vcmp.eq.s32.totalorder %v6257, 2
        %v6263 = vxor.u32 %v6253, 2147483648
        %v6264 = vsel %vm6262, %v6263, %v6254
        %v6265 = vsel %vm6258, %v6261, %v6264
        %v6266 = vsel %vm6255, nan, %v6265
        %v6267 = vand.u32 2147483647, %v726
        %vm6268 = vcmp.le.f32.partialorder %v6267, 0.7853982
        %vm6269 = vcmp.lt.s32.totalorder %v726, 0
        %v6270 = vand.u32 %v726, 2139095040
        %v6271 = vshrl.u32 %v6270, 23
        %v6272 = vsub.s32 %v6271, 127
        %v6273 = vand.u32 2147483647, %v726
        %v6274 = vand.u32 %v6273, 8388607
        %v6275 = vor.u32 %v6274, 8388608
        %v6276 = vsub.s32 0, %v6275
        %v6277 = vadd.s32 %v6272, 1
        %vm6278 = vcmp.gt.s32.totalorder %v6277, 0
        %v6279 = vsel %vm6278, %v6277, 0
        %v6280 = vshrl.u32 %v6279, 5
        %v6281 = vand.u32 %v6279, 31
        %v6282 = vsub.s32 32, %v6281
        %v6283 = vshrl.u32 683565275, %v6282
        %v6284 = vshll.u32 683565275, %v6281
        %v6285 = vshrl.u32 2475754826, %v6282
        %v6286 = vor.u32 %v6284, %v6285
        %v6287 = vshll.u32 2475754826, %v6281
        %v6288 = vshrl.u32 2131351028, %v6282
        %v6289 = vor.u32 %v6287, %v6288
        %v6290 = vshll.u32 2131351028, %v6281
        %v6291 = vshrl.u32 2102212464, %v6282
        %v6292 = vor.u32 %v6290, %v6291
        %v6293 = vshll.u32 2102212464, %v6281
        %v6294 = vshrl.u32 920167782, %v6282
        %v6295 = vor.u32 %v6293, %v6294
        %v6296 = vshll.u32 920167782, %v6281
        %v6297 = vshrl.u32 1326507024, %v6282
        %v6298 = vor.u32 %v6296, %v6297
        %vm6299 = vcmp.lt.s32.totalorder %v6280, 1
        %vm6300 = vcmp.lt.s32.totalorder %v6280, 2
        %vm6301 = vcmp.lt.s32.totalorder %v6280, 3
        %vm6302 = vcmp.lt.s32.totalorder %v6280, 4
        %v6303 = vsel %vm6299, %v6283, %v6286
        %v6304 = vsel %vm6302, %v6292, 2102212464
        %v6305 = vsel %vm6301, %v6289, %v6304
        %v6306 = vsel %vm6300, %v6303, %v6305
        %v6307 = vsel %vm6299, %v6286, %v6289
        %v6308 = vsel %vm6302, %v6295, 920167782
        %v6309 = vsel %vm6301, %v6292, %v6308
        %v6310 = vsel %vm6300, %v6307, %v6309
        %v6311 = vsel %vm6299, %v6289, %v6292
        %v6312 = vsel %vm6302, %v6298, 1326507024
        %v6313 = vsel %vm6301, %v6295, %v6312
        %v6314 = vsel %vm6300, %v6311, %v6313
        %v6315 = vshll.u32 %v6275, 8
        %v6316 = vmul.u32.u64.compose %v6315, %v6314
        %v6317 = vextract.low.u32 %v6316
        %v6318 = vextract.high.u32 %v6316
        %v6319 = vmul.u32.u64.compose %v6315, %v6310
        %v6320 = vextract.low.u32 %v6319
        %v6321 = vextract.high.u32 %v6319
        %v6322 = vmul.u32 %v6315, %v6306
        %v6323 = vadd.s32 %v6318, %v6320
        %vm6324 = vc.u32 %v6318, %v6320
        %v6325 = vadd.s32 %v6321, 1
        %v6326 = vsel %vm6324, %v6325, %v6321
        %v6327 = vadd.s32 %v6322, %v6326
        %v6328 = vadd.s32 %v6327, 536870912
        %v6329 = vshrl.u32 %v6328, 30
        %v6330 = vshll.u32 %v6329, 30
        %v6331 = vsub.s32 %v6327, %v6330
        %vm6332 = vcmp.lt.s32.totalorder %v6331, 0
        %v6333 = vsub.s32 0, %v6331
        %v6334 = vsel %vm6332, %v6333, %v6331
        %v6335 = vclz %v6334
        %v6336 = vsub.s32 %v6335, 2
        %vm6337 = vcmp.gt.s32.totalorder 0, %v6336
        %v6338 = vsel %vm6337, 0, %v6336
        %v6339 = vsub.s32 32, %v6338
        %v6340 = vshll.u32 %v6331, %v6338
        %v6341 = vshrl.u32 %v6323, %v6339
        %v6342 = vor.u32 %v6340, %v6341
        %v6343 = vsub.s32 4294967266, %v6338
        %v6344 = vadd.s32 %v6343, 127
        %v6345 = vshll.u32 %v6344, 23
        %v6346 = vor.u32 4788187, %v6345
        %v6347 = vand.u32 2147483647, %v6346
        %v6349 = vcvt.s32.f32 %v6342
        %v6350 = vmul.f32 %v6349, %v6347
        %v6351 = vxor.u32 %v6350, 2147483648
        %v6352 = vsel %vm6269, %v6351, %v6350
        %v6353 = vsub.s32 4, %v6329
        %v6354 = vsel %vm6269, %v6353, %v6329
        %v6355 = vsel %vm6268, %v726, %v6352
        %v6356 = vsel %vm6268, 0, %v6354
        %v6357 = vcosq.f32.pop %v6355
        %v6358 = vsinq.f32.pop %v6355
        %vm6359 = vweird.f32 %v726
        %v6360 = vadd.s32 %v6356, 3
        %v6361 = vand.u32 %v6360, 3
        %vm6362 = vcmp.lt.s32.totalorder %v6361, 2
        %vm6363 = vcmp.eq.s32.totalorder %v6361, 0
        %v6364 = vxor.u32 %v6358, 2147483648
        %v6365 = vsel %vm6363, %v6357, %v6364
        %vm6366 = vcmp.eq.s32.totalorder %v6361, 2
        %v6367 = vxor.u32 %v6357, 2147483648
        %v6368 = vsel %vm6366, %v6367, %v6358
        %v6369 = vsel %vm6362, %v6365, %v6368
        %v6370 = vsel %vm6359, nan, %v6369
        %v6371 = vand.u32 2147483647, %v728
        %vm6372 = vcmp.le.f32.partialorder %v6371, 0.7853982
        %vm6373 = vcmp.lt.s32.totalorder %v728, 0
        %v6374 = vand.u32 %v728, 2139095040
        %v6375 = vshrl.u32 %v6374, 23
        %v6376 = vsub.s32 %v6375, 127
        %v6377 = vand.u32 2147483647, %v728
        %v6378 = vand.u32 %v6377, 8388607
        %v6379 = vor.u32 %v6378, 8388608
        %v6380 = vsub.s32 0, %v6379
        %v6381 = vadd.s32 %v6376, 1
        %vm6382 = vcmp.gt.s32.totalorder %v6381, 0
        %v6383 = vsel %vm6382, %v6381, 0
        %v6384 = vshrl.u32 %v6383, 5
        %v6385 = vand.u32 %v6383, 31
        %v6386 = vsub.s32 32, %v6385
        %v6387 = vshrl.u32 683565275, %v6386
        %v6388 = vshll.u32 683565275, %v6385
        %v6389 = vshrl.u32 2475754826, %v6386
        %v6390 = vor.u32 %v6388, %v6389
        %v6391 = vshll.u32 2475754826, %v6385
        %v6392 = vshrl.u32 2131351028, %v6386
        %v6393 = vor.u32 %v6391, %v6392
        %v6394 = vshll.u32 2131351028, %v6385
        %v6395 = vshrl.u32 2102212464, %v6386
        %v6396 = vor.u32 %v6394, %v6395
        %v6397 = vshll.u32 2102212464, %v6385
        %v6398 = vshrl.u32 920167782, %v6386
        %v6399 = vor.u32 %v6397, %v6398
        %v6400 = vshll.u32 920167782, %v6385
        %v6401 = vshrl.u32 1326507024, %v6386
        %v6402 = vor.u32 %v6400, %v6401
        %vm6403 = vcmp.lt.s32.totalorder %v6384, 1
        %vm6404 = vcmp.lt.s32.totalorder %v6384, 2
        %vm6405 = vcmp.lt.s32.totalorder %v6384, 3
        %vm6406 = vcmp.lt.s32.totalorder %v6384, 4
        %v6407 = vsel %vm6403, %v6387, %v6390
        %v6408 = vsel %vm6406, %v6396, 2102212464
        %v6409 = vsel %vm6405, %v6393, %v6408
        %v6410 = vsel %vm6404, %v6407, %v6409
        %v6411 = vsel %vm6403, %v6390, %v6393
        %v6412 = vsel %vm6406, %v6399, 920167782
        %v6413 = vsel %vm6405, %v6396, %v6412
        %v6414 = vsel %vm6404, %v6411, %v6413
        %v6415 = vsel %vm6403, %v6393, %v6396
        %v6416 = vsel %vm6406, %v6402, 1326507024
        %v6417 = vsel %vm6405, %v6399, %v6416
        %v6418 = vsel %vm6404, %v6415, %v6417
        %v6419 = vshll.u32 %v6379, 8
        %v6420 = vmul.u32.u64.compose %v6419, %v6418
        %v6421 = vextract.low.u32 %v6420
        %v6422 = vextract.high.u32 %v6420
        %v6423 = vmul.u32.u64.compose %v6419, %v6414
        %v6424 = vextract.low.u32 %v6423
        %v6425 = vextract.high.u32 %v6423
        %v6426 = vmul.u32 %v6419, %v6410
        %v6427 = vadd.s32 %v6422, %v6424
        %vm6428 = vc.u32 %v6422, %v6424
        %v6429 = vadd.s32 %v6425, 1
        %v6430 = vsel %vm6428, %v6429, %v6425
        %v6431 = vadd.s32 %v6426, %v6430
        %v6432 = vadd.s32 %v6431, 536870912
        %v6433 = vshrl.u32 %v6432, 30
        %v6434 = vshll.u32 %v6433, 30
        %v6435 = vsub.s32 %v6431, %v6434
        %vm6436 = vcmp.lt.s32.totalorder %v6435, 0
        %v6437 = vsub.s32 0, %v6435
        %v6438 = vsel %vm6436, %v6437, %v6435
        %v6439 = vclz %v6438
        %v6440 = vsub.s32 %v6439, 2
        %vm6441 = vcmp.gt.s32.totalorder 0, %v6440
        %v6442 = vsel %vm6441, 0, %v6440
        %v6443 = vsub.s32 32, %v6442
        %v6444 = vshll.u32 %v6435, %v6442
        %v6445 = vshrl.u32 %v6427, %v6443
        %v6446 = vor.u32 %v6444, %v6445
        %v6447 = vsub.s32 4294967266, %v6442
        %v6448 = vadd.s32 %v6447, 127
        %v6449 = vshll.u32 %v6448, 23
        %v6450 = vor.u32 4788187, %v6449
        %v6451 = vand.u32 2147483647, %v6450
        %v6453 = vcvt.s32.f32 %v6446
        %v6454 = vmul.f32 %v6453, %v6451
        %v6455 = vxor.u32 %v6454, 2147483648
        %v6456 = vsel %vm6373, %v6455, %v6454
        %v6457 = vsub.s32 4, %v6433
        %v6458 = vsel %vm6373, %v6457, %v6433
        %v6459 = vsel %vm6372, %v728, %v6456
        %v6460 = vsel %vm6372, 0, %v6458
        %v6461 = vcosq.f32.pop %v6459
        %v6462 = vsinq.f32.pop %v6459
        %vm6463 = vweird.f32 %v728
        %v6464 = vadd.s32 %v6460, 3
        %v6465 = vand.u32 %v6464, 3
        %vm6466 = vcmp.lt.s32.totalorder %v6465, 2
        %vm6467 = vcmp.eq.s32.totalorder %v6465, 0
        %v6468 = vxor.u32 %v6462, 2147483648
        %v6469 = vsel %vm6467, %v6461, %v6468
        %vm6470 = vcmp.eq.s32.totalorder %v6465, 2
        %v6471 = vxor.u32 %v6461, 2147483648
        %v6472 = vsel %vm6470, %v6471, %v6462
        %v6473 = vsel %vm6466, %v6469, %v6472
        %v6474 = vsel %vm6463, nan, %v6473
        %v6475 = vand.u32 2147483647, %v815
        %vm6476 = vcmp.le.f32.partialorder %v6475, 0.7853982
        %vm6477 = vcmp.lt.s32.totalorder %v815, 0
        %v6478 = vand.u32 %v815, 2139095040
        %v6479 = vshrl.u32 %v6478, 23
        %v6480 = vsub.s32 %v6479, 127
        %v6481 = vand.u32 2147483647, %v815
        %v6482 = vand.u32 %v6481, 8388607
        %v6483 = vor.u32 %v6482, 8388608
        %v6484 = vsub.s32 0, %v6483
        %v6485 = vadd.s32 %v6480, 1
        %vm6486 = vcmp.gt.s32.totalorder %v6485, 0
        %v6487 = vsel %vm6486, %v6485, 0
        %v6488 = vshrl.u32 %v6487, 5
        %v6489 = vand.u32 %v6487, 31
        %v6490 = vsub.s32 32, %v6489
        %v6491 = vshrl.u32 683565275, %v6490
        %v6492 = vshll.u32 683565275, %v6489
        %v6493 = vshrl.u32 2475754826, %v6490
        %v6494 = vor.u32 %v6492, %v6493
        %v6495 = vshll.u32 2475754826, %v6489
        %v6496 = vshrl.u32 2131351028, %v6490
        %v6497 = vor.u32 %v6495, %v6496
        %v6498 = vshll.u32 2131351028, %v6489
        %v6499 = vshrl.u32 2102212464, %v6490
        %v6500 = vor.u32 %v6498, %v6499
        %v6501 = vshll.u32 2102212464, %v6489
        %v6502 = vshrl.u32 920167782, %v6490
        %v6503 = vor.u32 %v6501, %v6502
        %v6504 = vshll.u32 920167782, %v6489
        %v6505 = vshrl.u32 1326507024, %v6490
        %v6506 = vor.u32 %v6504, %v6505
        %vm6507 = vcmp.lt.s32.totalorder %v6488, 1
        %vm6508 = vcmp.lt.s32.totalorder %v6488, 2
        %vm6509 = vcmp.lt.s32.totalorder %v6488, 3
        %vm6510 = vcmp.lt.s32.totalorder %v6488, 4
        %v6511 = vsel %vm6507, %v6491, %v6494
        %v6512 = vsel %vm6510, %v6500, 2102212464
        %v6513 = vsel %vm6509, %v6497, %v6512
        %v6514 = vsel %vm6508, %v6511, %v6513
        %v6515 = vsel %vm6507, %v6494, %v6497
        %v6516 = vsel %vm6510, %v6503, 920167782
        %v6517 = vsel %vm6509, %v6500, %v6516
        %v6518 = vsel %vm6508, %v6515, %v6517
        %v6519 = vsel %vm6507, %v6497, %v6500
        %v6520 = vsel %vm6510, %v6506, 1326507024
        %v6521 = vsel %vm6509, %v6503, %v6520
        %v6522 = vsel %vm6508, %v6519, %v6521
        %v6523 = vshll.u32 %v6483, 8
        %v6524 = vmul.u32.u64.compose %v6523, %v6522
        %v6525 = vextract.low.u32 %v6524
        %v6526 = vextract.high.u32 %v6524
        %v6527 = vmul.u32.u64.compose %v6523, %v6518
        %v6528 = vextract.low.u32 %v6527
        %v6529 = vextract.high.u32 %v6527
        %v6530 = vmul.u32 %v6523, %v6514
        %v6531 = vadd.s32 %v6526, %v6528
        %vm6532 = vc.u32 %v6526, %v6528
        %v6533 = vadd.s32 %v6529, 1
        %v6534 = vsel %vm6532, %v6533, %v6529
        %v6535 = vadd.s32 %v6530, %v6534
        %v6536 = vadd.s32 %v6535, 536870912
        %v6537 = vshrl.u32 %v6536, 30
        %v6538 = vshll.u32 %v6537, 30
        %v6539 = vsub.s32 %v6535, %v6538
        %vm6540 = vcmp.lt.s32.totalorder %v6539, 0
        %v6541 = vsub.s32 0, %v6539
        %v6542 = vsel %vm6540, %v6541, %v6539
        %v6543 = vclz %v6542
        %v6544 = vsub.s32 %v6543, 2
        %vm6545 = vcmp.gt.s32.totalorder 0, %v6544
        %v6546 = vsel %vm6545, 0, %v6544
        %v6547 = vsub.s32 32, %v6546
        %v6548 = vshll.u32 %v6539, %v6546
        %v6549 = vshrl.u32 %v6531, %v6547
        %v6550 = vor.u32 %v6548, %v6549
        %v6551 = vsub.s32 4294967266, %v6546
        %v6552 = vadd.s32 %v6551, 127
        %v6553 = vshll.u32 %v6552, 23
        %v6554 = vor.u32 4788187, %v6553
        %v6555 = vand.u32 2147483647, %v6554
        %v6557 = vcvt.s32.f32 %v6550
        %v6558 = vmul.f32 %v6557, %v6555
        %v6559 = vxor.u32 %v6558, 2147483648
        %v6560 = vsel %vm6477, %v6559, %v6558
        %v6561 = vsub.s32 4, %v6537
        %v6562 = vsel %vm6477, %v6561, %v6537
        %v6563 = vsel %vm6476, %v815, %v6560
        %v6564 = vsel %vm6476, 0, %v6562
        %v6565 = vcosq.f32.pop %v6563
        %v6566 = vsinq.f32.pop %v6563
        %vm6567 = vweird.f32 %v815
        %v6568 = vadd.s32 %v6564, 3
        %v6569 = vand.u32 %v6568, 3
        %vm6570 = vcmp.lt.s32.totalorder %v6569, 2
        %vm6571 = vcmp.eq.s32.totalorder %v6569, 0
        %v6572 = vxor.u32 %v6566, 2147483648
        %v6573 = vsel %vm6571, %v6565, %v6572
        %vm6574 = vcmp.eq.s32.totalorder %v6569, 2
        %v6575 = vxor.u32 %v6565, 2147483648
        %v6576 = vsel %vm6574, %v6575, %v6566
        %v6577 = vsel %vm6570, %v6573, %v6576
        %v6578 = vsel %vm6567, nan, %v6577
        %v6579 = vand.u32 2147483647, %v817
        %vm6580 = vcmp.le.f32.partialorder %v6579, 0.7853982
        %vm6581 = vcmp.lt.s32.totalorder %v817, 0
        %v6582 = vand.u32 %v817, 2139095040
        %v6583 = vshrl.u32 %v6582, 23
        %v6584 = vsub.s32 %v6583, 127
        %v6585 = vand.u32 2147483647, %v817
        %v6586 = vand.u32 %v6585, 8388607
        %v6587 = vor.u32 %v6586, 8388608
        %v6588 = vsub.s32 0, %v6587
        %v6589 = vadd.s32 %v6584, 1
        %vm6590 = vcmp.gt.s32.totalorder %v6589, 0
        %v6591 = vsel %vm6590, %v6589, 0
        %v6592 = vshrl.u32 %v6591, 5
        %v6593 = vand.u32 %v6591, 31
        %v6594 = vsub.s32 32, %v6593
        %v6595 = vshrl.u32 683565275, %v6594
        %v6596 = vshll.u32 683565275, %v6593
        %v6597 = vshrl.u32 2475754826, %v6594
        %v6598 = vor.u32 %v6596, %v6597
        %v6599 = vshll.u32 2475754826, %v6593
        %v6600 = vshrl.u32 2131351028, %v6594
        %v6601 = vor.u32 %v6599, %v6600
        %v6602 = vshll.u32 2131351028, %v6593
        %v6603 = vshrl.u32 2102212464, %v6594
        %v6604 = vor.u32 %v6602, %v6603
        %v6605 = vshll.u32 2102212464, %v6593
        %v6606 = vshrl.u32 920167782, %v6594
        %v6607 = vor.u32 %v6605, %v6606
        %v6608 = vshll.u32 920167782, %v6593
        %v6609 = vshrl.u32 1326507024, %v6594
        %v6610 = vor.u32 %v6608, %v6609
        %vm6611 = vcmp.lt.s32.totalorder %v6592, 1
        %vm6612 = vcmp.lt.s32.totalorder %v6592, 2
        %vm6613 = vcmp.lt.s32.totalorder %v6592, 3
        %vm6614 = vcmp.lt.s32.totalorder %v6592, 4
        %v6615 = vsel %vm6611, %v6595, %v6598
        %v6616 = vsel %vm6614, %v6604, 2102212464
        %v6617 = vsel %vm6613, %v6601, %v6616
        %v6618 = vsel %vm6612, %v6615, %v6617
        %v6619 = vsel %vm6611, %v6598, %v6601
        %v6620 = vsel %vm6614, %v6607, 920167782
        %v6621 = vsel %vm6613, %v6604, %v6620
        %v6622 = vsel %vm6612, %v6619, %v6621
        %v6623 = vsel %vm6611, %v6601, %v6604
        %v6624 = vsel %vm6614, %v6610, 1326507024
        %v6625 = vsel %vm6613, %v6607, %v6624
        %v6626 = vsel %vm6612, %v6623, %v6625
        %v6627 = vshll.u32 %v6587, 8
        %v6628 = vmul.u32.u64.compose %v6627, %v6626
        %v6629 = vextract.low.u32 %v6628
        %v6630 = vextract.high.u32 %v6628
        %v6631 = vmul.u32.u64.compose %v6627, %v6622
        %v6632 = vextract.low.u32 %v6631
        %v6633 = vextract.high.u32 %v6631
        %v6634 = vmul.u32 %v6627, %v6618
        %v6635 = vadd.s32 %v6630, %v6632
        %vm6636 = vc.u32 %v6630, %v6632
        %v6637 = vadd.s32 %v6633, 1
        %v6638 = vsel %vm6636, %v6637, %v6633
        %v6639 = vadd.s32 %v6634, %v6638
        %v6640 = vadd.s32 %v6639, 536870912
        %v6641 = vshrl.u32 %v6640, 30
        %v6642 = vshll.u32 %v6641, 30
        %v6643 = vsub.s32 %v6639, %v6642
        %vm6644 = vcmp.lt.s32.totalorder %v6643, 0
        %v6645 = vsub.s32 0, %v6643
        %v6646 = vsel %vm6644, %v6645, %v6643
        %v6647 = vclz %v6646
        %v6648 = vsub.s32 %v6647, 2
        %vm6649 = vcmp.gt.s32.totalorder 0, %v6648
        %v6650 = vsel %vm6649, 0, %v6648
        %v6651 = vsub.s32 32, %v6650
        %v6652 = vshll.u32 %v6643, %v6650
        %v6653 = vshrl.u32 %v6635, %v6651
        %v6654 = vor.u32 %v6652, %v6653
        %v6655 = vsub.s32 4294967266, %v6650
        %v6656 = vadd.s32 %v6655, 127
        %v6657 = vshll.u32 %v6656, 23
        %v6658 = vor.u32 4788187, %v6657
        %v6659 = vand.u32 2147483647, %v6658
        %v6661 = vcvt.s32.f32 %v6654
        %v6662 = vmul.f32 %v6661, %v6659
        %v6663 = vxor.u32 %v6662, 2147483648
        %v6664 = vsel %vm6581, %v6663, %v6662
        %v6665 = vsub.s32 4, %v6641
        %v6666 = vsel %vm6581, %v6665, %v6641
        %v6667 = vsel %vm6580, %v817, %v6664
        %v6668 = vsel %vm6580, 0, %v6666
        %v6669 = vcosq.f32.pop %v6667
        %v6670 = vsinq.f32.pop %v6667
        %vm6671 = vweird.f32 %v817
        %v6672 = vadd.s32 %v6668, 3
        %v6673 = vand.u32 %v6672, 3
        %vm6674 = vcmp.lt.s32.totalorder %v6673, 2
        %vm6675 = vcmp.eq.s32.totalorder %v6673, 0
        %v6676 = vxor.u32 %v6670, 2147483648
        %v6677 = vsel %vm6675, %v6669, %v6676
        %vm6678 = vcmp.eq.s32.totalorder %v6673, 2
        %v6679 = vxor.u32 %v6669, 2147483648
        %v6680 = vsel %vm6678, %v6679, %v6670
        %v6681 = vsel %vm6674, %v6677, %v6680
        %v6682 = vsel %vm6671, nan, %v6681
        %v6683 = vand.u32 2147483647, %v904
        %vm6684 = vcmp.le.f32.partialorder %v6683, 0.7853982
        %vm6685 = vcmp.lt.s32.totalorder %v904, 0
        %v6686 = vand.u32 %v904, 2139095040
        %v6687 = vshrl.u32 %v6686, 23
        %v6688 = vsub.s32 %v6687, 127
        %v6689 = vand.u32 2147483647, %v904
        %v6690 = vand.u32 %v6689, 8388607
        %v6691 = vor.u32 %v6690, 8388608
        %v6692 = vsub.s32 0, %v6691
        %v6693 = vadd.s32 %v6688, 1
        %vm6694 = vcmp.gt.s32.totalorder %v6693, 0
        %v6695 = vsel %vm6694, %v6693, 0
        %v6696 = vshrl.u32 %v6695, 5
        %v6697 = vand.u32 %v6695, 31
        %v6698 = vsub.s32 32, %v6697
        %v6699 = vshrl.u32 683565275, %v6698
        %v6700 = vshll.u32 683565275, %v6697
        %v6701 = vshrl.u32 2475754826, %v6698
        %v6702 = vor.u32 %v6700, %v6701
        %v6703 = vshll.u32 2475754826, %v6697
        %v6704 = vshrl.u32 2131351028, %v6698
        %v6705 = vor.u32 %v6703, %v6704
        %v6706 = vshll.u32 2131351028, %v6697
        %v6707 = vshrl.u32 2102212464, %v6698
        %v6708 = vor.u32 %v6706, %v6707
        %v6709 = vshll.u32 2102212464, %v6697
        %v6710 = vshrl.u32 920167782, %v6698
        %v6711 = vor.u32 %v6709, %v6710
        %v6712 = vshll.u32 920167782, %v6697
        %v6713 = vshrl.u32 1326507024, %v6698
        %v6714 = vor.u32 %v6712, %v6713
        %vm6715 = vcmp.lt.s32.totalorder %v6696, 1
        %vm6716 = vcmp.lt.s32.totalorder %v6696, 2
        %vm6717 = vcmp.lt.s32.totalorder %v6696, 3
        %vm6718 = vcmp.lt.s32.totalorder %v6696, 4
        %v6719 = vsel %vm6715, %v6699, %v6702
        %v6720 = vsel %vm6718, %v6708, 2102212464
        %v6721 = vsel %vm6717, %v6705, %v6720
        %v6722 = vsel %vm6716, %v6719, %v6721
        %v6723 = vsel %vm6715, %v6702, %v6705
        %v6724 = vsel %vm6718, %v6711, 920167782
        %v6725 = vsel %vm6717, %v6708, %v6724
        %v6726 = vsel %vm6716, %v6723, %v6725
        %v6727 = vsel %vm6715, %v6705, %v6708
        %v6728 = vsel %vm6718, %v6714, 1326507024
        %v6729 = vsel %vm6717, %v6711, %v6728
        %v6730 = vsel %vm6716, %v6727, %v6729
        %v6731 = vshll.u32 %v6691, 8
        %v6732 = vmul.u32.u64.compose %v6731, %v6730
        %v6733 = vextract.low.u32 %v6732
        %v6734 = vextract.high.u32 %v6732
        %v6735 = vmul.u32.u64.compose %v6731, %v6726
        %v6736 = vextract.low.u32 %v6735
        %v6737 = vextract.high.u32 %v6735
        %v6738 = vmul.u32 %v6731, %v6722
        %v6739 = vadd.s32 %v6734, %v6736
        %vm6740 = vc.u32 %v6734, %v6736
        %v6741 = vadd.s32 %v6737, 1
        %v6742 = vsel %vm6740, %v6741, %v6737
        %v6743 = vadd.s32 %v6738, %v6742
        %v6744 = vadd.s32 %v6743, 536870912
        %v6745 = vshrl.u32 %v6744, 30
        %v6746 = vshll.u32 %v6745, 30
        %v6747 = vsub.s32 %v6743, %v6746
        %vm6748 = vcmp.lt.s32.totalorder %v6747, 0
        %v6749 = vsub.s32 0, %v6747
        %v6750 = vsel %vm6748, %v6749, %v6747
        %v6751 = vclz %v6750
        %v6752 = vsub.s32 %v6751, 2
        %vm6753 = vcmp.gt.s32.totalorder 0, %v6752
        %v6754 = vsel %vm6753, 0, %v6752
        %v6755 = vsub.s32 32, %v6754
        %v6756 = vshll.u32 %v6747, %v6754
        %v6757 = vshrl.u32 %v6739, %v6755
        %v6758 = vor.u32 %v6756, %v6757
        %v6759 = vsub.s32 4294967266, %v6754
        %v6760 = vadd.s32 %v6759, 127
        %v6761 = vshll.u32 %v6760, 23
        %v6762 = vor.u32 4788187, %v6761
        %v6763 = vand.u32 2147483647, %v6762
        %v6765 = vcvt.s32.f32 %v6758
        %v6766 = vmul.f32 %v6765, %v6763
        %v6767 = vxor.u32 %v6766, 2147483648
        %v6768 = vsel %vm6685, %v6767, %v6766
        %v6769 = vsub.s32 4, %v6745
        %v6770 = vsel %vm6685, %v6769, %v6745
        %v6771 = vsel %vm6684, %v904, %v6768
        %v6772 = vsel %vm6684, 0, %v6770
        %v6773 = vcosq.f32.pop %v6771
        %v6774 = vsinq.f32.pop %v6771
        %vm6775 = vweird.f32 %v904
        %v6776 = vadd.s32 %v6772, 3
        %v6777 = vand.u32 %v6776, 3
        %vm6778 = vcmp.lt.s32.totalorder %v6777, 2
        %vm6779 = vcmp.eq.s32.totalorder %v6777, 0
        %v6780 = vxor.u32 %v6774, 2147483648
        %v6781 = vsel %vm6779, %v6773, %v6780
        %vm6782 = vcmp.eq.s32.totalorder %v6777, 2
        %v6783 = vxor.u32 %v6773, 2147483648
        %v6784 = vsel %vm6782, %v6783, %v6774
        %v6785 = vsel %vm6778, %v6781, %v6784
        %v6786 = vsel %vm6775, nan, %v6785
        %v6787 = vand.u32 2147483647, %v906
        %vm6788 = vcmp.le.f32.partialorder %v6787, 0.7853982
        %vm6789 = vcmp.lt.s32.totalorder %v906, 0
        %v6790 = vand.u32 %v906, 2139095040
        %v6791 = vshrl.u32 %v6790, 23
        %v6792 = vsub.s32 %v6791, 127
        %v6793 = vand.u32 2147483647, %v906
        %v6794 = vand.u32 %v6793, 8388607
        %v6795 = vor.u32 %v6794, 8388608
        %v6796 = vsub.s32 0, %v6795
        %v6797 = vadd.s32 %v6792, 1
        %vm6798 = vcmp.gt.s32.totalorder %v6797, 0
        %v6799 = vsel %vm6798, %v6797, 0
        %v6800 = vshrl.u32 %v6799, 5
        %v6801 = vand.u32 %v6799, 31
        %v6802 = vsub.s32 32, %v6801
        %v6803 = vshrl.u32 683565275, %v6802
        %v6804 = vshll.u32 683565275, %v6801
        %v6805 = vshrl.u32 2475754826, %v6802
        %v6806 = vor.u32 %v6804, %v6805
        %v6807 = vshll.u32 2475754826, %v6801
        %v6808 = vshrl.u32 2131351028, %v6802
        %v6809 = vor.u32 %v6807, %v6808
        %v6810 = vshll.u32 2131351028, %v6801
        %v6811 = vshrl.u32 2102212464, %v6802
        %v6812 = vor.u32 %v6810, %v6811
        %v6813 = vshll.u32 2102212464, %v6801
        %v6814 = vshrl.u32 920167782, %v6802
        %v6815 = vor.u32 %v6813, %v6814
        %v6816 = vshll.u32 920167782, %v6801
        %v6817 = vshrl.u32 1326507024, %v6802
        %v6818 = vor.u32 %v6816, %v6817
        %vm6819 = vcmp.lt.s32.totalorder %v6800, 1
        %vm6820 = vcmp.lt.s32.totalorder %v6800, 2
        %vm6821 = vcmp.lt.s32.totalorder %v6800, 3
        %vm6822 = vcmp.lt.s32.totalorder %v6800, 4
        %v6823 = vsel %vm6819, %v6803, %v6806
        %v6824 = vsel %vm6822, %v6812, 2102212464
        %v6825 = vsel %vm6821, %v6809, %v6824
        %v6826 = vsel %vm6820, %v6823, %v6825
        %v6827 = vsel %vm6819, %v6806, %v6809
        %v6828 = vsel %vm6822, %v6815, 920167782
        %v6829 = vsel %vm6821, %v6812, %v6828
        %v6830 = vsel %vm6820, %v6827, %v6829
        %v6831 = vsel %vm6819, %v6809, %v6812
        %v6832 = vsel %vm6822, %v6818, 1326507024
        %v6833 = vsel %vm6821, %v6815, %v6832
        %v6834 = vsel %vm6820, %v6831, %v6833
        %v6835 = vshll.u32 %v6795, 8
        %v6836 = vmul.u32.u64.compose %v6835, %v6834
        %v6837 = vextract.low.u32 %v6836
        %v6838 = vextract.high.u32 %v6836
        %v6839 = vmul.u32.u64.compose %v6835, %v6830
        %v6840 = vextract.low.u32 %v6839
        %v6841 = vextract.high.u32 %v6839
        %v6842 = vmul.u32 %v6835, %v6826
        %v6843 = vadd.s32 %v6838, %v6840
        %vm6844 = vc.u32 %v6838, %v6840
        %v6845 = vadd.s32 %v6841, 1
        %v6846 = vsel %vm6844, %v6845, %v6841
        %v6847 = vadd.s32 %v6842, %v6846
        %v6848 = vadd.s32 %v6847, 536870912
        %v6849 = vshrl.u32 %v6848, 30
        %v6850 = vshll.u32 %v6849, 30
        %v6851 = vsub.s32 %v6847, %v6850
        %vm6852 = vcmp.lt.s32.totalorder %v6851, 0
        %v6853 = vsub.s32 0, %v6851
        %v6854 = vsel %vm6852, %v6853, %v6851
        %v6855 = vclz %v6854
        %v6856 = vsub.s32 %v6855, 2
        %vm6857 = vcmp.gt.s32.totalorder 0, %v6856
        %v6858 = vsel %vm6857, 0, %v6856
        %v6859 = vsub.s32 32, %v6858
        %v6860 = vshll.u32 %v6851, %v6858
        %v6861 = vshrl.u32 %v6843, %v6859
        %v6862 = vor.u32 %v6860, %v6861
        %v6863 = vsub.s32 4294967266, %v6858
        %v6864 = vadd.s32 %v6863, 127
        %v6865 = vshll.u32 %v6864, 23
        %v6866 = vor.u32 4788187, %v6865
        %v6867 = vand.u32 2147483647, %v6866
        %v6869 = vcvt.s32.f32 %v6862
        %v6870 = vmul.f32 %v6869, %v6867
        %v6871 = vxor.u32 %v6870, 2147483648
        %v6872 = vsel %vm6789, %v6871, %v6870
        %v6873 = vsub.s32 4, %v6849
        %v6874 = vsel %vm6789, %v6873, %v6849
        %v6875 = vsel %vm6788, %v906, %v6872
        %v6876 = vsel %vm6788, 0, %v6874
        %v6877 = vcosq.f32.pop %v6875
        %v6878 = vsinq.f32.pop %v6875
        %vm6879 = vweird.f32 %v906
        %v6880 = vadd.s32 %v6876, 3
        %v6881 = vand.u32 %v6880, 3
        %vm6882 = vcmp.lt.s32.totalorder %v6881, 2
        %vm6883 = vcmp.eq.s32.totalorder %v6881, 0
        %v6884 = vxor.u32 %v6878, 2147483648
        %v6885 = vsel %vm6883, %v6877, %v6884
        %vm6886 = vcmp.eq.s32.totalorder %v6881, 2
        %v6887 = vxor.u32 %v6877, 2147483648
        %v6888 = vsel %vm6886, %v6887, %v6878
        %v6889 = vsel %vm6882, %v6885, %v6888
        %v6890 = vsel %vm6879, nan, %v6889
        %v6891 = vand.u32 2147483647, %v993
        %vm6892 = vcmp.le.f32.partialorder %v6891, 0.7853982
        %vm6893 = vcmp.lt.s32.totalorder %v993, 0
        %v6894 = vand.u32 %v993, 2139095040
        %v6895 = vshrl.u32 %v6894, 23
        %v6896 = vsub.s32 %v6895, 127
        %v6897 = vand.u32 2147483647, %v993
        %v6898 = vand.u32 %v6897, 8388607
        %v6899 = vor.u32 %v6898, 8388608
        %v6900 = vsub.s32 0, %v6899
        %v6901 = vadd.s32 %v6896, 1
        %vm6902 = vcmp.gt.s32.totalorder %v6901, 0
        %v6903 = vsel %vm6902, %v6901, 0
        %v6904 = vshrl.u32 %v6903, 5
        %v6905 = vand.u32 %v6903, 31
        %v6906 = vsub.s32 32, %v6905
        %v6907 = vshrl.u32 683565275, %v6906
        %v6908 = vshll.u32 683565275, %v6905
        %v6909 = vshrl.u32 2475754826, %v6906
        %v6910 = vor.u32 %v6908, %v6909
        %v6911 = vshll.u32 2475754826, %v6905
        %v6912 = vshrl.u32 2131351028, %v6906
        %v6913 = vor.u32 %v6911, %v6912
        %v6914 = vshll.u32 2131351028, %v6905
        %v6915 = vshrl.u32 2102212464, %v6906
        %v6916 = vor.u32 %v6914, %v6915
        %v6917 = vshll.u32 2102212464, %v6905
        %v6918 = vshrl.u32 920167782, %v6906
        %v6919 = vor.u32 %v6917, %v6918
        %v6920 = vshll.u32 920167782, %v6905
        %v6921 = vshrl.u32 1326507024, %v6906
        %v6922 = vor.u32 %v6920, %v6921
        %vm6923 = vcmp.lt.s32.totalorder %v6904, 1
        %vm6924 = vcmp.lt.s32.totalorder %v6904, 2
        %vm6925 = vcmp.lt.s32.totalorder %v6904, 3
        %vm6926 = vcmp.lt.s32.totalorder %v6904, 4
        %v6927 = vsel %vm6923, %v6907, %v6910
        %v6928 = vsel %vm6926, %v6916, 2102212464
        %v6929 = vsel %vm6925, %v6913, %v6928
        %v6930 = vsel %vm6924, %v6927, %v6929
        %v6931 = vsel %vm6923, %v6910, %v6913
        %v6932 = vsel %vm6926, %v6919, 920167782
        %v6933 = vsel %vm6925, %v6916, %v6932
        %v6934 = vsel %vm6924, %v6931, %v6933
        %v6935 = vsel %vm6923, %v6913, %v6916
        %v6936 = vsel %vm6926, %v6922, 1326507024
        %v6937 = vsel %vm6925, %v6919, %v6936
        %v6938 = vsel %vm6924, %v6935, %v6937
        %v6939 = vshll.u32 %v6899, 8
        %v6940 = vmul.u32.u64.compose %v6939, %v6938
        %v6941 = vextract.low.u32 %v6940
        %v6942 = vextract.high.u32 %v6940
        %v6943 = vmul.u32.u64.compose %v6939, %v6934
        %v6944 = vextract.low.u32 %v6943
        %v6945 = vextract.high.u32 %v6943
        %v6946 = vmul.u32 %v6939, %v6930
        %v6947 = vadd.s32 %v6942, %v6944
        %vm6948 = vc.u32 %v6942, %v6944
        %v6949 = vadd.s32 %v6945, 1
        %v6950 = vsel %vm6948, %v6949, %v6945
        %v6951 = vadd.s32 %v6946, %v6950
        %v6952 = vadd.s32 %v6951, 536870912
        %v6953 = vshrl.u32 %v6952, 30
        %v6954 = vshll.u32 %v6953, 30
        %v6955 = vsub.s32 %v6951, %v6954
        %vm6956 = vcmp.lt.s32.totalorder %v6955, 0
        %v6957 = vsub.s32 0, %v6955
        %v6958 = vsel %vm6956, %v6957, %v6955
        %v6959 = vclz %v6958
        %v6960 = vsub.s32 %v6959, 2
        %vm6961 = vcmp.gt.s32.totalorder 0, %v6960
        %v6962 = vsel %vm6961, 0, %v6960
        %v6963 = vsub.s32 32, %v6962
        %v6964 = vshll.u32 %v6955, %v6962
        %v6965 = vshrl.u32 %v6947, %v6963
        %v6966 = vor.u32 %v6964, %v6965
        %v6967 = vsub.s32 4294967266, %v6962
        %v6968 = vadd.s32 %v6967, 127
        %v6969 = vshll.u32 %v6968, 23
        %v6970 = vor.u32 4788187, %v6969
        %v6971 = vand.u32 2147483647, %v6970
        %v6973 = vcvt.s32.f32 %v6966
        %v6974 = vmul.f32 %v6973, %v6971
        %v6975 = vxor.u32 %v6974, 2147483648
        %v6976 = vsel %vm6893, %v6975, %v6974
        %v6977 = vsub.s32 4, %v6953
        %v6978 = vsel %vm6893, %v6977, %v6953
        %v6979 = vsel %vm6892, %v993, %v6976
        %v6980 = vsel %vm6892, 0, %v6978
        %v6981 = vcosq.f32.pop %v6979
        %v6982 = vsinq.f32.pop %v6979
        %vm6983 = vweird.f32 %v993
        %v6984 = vadd.s32 %v6980, 3
        %v6985 = vand.u32 %v6984, 3
        %vm6986 = vcmp.lt.s32.totalorder %v6985, 2
        %vm6987 = vcmp.eq.s32.totalorder %v6985, 0
        %v6988 = vxor.u32 %v6982, 2147483648
        %v6989 = vsel %vm6987, %v6981, %v6988
        %vm6990 = vcmp.eq.s32.totalorder %v6985, 2
        %v6991 = vxor.u32 %v6981, 2147483648
        %v6992 = vsel %vm6990, %v6991, %v6982
        %v6993 = vsel %vm6986, %v6989, %v6992
        %v6994 = vsel %vm6983, nan, %v6993
        %v6995 = vand.u32 2147483647, %v995
        %vm6996 = vcmp.le.f32.partialorder %v6995, 0.7853982
        %vm6997 = vcmp.lt.s32.totalorder %v995, 0
        %v6998 = vand.u32 %v995, 2139095040
        %v6999 = vshrl.u32 %v6998, 23
        %v7000 = vsub.s32 %v6999, 127
        %v7001 = vand.u32 2147483647, %v995
        %v7002 = vand.u32 %v7001, 8388607
        %v7003 = vor.u32 %v7002, 8388608
        %v7004 = vsub.s32 0, %v7003
        %v7005 = vadd.s32 %v7000, 1
        %vm7006 = vcmp.gt.s32.totalorder %v7005, 0
        %v7007 = vsel %vm7006, %v7005, 0
        %v7008 = vshrl.u32 %v7007, 5
        %v7009 = vand.u32 %v7007, 31
        %v7010 = vsub.s32 32, %v7009
        %v7011 = vshrl.u32 683565275, %v7010
        %v7012 = vshll.u32 683565275, %v7009
        %v7013 = vshrl.u32 2475754826, %v7010
        %v7014 = vor.u32 %v7012, %v7013
        %v7015 = vshll.u32 2475754826, %v7009
        %v7016 = vshrl.u32 2131351028, %v7010
        %v7017 = vor.u32 %v7015, %v7016
        %v7018 = vshll.u32 2131351028, %v7009
        %v7019 = vshrl.u32 2102212464, %v7010
        %v7020 = vor.u32 %v7018, %v7019
        %v7021 = vshll.u32 2102212464, %v7009
        %v7022 = vshrl.u32 920167782, %v7010
        %v7023 = vor.u32 %v7021, %v7022
        %v7024 = vshll.u32 920167782, %v7009
        %v7025 = vshrl.u32 1326507024, %v7010
        %v7026 = vor.u32 %v7024, %v7025
        %vm7027 = vcmp.lt.s32.totalorder %v7008, 1
        %vm7028 = vcmp.lt.s32.totalorder %v7008, 2
        %vm7029 = vcmp.lt.s32.totalorder %v7008, 3
        %vm7030 = vcmp.lt.s32.totalorder %v7008, 4
        %v7031 = vsel %vm7027, %v7011, %v7014
        %v7032 = vsel %vm7030, %v7020, 2102212464
        %v7033 = vsel %vm7029, %v7017, %v7032
        %v7034 = vsel %vm7028, %v7031, %v7033
        %v7035 = vsel %vm7027, %v7014, %v7017
        %v7036 = vsel %vm7030, %v7023, 920167782
        %v7037 = vsel %vm7029, %v7020, %v7036
        %v7038 = vsel %vm7028, %v7035, %v7037
        %v7039 = vsel %vm7027, %v7017, %v7020
        %v7040 = vsel %vm7030, %v7026, 1326507024
        %v7041 = vsel %vm7029, %v7023, %v7040
        %v7042 = vsel %vm7028, %v7039, %v7041
        %v7043 = vshll.u32 %v7003, 8
        %v7044 = vmul.u32.u64.compose %v7043, %v7042
        %v7045 = vextract.low.u32 %v7044
        %v7046 = vextract.high.u32 %v7044
        %v7047 = vmul.u32.u64.compose %v7043, %v7038
        %v7048 = vextract.low.u32 %v7047
        %v7049 = vextract.high.u32 %v7047
        %v7050 = vmul.u32 %v7043, %v7034
        %v7051 = vadd.s32 %v7046, %v7048
        %vm7052 = vc.u32 %v7046, %v7048
        %v7053 = vadd.s32 %v7049, 1
        %v7054 = vsel %vm7052, %v7053, %v7049
        %v7055 = vadd.s32 %v7050, %v7054
        %v7056 = vadd.s32 %v7055, 536870912
        %v7057 = vshrl.u32 %v7056, 30
        %v7058 = vshll.u32 %v7057, 30
        %v7059 = vsub.s32 %v7055, %v7058
        %vm7060 = vcmp.lt.s32.totalorder %v7059, 0
        %v7061 = vsub.s32 0, %v7059
        %v7062 = vsel %vm7060, %v7061, %v7059
        %v7063 = vclz %v7062
        %v7064 = vsub.s32 %v7063, 2
        %vm7065 = vcmp.gt.s32.totalorder 0, %v7064
        %v7066 = vsel %vm7065, 0, %v7064
        %v7067 = vsub.s32 32, %v7066
        %v7068 = vshll.u32 %v7059, %v7066
        %v7069 = vshrl.u32 %v7051, %v7067
        %v7070 = vor.u32 %v7068, %v7069
        %v7071 = vsub.s32 4294967266, %v7066
        %v7072 = vadd.s32 %v7071, 127
        %v7073 = vshll.u32 %v7072, 23
        %v7074 = vor.u32 4788187, %v7073
        %v7075 = vand.u32 2147483647, %v7074
        %v7077 = vcvt.s32.f32 %v7070
        %v7078 = vmul.f32 %v7077, %v7075
        %v7079 = vxor.u32 %v7078, 2147483648
        %v7080 = vsel %vm6997, %v7079, %v7078
        %v7081 = vsub.s32 4, %v7057
        %v7082 = vsel %vm6997, %v7081, %v7057
        %v7083 = vsel %vm6996, %v995, %v7080
        %v7084 = vsel %vm6996, 0, %v7082
        %v7085 = vcosq.f32.pop %v7083
        %v7086 = vsinq.f32.pop %v7083
        %vm7087 = vweird.f32 %v995
        %v7088 = vadd.s32 %v7084, 3
        %v7089 = vand.u32 %v7088, 3
        %vm7090 = vcmp.lt.s32.totalorder %v7089, 2
        %vm7091 = vcmp.eq.s32.totalorder %v7089, 0
        %v7092 = vxor.u32 %v7086, 2147483648
        %v7093 = vsel %vm7091, %v7085, %v7092
        %vm7094 = vcmp.eq.s32.totalorder %v7089, 2
        %v7095 = vxor.u32 %v7085, 2147483648
        %v7096 = vsel %vm7094, %v7095, %v7086
        %v7097 = vsel %vm7090, %v7093, %v7096
        %v7098 = vsel %vm7087, nan, %v7097
        %v7099 = vand.u32 2147483647, %v1082
        %vm7100 = vcmp.le.f32.partialorder %v7099, 0.7853982
        %vm7101 = vcmp.lt.s32.totalorder %v1082, 0
        %v7102 = vand.u32 %v1082, 2139095040
        %v7103 = vshrl.u32 %v7102, 23
        %v7104 = vsub.s32 %v7103, 127
        %v7105 = vand.u32 2147483647, %v1082
        %v7106 = vand.u32 %v7105, 8388607
        %v7107 = vor.u32 %v7106, 8388608
        %v7108 = vsub.s32 0, %v7107
        %v7109 = vadd.s32 %v7104, 1
        %vm7110 = vcmp.gt.s32.totalorder %v7109, 0
        %v7111 = vsel %vm7110, %v7109, 0
        %v7112 = vshrl.u32 %v7111, 5
        %v7113 = vand.u32 %v7111, 31
        %v7114 = vsub.s32 32, %v7113
        %v7115 = vshrl.u32 683565275, %v7114
        %v7116 = vshll.u32 683565275, %v7113
        %v7117 = vshrl.u32 2475754826, %v7114
        %v7118 = vor.u32 %v7116, %v7117
        %v7119 = vshll.u32 2475754826, %v7113
        %v7120 = vshrl.u32 2131351028, %v7114
        %v7121 = vor.u32 %v7119, %v7120
        %v7122 = vshll.u32 2131351028, %v7113
        %v7123 = vshrl.u32 2102212464, %v7114
        %v7124 = vor.u32 %v7122, %v7123
        %v7125 = vshll.u32 2102212464, %v7113
        %v7126 = vshrl.u32 920167782, %v7114
        %v7127 = vor.u32 %v7125, %v7126
        %v7128 = vshll.u32 920167782, %v7113
        %v7129 = vshrl.u32 1326507024, %v7114
        %v7130 = vor.u32 %v7128, %v7129
        %vm7131 = vcmp.lt.s32.totalorder %v7112, 1
        %vm7132 = vcmp.lt.s32.totalorder %v7112, 2
        %vm7133 = vcmp.lt.s32.totalorder %v7112, 3
        %vm7134 = vcmp.lt.s32.totalorder %v7112, 4
        %v7135 = vsel %vm7131, %v7115, %v7118
        %v7136 = vsel %vm7134, %v7124, 2102212464
        %v7137 = vsel %vm7133, %v7121, %v7136
        %v7138 = vsel %vm7132, %v7135, %v7137
        %v7139 = vsel %vm7131, %v7118, %v7121
        %v7140 = vsel %vm7134, %v7127, 920167782
        %v7141 = vsel %vm7133, %v7124, %v7140
        %v7142 = vsel %vm7132, %v7139, %v7141
        %v7143 = vsel %vm7131, %v7121, %v7124
        %v7144 = vsel %vm7134, %v7130, 1326507024
        %v7145 = vsel %vm7133, %v7127, %v7144
        %v7146 = vsel %vm7132, %v7143, %v7145
        %v7147 = vshll.u32 %v7107, 8
        %v7148 = vmul.u32.u64.compose %v7147, %v7146
        %v7149 = vextract.low.u32 %v7148
        %v7150 = vextract.high.u32 %v7148
        %v7151 = vmul.u32.u64.compose %v7147, %v7142
        %v7152 = vextract.low.u32 %v7151
        %v7153 = vextract.high.u32 %v7151
        %v7154 = vmul.u32 %v7147, %v7138
        %v7155 = vadd.s32 %v7150, %v7152
        %vm7156 = vc.u32 %v7150, %v7152
        %v7157 = vadd.s32 %v7153, 1
        %v7158 = vsel %vm7156, %v7157, %v7153
        %v7159 = vadd.s32 %v7154, %v7158
        %v7160 = vadd.s32 %v7159, 536870912
        %v7161 = vshrl.u32 %v7160, 30
        %v7162 = vshll.u32 %v7161, 30
        %v7163 = vsub.s32 %v7159, %v7162
        %vm7164 = vcmp.lt.s32.totalorder %v7163, 0
        %v7165 = vsub.s32 0, %v7163
        %v7166 = vsel %vm7164, %v7165, %v7163
        %v7167 = vclz %v7166
        %v7168 = vsub.s32 %v7167, 2
        %vm7169 = vcmp.gt.s32.totalorder 0, %v7168
        %v7170 = vsel %vm7169, 0, %v7168
        %v7171 = vsub.s32 32, %v7170
        %v7172 = vshll.u32 %v7163, %v7170
        %v7173 = vshrl.u32 %v7155, %v7171
        %v7174 = vor.u32 %v7172, %v7173
        %v7175 = vsub.s32 4294967266, %v7170
        %v7176 = vadd.s32 %v7175, 127
        %v7177 = vshll.u32 %v7176, 23
        %v7178 = vor.u32 4788187, %v7177
        %v7179 = vand.u32 2147483647, %v7178
        %v7181 = vcvt.s32.f32 %v7174
        %v7182 = vmul.f32 %v7181, %v7179
        %v7183 = vxor.u32 %v7182, 2147483648
        %v7184 = vsel %vm7101, %v7183, %v7182
        %v7185 = vsub.s32 4, %v7161
        %v7186 = vsel %vm7101, %v7185, %v7161
        %v7187 = vsel %vm7100, %v1082, %v7184
        %v7188 = vsel %vm7100, 0, %v7186
        %v7189 = vcosq.f32.pop %v7187
        %v7190 = vsinq.f32.pop %v7187
        %vm7191 = vweird.f32 %v1082
        %v7192 = vadd.s32 %v7188, 3
        %v7193 = vand.u32 %v7192, 3
        %vm7194 = vcmp.lt.s32.totalorder %v7193, 2
        %vm7195 = vcmp.eq.s32.totalorder %v7193, 0
        %v7196 = vxor.u32 %v7190, 2147483648
        %v7197 = vsel %vm7195, %v7189, %v7196
        %vm7198 = vcmp.eq.s32.totalorder %v7193, 2
        %v7199 = vxor.u32 %v7189, 2147483648
        %v7200 = vsel %vm7198, %v7199, %v7190
        %v7201 = vsel %vm7194, %v7197, %v7200
        %v7202 = vsel %vm7191, nan, %v7201
        %v7203 = vand.u32 2147483647, %v1084
        %vm7204 = vcmp.le.f32.partialorder %v7203, 0.7853982
        %vm7205 = vcmp.lt.s32.totalorder %v1084, 0
        %v7206 = vand.u32 %v1084, 2139095040
        %v7207 = vshrl.u32 %v7206, 23
        %v7208 = vsub.s32 %v7207, 127
        %v7209 = vand.u32 2147483647, %v1084
        %v7210 = vand.u32 %v7209, 8388607
        %v7211 = vor.u32 %v7210, 8388608
        %v7212 = vsub.s32 0, %v7211
        %v7213 = vadd.s32 %v7208, 1
        %vm7214 = vcmp.gt.s32.totalorder %v7213, 0
        %v7215 = vsel %vm7214, %v7213, 0
        %v7216 = vshrl.u32 %v7215, 5
        %v7217 = vand.u32 %v7215, 31
        %v7218 = vsub.s32 32, %v7217
        %v7219 = vshrl.u32 683565275, %v7218
        %v7220 = vshll.u32 683565275, %v7217
        %v7221 = vshrl.u32 2475754826, %v7218
        %v7222 = vor.u32 %v7220, %v7221
        %v7223 = vshll.u32 2475754826, %v7217
        %v7224 = vshrl.u32 2131351028, %v7218
        %v7225 = vor.u32 %v7223, %v7224
        %v7226 = vshll.u32 2131351028, %v7217
        %v7227 = vshrl.u32 2102212464, %v7218
        %v7228 = vor.u32 %v7226, %v7227
        %v7229 = vshll.u32 2102212464, %v7217
        %v7230 = vshrl.u32 920167782, %v7218
        %v7231 = vor.u32 %v7229, %v7230
        %v7232 = vshll.u32 920167782, %v7217
        %v7233 = vshrl.u32 1326507024, %v7218
        %v7234 = vor.u32 %v7232, %v7233
        %vm7235 = vcmp.lt.s32.totalorder %v7216, 1
        %vm7236 = vcmp.lt.s32.totalorder %v7216, 2
        %vm7237 = vcmp.lt.s32.totalorder %v7216, 3
        %vm7238 = vcmp.lt.s32.totalorder %v7216, 4
        %v7239 = vsel %vm7235, %v7219, %v7222
        %v7240 = vsel %vm7238, %v7228, 2102212464
        %v7241 = vsel %vm7237, %v7225, %v7240
        %v7242 = vsel %vm7236, %v7239, %v7241
        %v7243 = vsel %vm7235, %v7222, %v7225
        %v7244 = vsel %vm7238, %v7231, 920167782
        %v7245 = vsel %vm7237, %v7228, %v7244
        %v7246 = vsel %vm7236, %v7243, %v7245
        %v7247 = vsel %vm7235, %v7225, %v7228
        %v7248 = vsel %vm7238, %v7234, 1326507024
        %v7249 = vsel %vm7237, %v7231, %v7248
        %v7250 = vsel %vm7236, %v7247, %v7249
        %v7251 = vshll.u32 %v7211, 8
        %v7252 = vmul.u32.u64.compose %v7251, %v7250
        %v7253 = vextract.low.u32 %v7252
        %v7254 = vextract.high.u32 %v7252
        %v7255 = vmul.u32.u64.compose %v7251, %v7246
        %v7256 = vextract.low.u32 %v7255
        %v7257 = vextract.high.u32 %v7255
        %v7258 = vmul.u32 %v7251, %v7242
        %v7259 = vadd.s32 %v7254, %v7256
        %vm7260 = vc.u32 %v7254, %v7256
        %v7261 = vadd.s32 %v7257, 1
        %v7262 = vsel %vm7260, %v7261, %v7257
        %v7263 = vadd.s32 %v7258, %v7262
        %v7264 = vadd.s32 %v7263, 536870912
        %v7265 = vshrl.u32 %v7264, 30
        %v7266 = vshll.u32 %v7265, 30
        %v7267 = vsub.s32 %v7263, %v7266
        %vm7268 = vcmp.lt.s32.totalorder %v7267, 0
        %v7269 = vsub.s32 0, %v7267
        %v7270 = vsel %vm7268, %v7269, %v7267
        %v7271 = vclz %v7270
        %v7272 = vsub.s32 %v7271, 2
        %vm7273 = vcmp.gt.s32.totalorder 0, %v7272
        %v7274 = vsel %vm7273, 0, %v7272
        %v7275 = vsub.s32 32, %v7274
        %v7276 = vshll.u32 %v7267, %v7274
        %v7277 = vshrl.u32 %v7259, %v7275
        %v7278 = vor.u32 %v7276, %v7277
        %v7279 = vsub.s32 4294967266, %v7274
        %v7280 = vadd.s32 %v7279, 127
        %v7281 = vshll.u32 %v7280, 23
        %v7282 = vor.u32 4788187, %v7281
        %v7283 = vand.u32 2147483647, %v7282
        %v7285 = vcvt.s32.f32 %v7278
        %v7286 = vmul.f32 %v7285, %v7283
        %v7287 = vxor.u32 %v7286, 2147483648
        %v7288 = vsel %vm7205, %v7287, %v7286
        %v7289 = vsub.s32 4, %v7265
        %v7290 = vsel %vm7205, %v7289, %v7265
        %v7291 = vsel %vm7204, %v1084, %v7288
        %v7292 = vsel %vm7204, 0, %v7290
        %v7293 = vcosq.f32.pop %v7291
        %v7294 = vsinq.f32.pop %v7291
        %vm7295 = vweird.f32 %v1084
        %v7296 = vadd.s32 %v7292, 3
        %v7297 = vand.u32 %v7296, 3
        %vm7298 = vcmp.lt.s32.totalorder %v7297, 2
        %vm7299 = vcmp.eq.s32.totalorder %v7297, 0
        %v7300 = vxor.u32 %v7294, 2147483648
        %v7301 = vsel %vm7299, %v7293, %v7300
        %vm7302 = vcmp.eq.s32.totalorder %v7297, 2
        %v7303 = vxor.u32 %v7293, 2147483648
        %v7304 = vsel %vm7302, %v7303, %v7294
        %v7305 = vsel %vm7298, %v7301, %v7304
        %v7306 = vsel %vm7295, nan, %v7305
        %v7307 = vand.u32 2147483647, %v1168
        %vm7308 = vcmp.le.f32.partialorder %v7307, 0.7853982
        %vm7309 = vcmp.lt.s32.totalorder %v1168, 0
        %v7310 = vand.u32 %v1168, 2139095040
        %v7311 = vshrl.u32 %v7310, 23
        %v7312 = vsub.s32 %v7311, 127
        %v7313 = vand.u32 2147483647, %v1168
        %v7314 = vand.u32 %v7313, 8388607
        %v7315 = vor.u32 %v7314, 8388608
        %v7316 = vsub.s32 0, %v7315
        %v7317 = vadd.s32 %v7312, 1
        %vm7318 = vcmp.gt.s32.totalorder %v7317, 0
        %v7319 = vsel %vm7318, %v7317, 0
        %v7320 = vshrl.u32 %v7319, 5
        %v7321 = vand.u32 %v7319, 31
        %v7322 = vsub.s32 32, %v7321
        %v7323 = vshrl.u32 683565275, %v7322
        %v7324 = vshll.u32 683565275, %v7321
        %v7325 = vshrl.u32 2475754826, %v7322
        %v7326 = vor.u32 %v7324, %v7325
        %v7327 = vshll.u32 2475754826, %v7321
        %v7328 = vshrl.u32 2131351028, %v7322
        %v7329 = vor.u32 %v7327, %v7328
        %v7330 = vshll.u32 2131351028, %v7321
        %v7331 = vshrl.u32 2102212464, %v7322
        %v7332 = vor.u32 %v7330, %v7331
        %v7333 = vshll.u32 2102212464, %v7321
        %v7334 = vshrl.u32 920167782, %v7322
        %v7335 = vor.u32 %v7333, %v7334
        %v7336 = vshll.u32 920167782, %v7321
        %v7337 = vshrl.u32 1326507024, %v7322
        %v7338 = vor.u32 %v7336, %v7337
        %vm7339 = vcmp.lt.s32.totalorder %v7320, 1
        %vm7340 = vcmp.lt.s32.totalorder %v7320, 2
        %vm7341 = vcmp.lt.s32.totalorder %v7320, 3
        %vm7342 = vcmp.lt.s32.totalorder %v7320, 4
        %v7343 = vsel %vm7339, %v7323, %v7326
        %v7344 = vsel %vm7342, %v7332, 2102212464
        %v7345 = vsel %vm7341, %v7329, %v7344
        %v7346 = vsel %vm7340, %v7343, %v7345
        %v7347 = vsel %vm7339, %v7326, %v7329
        %v7348 = vsel %vm7342, %v7335, 920167782
        %v7349 = vsel %vm7341, %v7332, %v7348
        %v7350 = vsel %vm7340, %v7347, %v7349
        %v7351 = vsel %vm7339, %v7329, %v7332
        %v7352 = vsel %vm7342, %v7338, 1326507024
        %v7353 = vsel %vm7341, %v7335, %v7352
        %v7354 = vsel %vm7340, %v7351, %v7353
        %v7355 = vshll.u32 %v7315, 8
        %v7356 = vmul.u32.u64.compose %v7355, %v7354
        %v7357 = vextract.low.u32 %v7356
        %v7358 = vextract.high.u32 %v7356
        %v7359 = vmul.u32.u64.compose %v7355, %v7350
        %v7360 = vextract.low.u32 %v7359
        %v7361 = vextract.high.u32 %v7359
        %v7362 = vmul.u32 %v7355, %v7346
        %v7363 = vadd.s32 %v7358, %v7360
        %vm7364 = vc.u32 %v7358, %v7360
        %v7365 = vadd.s32 %v7361, 1
        %v7366 = vsel %vm7364, %v7365, %v7361
        %v7367 = vadd.s32 %v7362, %v7366
        %v7368 = vadd.s32 %v7367, 536870912
        %v7369 = vshrl.u32 %v7368, 30
        %v7370 = vshll.u32 %v7369, 30
        %v7371 = vsub.s32 %v7367, %v7370
        %vm7372 = vcmp.lt.s32.totalorder %v7371, 0
        %v7373 = vsub.s32 0, %v7371
        %v7374 = vsel %vm7372, %v7373, %v7371
        %v7375 = vclz %v7374
        %v7376 = vsub.s32 %v7375, 2
        %vm7377 = vcmp.gt.s32.totalorder 0, %v7376
        %v7378 = vsel %vm7377, 0, %v7376
        %v7379 = vsub.s32 32, %v7378
        %v7380 = vshll.u32 %v7371, %v7378
        %v7381 = vshrl.u32 %v7363, %v7379
        %v7382 = vor.u32 %v7380, %v7381
        %v7383 = vsub.s32 4294967266, %v7378
        %v7384 = vadd.s32 %v7383, 127
        %v7385 = vshll.u32 %v7384, 23
        %v7386 = vor.u32 4788187, %v7385
        %v7387 = vand.u32 2147483647, %v7386
        %v7389 = vcvt.s32.f32 %v7382
        %v7390 = vmul.f32 %v7389, %v7387
        %v7391 = vxor.u32 %v7390, 2147483648
        %v7392 = vsel %vm7309, %v7391, %v7390
        %v7393 = vsub.s32 4, %v7369
        %v7394 = vsel %vm7309, %v7393, %v7369
        %v7395 = vsel %vm7308, %v1168, %v7392
        %v7396 = vsel %vm7308, 0, %v7394
        %v7397 = vcosq.f32.pop %v7395
        %v7398 = vsinq.f32.pop %v7395
        %vm7399 = vweird.f32 %v1168
        %v7400 = vadd.s32 %v7396, 3
        %v7401 = vand.u32 %v7400, 3
        %vm7402 = vcmp.lt.s32.totalorder %v7401, 2
        %vm7403 = vcmp.eq.s32.totalorder %v7401, 0
        %v7404 = vxor.u32 %v7398, 2147483648
        %v7405 = vsel %vm7403, %v7397, %v7404
        %vm7406 = vcmp.eq.s32.totalorder %v7401, 2
        %v7407 = vxor.u32 %v7397, 2147483648
        %v7408 = vsel %vm7406, %v7407, %v7398
        %v7409 = vsel %vm7402, %v7405, %v7408
        %v7410 = vsel %vm7399, nan, %v7409
        %7411 = vst [vmem:[%s179] sm:$0xff] %v1274
        %7412 = vst [vmem:[%s179 + $0x8] sm:$0xff] %v1378
        %7413 = vst [vmem:[%s179 + $0x10] sm:$0xff] %v1482
        %7414 = vst [vmem:[%s179 + $0x18] sm:$0xff] %v1586
        %7415 = vst [vmem:[%s179 + $0x20] sm:$0xff] %v1690
        %7416 = vst [vmem:[%s179 + $0x28] sm:$0xff] %v1794
        %7417 = vst [vmem:[%s179 + $0x30] sm:$0xff] %v1898
        %7418 = vst [vmem:[%s179 + $0x38] sm:$0xff] %v2002
        %7419 = vst [vmem:[%s179 + $0x40] sm:$0xff] %v2106
        %7420 = vst [vmem:[%s179 + $0x48] sm:$0xff] %v2210
        %7421 = vst [vmem:[%s179 + $0x50] sm:$0xff] %v2314
        %7422 = vst [vmem:[%s179 + $0x58] sm:$0xff] %v2418
        %7423 = vst [vmem:[%s179 + $0x60] sm:$0xff] %v2522
        %7424 = vst [vmem:[%s179 + $0x68] sm:$0xff] %v2626
        %7425 = vst [vmem:[%s179 + $0x70] sm:$0xff] %v2730
        %7426 = vst [vmem:[%s179 + $0x78] sm:$0xff] %v2834
        %7427 = vst [vmem:[%s179 + $0x80] sm:$0xff] %v2938
        %7428 = vst [vmem:[%s179 + $0x88] sm:$0xff] %v3042
        %7429 = vst [vmem:[%s179 + $0x90] sm:$0xff] %v3146
        %7430 = vst [vmem:[%s179 + $0x98] sm:$0xff] %v3250
        %7431 = vst [vmem:[%s179 + $0xa0] sm:$0xff] %v3354
        %7432 = vst [vmem:[%s179 + $0xa8] sm:$0xff] %v3458
        %7433 = vst [vmem:[%s179 + $0xb0] sm:$0xff] %v3562
        %7434 = vst [vmem:[%s179 + $0xb8] sm:$0xff] %v3666
        %7435 = vst [vmem:[%s179 + $0xc0] sm:$0xff] %v3770
        %7436 = vst [vmem:[%s179 + $0xc8] sm:$0xff] %v3874
        %7437 = vst [vmem:[%s179 + $0xd0] sm:$0xff] %v3978
        %7438 = vst [vmem:[%s179 + $0xd8] sm:$0xff] %v4082
        %7439 = vst [vmem:[%s179 + $0xe0] sm:$0xff] %v4186
        %7440 = vst [vmem:[%s179 + $0xe8] sm:$0xff] %v4290
        %7441 = vst [vmem:[%s179 + $0xf0] sm:$0xff] %v4394
        %7442 = vst [vmem:[%s179 + $0xf8] sm:$0xff] %v4498
        %7443 = vst [vmem:[%s179 + $0x100] sm:$0xff] %v4602
        %7444 = vst [vmem:[%s179 + $0x108] sm:$0xff] %v4706
        %7445 = vst [vmem:[%s179 + $0x110] sm:$0xff] %v4810
        %7446 = vst [vmem:[%s179 + $0x118] sm:$0xff] %v4914
        %7447 = vst [vmem:[%s179 + $0x120] sm:$0xff] %v5018
        %7448 = vst [vmem:[%s179 + $0x128] sm:$0xff] %v5122
        %7449 = vst [vmem:[%s179 + $0x130] sm:$0xff] %v5226
        %7450 = vst [vmem:[%s179 + $0x138] sm:$0xff] %v5330
        %7451 = vst [vmem:[%s179 + $0x140] sm:$0xff] %v5434
        %7452 = vst [vmem:[%s179 + $0x148] sm:$0xff] %v5538
        %7453 = vst [vmem:[%s179 + $0x150] sm:$0xff] %v5642
        %7454 = vst [vmem:[%s179 + $0x158] sm:$0xff] %v5746
        %7455 = vst [vmem:[%s179 + $0x160] sm:$0xff] %v5850
        %7456 = vst [vmem:[%s179 + $0x168] sm:$0xff] %v5954
        %7457 = vst [vmem:[%s179 + $0x170] sm:$0xff] %v6058
        %7458 = vst [vmem:[%s179 + $0x178] sm:$0xff] %v6162
        %7459 = vst [vmem:[%s179 + $0x180] sm:$0xff] %v6266
        %7460 = vst [vmem:[%s179 + $0x188] sm:$0xff] %v6370
        %7461 = vst [vmem:[%s179 + $0x190] sm:$0xff] %v6474
        %7462 = vst [vmem:[%s179 + $0x198] sm:$0xff] %v6578
        %7463 = vst [vmem:[%s179 + $0x1a0] sm:$0xff] %v6682
        %7464 = vst [vmem:[%s179 + $0x1a8] sm:$0xff] %v6786
        %7465 = vst [vmem:[%s179 + $0x1b0] sm:$0xff] %v6890
        %7466 = vst [vmem:[%s179 + $0x1b8] sm:$0xff] %v6994
        %7467 = vst [vmem:[%s179 + $0x1c0] sm:$0xff] %v7098
        %7468 = vst [vmem:[%s179 + $0x1c8] sm:$0xff] %v7202
        %7469 = vst [vmem:[%s179 + $0x1d0] sm:$0xff] %v7306
        %7470 = vst [vmem:[%s179 + $0x1d8] sm:$0xff] %v7410
        %s7471 = sand.u32 %s94, 1
        %s7472 = scalar_lea.sflag [#allocation4], %s7471
        %s7473 = sand.u32 %s94, 1
        %s7474 = smul.addr %s7473, 480
        %s7475 = scalar_lea.vmem [#allocation5], %s7474
        // Predicated region
        $region37: #{tpu_custom_call.1} parent=31 // pred_check
          %p7476 = pneg %p104
        $region38: #{tpu_custom_call.1} parent=31 // pred_check_branch
          %7478 = sbr.rel (%p7476) target = $region40
        $region39: #{tpu_custom_call.1} parent=31 // pred_region
          %s7479 = smul.u32 4, %s18
          %s7481 = ssub.s32 7680, 7680
          %7482 = vsyncadd %s7472, %s7481
          %s7483 = smul.addr %s7479, 15
          %s7484 = smul.addr %s7483, 128
          %s7485 = scalar_lea.hbm %s3, %s7484
          %s7486 = sshll.u32 %s7475, 4
          %s7487 = int_to_ptr.vmem [resolvable:$true] %s7486
          %7492 = dma.vmem_to_hbm [thread:$0]  %s7487, 7680, %s7485, %s7472, 1920, 1920, 120
        $region40: #{tpu_custom_call.1} parent=31 // pred_fallthru
          _
      $region32: #{tpu_custom_call.1} parent=5 // pred_fallthru
        _
      %p7493 = scmp.le.s32.totalorder 2, %s13
      // Predicated region
      $region41: #{tpu_custom_call.1} parent=5 // pred_check
        %p7494 = pneg %p7493
      $region42: #{tpu_custom_call.1} parent=5 // pred_check_branch
        %7496 = sbr.rel (%p7494) target = $region44
      $region43: #{tpu_custom_call.1} parent=5 // pred_region
        %s7497 = ssub.s32 %s13, 2
        // Predicated region
        $region45: #{tpu_custom_call.1} parent=43 // pred_check
          %p7498 = pneg %p110
        $region46: #{tpu_custom_call.1} parent=43 // pred_check_branch
          %7500 = sbr.rel (%p7498) target = $region48
        $region47: #{tpu_custom_call.1} parent=43 // pred_region
          %s7501 = sand.u32 %s95, 1
          %s7502 = scalar_lea.sflag [#allocation4], %s7501
          %s7503 = sand.u32 %s95, 1
          %s7504 = smul.addr %s7503, 480
          %s7505 = scalar_lea.vmem [#allocation5], %s7504
          %7506 = dma.done %s7502, 7680
        $region48: #{tpu_custom_call.1} parent=43 // pred_fallthru
          _
      $region44: #{tpu_custom_call.1} parent=5 // pred_fallthru
        _
    $region6: #{tpu_custom_call.1} parent=1 // loop_footer
      %s17 = sadd.s32 1, %s13
    $region7: #{tpu_custom_call.1} parent=1 // loop_footer_branch
      %12 = sbr.rel target = $region3
    $region8: #{tpu_custom_call.1} parent=1 // loop_exit
      _
    %7507 = vsyncpa [#allocation3], 1
    %s7508 = scalar_lea.sflag [#allocation3], 1
    %7509 = vsyncpa %s7508, 1
    %7510 = vsyncpa [#allocation4], 1
    %s7511 = scalar_lea.sflag [#allocation4], 1
    %7512 = vsyncpa %s7511, 1

</llo_original>
